<compile_context>
chip_gen: v7x
topology: tpu7x:2x2x1
jax: 0.10.0
libtpu: 0.0.40
codegen_flags: <defaults>
</compile_context>

<pallas_src>
import functools

import jax
import jax.numpy as jnp
from jax import lax
from jax.experimental import pallas as pl
from jax.experimental.pallas import tpu as pltpu


def _round_up(x, m):
    return (x + m - 1) // m * m


# --------------------- fixed Conv6 geometry (Dense6(16384)) ------------------
CIN, CIN_PAD = 6, 8                    # input channels, padded for lane packing
C1, C2 = 64, 128                       # conv1 / conv2 output channels
KD1, KH1, KW1 = 5, 3, 3                # conv1 kernel
KD2, KH2, KW2 = 3, 3, 3                # conv2 kernel
SD = 2                                 # depth stride of both convs
D0, H0, W0 = 13, 12, 12                # input spatial (T, H, W) -> 16384 features
D1, H1, W1 = 5, 10, 10                 # conv1 output spatial
D2, H2, W2 = 2, 8, 8                   # conv2 output spatial
M1 = D1 * H1 * W1                      # 500 conv1 rows per batch element
K1 = KD1 * KH1 * KW1 * CIN_PAD         # 360
K1_PAD = _round_up(K1, 128)            # 384 (lane-dense K for conv1)
M1_PAD = 512                           # conv1 rows padded so shifted reads stay in range
MAX_ANCHOR = SD * (D2 - 1) * H1 * W1 + (H2 - 1) * W1 + (W2 - 1)        # 277
R2 = _round_up(MAX_ANCHOR + 1, 8)                                      # 280
MAX_SHIFT = (KD2 - 1) * H1 * W1 + (KH2 - 1) * W1 + (KW2 - 1)           # 222
assert R2 - 1 + MAX_SHIFT < M1_PAD
# one tap-group per (dz, dy); dx taps are folded into K by lane-concat
TAPS = tuple(dz * H1 * W1 + dy * W1 for dz in range(KD2) for dy in range(KH2))


# ------------------------------- Pallas kernel --------------------------------
def _conv6_kernel(a1_ref, w1_ref, b1_ref, w2_ref, b2_ref, o_ref, x1_ref, acc_ref):
    """One batch element per grid step.

    a1_ref : (1, M1_PAD, K1_PAD) bf16  conv1 im2col rows (rows 500.. are zero pad)
    w1_ref : (K1_PAD, C1)        bf16  conv1 weight matrix
    b1_ref : (1, C1)             f32
    w2_ref : (9, KW2*C1, C2)     bf16  conv2 weights grouped by (dz,dy), K=(dx,ci)
    b2_ref : (1, C2)             f32
    o_ref  : (1, R2, C2)         f32   conv2 output, valid rows at the anchor indices
    x1_ref : (M1_PAD, C1) bf16 scratch — conv1 activations (stay in VMEM)
    acc_ref: (R2, C2) f32 scratch      — conv2 accumulator
    """
    # conv1: one MXU matmul + bias + ReLU; result never leaves VMEM.
    h1 = jnp.dot(a1_ref[0], w1_ref[...], preferred_element_type=jnp.float32)
    h1 = jnp.maximum(h1 + b1_ref[...], 0.0)
    x1_ref[...] = h1.astype(x1_ref.dtype)

    # conv2: shifted-window accumulation.  For anchor row r = 2*d2*100 + h2*10 + w2
    # the rows r + (dz*100 + dy*10 + dx) of x1 are exactly the receptive field of
    # output position (d2, h2, w2); non-anchor rows are discarded by the caller.
    acc_ref[...] = jnp.zeros_like(acc_ref)
    for g, s0 in enumerate(TAPS):
        lhs = jnp.concatenate(
            [x1_ref[pl.ds(s0 + dx, R2), :] for dx in range(KW2)], axis=1)
        acc_ref[...] += jnp.dot(lhs, w2_ref[g], preferred_element_type=jnp.float32)

    o_ref[0] = jnp.maximum(acc_ref[...] + b2_ref[...], 0.0).astype(o_ref.dtype)


def conv6_fused(a1, w1m, b1, w2g, b2):
    """a1: (N, M1_PAD, K1_PAD) bf16 -> (N, R2, C2) f32 (conv1+conv2, bias+ReLU)."""
    n = a1.shape[0]
    flops = 2 * n * (M1_PAD * K1_PAD * C1 + len(TAPS) * R2 * (KW2 * C1) * C2)
    bytes_accessed = int(a1.size * 2 + w1m.size * 2 + w2g.size * 2
                         + b1.size * 4 + b2.size * 4 + n * R2 * C2 * 4)
    return pl.pallas_call(
        _conv6_kernel,
        out_shape=jax.ShapeDtypeStruct((n, R2, C2), jnp.float32),
        grid=(n,),
        in_specs=[
            pl.BlockSpec((1, M1_PAD, K1_PAD), lambda i: (i, 0, 0)),   # per-elem A
            pl.BlockSpec((K1_PAD, C1), lambda i: (0, 0)),             # w1 resident
            pl.BlockSpec((1, C1), lambda i: (0, 0)),
            pl.BlockSpec((len(TAPS), KW2 * C1, C2), lambda i: (0, 0, 0)),  # w2 resident
            pl.BlockSpec((1, C2), lambda i: (0, 0)),
        ],
        out_specs=pl.BlockSpec((1, R2, C2), lambda i: (i, 0, 0)),
        scratch_shapes=[
            pltpu.VMEM((M1_PAD, C1), jnp.bfloat16),    # conv1 activations
            pltpu.VMEM((R2, C2), jnp.float32),         # conv2 accumulator
        ],
        compiler_params=pltpu.CompilerParams(dimension_semantics=("parallel",)),
        cost_estimate=pl.CostEstimate(flops=flops, transcendentals=0,
                                      bytes_accessed=bytes_accessed),
    )(a1, w1m, b1, w2g, b2)


# -------------------------- conv1 im2col (XLA side) ---------------------------
def _conv1_im2col(x_cl):
    """x_cl: (N, D0, H0, W0, CIN_PAD) bf16 -> (N, M1_PAD, K1_PAD) patch matrix.

    K ordering (dz, dy, dx, ci); channels-last so every piece concatenates on
    the lane axis (width-8 pieces).  Extra K columns and M rows are zero."""
    n, d, h, w, c = x_cl.shape
    do = (d - KD1) // SD + 1
    ho = h - KH1 + 1
    wo = w - KW1 + 1
    assert (do, ho, wo) == (D1, H1, W1)
    pieces = []
    for dz in range(KD1):
        for dy in range(KH1):
            for dx in range(KW1):
                pieces.append(x_cl[:, dz:dz + SD * (do - 1) + 1:SD,
                                   dy:dy + ho, dx:dx + wo, :])
    k_real = KD1 * KH1 * KW1 * c
    if K1_PAD > k_real:
        pieces.append(jnp.zeros((n, do, ho, wo, K1_PAD - k_real), x_cl.dtype))
    a = jnp.concatenate(pieces, axis=-1).reshape(n, do * ho * wo, K1_PAD)
    return jnp.pad(a, ((0, 0), (0, M1_PAD - do * ho * wo), (0, 0)))


# ------------------------------ Conv6 forward ---------------------------------
def conv6_forward(x, kp):
    """x: (N, T=13, C=6, H=12, W=12) float32 -> (N, 10) logits."""
    n = x.shape[0]
    # channels-last relayout + pad C 6->8, bf16 MXU operands.
    x = jnp.transpose(x, (0, 1, 3, 4, 2))
    x = jnp.pad(x, ((0, 0), (0, 0), (0, 0), (0, 0), (0, CIN_PAD - CIN)))
    a1 = _conv1_im2col(x.astype(jnp.bfloat16))
    y2 = conv6_fused(a1, kp["w1m"], kp["b1"], kp["w2g"], kp["b2"])    # (N, R2, 128)
    # gather the 128 valid conv2 rows (d2, h2, w2 order) out of the anchored block
    d2i = SD * jnp.arange(D2) * H1 * W1
    h2i = jnp.arange(H2) * W1
    w2i = jnp.arange(W2)
    anchors = (d2i[:, None, None] + h2i[None, :, None] + w2i[None, None, :]).reshape(-1)
    feat = jnp.take(y2, anchors, axis=1).reshape(n, -1)               # (N, 16384)
    # TODO(synk): Dense6 definition not provided in the source; modeled as a
    # single Linear(16384 -> 10) head.  Skinny (M=2, N=10) -> plain XLA dot.
    return feat @ kp["wd"] + kp["bd"]


# --------------------------------- params -------------------------------------
def init_params(key):
    """Parameters in native PyTorch layouts (Conv3d / Linear)."""
    def uinit(k, shape, fan_in):
        bound = 1.0 / (fan_in ** 0.5)
        return jax.random.uniform(k, shape, jnp.float32, -bound, bound)

    k1, k2, k3, k4, k5, k6 = jax.random.split(key, 6)
    f1 = CIN * KD1 * KH1 * KW1
    f2 = C1 * KD2 * KH2 * KW2
    fd = C2 * D2 * H2 * W2
    return {
        "w1": uinit(k1, (C1, CIN, KD1, KH1, KW1), f1),
        "b1": uinit(k2, (C1,), f1),
        "w2": uinit(k3, (C2, C1, KD2, KH2, KW2), f2),
        "b2": uinit(k4, (C2,), f2),
        "wd": uinit(k5, (10, fd), fd),
        "bd": uinit(k6, (10,), fd),
    }


def prepare_params(p):
    """One-time conversion from PyTorch layouts to kernel-friendly layouts."""
    # conv1: (C1, CIN, kd, kh, kw) -> (K1_PAD, C1), K ordered (dz, dy, dx, ci)
    w1 = jnp.pad(p["w1"], ((0, 0), (0, CIN_PAD - CIN), (0, 0), (0, 0), (0, 0)))
    w1m = w1.transpose(2, 3, 4, 1, 0).reshape(KD1 * KH1 * KW1 * CIN_PAD, C1)
    w1m = jnp.pad(w1m, ((0, K1_PAD - w1m.shape[0]), (0, 0))).astype(jnp.bfloat16)
    # conv2: (C2, C1, kd, kh, kw) -> (9, KW2*C1, C2): group (dz, dy), K = (dx, ci)
    w2g = p["w2"].transpose(2, 3, 4, 1, 0).reshape(KD2 * KH2, KW2 * C1, C2)
    w2g = w2g.astype(jnp.bfloat16)
    # dense head: permute the Linear input axis once so our (d2, h2, w2, c)
    # flatten matches PyTorch's NCDHW .view(N, -1) ordering.
    wd = p["wd"].reshape(10, C2, D2, H2, W2).transpose(2, 3, 4, 1, 0).reshape(-1, 10)
    return {
        "w1m": w1m, "b1": p["b1"].reshape(1, C1).astype(jnp.float32),
        "w2g": w2g, "b2": p["b2"].reshape(1, C2).astype(jnp.float32),
        "wd": wd, "bd": p["bd"],
    }


# ----------------------------- pure-JAX reference ------------------------------
def reference_forward(x, p):
    xt = jnp.transpose(x, (0, 2, 1, 3, 4))                  # torch permute(0,2,1,3,4)
    dn = ("NCDHW", "OIDHW", "NCDHW")
    y = lax.conv_general_dilated(xt, p["w1"], (SD, 1, 1), "VALID", dimension_numbers=dn)
    y = jax.nn.relu(y + p["b1"].reshape(1, C1, 1, 1, 1))
    y = lax.conv_general_dilated(y, p["w2"], (SD, 1, 1), "VALID", dimension_numbers=dn)
    y = jax.nn.relu(y + p["b2"].reshape(1, C2, 1, 1, 1))
    return y.reshape(y.shape[0], -1) @ p["wd"].T + p["bd"]


if __name__ == "__main__":
    key = jax.random.PRNGKey(0)
    kparam, kx = jax.random.split(key)
    params = init_params(kparam)
    kernel_params = prepare_params(params)

    # (N=2, T=13, C=6, H=12, W=12): the two strided valid convs give a flattened
    # feature size of 128 * 2 * 8 * 8 = 16384, matching Dense6(16384).
    x = jax.random.normal(kx, (2, D0, CIN, H0, W0), jnp.float32)

    out = jax.block_until_ready(jax.jit(conv6_forward)(x, kernel_params))
    assert out.shape == (2, 10), out.shape
    assert bool(jnp.all(jnp.isfinite(out)))

    # loose tolerance: bf16 MXU operands vs f32 reference
    ref = reference_forward(x, params)
    err = float(jnp.max(jnp.abs(out - ref)))
    scale = float(jnp.max(jnp.abs(ref))) + 1e-6
    assert err <= 0.1 * scale, (err, scale)
    print("KERNEL_OK")
</pallas_src>

<mosaic_0001>
module attributes {stable_mosaic.version = 11 : i64} {
  func.func @_conv6_kernel(%arg0: i32, %arg1: memref<1x512x384xbf16, #tpu.memory_space<vmem>>, %arg2: memref<384x64xbf16, #tpu.memory_space<vmem>>, %arg3: memref<1x64xf32, #tpu.memory_space<vmem>>, %arg4: memref<9x192x128xbf16, #tpu.memory_space<vmem>>, %arg5: memref<1x128xf32, #tpu.memory_space<vmem>>, %arg6: memref<1x280x128xf32, #tpu.memory_space<vmem>>, %arg7: memref<512x64xbf16, #tpu.memory_space<vmem>>, %arg8: memref<280x128xf32, #tpu.memory_space<vmem>>) attributes {dimension_semantics = [#tpu.dimension_semantics<parallel>], iteration_bounds = array<i64: 2>, scalar_prefetch = 0 : i64, scratch_operands = 2 : i64, tpu.core_type = #tpu.core_type<tc>, window_params = [{transform_indices = @transform_0, window_bounds = array<i64: 1, 512, 384>}, {pipeline_mode = #tpu.pipeline_mode<synchronous>, transform_indices = @transform_1, window_bounds = array<i64: 384, 64>}, {pipeline_mode = #tpu.pipeline_mode<synchronous>, transform_indices = @transform_2, window_bounds = array<i64: 1, 64>}, {pipeline_mode = #tpu.pipeline_mode<synchronous>, transform_indices = @transform_3, window_bounds = array<i64: 9, 192, 128>}, {pipeline_mode = #tpu.pipeline_mode<synchronous>, transform_indices = @transform_4, window_bounds = array<i64: 1, 128>}, {transform_indices = @transform_5, window_bounds = array<i64: 1, 280, 128>}]} {
    %c0 = arith.constant 0 : index
    %c0_0 = arith.constant 0 : index
    %c0_1 = arith.constant 0 : index
    %0 = vector.load %arg1[%c0, %c0_0, %c0_1] : memref<1x512x384xbf16, #tpu.memory_space<vmem>>, vector<1x512x384xbf16>
    %1 = vector.shape_cast %0 : vector<1x512x384xbf16> to vector<512x384xbf16>
    %c0_2 = arith.constant 0 : index
    %c0_3 = arith.constant 0 : index
    %2 = vector.load %arg2[%c0_2, %c0_3] : memref<384x64xbf16, #tpu.memory_space<vmem>>, vector<384x64xbf16>
    %cst = arith.constant dense<0.000000e+00> : vector<512x64xf32>
    %3 = tpu.matmul %1, %2, %cst {dimension_numbers = #tpu.dot_dimension_numbers<[1], [0], [0], [1], [0, 0, 1, 1], [], []>} : vector<512x384xbf16>, vector<384x64xbf16>, vector<512x64xf32> -> vector<512x64xf32>
    %c0_4 = arith.constant 0 : index
    %c0_5 = arith.constant 0 : index
    %4 = vector.load %arg3[%c0_4, %c0_5] : memref<1x64xf32, #tpu.memory_space<vmem>>, vector<1x64xf32>
    %5 = vector.broadcast %4 : vector<1x64xf32> to vector<512x64xf32>
    %6 = arith.addf %3, %5 : vector<512x64xf32>
    %cst_6 = arith.constant 0.000000e+00 : f32
    %7 = vector.broadcast %cst_6 : f32 to vector<512x64xf32>
    %8 = arith.maximumf %6, %7 : vector<512x64xf32>
    %9 = arith.truncf %8 : vector<512x64xf32> to vector<512x64xbf16>
    %c0_7 = arith.constant 0 : index
    %c0_8 = arith.constant 0 : index
    %10 = vector.load %arg7[%c0_7, %c0_8] : memref<512x64xbf16, #tpu.memory_space<vmem>>, vector<512x64xbf16>
    tpu.vector_store %arg7[%c0_7, %c0_8], %9 {strides = array<i32>} : memref<512x64xbf16, #tpu.memory_space<vmem>>, vector<512x64xbf16>,
    %cst_9 = arith.constant 0.000000e+00 : f32
    %11 = vector.broadcast %cst_9 : f32 to vector<280x128xf32>
    %c0_10 = arith.constant 0 : index
    %c0_11 = arith.constant 0 : index
    %12 = vector.load %arg8[%c0_10, %c0_11] : memref<280x128xf32, #tpu.memory_space<vmem>>, vector<280x128xf32>
    tpu.vector_store %arg8[%c0_10, %c0_11], %11 {strides = array<i32>} : memref<280x128xf32, #tpu.memory_space<vmem>>, vector<280x128xf32>,
    %c0_12 = arith.constant 0 : index
    %c0_13 = arith.constant 0 : index
    %13 = vector.load %arg7[%c0_12, %c0_13] : memref<512x64xbf16, #tpu.memory_space<vmem>>, vector<280x64xbf16>
    %c1 = arith.constant 1 : index
    %c0_14 = arith.constant 0 : index
    %14 = vector.load %arg7[%c1, %c0_14] : memref<512x64xbf16, #tpu.memory_space<vmem>>, vector<280x64xbf16>
    %c2 = arith.constant 2 : index
    %c0_15 = arith.constant 0 : index
    %15 = vector.load %arg7[%c2, %c0_15] : memref<512x64xbf16, #tpu.memory_space<vmem>>, vector<280x64xbf16>
    %16 = tpu.concatenate %13, %14, %15 in 1 : vector<280x64xbf16>, vector<280x64xbf16>, vector<280x64xbf16> -> vector<280x192xbf16>
    %c0_16 = arith.constant 0 : index
    %c0_17 = arith.constant 0 : index
    %17 = vector.load %arg8[%c0_16, %c0_17] : memref<280x128xf32, #tpu.memory_space<vmem>>, vector<280x128xf32>
    %c0_18 = arith.constant 0 : index
    %c0_19 = arith.constant 0 : index
    %c0_20 = arith.constant 0 : index
    %18 = vector.load %arg4[%c0_18, %c0_19, %c0_20] : memref<9x192x128xbf16, #tpu.memory_space<vmem>>, vector<1x192x128xbf16>
    %19 = vector.shape_cast %18 : vector<1x192x128xbf16> to vector<192x128xbf16>
    %cst_21 = arith.constant dense<0.000000e+00> : vector<280x128xf32>
    %20 = tpu.matmul %16, %19, %cst_21 {dimension_numbers = #tpu.dot_dimension_numbers<[1], [0], [0], [1], [0, 0, 1, 1], [], []>} : vector<280x192xbf16>, vector<192x128xbf16>, vector<280x128xf32> -> vector<280x128xf32>
    %21 = arith.addf %17, %20 : vector<280x128xf32>
    %c0_22 = arith.constant 0 : index
    %c0_23 = arith.constant 0 : index
    %22 = vector.load %arg8[%c0_22, %c0_23] : memref<280x128xf32, #tpu.memory_space<vmem>>, vector<280x128xf32>
    tpu.vector_store %arg8[%c0_22, %c0_23], %21 {strides = array<i32>} : memref<280x128xf32, #tpu.memory_space<vmem>>, vector<280x128xf32>,
    %c10 = arith.constant 10 : index
    %c0_24 = arith.constant 0 : index
    %23 = vector.load %arg7[%c10, %c0_24] : memref<512x64xbf16, #tpu.memory_space<vmem>>, vector<280x64xbf16>
    %c11 = arith.constant 11 : index
    %c0_25 = arith.constant 0 : index
    %24 = vector.load %arg7[%c11, %c0_25] : memref<512x64xbf16, #tpu.memory_space<vmem>>, vector<280x64xbf16>
    %c12 = arith.constant 12 : index
    %c0_26 = arith.constant 0 : index
    %25 = vector.load %arg7[%c12, %c0_26] : memref<512x64xbf16, #tpu.memory_space<vmem>>, vector<280x64xbf16>
    %26 = tpu.concatenate %23, %24, %25 in 1 : vector<280x64xbf16>, vector<280x64xbf16>, vector<280x64xbf16> -> vector<280x192xbf16>
    %c0_27 = arith.constant 0 : index
    %c0_28 = arith.constant 0 : index
    %27 = vector.load %arg8[%c0_27, %c0_28] : memref<280x128xf32, #tpu.memory_space<vmem>>, vector<280x128xf32>
    %c1_29 = arith.constant 1 : index
    %c0_30 = arith.constant 0 : index
    %c0_31 = arith.constant 0 : index
    %28 = vector.load %arg4[%c1_29, %c0_30, %c0_31] : memref<9x192x128xbf16, #tpu.memory_space<vmem>>, vector<1x192x128xbf16>
    %29 = vector.shape_cast %28 : vector<1x192x128xbf16> to vector<192x128xbf16>
    %cst_32 = arith.constant dense<0.000000e+00> : vector<280x128xf32>
    %30 = tpu.matmul %26, %29, %cst_32 {dimension_numbers = #tpu.dot_dimension_numbers<[1], [0], [0], [1], [0, 0, 1, 1], [], []>} : vector<280x192xbf16>, vector<192x128xbf16>, vector<280x128xf32> -> vector<280x128xf32>
    %31 = arith.addf %27, %30 : vector<280x128xf32>
    %c0_33 = arith.constant 0 : index
    %c0_34 = arith.constant 0 : index
    %32 = vector.load %arg8[%c0_33, %c0_34] : memref<280x128xf32, #tpu.memory_space<vmem>>, vector<280x128xf32>
    tpu.vector_store %arg8[%c0_33, %c0_34], %31 {strides = array<i32>} : memref<280x128xf32, #tpu.memory_space<vmem>>, vector<280x128xf32>,
    %c20 = arith.constant 20 : index
    %c0_35 = arith.constant 0 : index
    %33 = vector.load %arg7[%c20, %c0_35] : memref<512x64xbf16, #tpu.memory_space<vmem>>, vector<280x64xbf16>
    %c21 = arith.constant 21 : index
    %c0_36 = arith.constant 0 : index
    %34 = vector.load %arg7[%c21, %c0_36] : memref<512x64xbf16, #tpu.memory_space<vmem>>, vector<280x64xbf16>
    %c22 = arith.constant 22 : index
    %c0_37 = arith.constant 0 : index
    %35 = vector.load %arg7[%c22, %c0_37] : memref<512x64xbf16, #tpu.memory_space<vmem>>, vector<280x64xbf16>
    %36 = tpu.concatenate %33, %34, %35 in 1 : vector<280x64xbf16>, vector<280x64xbf16>, vector<280x64xbf16> -> vector<280x192xbf16>
    %c0_38 = arith.constant 0 : index
    %c0_39 = arith.constant 0 : index
    %37 = vector.load %arg8[%c0_38, %c0_39] : memref<280x128xf32, #tpu.memory_space<vmem>>, vector<280x128xf32>
    %c2_40 = arith.constant 2 : index
    %c0_41 = arith.constant 0 : index
    %c0_42 = arith.constant 0 : index
    %38 = vector.load %arg4[%c2_40, %c0_41, %c0_42] : memref<9x192x128xbf16, #tpu.memory_space<vmem>>, vector<1x192x128xbf16>
    %39 = vector.shape_cast %38 : vector<1x192x128xbf16> to vector<192x128xbf16>
    %cst_43 = arith.constant dense<0.000000e+00> : vector<280x128xf32>
    %40 = tpu.matmul %36, %39, %cst_43 {dimension_numbers = #tpu.dot_dimension_numbers<[1], [0], [0], [1], [0, 0, 1, 1], [], []>} : vector<280x192xbf16>, vector<192x128xbf16>, vector<280x128xf32> -> vector<280x128xf32>
    %41 = arith.addf %37, %40 : vector<280x128xf32>
    %c0_44 = arith.constant 0 : index
    %c0_45 = arith.constant 0 : index
    %42 = vector.load %arg8[%c0_44, %c0_45] : memref<280x128xf32, #tpu.memory_space<vmem>>, vector<280x128xf32>
    tpu.vector_store %arg8[%c0_44, %c0_45], %41 {strides = array<i32>} : memref<280x128xf32, #tpu.memory_space<vmem>>, vector<280x128xf32>,
    %c100 = arith.constant 100 : index
    %c0_46 = arith.constant 0 : index
    %43 = vector.load %arg7[%c100, %c0_46] : memref<512x64xbf16, #tpu.memory_space<vmem>>, vector<280x64xbf16>
    %c101 = arith.constant 101 : index
    %c0_47 = arith.constant 0 : index
    %44 = vector.load %arg7[%c101, %c0_47] : memref<512x64xbf16, #tpu.memory_space<vmem>>, vector<280x64xbf16>
    %c102 = arith.constant 102 : index
    %c0_48 = arith.constant 0 : index
    %45 = vector.load %arg7[%c102, %c0_48] : memref<512x64xbf16, #tpu.memory_space<vmem>>, vector<280x64xbf16>
    %46 = tpu.concatenate %43, %44, %45 in 1 : vector<280x64xbf16>, vector<280x64xbf16>, vector<280x64xbf16> -> vector<280x192xbf16>
    %c0_49 = arith.constant 0 : index
    %c0_50 = arith.constant 0 : index
    %47 = vector.load %arg8[%c0_49, %c0_50] : memref<280x128xf32, #tpu.memory_space<vmem>>, vector<280x128xf32>
    %c3 = arith.constant 3 : index
    %c0_51 = arith.constant 0 : index
    %c0_52 = arith.constant 0 : index
    %48 = vector.load %arg4[%c3, %c0_51, %c0_52] : memref<9x192x128xbf16, #tpu.memory_space<vmem>>, vector<1x192x128xbf16>
    %49 = vector.shape_cast %48 : vector<1x192x128xbf16> to vector<192x128xbf16>
    %cst_53 = arith.constant dense<0.000000e+00> : vector<280x128xf32>
    %50 = tpu.matmul %46, %49, %cst_53 {dimension_numbers = #tpu.dot_dimension_numbers<[1], [0], [0], [1], [0, 0, 1, 1], [], []>} : vector<280x192xbf16>, vector<192x128xbf16>, vector<280x128xf32> -> vector<280x128xf32>
    %51 = arith.addf %47, %50 : vector<280x128xf32>
    %c0_54 = arith.constant 0 : index
    %c0_55 = arith.constant 0 : index
    %52 = vector.load %arg8[%c0_54, %c0_55] : memref<280x128xf32, #tpu.memory_space<vmem>>, vector<280x128xf32>
    tpu.vector_store %arg8[%c0_54, %c0_55], %51 {strides = array<i32>} : memref<280x128xf32, #tpu.memory_space<vmem>>, vector<280x128xf32>,
    %c110 = arith.constant 110 : index
    %c0_56 = arith.constant 0 : index
    %53 = vector.load %arg7[%c110, %c0_56] : memref<512x64xbf16, #tpu.memory_space<vmem>>, vector<280x64xbf16>
    %c111 = arith.constant 111 : index
    %c0_57 = arith.constant 0 : index
    %54 = vector.load %arg7[%c111, %c0_57] : memref<512x64xbf16, #tpu.memory_space<vmem>>, vector<280x64xbf16>
    %c112 = arith.constant 112 : index
    %c0_58 = arith.constant 0 : index
    %55 = vector.load %arg7[%c112, %c0_58] : memref<512x64xbf16, #tpu.memory_space<vmem>>, vector<280x64xbf16>
    %56 = tpu.concatenate %53, %54, %55 in 1 : vector<280x64xbf16>, vector<280x64xbf16>, vector<280x64xbf16> -> vector<280x192xbf16>
    %c0_59 = arith.constant 0 : index
    %c0_60 = arith.constant 0 : index
    %57 = vector.load %arg8[%c0_59, %c0_60] : memref<280x128xf32, #tpu.memory_space<vmem>>, vector<280x128xf32>
    %c4 = arith.constant 4 : index
    %c0_61 = arith.constant 0 : index
    %c0_62 = arith.constant 0 : index
    %58 = vector.load %arg4[%c4, %c0_61, %c0_62] : memref<9x192x128xbf16, #tpu.memory_space<vmem>>, vector<1x192x128xbf16>
    %59 = vector.shape_cast %58 : vector<1x192x128xbf16> to vector<192x128xbf16>
    %cst_63 = arith.constant dense<0.000000e+00> : vector<280x128xf32>
    %60 = tpu.matmul %56, %59, %cst_63 {dimension_numbers = #tpu.dot_dimension_numbers<[1], [0], [0], [1], [0, 0, 1, 1], [], []>} : vector<280x192xbf16>, vector<192x128xbf16>, vector<280x128xf32> -> vector<280x128xf32>
    %61 = arith.addf %57, %60 : vector<280x128xf32>
    %c0_64 = arith.constant 0 : index
    %c0_65 = arith.constant 0 : index
    %62 = vector.load %arg8[%c0_64, %c0_65] : memref<280x128xf32, #tpu.memory_space<vmem>>, vector<280x128xf32>
    tpu.vector_store %arg8[%c0_64, %c0_65], %61 {strides = array<i32>} : memref<280x128xf32, #tpu.memory_space<vmem>>, vector<280x128xf32>,
    %c120 = arith.constant 120 : index
    %c0_66 = arith.constant 0 : index
    %63 = vector.load %arg7[%c120, %c0_66] : memref<512x64xbf16, #tpu.memory_space<vmem>>, vector<280x64xbf16>
    %c121 = arith.constant 121 : index
    %c0_67 = arith.constant 0 : index
    %64 = vector.load %arg7[%c121, %c0_67] : memref<512x64xbf16, #tpu.memory_space<vmem>>, vector<280x64xbf16>
    %c122 = arith.constant 122 : index
    %c0_68 = arith.constant 0 : index
    %65 = vector.load %arg7[%c122, %c0_68] : memref<512x64xbf16, #tpu.memory_space<vmem>>, vector<280x64xbf16>
    %66 = tpu.concatenate %63, %64, %65 in 1 : vector<280x64xbf16>, vector<280x64xbf16>, vector<280x64xbf16> -> vector<280x192xbf16>
    %c0_69 = arith.constant 0 : index
    %c0_70 = arith.constant 0 : index
    %67 = vector.load %arg8[%c0_69, %c0_70] : memref<280x128xf32, #tpu.memory_space<vmem>>, vector<280x128xf32>
    %c5 = arith.constant 5 : index
    %c0_71 = arith.constant 0 : index
    %c0_72 = arith.constant 0 : index
    %68 = vector.load %arg4[%c5, %c0_71, %c0_72] : memref<9x192x128xbf16, #tpu.memory_space<vmem>>, vector<1x192x128xbf16>
    %69 = vector.shape_cast %68 : vector<1x192x128xbf16> to vector<192x128xbf16>
    %cst_73 = arith.constant dense<0.000000e+00> : vector<280x128xf32>
    %70 = tpu.matmul %66, %69, %cst_73 {dimension_numbers = #tpu.dot_dimension_numbers<[1], [0], [0], [1], [0, 0, 1, 1], [], []>} : vector<280x192xbf16>, vector<192x128xbf16>, vector<280x128xf32> -> vector<280x128xf32>
    %71 = arith.addf %67, %70 : vector<280x128xf32>
    %c0_74 = arith.constant 0 : index
    %c0_75 = arith.constant 0 : index
    %72 = vector.load %arg8[%c0_74, %c0_75] : memref<280x128xf32, #tpu.memory_space<vmem>>, vector<280x128xf32>
    tpu.vector_store %arg8[%c0_74, %c0_75], %71 {strides = array<i32>} : memref<280x128xf32, #tpu.memory_space<vmem>>, vector<280x128xf32>,
    %c200 = arith.constant 200 : index
    %c0_76 = arith.constant 0 : index
    %73 = vector.load %arg7[%c200, %c0_76] : memref<512x64xbf16, #tpu.memory_space<vmem>>, vector<280x64xbf16>
    %c201 = arith.constant 201 : index
    %c0_77 = arith.constant 0 : index
    %74 = vector.load %arg7[%c201, %c0_77] : memref<512x64xbf16, #tpu.memory_space<vmem>>, vector<280x64xbf16>
    %c202 = arith.constant 202 : index
    %c0_78 = arith.constant 0 : index
    %75 = vector.load %arg7[%c202, %c0_78] : memref<512x64xbf16, #tpu.memory_space<vmem>>, vector<280x64xbf16>
    %76 = tpu.concatenate %73, %74, %75 in 1 : vector<280x64xbf16>, vector<280x64xbf16>, vector<280x64xbf16> -> vector<280x192xbf16>
    %c0_79 = arith.constant 0 : index
    %c0_80 = arith.constant 0 : index
    %77 = vector.load %arg8[%c0_79, %c0_80] : memref<280x128xf32, #tpu.memory_space<vmem>>, vector<280x128xf32>
    %c6 = arith.constant 6 : index
    %c0_81 = arith.constant 0 : index
    %c0_82 = arith.constant 0 : index
    %78 = vector.load %arg4[%c6, %c0_81, %c0_82] : memref<9x192x128xbf16, #tpu.memory_space<vmem>>, vector<1x192x128xbf16>
    %79 = vector.shape_cast %78 : vector<1x192x128xbf16> to vector<192x128xbf16>
    %cst_83 = arith.constant dense<0.000000e+00> : vector<280x128xf32>
    %80 = tpu.matmul %76, %79, %cst_83 {dimension_numbers = #tpu.dot_dimension_numbers<[1], [0], [0], [1], [0, 0, 1, 1], [], []>} : vector<280x192xbf16>, vector<192x128xbf16>, vector<280x128xf32> -> vector<280x128xf32>
    %81 = arith.addf %77, %80 : vector<280x128xf32>
    %c0_84 = arith.constant 0 : index
    %c0_85 = arith.constant 0 : index
    %82 = vector.load %arg8[%c0_84, %c0_85] : memref<280x128xf32, #tpu.memory_space<vmem>>, vector<280x128xf32>
    tpu.vector_store %arg8[%c0_84, %c0_85], %81 {strides = array<i32>} : memref<280x128xf32, #tpu.memory_space<vmem>>, vector<280x128xf32>,
    %c210 = arith.constant 210 : index
    %c0_86 = arith.constant 0 : index
    %83 = vector.load %arg7[%c210, %c0_86] : memref<512x64xbf16, #tpu.memory_space<vmem>>, vector<280x64xbf16>
    %c211 = arith.constant 211 : index
    %c0_87 = arith.constant 0 : index
    %84 = vector.load %arg7[%c211, %c0_87] : memref<512x64xbf16, #tpu.memory_space<vmem>>, vector<280x64xbf16>
    %c212 = arith.constant 212 : index
    %c0_88 = arith.constant 0 : index
    %85 = vector.load %arg7[%c212, %c0_88] : memref<512x64xbf16, #tpu.memory_space<vmem>>, vector<280x64xbf16>
    %86 = tpu.concatenate %83, %84, %85 in 1 : vector<280x64xbf16>, vector<280x64xbf16>, vector<280x64xbf16> -> vector<280x192xbf16>
    %c0_89 = arith.constant 0 : index
    %c0_90 = arith.constant 0 : index
    %87 = vector.load %arg8[%c0_89, %c0_90] : memref<280x128xf32, #tpu.memory_space<vmem>>, vector<280x128xf32>
    %c7 = arith.constant 7 : index
    %c0_91 = arith.constant 0 : index
    %c0_92 = arith.constant 0 : index
    %88 = vector.load %arg4[%c7, %c0_91, %c0_92] : memref<9x192x128xbf16, #tpu.memory_space<vmem>>, vector<1x192x128xbf16>
    %89 = vector.shape_cast %88 : vector<1x192x128xbf16> to vector<192x128xbf16>
    %cst_93 = arith.constant dense<0.000000e+00> : vector<280x128xf32>
    %90 = tpu.matmul %86, %89, %cst_93 {dimension_numbers = #tpu.dot_dimension_numbers<[1], [0], [0], [1], [0, 0, 1, 1], [], []>} : vector<280x192xbf16>, vector<192x128xbf16>, vector<280x128xf32> -> vector<280x128xf32>
    %91 = arith.addf %87, %90 : vector<280x128xf32>
    %c0_94 = arith.constant 0 : index
    %c0_95 = arith.constant 0 : index
    %92 = vector.load %arg8[%c0_94, %c0_95] : memref<280x128xf32, #tpu.memory_space<vmem>>, vector<280x128xf32>
    tpu.vector_store %arg8[%c0_94, %c0_95], %91 {strides = array<i32>} : memref<280x128xf32, #tpu.memory_space<vmem>>, vector<280x128xf32>,
    %c220 = arith.constant 220 : index
    %c0_96 = arith.constant 0 : index
    %93 = vector.load %arg7[%c220, %c0_96] : memref<512x64xbf16, #tpu.memory_space<vmem>>, vector<280x64xbf16>
    %c221 = arith.constant 221 : index
    %c0_97 = arith.constant 0 : index
    %94 = vector.load %arg7[%c221, %c0_97] : memref<512x64xbf16, #tpu.memory_space<vmem>>, vector<280x64xbf16>
    %c222 = arith.constant 222 : index
    %c0_98 = arith.constant 0 : index
    %95 = vector.load %arg7[%c222, %c0_98] : memref<512x64xbf16, #tpu.memory_space<vmem>>, vector<280x64xbf16>
    %96 = tpu.concatenate %93, %94, %95 in 1 : vector<280x64xbf16>, vector<280x64xbf16>, vector<280x64xbf16> -> vector<280x192xbf16>
    %c0_99 = arith.constant 0 : index
    %c0_100 = arith.constant 0 : index
    %97 = vector.load %arg8[%c0_99, %c0_100] : memref<280x128xf32, #tpu.memory_space<vmem>>, vector<280x128xf32>
    %c8 = arith.constant 8 : index
    %c0_101 = arith.constant 0 : index
    %c0_102 = arith.constant 0 : index
    %98 = vector.load %arg4[%c8, %c0_101, %c0_102] : memref<9x192x128xbf16, #tpu.memory_space<vmem>>, vector<1x192x128xbf16>
    %99 = vector.shape_cast %98 : vector<1x192x128xbf16> to vector<192x128xbf16>
    %cst_103 = arith.constant dense<0.000000e+00> : vector<280x128xf32>
    %100 = tpu.matmul %96, %99, %cst_103 {dimension_numbers = #tpu.dot_dimension_numbers<[1], [0], [0], [1], [0, 0, 1, 1], [], []>} : vector<280x192xbf16>, vector<192x128xbf16>, vector<280x128xf32> -> vector<280x128xf32>
    %101 = arith.addf %97, %100 : vector<280x128xf32>
    %c0_104 = arith.constant 0 : index
    %c0_105 = arith.constant 0 : index
    %102 = vector.load %arg8[%c0_104, %c0_105] : memref<280x128xf32, #tpu.memory_space<vmem>>, vector<280x128xf32>
    tpu.vector_store %arg8[%c0_104, %c0_105], %101 {strides = array<i32>} : memref<280x128xf32, #tpu.memory_space<vmem>>, vector<280x128xf32>,
    %c0_106 = arith.constant 0 : index
    %c0_107 = arith.constant 0 : index
    %103 = vector.load %arg8[%c0_106, %c0_107] : memref<280x128xf32, #tpu.memory_space<vmem>>, vector<280x128xf32>
    %c0_108 = arith.constant 0 : index
    %c0_109 = arith.constant 0 : index
    %104 = vector.load %arg5[%c0_108, %c0_109] : memref<1x128xf32, #tpu.memory_space<vmem>>, vector<1x128xf32>
    %105 = vector.broadcast %104 : vector<1x128xf32> to vector<280x128xf32>
    %106 = arith.addf %103, %105 : vector<280x128xf32>
    %cst_110 = arith.constant 0.000000e+00 : f32
    %107 = vector.broadcast %cst_110 : f32 to vector<280x128xf32>
    %108 = arith.maximumf %106, %107 : vector<280x128xf32>
    %c0_111 = arith.constant 0 : index
    %c0_112 = arith.constant 0 : index
    %c0_113 = arith.constant 0 : index
    %109 = vector.load %arg6[%c0_111, %c0_112, %c0_113] : memref<1x280x128xf32, #tpu.memory_space<vmem>>, vector<1x280x128xf32>
    %110 = vector.shape_cast %109 : vector<1x280x128xf32> to vector<280x128xf32>
    %111 = vector.shape_cast %108 : vector<280x128xf32> to vector<1x280x128xf32>
    tpu.vector_store %arg6[%c0_111, %c0_112, %c0_113], %111 {strides = array<i32>} : memref<1x280x128xf32, #tpu.memory_space<vmem>>, vector<1x280x128xf32>,
    return
  }
  func.func @transform_0(%arg0: i32) -> (i32, i32, i32) {
    %c0_i32 = arith.constant 0 : i32
    %c0_i32_0 = arith.constant 0 : i32
    %c0_i32_1 = arith.constant 0 : i32
    return %arg0, %c0_i32, %c0_i32_0 : i32, i32, i32
  }
  func.func @transform_1(%arg0: i32) -> (i32, i32) {
    %c0_i32 = arith.constant 0 : i32
    %c0_i32_0 = arith.constant 0 : i32
    %c0_i32_1 = arith.constant 0 : i32
    return %c0_i32, %c0_i32_0 : i32, i32
  }
  func.func @transform_2(%arg0: i32) -> (i32, i32) {
    %c0_i32 = arith.constant 0 : i32
    %c0_i32_0 = arith.constant 0 : i32
    %c0_i32_1 = arith.constant 0 : i32
    return %c0_i32, %c0_i32_0 : i32, i32
  }
  func.func @transform_3(%arg0: i32) -> (i32, i32, i32) {
    %c0_i32 = arith.constant 0 : i32
    %c0_i32_0 = arith.constant 0 : i32
    %c0_i32_1 = arith.constant 0 : i32
    %c0_i32_2 = arith.constant 0 : i32
    return %c0_i32, %c0_i32_0, %c0_i32_1 : i32, i32, i32
  }
  func.func @transform_4(%arg0: i32) -> (i32, i32) {
    %c0_i32 = arith.constant 0 : i32
    %c0_i32_0 = arith.constant 0 : i32
    %c0_i32_1 = arith.constant 0 : i32
    return %c0_i32, %c0_i32_0 : i32, i32
  }
  func.func @transform_5(%arg0: i32) -> (i32, i32, i32) {
    %c0_i32 = arith.constant 0 : i32
    %c0_i32_0 = arith.constant 0 : i32
    %c0_i32_1 = arith.constant 0 : i32
    return %arg0, %c0_i32, %c0_i32_0 : i32, i32, i32
  }
}

</mosaic_0001>

<llo_original>
// kernel: conv6_forward.1
$region0: #{conv6_forward.1}
  #allocation0 [shape = 'u32[]', space=smem, size = 0x4, offset = 0x4, fixed_abs, tag = 'smem constant byte address 0x4 - core index']
  #allocation1 [shape = 'u32[144,128]{1,0:T(1,128)}', space=vmem, size = 0x12000, scoped, tag = 'internal scratch']
  #allocation2 [shape = 'bf16[512,64]{1,0:T(16,128)(2,1)}', space=vmem, size = 0x20000, scoped, tag = 'scratch operand']
  #allocation3 [shape = 'f32[280,128]{1,0:T(8,128)}', space=vmem, size = 0x23000, scoped, tag = 'scratch operand']
  %s0 = inlined_call_operand.vmem [shape: bf16[2,512,384], index: 0, kind: input, shape index: {}]
  %s1 = inlined_call_operand.vmem [shape: bf16[384,64], index: 1, kind: input, shape index: {}]
  %s2 = inlined_call_operand.vmem [shape: f32[1,64], index: 2, kind: input, shape index: {}]
  %s3 = inlined_call_operand.vmem [shape: bf16[9,192,128], index: 3, kind: input, shape index: {}]
  %s4 = inlined_call_operand.vmem [shape: f32[1,128], index: 4, kind: input, shape index: {}]
  %s5 = inlined_call_operand.vmem [shape: f32[2,280,128], index: 5, kind: output, shape index: {}]
  %s6 = sld [smem:[#allocation0]]
  $region53: #{conv6_forward.1} parent=0
    _
  %s8 = ssub.s32 1, %s6
  %s9 = scalar_select 0, %s8, %s6
  loop: start=0, step=1, limit=4
  $region2: #{conv6_forward.1} parent=0 // loop_pre_header
    _
  $region3: #{conv6_forward.1} parent=0 // loop_header
    %s11 = sphi 0, %s15
    %p12 = scmp.ge.s32.totalorder %s11, 4
    %s21 = sphi 0, %s23
    %s24 = sphi 0, %s21
    %s25 = sphi 0, %s24
    %s41 = sphi 0, %s25
    %s45 = sphi 0, %s45
    %s47 = sphi 0, %s45
    %s48 = sphi 0, %s47
    %s62 = sphi 0, %s48
    %s66 = sphi 0, %s66
    %s68 = sphi 0, %s66
    %s69 = sphi 0, %s68
    %s83 = sphi 0, %s69
    %s87 = sphi 0, %s87
    %s89 = sphi 0, %s87
    %s90 = sphi 0, %s89
    %s104 = sphi 0, %s90
    %s108 = sphi 0, %s108
    %s110 = sphi 0, %s108
    %s111 = sphi 0, %s110
    %s125 = sphi 0, %s111
    %s131 = sphi 0, %s133
    %s134 = sphi 0, %s131
    %s135 = sphi 0, %s134
    %s151 = sphi 0, %s135
  $region4: #{conv6_forward.1} parent=0 // loop_header_branch
    %14 = sbr.rel (%p12) target = $region8
  $region5: #{conv6_forward.1} parent=0 // loop_body
    %s16 = ssub.s32 %s11, 1
    %s17 = ssub.s32 %s11, 2
    %s18 = sadd.s32 %s11, 1
    %s19 = ssub.s32 %s11, %s18
    %p20 = scmp.eq.s32.totalorder %s19, 0
    %s22 = sadd.s32 %s21, 1
    %s23 = scalar_select %p20, %s21, %s22
    %p26 = pneg %p20
    %p27 = scmp.eq.s32.totalorder %s11, 1
    %p28 = por %p26, %p27
    %p29 = scmp.ne.s32.totalorder %s21, %s24
    %p30 = scmp.eq.s32.totalorder %s11, 0
    %p31 = por %p29, %p30
    %p32 = scmp.ne.s32.totalorder %s21, %s24
    %p33 = scmp.eq.s32.totalorder %s16, 1
    %p34 = por %p32, %p33
    %p35 = scmp.ne.s32.totalorder %s24, %s25
    %p36 = scmp.eq.s32.totalorder %s16, 0
    %p37 = por %p35, %p36
    %p38 = scmp.ne.s32.totalorder %s24, %s25
    %p39 = scmp.eq.s32.totalorder %s17, 1
    %p40 = por %p38, %p39
    %p42 = scmp.ne.s32.totalorder %s25, %s41
    %p43 = scmp.eq.s32.totalorder %s17, 0
    %p44 = por %p42, %p43
    %s46 = sadd.s32 %s45, 1
    %p49 = scmp.eq.s32.totalorder %s11, 1
    %p50 = scmp.ne.s32.totalorder %s45, %s47
    %p51 = scmp.eq.s32.totalorder %s11, 0
    %p52 = por %p50, %p51
    %p53 = scmp.ne.s32.totalorder %s45, %s47
    %p54 = scmp.eq.s32.totalorder %s16, 1
    %p55 = por %p53, %p54
    %p56 = scmp.ne.s32.totalorder %s47, %s48
    %p57 = scmp.eq.s32.totalorder %s16, 0
    %p58 = por %p56, %p57
    %p59 = scmp.ne.s32.totalorder %s47, %s48
    %p60 = scmp.eq.s32.totalorder %s17, 1
    %p61 = por %p59, %p60
    %p63 = scmp.ne.s32.totalorder %s48, %s62
    %p64 = scmp.eq.s32.totalorder %s17, 0
    %p65 = por %p63, %p64
    %s67 = sadd.s32 %s66, 1
    %p70 = scmp.eq.s32.totalorder %s11, 1
    %p71 = scmp.ne.s32.totalorder %s66, %s68
    %p72 = scmp.eq.s32.totalorder %s11, 0
    %p73 = por %p71, %p72
    %p74 = scmp.ne.s32.totalorder %s66, %s68
    %p75 = scmp.eq.s32.totalorder %s16, 1
    %p76 = por %p74, %p75
    %p77 = scmp.ne.s32.totalorder %s68, %s69
    %p78 = scmp.eq.s32.totalorder %s16, 0
    %p79 = por %p77, %p78
    %p80 = scmp.ne.s32.totalorder %s68, %s69
    %p81 = scmp.eq.s32.totalorder %s17, 1
    %p82 = por %p80, %p81
    %p84 = scmp.ne.s32.totalorder %s69, %s83
    %p85 = scmp.eq.s32.totalorder %s17, 0
    %p86 = por %p84, %p85
    %s88 = sadd.s32 %s87, 1
    %p91 = scmp.eq.s32.totalorder %s11, 1
    %p92 = scmp.ne.s32.totalorder %s87, %s89
    %p93 = scmp.eq.s32.totalorder %s11, 0
    %p94 = por %p92, %p93
    %p95 = scmp.ne.s32.totalorder %s87, %s89
    %p96 = scmp.eq.s32.totalorder %s16, 1
    %p97 = por %p95, %p96
    %p98 = scmp.ne.s32.totalorder %s89, %s90
    %p99 = scmp.eq.s32.totalorder %s16, 0
    %p100 = por %p98, %p99
    %p101 = scmp.ne.s32.totalorder %s89, %s90
    %p102 = scmp.eq.s32.totalorder %s17, 1
    %p103 = por %p101, %p102
    %p105 = scmp.ne.s32.totalorder %s90, %s104
    %p106 = scmp.eq.s32.totalorder %s17, 0
    %p107 = por %p105, %p106
    %s109 = sadd.s32 %s108, 1
    %p112 = scmp.eq.s32.totalorder %s11, 1
    %p113 = scmp.ne.s32.totalorder %s108, %s110
    %p114 = scmp.eq.s32.totalorder %s11, 0
    %p115 = por %p113, %p114
    %p116 = scmp.ne.s32.totalorder %s108, %s110
    %p117 = scmp.eq.s32.totalorder %s16, 1
    %p118 = por %p116, %p117
    %p119 = scmp.ne.s32.totalorder %s110, %s111
    %p120 = scmp.eq.s32.totalorder %s16, 0
    %p121 = por %p119, %p120
    %p122 = scmp.ne.s32.totalorder %s110, %s111
    %p123 = scmp.eq.s32.totalorder %s17, 1
    %p124 = por %p122, %p123
    %p126 = scmp.ne.s32.totalorder %s111, %s125
    %p127 = scmp.eq.s32.totalorder %s17, 0
    %p128 = por %p126, %p127
    %s129 = ssub.s32 %s11, %s18
    %p130 = scmp.eq.s32.totalorder %s129, 0
    %s132 = sadd.s32 %s131, 1
    %s133 = scalar_select %p130, %s131, %s132
    %p136 = pneg %p130
    %p137 = scmp.eq.s32.totalorder %s11, 1
    %p138 = por %p136, %p137
    %p139 = scmp.ne.s32.totalorder %s131, %s134
    %p140 = scmp.eq.s32.totalorder %s11, 0
    %p141 = por %p139, %p140
    %p142 = scmp.ne.s32.totalorder %s131, %s134
    %p143 = scmp.eq.s32.totalorder %s16, 1
    %p144 = por %p142, %p143
    %p145 = scmp.ne.s32.totalorder %s134, %s135
    %p146 = scmp.eq.s32.totalorder %s16, 0
    %p147 = por %p145, %p146
    %p148 = scmp.ne.s32.totalorder %s134, %s135
    %p149 = scmp.eq.s32.totalorder %s17, 1
    %p150 = por %p148, %p149
    %p152 = scmp.ne.s32.totalorder %s135, %s151
    %p153 = scmp.eq.s32.totalorder %s17, 0
    %p154 = por %p152, %p153
    %p155 = scmp.le.s32.totalorder 1, %s11
    %p156 = scmp.lt.s32.totalorder %s11, 3
    %p157 = pnand %p155, %p156
    %p158 = pneg %p157
    // Predicated region
    $region9: #{conv6_forward.1} parent=5 // pred_check
      _
    $region10: #{conv6_forward.1} parent=5 // pred_check_branch
      %160 = sbr.rel (%p157) target = $region12
    $region11: #{conv6_forward.1} parent=5 // pred_region
      %s161 = ssub.s32 %s11, 1
      // Predicated region
      $region13: #{conv6_forward.1} parent=11 // pred_check
        %p162 = pneg %p58
      $region14: #{conv6_forward.1} parent=11 // pred_check_branch
        %164 = sbr.rel (%p162) target = $region16
      $region15: #{conv6_forward.1} parent=11 // pred_region
        _
      $region16: #{conv6_forward.1} parent=11 // pred_fallthru
        _
      // Predicated region
      $region17: #{conv6_forward.1} parent=11 // pred_check
        %p165 = pneg %p79
      $region18: #{conv6_forward.1} parent=11 // pred_check_branch
        %167 = sbr.rel (%p165) target = $region20
      $region19: #{conv6_forward.1} parent=11 // pred_region
        _
      $region20: #{conv6_forward.1} parent=11 // pred_fallthru
        _
      // Predicated region
      $region21: #{conv6_forward.1} parent=11 // pred_check
        %p168 = pneg %p100
      $region22: #{conv6_forward.1} parent=11 // pred_check_branch
        %170 = sbr.rel (%p168) target = $region24
      $region23: #{conv6_forward.1} parent=11 // pred_region
        _
      $region24: #{conv6_forward.1} parent=11 // pred_fallthru
        _
      // Predicated region
      $region25: #{conv6_forward.1} parent=11 // pred_check
        %p171 = pneg %p121
      $region26: #{conv6_forward.1} parent=11 // pred_check_branch
        %173 = sbr.rel (%p171) target = $region28
      $region27: #{conv6_forward.1} parent=11 // pred_region
        _
      $region28: #{conv6_forward.1} parent=11 // pred_fallthru
        _
    $region12: #{conv6_forward.1} parent=5 // pred_fallthru
      _
    %p174 = scmp.lt.s32.totalorder %s11, 2
    // Predicated region
    $region29: #{conv6_forward.1} parent=5 // pred_check
      %p175 = pneg %p174
    $region30: #{conv6_forward.1} parent=5 // pred_check_branch
      %177 = sbr.rel (%p175) target = $region32
    $region31: #{conv6_forward.1} parent=5 // pred_region
      // Predicated region
      $region33: #{conv6_forward.1} parent=31 // pred_check
        %p178 = pneg %p31
      $region34: #{conv6_forward.1} parent=31 // pred_check_branch
        %180 = sbr.rel (%p178) target = $region36
      $region35: #{conv6_forward.1} parent=31 // pred_region
        %p181 = scmp.lt.s32.totalorder %s11, 1
        %s182 = scalar_select %p181, %s11, 1
        %s183 = smul.addr %s182, 192
        %s184 = smul.addr %s183, 4
        %s185 = scalar_lea.vmem %s0, %s184
      $region36: #{conv6_forward.1} parent=31 // pred_fallthru
        _
    $region32: #{conv6_forward.1} parent=5 // pred_fallthru
      _
    %p186 = scmp.le.s32.totalorder 1, %s11
    %p187 = scmp.lt.s32.totalorder %s11, 3
    %p188 = pnand %p186, %p187
    %p189 = pneg %p188
    // Predicated region
    $region37: #{conv6_forward.1} parent=5 // pred_check
      _
    $region38: #{conv6_forward.1} parent=5 // pred_check_branch
      %191 = sbr.rel (%p188) target = $region40
    $region39: #{conv6_forward.1} parent=5 // pred_region
      %s192 = ssub.s32 %s11, 1
      %p193 = scmp.lt.s32.totalorder %s16, 1
      %s194 = scalar_select %p193, %s16, 1
      %s195 = smul.addr %s194, 192
      %s196 = smul.addr %s195, 4
      %s197 = scalar_lea.vmem %s0, %s196
      %p198 = pneg %p37
      %p199 = pneg %p34
      %p200 = pneg %p58
      %p201 = pneg %p55
      %p202 = pneg %p79
      %p203 = pneg %p76
      %p204 = pneg %p100
      %p205 = pneg %p97
      %p206 = pneg %p121
      %p207 = pneg %p118
      %p208 = pneg %p147
      %p209 = pneg %p144
      %p210 = scmp.lt.s32.totalorder %s16, 1
      %s211 = scalar_select %p210, %s16, 1
      %s212 = smul.addr %s211, 35
      %s213 = smul.addr %s212, 8
      %s214 = scalar_lea.vmem %s5, %s213
      %p215 = scmp.lt.s32.totalorder %s16, 1
      %s216 = scalar_select %p215, %s16, 1
      %s217 = smul.addr %s216, 192
      %s218 = smul.addr %s217, 4
      %s219 = scalar_lea.vmem %s0, %s218
      %p220 = scmp.lt.s32.totalorder %s16, 1
      %s221 = scalar_select %p220, %s16, 1
      %s222 = smul.addr %s221, 35
      %s223 = smul.addr %s222, 8
      %s224 = scalar_lea.vmem %s5, %s223
      %v226 = vld [vmem:[%s219] sm:$0xff]
      %v227 = vld [vmem:[%s219 + $0x8] sm:$0xf]
      %v228 = vld [vmem:[%s219 + $0xc] sm:$0xff]
      %v229 = vld [vmem:[%s219 + $0x14] sm:$0xf]
      %v230 = vld [vmem:[%s219 + $0x18] sm:$0xff]
      %v231 = vld [vmem:[%s219 + $0x20] sm:$0xf]
      %v232 = vld [vmem:[%s219 + $0x24] sm:$0xff]
      %v233 = vld [vmem:[%s219 + $0x2c] sm:$0xf]
      %v234 = vld [vmem:[%s219 + $0x30] sm:$0xff]
      %v235 = vld [vmem:[%s219 + $0x38] sm:$0xf]
      %v236 = vld [vmem:[%s219 + $0x3c] sm:$0xff]
      %v237 = vld [vmem:[%s219 + $0x44] sm:$0xf]
      %v238 = vld [vmem:[%s219 + $0x48] sm:$0xff]
      %v239 = vld [vmem:[%s219 + $0x50] sm:$0xf]
      %v240 = vld [vmem:[%s219 + $0x54] sm:$0xff]
      %v241 = vld [vmem:[%s219 + $0x5c] sm:$0xf]
      %v242 = vld [vmem:[%s219 + $0x60] sm:$0xff]
      %v243 = vld [vmem:[%s219 + $0x68] sm:$0xf]
      %v244 = vld [vmem:[%s219 + $0x6c] sm:$0xff]
      %v245 = vld [vmem:[%s219 + $0x74] sm:$0xf]
      %v246 = vld [vmem:[%s219 + $0x78] sm:$0xff]
      %v247 = vld [vmem:[%s219 + $0x80] sm:$0xf]
      %v248 = vld [vmem:[%s219 + $0x84] sm:$0xff]
      %v249 = vld [vmem:[%s219 + $0x8c] sm:$0xf]
      %v250 = vld [vmem:[%s219 + $0x90] sm:$0xff]
      %v251 = vld [vmem:[%s219 + $0x98] sm:$0xf]
      %v252 = vld [vmem:[%s219 + $0x9c] sm:$0xff]
      %v253 = vld [vmem:[%s219 + $0xa4] sm:$0xf]
      %v254 = vld [vmem:[%s219 + $0xa8] sm:$0xff]
      %v255 = vld [vmem:[%s219 + $0xb0] sm:$0xf]
      %v256 = vld [vmem:[%s219 + $0xb4] sm:$0xff]
      %v257 = vld [vmem:[%s219 + $0xbc] sm:$0xf]
      %v258 = vld [vmem:[%s219 + $0xc0] sm:$0xff]
      %v259 = vld [vmem:[%s219 + $0xc8] sm:$0xf]
      %v260 = vld [vmem:[%s219 + $0xcc] sm:$0xff]
      %v261 = vld [vmem:[%s219 + $0xd4] sm:$0xf]
      %v262 = vld [vmem:[%s219 + $0xd8] sm:$0xff]
      %v263 = vld [vmem:[%s219 + $0xe0] sm:$0xf]
      %v264 = vld [vmem:[%s219 + $0xe4] sm:$0xff]
      %v265 = vld [vmem:[%s219 + $0xec] sm:$0xf]
      %v266 = vld [vmem:[%s219 + $0xf0] sm:$0xff]
      %v267 = vld [vmem:[%s219 + $0xf8] sm:$0xf]
      %v268 = vld [vmem:[%s219 + $0xfc] sm:$0xff]
      %v269 = vld [vmem:[%s219 + $0x104] sm:$0xf]
      %v270 = vld [vmem:[%s219 + $0x108] sm:$0xff]
      %v271 = vld [vmem:[%s219 + $0x110] sm:$0xf]
      %v272 = vld [vmem:[%s219 + $0x114] sm:$0xff]
      %v273 = vld [vmem:[%s219 + $0x11c] sm:$0xf]
      %v274 = vld [vmem:[%s219 + $0x120] sm:$0xff]
      %v275 = vld [vmem:[%s219 + $0x128] sm:$0xf]
      %v276 = vld [vmem:[%s219 + $0x12c] sm:$0xff]
      %v277 = vld [vmem:[%s219 + $0x134] sm:$0xf]
      %v278 = vld [vmem:[%s219 + $0x138] sm:$0xff]
      %v279 = vld [vmem:[%s219 + $0x140] sm:$0xf]
      %v280 = vld [vmem:[%s219 + $0x144] sm:$0xff]
      %v281 = vld [vmem:[%s219 + $0x14c] sm:$0xf]
      %v282 = vld [vmem:[%s219 + $0x150] sm:$0xff]
      %v283 = vld [vmem:[%s219 + $0x158] sm:$0xf]
      %v284 = vld [vmem:[%s219 + $0x15c] sm:$0xff]
      %v285 = vld [vmem:[%s219 + $0x164] sm:$0xf]
      %v286 = vld [vmem:[%s219 + $0x168] sm:$0xff]
      %v287 = vld [vmem:[%s219 + $0x170] sm:$0xf]
      %v288 = vld [vmem:[%s219 + $0x174] sm:$0xff]
      %v289 = vld [vmem:[%s219 + $0x17c] sm:$0xf]
      %v290 = vld [vmem:[%s219 + $0x180] sm:$0xff]
      %v291 = vld [vmem:[%s219 + $0x188] sm:$0xf]
      %v292 = vld [vmem:[%s219 + $0x18c] sm:$0xff]
      %v293 = vld [vmem:[%s219 + $0x194] sm:$0xf]
      %v294 = vld [vmem:[%s219 + $0x198] sm:$0xff]
      %v295 = vld [vmem:[%s219 + $0x1a0] sm:$0xf]
      %v296 = vld [vmem:[%s219 + $0x1a4] sm:$0xff]
      %v297 = vld [vmem:[%s219 + $0x1ac] sm:$0xf]
      %v298 = vld [vmem:[%s219 + $0x1b0] sm:$0xff]
      %v299 = vld [vmem:[%s219 + $0x1b8] sm:$0xf]
      %v300 = vld [vmem:[%s219 + $0x1bc] sm:$0xff]
      %v301 = vld [vmem:[%s219 + $0x1c4] sm:$0xf]
      %v302 = vld [vmem:[%s219 + $0x1c8] sm:$0xff]
      %v303 = vld [vmem:[%s219 + $0x1d0] sm:$0xf]
      %v304 = vld [vmem:[%s219 + $0x1d4] sm:$0xff]
      %v305 = vld [vmem:[%s219 + $0x1dc] sm:$0xf]
      %v306 = vld [vmem:[%s219 + $0x1e0] sm:$0xff]
      %v307 = vld [vmem:[%s219 + $0x1e8] sm:$0xf]
      %v308 = vld [vmem:[%s219 + $0x1ec] sm:$0xff]
      %v309 = vld [vmem:[%s219 + $0x1f4] sm:$0xf]
      %v310 = vld [vmem:[%s219 + $0x1f8] sm:$0xff]
      %v311 = vld [vmem:[%s219 + $0x200] sm:$0xf]
      %v312 = vld [vmem:[%s219 + $0x204] sm:$0xff]
      %v313 = vld [vmem:[%s219 + $0x20c] sm:$0xf]
      %v314 = vld [vmem:[%s219 + $0x210] sm:$0xff]
      %v315 = vld [vmem:[%s219 + $0x218] sm:$0xf]
      %v316 = vld [vmem:[%s219 + $0x21c] sm:$0xff]
      %v317 = vld [vmem:[%s219 + $0x224] sm:$0xf]
      %v318 = vld [vmem:[%s219 + $0x228] sm:$0xff]
      %v319 = vld [vmem:[%s219 + $0x230] sm:$0xf]
      %v320 = vld [vmem:[%s219 + $0x234] sm:$0xff]
      %v321 = vld [vmem:[%s219 + $0x23c] sm:$0xf]
      %v322 = vld [vmem:[%s219 + $0x240] sm:$0xff]
      %v323 = vld [vmem:[%s219 + $0x248] sm:$0xf]
      %v324 = vld [vmem:[%s219 + $0x24c] sm:$0xff]
      %v325 = vld [vmem:[%s219 + $0x254] sm:$0xf]
      %v326 = vld [vmem:[%s219 + $0x258] sm:$0xff]
      %v327 = vld [vmem:[%s219 + $0x260] sm:$0xf]
      %v328 = vld [vmem:[%s219 + $0x264] sm:$0xff]
      %v329 = vld [vmem:[%s219 + $0x26c] sm:$0xf]
      %v330 = vld [vmem:[%s219 + $0x270] sm:$0xff]
      %v331 = vld [vmem:[%s219 + $0x278] sm:$0xf]
      %v332 = vld [vmem:[%s219 + $0x27c] sm:$0xff]
      %v333 = vld [vmem:[%s219 + $0x284] sm:$0xf]
      %v334 = vld [vmem:[%s219 + $0x288] sm:$0xff]
      %v335 = vld [vmem:[%s219 + $0x290] sm:$0xf]
      %v336 = vld [vmem:[%s219 + $0x294] sm:$0xff]
      %v337 = vld [vmem:[%s219 + $0x29c] sm:$0xf]
      %v338 = vld [vmem:[%s219 + $0x2a0] sm:$0xff]
      %v339 = vld [vmem:[%s219 + $0x2a8] sm:$0xf]
      %v340 = vld [vmem:[%s219 + $0x2ac] sm:$0xff]
      %v341 = vld [vmem:[%s219 + $0x2b4] sm:$0xf]
      %v342 = vld [vmem:[%s219 + $0x2b8] sm:$0xff]
      %v343 = vld [vmem:[%s219 + $0x2c0] sm:$0xf]
      %v344 = vld [vmem:[%s219 + $0x2c4] sm:$0xff]
      %v345 = vld [vmem:[%s219 + $0x2cc] sm:$0xf]
      %v346 = vld [vmem:[%s219 + $0x2d0] sm:$0xff]
      %v347 = vld [vmem:[%s219 + $0x2d8] sm:$0xf]
      %v348 = vld [vmem:[%s219 + $0x2dc] sm:$0xff]
      %v349 = vld [vmem:[%s219 + $0x2e4] sm:$0xf]
      %v350 = vld [vmem:[%s219 + $0x2e8] sm:$0xff]
      %v351 = vld [vmem:[%s219 + $0x2f0] sm:$0xf]
      %v352 = vld [vmem:[%s219 + $0x2f4] sm:$0xff]
      %v353 = vld [vmem:[%s219 + $0x2fc] sm:$0xf]
      %v354 = vld [vmem:[%s1] sm:$0xf]
      %v355 = vld [vmem:[%s1 + $0x4] sm:$0xf]
      %v356 = vld [vmem:[%s1 + $0x8] sm:$0xf]
      %v357 = vld [vmem:[%s1 + $0xc] sm:$0xf]
      %v358 = vld [vmem:[%s1 + $0x10] sm:$0xf]
      %v359 = vld [vmem:[%s1 + $0x14] sm:$0xf]
      %v360 = vld [vmem:[%s1 + $0x18] sm:$0xf]
      %v361 = vld [vmem:[%s1 + $0x1c] sm:$0xf]
      %v362 = vld [vmem:[%s1 + $0x20] sm:$0xf]
      %v363 = vld [vmem:[%s1 + $0x24] sm:$0xf]
      %v364 = vld [vmem:[%s1 + $0x28] sm:$0xf]
      %v365 = vld [vmem:[%s1 + $0x2c] sm:$0xf]
      %v366 = vld [vmem:[%s1 + $0x30] sm:$0xf]
      %v367 = vld [vmem:[%s1 + $0x34] sm:$0xf]
      %v368 = vld [vmem:[%s1 + $0x38] sm:$0xf]
      %v369 = vld [vmem:[%s1 + $0x3c] sm:$0xf]
      %v370 = vld [vmem:[%s1 + $0x40] sm:$0xf]
      %v371 = vld [vmem:[%s1 + $0x44] sm:$0xf]
      %v372 = vld [vmem:[%s1 + $0x48] sm:$0xf]
      %v373 = vld [vmem:[%s1 + $0x4c] sm:$0xf]
      %v374 = vld [vmem:[%s1 + $0x50] sm:$0xf]
      %v375 = vld [vmem:[%s1 + $0x54] sm:$0xf]
      %v376 = vld [vmem:[%s1 + $0x58] sm:$0xf]
      %v377 = vld [vmem:[%s1 + $0x5c] sm:$0xf]
      %v378 = vld [vmem:[%s1 + $0x60] sm:$0xf]
      %v379 = vld [vmem:[%s1 + $0x64] sm:$0xf]
      %v380 = vld [vmem:[%s1 + $0x68] sm:$0xf]
      %v381 = vld [vmem:[%s1 + $0x6c] sm:$0xf]
      %v382 = vld [vmem:[%s1 + $0x70] sm:$0xf]
      %v383 = vld [vmem:[%s1 + $0x74] sm:$0xf]
      %v384 = vld [vmem:[%s1 + $0x78] sm:$0xf]
      %v385 = vld [vmem:[%s1 + $0x7c] sm:$0xf]
      %v386 = vld [vmem:[%s1 + $0x80] sm:$0xf]
      %v387 = vld [vmem:[%s1 + $0x84] sm:$0xf]
      %v388 = vld [vmem:[%s1 + $0x88] sm:$0xf]
      %v389 = vld [vmem:[%s1 + $0x8c] sm:$0xf]
      %v390 = vld [vmem:[%s1 + $0x90] sm:$0xf]
      %v391 = vld [vmem:[%s1 + $0x94] sm:$0xf]
      %v392 = vld [vmem:[%s1 + $0x98] sm:$0xf]
      %v393 = vld [vmem:[%s1 + $0x9c] sm:$0xf]
      %v394 = vld [vmem:[%s1 + $0xa0] sm:$0xf]
      %v395 = vld [vmem:[%s1 + $0xa4] sm:$0xf]
      %v396 = vld [vmem:[%s1 + $0xa8] sm:$0xf]
      %v397 = vld [vmem:[%s1 + $0xac] sm:$0xf]
      %v398 = vld [vmem:[%s1 + $0xb0] sm:$0xf]
      %v399 = vld [vmem:[%s1 + $0xb4] sm:$0xf]
      %v400 = vld [vmem:[%s1 + $0xb8] sm:$0xf]
      %v401 = vld [vmem:[%s1 + $0xbc] sm:$0xf]
      %v402 = vld [vmem:[%s2] sm:$0x1]
      %v404 = vlaneseq
      %v405 = vshrl.u32 %v404, 7
      %v406 = vsub.s32 0, %v405
      %v407 = vrot.slane %v402, %v406
      %v537 = vunpack.c.l.b16 %v226
      %v538 = vunpack.c.h.b16 %v226
      %v539 = vunpack.c.l.b16 %v227
      %v540 = vunpack.c.l.b16 %v228
      %v541 = vunpack.c.h.b16 %v228
      %v542 = vunpack.c.l.b16 %v229
      %v543 = vunpack.c.l.b16 %v230
      %v544 = vunpack.c.h.b16 %v230
      %v545 = vunpack.c.l.b16 %v231
      %v546 = vunpack.c.l.b16 %v232
      %v547 = vunpack.c.h.b16 %v232
      %v548 = vunpack.c.l.b16 %v233
      %v549 = vunpack.c.l.b16 %v234
      %v550 = vunpack.c.h.b16 %v234
      %v551 = vunpack.c.l.b16 %v235
      %v552 = vunpack.c.l.b16 %v236
      %v553 = vunpack.c.h.b16 %v236
      %v554 = vunpack.c.l.b16 %v237
      %v555 = vunpack.c.l.b16 %v238
      %v556 = vunpack.c.h.b16 %v238
      %v557 = vunpack.c.l.b16 %v239
      %v558 = vunpack.c.l.b16 %v240
      %v559 = vunpack.c.h.b16 %v240
      %v560 = vunpack.c.l.b16 %v241
      %v561 = vunpack.c.l.b16 %v242
      %v562 = vunpack.c.h.b16 %v242
      %v563 = vunpack.c.l.b16 %v243
      %v564 = vunpack.c.l.b16 %v244
      %v565 = vunpack.c.h.b16 %v244
      %v566 = vunpack.c.l.b16 %v245
      %v567 = vunpack.c.l.b16 %v246
      %v568 = vunpack.c.h.b16 %v246
      %v569 = vunpack.c.l.b16 %v247
      %v570 = vunpack.c.l.b16 %v248
      %v571 = vunpack.c.h.b16 %v248
      %v572 = vunpack.c.l.b16 %v249
      %v573 = vunpack.c.l.b16 %v250
      %v574 = vunpack.c.h.b16 %v250
      %v575 = vunpack.c.l.b16 %v251
      %v576 = vunpack.c.l.b16 %v252
      %v577 = vunpack.c.h.b16 %v252
      %v578 = vunpack.c.l.b16 %v253
      %v579 = vunpack.c.l.b16 %v254
      %v580 = vunpack.c.h.b16 %v254
      %v581 = vunpack.c.l.b16 %v255
      %v582 = vunpack.c.l.b16 %v256
      %v583 = vunpack.c.h.b16 %v256
      %v584 = vunpack.c.l.b16 %v257
      %v585 = vunpack.c.l.b16 %v258
      %v586 = vunpack.c.h.b16 %v258
      %v587 = vunpack.c.l.b16 %v259
      %v588 = vunpack.c.l.b16 %v260
      %v589 = vunpack.c.h.b16 %v260
      %v590 = vunpack.c.l.b16 %v261
      %v591 = vunpack.c.l.b16 %v262
      %v592 = vunpack.c.h.b16 %v262
      %v593 = vunpack.c.l.b16 %v263
      %v594 = vunpack.c.l.b16 %v264
      %v595 = vunpack.c.h.b16 %v264
      %v596 = vunpack.c.l.b16 %v265
      %v597 = vunpack.c.l.b16 %v266
      %v598 = vunpack.c.h.b16 %v266
      %v599 = vunpack.c.l.b16 %v267
      %v600 = vunpack.c.l.b16 %v268
      %v601 = vunpack.c.h.b16 %v268
      %v602 = vunpack.c.l.b16 %v269
      %v603 = vunpack.c.l.b16 %v270
      %v604 = vunpack.c.h.b16 %v270
      %v605 = vunpack.c.l.b16 %v271
      %v606 = vunpack.c.l.b16 %v272
      %v607 = vunpack.c.h.b16 %v272
      %v608 = vunpack.c.l.b16 %v273
      %v609 = vunpack.c.l.b16 %v274
      %v610 = vunpack.c.h.b16 %v274
      %v611 = vunpack.c.l.b16 %v275
      %v612 = vunpack.c.l.b16 %v276
      %v613 = vunpack.c.h.b16 %v276
      %v614 = vunpack.c.l.b16 %v277
      %v615 = vunpack.c.l.b16 %v278
      %v616 = vunpack.c.h.b16 %v278
      %v617 = vunpack.c.l.b16 %v279
      %v618 = vunpack.c.l.b16 %v280
      %v619 = vunpack.c.h.b16 %v280
      %v620 = vunpack.c.l.b16 %v281
      %v621 = vunpack.c.l.b16 %v282
      %v622 = vunpack.c.h.b16 %v282
      %v623 = vunpack.c.l.b16 %v283
      %v624 = vunpack.c.l.b16 %v284
      %v625 = vunpack.c.h.b16 %v284
      %v626 = vunpack.c.l.b16 %v285
      %v627 = vunpack.c.l.b16 %v286
      %v628 = vunpack.c.h.b16 %v286
      %v629 = vunpack.c.l.b16 %v287
      %v630 = vunpack.c.l.b16 %v288
      %v631 = vunpack.c.h.b16 %v288
      %v632 = vunpack.c.l.b16 %v289
      %v633 = vunpack.c.l.b16 %v290
      %v634 = vunpack.c.h.b16 %v290
      %v635 = vunpack.c.l.b16 %v291
      %v636 = vunpack.c.l.b16 %v292
      %v637 = vunpack.c.h.b16 %v292
      %v638 = vunpack.c.l.b16 %v293
      %v639 = vunpack.c.l.b16 %v294
      %v640 = vunpack.c.h.b16 %v294
      %v641 = vunpack.c.l.b16 %v295
      %v642 = vunpack.c.l.b16 %v296
      %v643 = vunpack.c.h.b16 %v296
      %v644 = vunpack.c.l.b16 %v297
      %v645 = vunpack.c.l.b16 %v298
      %v646 = vunpack.c.h.b16 %v298
      %v647 = vunpack.c.l.b16 %v299
      %v648 = vunpack.c.l.b16 %v300
      %v649 = vunpack.c.h.b16 %v300
      %v650 = vunpack.c.l.b16 %v301
      %v651 = vunpack.c.l.b16 %v302
      %v652 = vunpack.c.h.b16 %v302
      %v653 = vunpack.c.l.b16 %v303
      %v654 = vunpack.c.l.b16 %v304
      %v655 = vunpack.c.h.b16 %v304
      %v656 = vunpack.c.l.b16 %v305
      %v657 = vunpack.c.l.b16 %v306
      %v658 = vunpack.c.h.b16 %v306
      %v659 = vunpack.c.l.b16 %v307
      %v660 = vunpack.c.l.b16 %v308
      %v661 = vunpack.c.h.b16 %v308
      %v662 = vunpack.c.l.b16 %v309
      %v663 = vunpack.c.l.b16 %v310
      %v664 = vunpack.c.h.b16 %v310
      %v665 = vunpack.c.l.b16 %v311
      %v666 = vunpack.c.l.b16 %v312
      %v667 = vunpack.c.h.b16 %v312
      %v668 = vunpack.c.l.b16 %v313
      %v669 = vunpack.c.l.b16 %v314
      %v670 = vunpack.c.h.b16 %v314
      %v671 = vunpack.c.l.b16 %v315
      %v672 = vunpack.c.l.b16 %v316
      %v673 = vunpack.c.h.b16 %v316
      %v674 = vunpack.c.l.b16 %v317
      %v675 = vunpack.c.l.b16 %v318
      %v676 = vunpack.c.h.b16 %v318
      %v677 = vunpack.c.l.b16 %v319
      %v678 = vunpack.c.l.b16 %v320
      %v679 = vunpack.c.h.b16 %v320
      %v680 = vunpack.c.l.b16 %v321
      %v681 = vunpack.c.l.b16 %v322
      %v682 = vunpack.c.h.b16 %v322
      %v683 = vunpack.c.l.b16 %v323
      %v684 = vunpack.c.l.b16 %v324
      %v685 = vunpack.c.h.b16 %v324
      %v686 = vunpack.c.l.b16 %v325
      %v687 = vunpack.c.l.b16 %v326
      %v688 = vunpack.c.h.b16 %v326
      %v689 = vunpack.c.l.b16 %v327
      %v690 = vunpack.c.l.b16 %v328
      %v691 = vunpack.c.h.b16 %v328
      %v692 = vunpack.c.l.b16 %v329
      %v693 = vunpack.c.l.b16 %v330
      %v694 = vunpack.c.h.b16 %v330
      %v695 = vunpack.c.l.b16 %v331
      %v696 = vunpack.c.l.b16 %v332
      %v697 = vunpack.c.h.b16 %v332
      %v698 = vunpack.c.l.b16 %v333
      %v699 = vunpack.c.l.b16 %v334
      %v700 = vunpack.c.h.b16 %v334
      %v701 = vunpack.c.l.b16 %v335
      %v702 = vunpack.c.l.b16 %v336
      %v703 = vunpack.c.h.b16 %v336
      %v704 = vunpack.c.l.b16 %v337
      %v705 = vunpack.c.l.b16 %v338
      %v706 = vunpack.c.h.b16 %v338
      %v707 = vunpack.c.l.b16 %v339
      %v708 = vunpack.c.l.b16 %v340
      %v709 = vunpack.c.h.b16 %v340
      %v710 = vunpack.c.l.b16 %v341
      %v711 = vunpack.c.l.b16 %v342
      %v712 = vunpack.c.h.b16 %v342
      %v713 = vunpack.c.l.b16 %v343
      %v714 = vunpack.c.l.b16 %v344
      %v715 = vunpack.c.h.b16 %v344
      %v716 = vunpack.c.l.b16 %v345
      %v717 = vunpack.c.l.b16 %v346
      %v718 = vunpack.c.h.b16 %v346
      %v719 = vunpack.c.l.b16 %v347
      %v720 = vunpack.c.l.b16 %v348
      %v721 = vunpack.c.h.b16 %v348
      %v722 = vunpack.c.l.b16 %v349
      %v723 = vunpack.c.l.b16 %v350
      %v724 = vunpack.c.h.b16 %v350
      %v725 = vunpack.c.l.b16 %v351
      %v726 = vunpack.c.l.b16 %v352
      %v727 = vunpack.c.h.b16 %v352
      %v728 = vunpack.c.l.b16 %v353
      %v729 = vpack.c.b16 %v540, %v537
      %v730 = vpack.c.b16 %v541, %v538
      %v731 = vpack.c.b16 %v542, %v539
      %v732 = vpack.c.b16 %v546, %v543
      %v733 = vpack.c.b16 %v547, %v544
      %v734 = vpack.c.b16 %v548, %v545
      %v735 = vpack.c.b16 %v552, %v549
      %v736 = vpack.c.b16 %v553, %v550
      %v737 = vpack.c.b16 %v554, %v551
      %v738 = vpack.c.b16 %v558, %v555
      %v739 = vpack.c.b16 %v559, %v556
      %v740 = vpack.c.b16 %v560, %v557
      %v741 = vpack.c.b16 %v564, %v561
      %v742 = vpack.c.b16 %v565, %v562
      %v743 = vpack.c.b16 %v566, %v563
      %v744 = vpack.c.b16 %v570, %v567
      %v745 = vpack.c.b16 %v571, %v568
      %v746 = vpack.c.b16 %v572, %v569
      %v747 = vpack.c.b16 %v576, %v573
      %v748 = vpack.c.b16 %v577, %v574
      %v749 = vpack.c.b16 %v578, %v575
      %v750 = vpack.c.b16 %v582, %v579
      %v751 = vpack.c.b16 %v583, %v580
      %v752 = vpack.c.b16 %v584, %v581
      %v753 = vpack.c.b16 %v588, %v585
      %v754 = vpack.c.b16 %v589, %v586
      %v755 = vpack.c.b16 %v590, %v587
      %v756 = vpack.c.b16 %v594, %v591
      %v757 = vpack.c.b16 %v595, %v592
      %v758 = vpack.c.b16 %v596, %v593
      %v759 = vpack.c.b16 %v600, %v597
      %v760 = vpack.c.b16 %v601, %v598
      %v761 = vpack.c.b16 %v602, %v599
      %v762 = vpack.c.b16 %v606, %v603
      %v763 = vpack.c.b16 %v607, %v604
      %v764 = vpack.c.b16 %v608, %v605
      %v765 = vpack.c.b16 %v612, %v609
      %v766 = vpack.c.b16 %v613, %v610
      %v767 = vpack.c.b16 %v614, %v611
      %v768 = vpack.c.b16 %v618, %v615
      %v769 = vpack.c.b16 %v619, %v616
      %v770 = vpack.c.b16 %v620, %v617
      %v771 = vpack.c.b16 %v624, %v621
      %v772 = vpack.c.b16 %v625, %v622
      %v773 = vpack.c.b16 %v626, %v623
      %v774 = vpack.c.b16 %v630, %v627
      %v775 = vpack.c.b16 %v631, %v628
      %v776 = vpack.c.b16 %v632, %v629
      %v777 = vpack.c.b16 %v636, %v633
      %v778 = vpack.c.b16 %v637, %v634
      %v779 = vpack.c.b16 %v638, %v635
      %v780 = vpack.c.b16 %v642, %v639
      %v781 = vpack.c.b16 %v643, %v640
      %v782 = vpack.c.b16 %v644, %v641
      %v783 = vpack.c.b16 %v648, %v645
      %v784 = vpack.c.b16 %v649, %v646
      %v785 = vpack.c.b16 %v650, %v647
      %v786 = vpack.c.b16 %v654, %v651
      %v787 = vpack.c.b16 %v655, %v652
      %v788 = vpack.c.b16 %v656, %v653
      %v789 = vpack.c.b16 %v660, %v657
      %v790 = vpack.c.b16 %v661, %v658
      %v791 = vpack.c.b16 %v662, %v659
      %v792 = vpack.c.b16 %v666, %v663
      %v793 = vpack.c.b16 %v667, %v664
      %v794 = vpack.c.b16 %v668, %v665
      %v795 = vpack.c.b16 %v672, %v669
      %v796 = vpack.c.b16 %v673, %v670
      %v797 = vpack.c.b16 %v674, %v671
      %v798 = vpack.c.b16 %v678, %v675
      %v799 = vpack.c.b16 %v679, %v676
      %v800 = vpack.c.b16 %v680, %v677
      %v801 = vpack.c.b16 %v684, %v681
      %v802 = vpack.c.b16 %v685, %v682
      %v803 = vpack.c.b16 %v686, %v683
      %v804 = vpack.c.b16 %v690, %v687
      %v805 = vpack.c.b16 %v691, %v688
      %v806 = vpack.c.b16 %v692, %v689
      %v807 = vpack.c.b16 %v696, %v693
      %v808 = vpack.c.b16 %v697, %v694
      %v809 = vpack.c.b16 %v698, %v695
      %v810 = vpack.c.b16 %v702, %v699
      %v811 = vpack.c.b16 %v703, %v700
      %v812 = vpack.c.b16 %v704, %v701
      %v813 = vpack.c.b16 %v708, %v705
      %v814 = vpack.c.b16 %v709, %v706
      %v815 = vpack.c.b16 %v710, %v707
      %v816 = vpack.c.b16 %v714, %v711
      %v817 = vpack.c.b16 %v715, %v712
      %v818 = vpack.c.b16 %v716, %v713
      %v819 = vpack.c.b16 %v720, %v717
      %v820 = vpack.c.b16 %v721, %v718
      %v821 = vpack.c.b16 %v722, %v719
      %v822 = vpack.c.b16 %v726, %v723
      %v823 = vpack.c.b16 %v727, %v724
      %v824 = vpack.c.b16 %v728, %v725
      %v969 = vunpack.c.l.b16 %v354
      %v970 = vunpack.c.l.b16 %v355
      %v971 = vunpack.c.l.b16 %v356
      %v972 = vunpack.c.l.b16 %v357
      %v973 = vunpack.c.l.b16 %v358
      %v974 = vunpack.c.l.b16 %v359
      %v975 = vunpack.c.l.b16 %v360
      %v976 = vunpack.c.l.b16 %v361
      %v977 = vunpack.c.l.b16 %v362
      %v978 = vunpack.c.l.b16 %v363
      %v979 = vunpack.c.l.b16 %v364
      %v980 = vunpack.c.l.b16 %v365
      %v981 = vunpack.c.l.b16 %v366
      %v982 = vunpack.c.l.b16 %v367
      %v983 = vunpack.c.l.b16 %v368
      %v984 = vunpack.c.l.b16 %v369
      %v985 = vunpack.c.l.b16 %v370
      %v986 = vunpack.c.l.b16 %v371
      %v987 = vunpack.c.l.b16 %v372
      %v988 = vunpack.c.l.b16 %v373
      %v989 = vunpack.c.l.b16 %v374
      %v990 = vunpack.c.l.b16 %v375
      %v991 = vunpack.c.l.b16 %v376
      %v992 = vunpack.c.l.b16 %v377
      %v993 = vunpack.c.l.b16 %v378
      %v994 = vunpack.c.l.b16 %v379
      %v995 = vunpack.c.l.b16 %v380
      %v996 = vunpack.c.l.b16 %v381
      %v997 = vunpack.c.l.b16 %v382
      %v998 = vunpack.c.l.b16 %v383
      %v999 = vunpack.c.l.b16 %v384
      %v1000 = vunpack.c.l.b16 %v385
      %v1001 = vunpack.c.l.b16 %v386
      %v1002 = vunpack.c.l.b16 %v387
      %v1003 = vunpack.c.l.b16 %v388
      %v1004 = vunpack.c.l.b16 %v389
      %v1005 = vunpack.c.l.b16 %v390
      %v1006 = vunpack.c.l.b16 %v391
      %v1007 = vunpack.c.l.b16 %v392
      %v1008 = vunpack.c.l.b16 %v393
      %v1009 = vunpack.c.l.b16 %v394
      %v1010 = vunpack.c.l.b16 %v395
      %v1011 = vunpack.c.l.b16 %v396
      %v1012 = vunpack.c.l.b16 %v397
      %v1013 = vunpack.c.l.b16 %v398
      %v1014 = vunpack.c.l.b16 %v399
      %v1015 = vunpack.c.l.b16 %v400
      %v1016 = vunpack.c.l.b16 %v401
      %v1017 = vpack.c.b16 %v970, %v969
      %v1018 = vpack.c.b16 %v972, %v971
      %v1019 = vpack.c.b16 %v974, %v973
      %v1020 = vpack.c.b16 %v976, %v975
      %v1021 = vpack.c.b16 %v978, %v977
      %v1022 = vpack.c.b16 %v980, %v979
      %v1023 = vpack.c.b16 %v982, %v981
      %v1024 = vpack.c.b16 %v984, %v983
      %v1025 = vpack.c.b16 %v986, %v985
      %v1026 = vpack.c.b16 %v988, %v987
      %v1027 = vpack.c.b16 %v990, %v989
      %v1028 = vpack.c.b16 %v992, %v991
      %v1029 = vpack.c.b16 %v994, %v993
      %v1030 = vpack.c.b16 %v996, %v995
      %v1031 = vpack.c.b16 %v998, %v997
      %v1032 = vpack.c.b16 %v1000, %v999
      %v1033 = vpack.c.b16 %v1002, %v1001
      %v1034 = vpack.c.b16 %v1004, %v1003
      %v1035 = vpack.c.b16 %v1006, %v1005
      %v1036 = vpack.c.b16 %v1008, %v1007
      %v1037 = vpack.c.b16 %v1010, %v1009
      %v1038 = vpack.c.b16 %v1012, %v1011
      %v1039 = vpack.c.b16 %v1014, %v1013
      %v1040 = vpack.c.b16 %v1016, %v1015
      %1065 = vmatprep.subr.bf16.mxu0 0
      %1066 = vmatpush1.bf16.msra.mxu0 %v1017
      %1067 = vmatprep.subr.bf16.mxu0 0
      %1068 = vmatpush1.bf16.msra.mxu0 %v1018
      %1069 = vmatprep.subr.bf16.mxu0 0
      %1070 = vmatpush1.bf16.msra.mxu0 %v1019
      %1071 = vmatprep.subr.bf16.mxu0 0
      %1072 = vmatpush1.bf16.msra.mxu0 %v1020
      %1073 = vmatprep.subr.bf16.mxu0 0
      %1074 = vmatpush1.bf16.msra.mxu0 %v1021
      %1075 = vmatprep.subr.bf16.mxu0 0
      %1076 = vmatpush1.bf16.msra.mxu0 %v1022
      %1077 = vmatprep.subr.bf16.mxu0 0
      %1078 = vmatpush1.bf16.msra.mxu0 %v1023
      %1079 = vmatprep.subr.bf16.mxu0 0
      %1080 = vmatpush1.bf16.msra.mxu0 %v1024
      %1081 = vmatprep.subr.bf16.mxu0 0
      %1082 = vmatpush1.bf16.msra.mxu0 %v1025
      %1083 = vmatprep.subr.bf16.mxu0 0
      %1084 = vmatpush1.bf16.msra.mxu0 %v1026
      %1085 = vmatprep.subr.bf16.mxu0 0
      %1086 = vmatpush1.bf16.msra.mxu0 %v1027
      %1087 = vmatprep.subr.bf16.mxu0 0
      %1088 = vmatpush1.bf16.msra.mxu0 %v1028
      %1089 = vmatprep.subr.bf16.mxu0 0
      %1090 = vmatpush1.bf16.msra.mxu0 %v1029
      %1091 = vmatprep.subr.bf16.mxu0 0
      %1092 = vmatpush1.bf16.msra.mxu0 %v1030
      %1093 = vmatprep.subr.bf16.mxu0 0
      %1094 = vmatpush1.bf16.msra.mxu0 %v1031
      %1095 = vmatprep.subr.bf16.mxu0 0
      %1096 = vmatpush1.bf16.msra.mxu0 %v1032
      %1097 = vmatprep.mubr.bf16.mxu0 %v730
      %1098 = vmatmul.mubr.bf16.gmra.mrb[0].mxu0 %v729
      %v1099 = vpop.f32.mrb[0].mxu0
      %v1100 = vadd.f32 %v407, %v1099
      %v1101 = vpop.f32.mrb[0].mxu0
      %v1102 = vpop.f32.mrb[0].mxu0
      %v1103 = vadd.f32 %v407, %v1102
      %v1104 = vpop.f32.mrb[0].mxu0
      %1105 = vmatprep.mubr.bf16.mxu0 %v733
      %1106 = vmatmul.mubr.bf16.gmra.mrb[0].mxu0 %v732
      %v1107 = vpop.f32.mrb[0].mxu0
      %v1108 = vadd.f32 %v407, %v1107
      %v1109 = vpop.f32.mrb[0].mxu0
      %v1110 = vpop.f32.mrb[0].mxu0
      %v1111 = vadd.f32 %v407, %v1110
      %v1112 = vpop.f32.mrb[0].mxu0
      %1113 = vmatprep.mubr.bf16.mxu0 %v736
      %1114 = vmatmul.mubr.bf16.gmra.mrb[0].mxu0 %v735
      %v1115 = vpop.f32.mrb[0].mxu0
      %v1116 = vadd.f32 %v407, %v1115
      %v1117 = vpop.f32.mrb[0].mxu0
      %v1118 = vpop.f32.mrb[0].mxu0
      %v1119 = vadd.f32 %v407, %v1118
      %v1120 = vpop.f32.mrb[0].mxu0
      %1121 = vmatprep.mubr.bf16.mxu0 %v739
      %1122 = vmatmul.mubr.bf16.gmra.mrb[0].mxu0 %v738
      %v1123 = vpop.f32.mrb[0].mxu0
      %v1124 = vadd.f32 %v407, %v1123
      %v1125 = vpop.f32.mrb[0].mxu0
      %v1126 = vpop.f32.mrb[0].mxu0
      %v1127 = vadd.f32 %v407, %v1126
      %v1128 = vpop.f32.mrb[0].mxu0
      %1129 = vmatprep.mubr.bf16.mxu0 %v742
      %1130 = vmatmul.mubr.bf16.gmra.mrb[0].mxu0 %v741
      %v1131 = vpop.f32.mrb[0].mxu0
      %v1132 = vadd.f32 %v407, %v1131
      %v1133 = vpop.f32.mrb[0].mxu0
      %v1134 = vpop.f32.mrb[0].mxu0
      %v1135 = vadd.f32 %v407, %v1134
      %v1136 = vpop.f32.mrb[0].mxu0
      %1137 = vmatprep.mubr.bf16.mxu0 %v745
      %1138 = vmatmul.mubr.bf16.gmra.mrb[0].mxu0 %v744
      %v1139 = vpop.f32.mrb[0].mxu0
      %v1140 = vadd.f32 %v407, %v1139
      %v1141 = vpop.f32.mrb[0].mxu0
      %v1142 = vpop.f32.mrb[0].mxu0
      %v1143 = vadd.f32 %v407, %v1142
      %v1144 = vpop.f32.mrb[0].mxu0
      %1145 = vmatprep.mubr.bf16.mxu0 %v748
      %1146 = vmatmul.mubr.bf16.gmra.mrb[0].mxu0 %v747
      %v1147 = vpop.f32.mrb[0].mxu0
      %v1148 = vadd.f32 %v407, %v1147
      %v1149 = vpop.f32.mrb[0].mxu0
      %v1150 = vpop.f32.mrb[0].mxu0
      %v1151 = vadd.f32 %v407, %v1150
      %v1152 = vpop.f32.mrb[0].mxu0
      %1153 = vmatprep.mubr.bf16.mxu0 %v751
      %1154 = vmatmul.mubr.bf16.gmra.mrb[0].mxu0 %v750
      %v1155 = vpop.f32.mrb[0].mxu0
      %v1156 = vadd.f32 %v407, %v1155
      %v1157 = vpop.f32.mrb[0].mxu0
      %v1158 = vpop.f32.mrb[0].mxu0
      %v1159 = vadd.f32 %v407, %v1158
      %v1160 = vpop.f32.mrb[0].mxu0
      %1161 = vmatprep.mubr.bf16.mxu0 %v754
      %1162 = vmatmul.mubr.bf16.gmra.mrb[0].mxu0 %v753
      %v1163 = vpop.f32.mrb[0].mxu0
      %v1164 = vadd.f32 %v407, %v1163
      %v1165 = vpop.f32.mrb[0].mxu0
      %v1166 = vpop.f32.mrb[0].mxu0
      %v1167 = vadd.f32 %v407, %v1166
      %v1168 = vpop.f32.mrb[0].mxu0
      %1169 = vmatprep.mubr.bf16.mxu0 %v757
      %1170 = vmatmul.mubr.bf16.gmra.mrb[0].mxu0 %v756
      %v1171 = vpop.f32.mrb[0].mxu0
      %v1172 = vadd.f32 %v407, %v1171
      %v1173 = vpop.f32.mrb[0].mxu0
      %v1174 = vpop.f32.mrb[0].mxu0
      %v1175 = vadd.f32 %v407, %v1174
      %v1176 = vpop.f32.mrb[0].mxu0
      %1177 = vmatprep.mubr.bf16.mxu0 %v760
      %1178 = vmatmul.mubr.bf16.gmra.mrb[0].mxu0 %v759
      %v1179 = vpop.f32.mrb[0].mxu0
      %v1180 = vadd.f32 %v407, %v1179
      %v1181 = vpop.f32.mrb[0].mxu0
      %v1182 = vpop.f32.mrb[0].mxu0
      %v1183 = vadd.f32 %v407, %v1182
      %v1184 = vpop.f32.mrb[0].mxu0
      %1185 = vmatprep.mubr.bf16.mxu0 %v763
      %1186 = vmatmul.mubr.bf16.gmra.mrb[0].mxu0 %v762
      %v1187 = vpop.f32.mrb[0].mxu0
      %v1188 = vadd.f32 %v407, %v1187
      %v1189 = vpop.f32.mrb[0].mxu0
      %v1190 = vpop.f32.mrb[0].mxu0
      %v1191 = vadd.f32 %v407, %v1190
      %v1192 = vpop.f32.mrb[0].mxu0
      %1193 = vmatprep.mubr.bf16.mxu0 %v766
      %1194 = vmatmul.mubr.bf16.gmra.mrb[0].mxu0 %v765
      %v1195 = vpop.f32.mrb[0].mxu0
      %v1196 = vadd.f32 %v407, %v1195
      %v1197 = vpop.f32.mrb[0].mxu0
      %v1198 = vpop.f32.mrb[0].mxu0
      %v1199 = vadd.f32 %v407, %v1198
      %v1200 = vpop.f32.mrb[0].mxu0
      %1201 = vmatprep.mubr.bf16.mxu0 %v769
      %1202 = vmatmul.mubr.bf16.gmra.mrb[0].mxu0 %v768
      %v1203 = vpop.f32.mrb[0].mxu0
      %v1204 = vadd.f32 %v407, %v1203
      %v1205 = vpop.f32.mrb[0].mxu0
      %v1206 = vpop.f32.mrb[0].mxu0
      %v1207 = vadd.f32 %v407, %v1206
      %v1208 = vpop.f32.mrb[0].mxu0
      %1209 = vmatprep.mubr.bf16.mxu0 %v772
      %1210 = vmatmul.mubr.bf16.gmra.mrb[0].mxu0 %v771
      %v1211 = vpop.f32.mrb[0].mxu0
      %v1212 = vadd.f32 %v407, %v1211
      %v1213 = vpop.f32.mrb[0].mxu0
      %v1214 = vpop.f32.mrb[0].mxu0
      %v1215 = vadd.f32 %v407, %v1214
      %v1216 = vpop.f32.mrb[0].mxu0
      %1217 = vmatprep.mubr.bf16.mxu0 %v775
      %1218 = vmatmul.mubr.bf16.gmra.mrb[0].mxu0 %v774
      %v1219 = vpop.f32.mrb[0].mxu0
      %v1220 = vadd.f32 %v407, %v1219
      %v1221 = vpop.f32.mrb[0].mxu0
      %v1222 = vpop.f32.mrb[0].mxu0
      %v1223 = vadd.f32 %v407, %v1222
      %v1224 = vpop.f32.mrb[0].mxu0
      %1225 = vmatprep.mubr.bf16.mxu0 %v778
      %1226 = vmatmul.mubr.bf16.gmra.mrb[0].mxu0 %v777
      %v1227 = vpop.f32.mrb[0].mxu0
      %v1228 = vadd.f32 %v407, %v1227
      %v1229 = vpop.f32.mrb[0].mxu0
      %v1230 = vpop.f32.mrb[0].mxu0
      %v1231 = vadd.f32 %v407, %v1230
      %v1232 = vpop.f32.mrb[0].mxu0
      %1233 = vmatprep.mubr.bf16.mxu0 %v781
      %1234 = vmatmul.mubr.bf16.gmra.mrb[0].mxu0 %v780
      %v1235 = vpop.f32.mrb[0].mxu0
      %v1236 = vadd.f32 %v407, %v1235
      %v1237 = vpop.f32.mrb[0].mxu0
      %v1238 = vpop.f32.mrb[0].mxu0
      %v1239 = vadd.f32 %v407, %v1238
      %v1240 = vpop.f32.mrb[0].mxu0
      %1241 = vmatprep.mubr.bf16.mxu0 %v784
      %1242 = vmatmul.mubr.bf16.gmra.mrb[0].mxu0 %v783
      %v1243 = vpop.f32.mrb[0].mxu0
      %v1244 = vadd.f32 %v407, %v1243
      %v1245 = vpop.f32.mrb[0].mxu0
      %v1246 = vpop.f32.mrb[0].mxu0
      %v1247 = vadd.f32 %v407, %v1246
      %v1248 = vpop.f32.mrb[0].mxu0
      %1249 = vmatprep.mubr.bf16.mxu0 %v787
      %1250 = vmatmul.mubr.bf16.gmra.mrb[0].mxu0 %v786
      %v1251 = vpop.f32.mrb[0].mxu0
      %v1252 = vadd.f32 %v407, %v1251
      %v1253 = vpop.f32.mrb[0].mxu0
      %v1254 = vpop.f32.mrb[0].mxu0
      %v1255 = vadd.f32 %v407, %v1254
      %v1256 = vpop.f32.mrb[0].mxu0
      %1257 = vmatprep.mubr.bf16.mxu0 %v790
      %1258 = vmatmul.mubr.bf16.gmra.mrb[0].mxu0 %v789
      %v1259 = vpop.f32.mrb[0].mxu0
      %v1260 = vadd.f32 %v407, %v1259
      %v1261 = vpop.f32.mrb[0].mxu0
      %v1262 = vpop.f32.mrb[0].mxu0
      %v1263 = vadd.f32 %v407, %v1262
      %v1264 = vpop.f32.mrb[0].mxu0
      %1265 = vmatprep.mubr.bf16.mxu0 %v793
      %1266 = vmatmul.mubr.bf16.gmra.mrb[0].mxu0 %v792
      %v1267 = vpop.f32.mrb[0].mxu0
      %v1268 = vadd.f32 %v407, %v1267
      %v1269 = vpop.f32.mrb[0].mxu0
      %v1270 = vpop.f32.mrb[0].mxu0
      %v1271 = vadd.f32 %v407, %v1270
      %v1272 = vpop.f32.mrb[0].mxu0
      %1273 = vmatprep.mubr.bf16.mxu0 %v796
      %1274 = vmatmul.mubr.bf16.gmra.mrb[0].mxu0 %v795
      %v1275 = vpop.f32.mrb[0].mxu0
      %v1276 = vadd.f32 %v407, %v1275
      %v1277 = vpop.f32.mrb[0].mxu0
      %v1278 = vpop.f32.mrb[0].mxu0
      %v1279 = vadd.f32 %v407, %v1278
      %v1280 = vpop.f32.mrb[0].mxu0
      %1281 = vmatprep.mubr.bf16.mxu0 %v799
      %1282 = vmatmul.mubr.bf16.gmra.mrb[0].mxu0 %v798
      %v1283 = vpop.f32.mrb[0].mxu0
      %v1284 = vadd.f32 %v407, %v1283
      %v1285 = vpop.f32.mrb[0].mxu0
      %v1286 = vpop.f32.mrb[0].mxu0
      %v1287 = vadd.f32 %v407, %v1286
      %v1288 = vpop.f32.mrb[0].mxu0
      %1289 = vmatprep.mubr.bf16.mxu0 %v802
      %1290 = vmatmul.mubr.bf16.gmra.mrb[0].mxu0 %v801
      %v1291 = vpop.f32.mrb[0].mxu0
      %v1292 = vadd.f32 %v407, %v1291
      %v1293 = vpop.f32.mrb[0].mxu0
      %v1294 = vpop.f32.mrb[0].mxu0
      %v1295 = vadd.f32 %v407, %v1294
      %v1296 = vpop.f32.mrb[0].mxu0
      %1297 = vmatprep.mubr.bf16.mxu0 %v805
      %1298 = vmatmul.mubr.bf16.gmra.mrb[0].mxu0 %v804
      %v1299 = vpop.f32.mrb[0].mxu0
      %v1300 = vadd.f32 %v407, %v1299
      %v1301 = vpop.f32.mrb[0].mxu0
      %v1302 = vpop.f32.mrb[0].mxu0
      %v1303 = vadd.f32 %v407, %v1302
      %v1304 = vpop.f32.mrb[0].mxu0
      %1305 = vmatprep.mubr.bf16.mxu0 %v808
      %1306 = vmatmul.mubr.bf16.gmra.mrb[0].mxu0 %v807
      %v1307 = vpop.f32.mrb[0].mxu0
      %v1308 = vadd.f32 %v407, %v1307
      %v1309 = vpop.f32.mrb[0].mxu0
      %v1310 = vpop.f32.mrb[0].mxu0
      %v1311 = vadd.f32 %v407, %v1310
      %v1312 = vpop.f32.mrb[0].mxu0
      %1313 = vmatprep.mubr.bf16.mxu0 %v811
      %1314 = vmatmul.mubr.bf16.gmra.mrb[0].mxu0 %v810
      %v1315 = vpop.f32.mrb[0].mxu0
      %v1316 = vadd.f32 %v407, %v1315
      %v1317 = vpop.f32.mrb[0].mxu0
      %v1318 = vpop.f32.mrb[0].mxu0
      %v1319 = vadd.f32 %v407, %v1318
      %v1320 = vpop.f32.mrb[0].mxu0
      %1321 = vmatprep.mubr.bf16.mxu0 %v814
      %1322 = vmatmul.mubr.bf16.gmra.mrb[0].mxu0 %v813
      %v1323 = vpop.f32.mrb[0].mxu0
      %v1324 = vadd.f32 %v407, %v1323
      %v1325 = vpop.f32.mrb[0].mxu0
      %v1326 = vpop.f32.mrb[0].mxu0
      %v1327 = vadd.f32 %v407, %v1326
      %v1328 = vpop.f32.mrb[0].mxu0
      %1329 = vmatprep.mubr.bf16.mxu0 %v817
      %1330 = vmatmul.mubr.bf16.gmra.mrb[0].mxu0 %v816
      %v1331 = vpop.f32.mrb[0].mxu0
      %v1332 = vadd.f32 %v407, %v1331
      %v1333 = vpop.f32.mrb[0].mxu0
      %v1334 = vpop.f32.mrb[0].mxu0
      %v1335 = vadd.f32 %v407, %v1334
      %v1336 = vpop.f32.mrb[0].mxu0
      %1337 = vmatprep.mubr.bf16.mxu0 %v820
      %1338 = vmatmul.mubr.bf16.gmra.mrb[0].mxu0 %v819
      %v1339 = vpop.f32.mrb[0].mxu0
      %v1340 = vadd.f32 %v407, %v1339
      %v1341 = vpop.f32.mrb[0].mxu0
      %v1342 = vpop.f32.mrb[0].mxu0
      %v1343 = vadd.f32 %v407, %v1342
      %v1344 = vpop.f32.mrb[0].mxu0
      %1345 = vmatprep.mubr.bf16.mxu0 %v823
      %1346 = vmatmul.mubr.bf16.gmra.mrb[0].mxu0 %v822
      %v1347 = vpop.f32.mrb[0].mxu0
      %v1348 = vadd.f32 %v407, %v1347
      %v1349 = vpop.f32.mrb[0].mxu0
      %v1350 = vpop.f32.mrb[0].mxu0
      %v1351 = vadd.f32 %v407, %v1350
      %v1352 = vpop.f32.mrb[0].mxu0
      %1353 = vdwg.mxu0
      %1354 = vmatprep.subr.bf16.mxu0 0
      %1355 = vmatpush1.bf16.msra.mxu0 %v1033
      %1356 = vmatprep.subr.bf16.mxu0 0
      %1357 = vmatpush1.bf16.msra.mxu0 %v1034
      %1358 = vmatprep.subr.bf16.mxu0 0
      %1359 = vmatpush1.bf16.msra.mxu0 %v1035
      %1360 = vmatprep.subr.bf16.mxu0 0
      %1361 = vmatpush1.bf16.msra.mxu0 %v1036
      %1362 = vmatprep.subr.bf16.mxu0 0
      %1363 = vmatpush1.bf16.msra.mxu0 %v1037
      %1364 = vmatprep.subr.bf16.mxu0 0
      %1365 = vmatpush1.bf16.msra.mxu0 %v1038
      %1366 = vmatprep.subr.bf16.mxu0 0
      %1367 = vmatpush1.bf16.msra.mxu0 %v1039
      %1368 = vmatprep.subr.bf16.mxu0 0
      %1369 = vmatpush1.bf16.msra.mxu0 %v1040
      %1370 = vmatprep.subr.bf16.mxu0 0
      %1371 = vmatpush1.bf16.msra.mxu0 0
      %1372 = vmatprep.subr.bf16.mxu0 0
      %1373 = vmatpush1.bf16.msra.mxu0 0
      %1374 = vmatprep.subr.bf16.mxu0 0
      %1375 = vmatpush1.bf16.msra.mxu0 0
      %1376 = vmatprep.subr.bf16.mxu0 0
      %1377 = vmatpush1.bf16.msra.mxu0 0
      %1378 = vmatprep.subr.bf16.mxu0 0
      %1379 = vmatpush1.bf16.msra.mxu0 0
      %1380 = vmatprep.subr.bf16.mxu0 0
      %1381 = vmatpush1.bf16.msra.mxu0 0
      %1382 = vmatprep.subr.bf16.mxu0 0
      %1383 = vmatpush1.bf16.msra.mxu0 0
      %1384 = vmatprep.subr.bf16.mxu0 0
      %1385 = vmatpush1.bf16.msra.mxu0 0
      %1386 = vmatprep.mubr.bf16.mxu0 0
      %1387 = vmatmul.mubr.bf16.gmra.mrb[0].mxu0 %v731
      %v1388 = vpop.f32.mrb[0].mxu0
      %v1389 = vadd.f32 %v1100, %v1388
      %v1390 = vpop.f32.mrb[0].mxu0
      %v1391 = vpop.f32.mrb[0].mxu0
      %v1392 = vadd.f32 %v1103, %v1391
      %v1393 = vpop.f32.mrb[0].mxu0
      %1394 = vmatprep.mubr.bf16.mxu0 0
      %1395 = vmatmul.mubr.bf16.gmra.mrb[0].mxu0 %v734
      %v1396 = vpop.f32.mrb[0].mxu0
      %v1397 = vadd.f32 %v1108, %v1396
      %v1398 = vpop.f32.mrb[0].mxu0
      %v1399 = vpop.f32.mrb[0].mxu0
      %v1400 = vadd.f32 %v1111, %v1399
      %v1401 = vpop.f32.mrb[0].mxu0
      %1402 = vmatprep.mubr.bf16.mxu0 0
      %1403 = vmatmul.mubr.bf16.gmra.mrb[0].mxu0 %v737
      %v1404 = vpop.f32.mrb[0].mxu0
      %v1405 = vadd.f32 %v1116, %v1404
      %v1406 = vpop.f32.mrb[0].mxu0
      %v1407 = vpop.f32.mrb[0].mxu0
      %v1408 = vadd.f32 %v1119, %v1407
      %v1409 = vpop.f32.mrb[0].mxu0
      %1410 = vmatprep.mubr.bf16.mxu0 0
      %1411 = vmatmul.mubr.bf16.gmra.mrb[0].mxu0 %v740
      %v1412 = vpop.f32.mrb[0].mxu0
      %v1413 = vadd.f32 %v1124, %v1412
      %v1414 = vpop.f32.mrb[0].mxu0
      %v1415 = vpop.f32.mrb[0].mxu0
      %v1416 = vadd.f32 %v1127, %v1415
      %v1417 = vpop.f32.mrb[0].mxu0
      %1418 = vmatprep.mubr.bf16.mxu0 0
      %1419 = vmatmul.mubr.bf16.gmra.mrb[0].mxu0 %v743
      %v1420 = vpop.f32.mrb[0].mxu0
      %v1421 = vadd.f32 %v1132, %v1420
      %v1422 = vpop.f32.mrb[0].mxu0
      %v1423 = vpop.f32.mrb[0].mxu0
      %v1424 = vadd.f32 %v1135, %v1423
      %v1425 = vpop.f32.mrb[0].mxu0
      %1426 = vmatprep.mubr.bf16.mxu0 0
      %1427 = vmatmul.mubr.bf16.gmra.mrb[0].mxu0 %v746
      %v1428 = vpop.f32.mrb[0].mxu0
      %v1429 = vadd.f32 %v1140, %v1428
      %v1430 = vpop.f32.mrb[0].mxu0
      %v1431 = vpop.f32.mrb[0].mxu0
      %v1432 = vadd.f32 %v1143, %v1431
      %v1433 = vpop.f32.mrb[0].mxu0
      %1434 = vmatprep.mubr.bf16.mxu0 0
      %1435 = vmatmul.mubr.bf16.gmra.mrb[0].mxu0 %v749
      %v1436 = vpop.f32.mrb[0].mxu0
      %v1437 = vadd.f32 %v1148, %v1436
      %v1438 = vpop.f32.mrb[0].mxu0
      %v1439 = vpop.f32.mrb[0].mxu0
      %v1440 = vadd.f32 %v1151, %v1439
      %v1441 = vpop.f32.mrb[0].mxu0
      %1442 = vmatprep.mubr.bf16.mxu0 0
      %1443 = vmatmul.mubr.bf16.gmra.mrb[0].mxu0 %v752
      %v1444 = vpop.f32.mrb[0].mxu0
      %v1445 = vadd.f32 %v1156, %v1444
      %v1446 = vpop.f32.mrb[0].mxu0
      %v1447 = vpop.f32.mrb[0].mxu0
      %v1448 = vadd.f32 %v1159, %v1447
      %v1449 = vpop.f32.mrb[0].mxu0
      %1450 = vmatprep.mubr.bf16.mxu0 0
      %1451 = vmatmul.mubr.bf16.gmra.mrb[0].mxu0 %v755
      %v1452 = vpop.f32.mrb[0].mxu0
      %v1453 = vadd.f32 %v1164, %v1452
      %v1454 = vpop.f32.mrb[0].mxu0
      %v1455 = vpop.f32.mrb[0].mxu0
      %v1456 = vadd.f32 %v1167, %v1455
      %v1457 = vpop.f32.mrb[0].mxu0
      %1458 = vmatprep.mubr.bf16.mxu0 0
      %1459 = vmatmul.mubr.bf16.gmra.mrb[0].mxu0 %v758
      %v1460 = vpop.f32.mrb[0].mxu0
      %v1461 = vadd.f32 %v1172, %v1460
      %v1462 = vpop.f32.mrb[0].mxu0
      %v1463 = vpop.f32.mrb[0].mxu0
      %v1464 = vadd.f32 %v1175, %v1463
      %v1465 = vpop.f32.mrb[0].mxu0
      %1466 = vmatprep.mubr.bf16.mxu0 0
      %1467 = vmatmul.mubr.bf16.gmra.mrb[0].mxu0 %v761
      %v1468 = vpop.f32.mrb[0].mxu0
      %v1469 = vadd.f32 %v1180, %v1468
      %v1470 = vpop.f32.mrb[0].mxu0
      %v1471 = vpop.f32.mrb[0].mxu0
      %v1472 = vadd.f32 %v1183, %v1471
      %v1473 = vpop.f32.mrb[0].mxu0
      %1474 = vmatprep.mubr.bf16.mxu0 0
      %1475 = vmatmul.mubr.bf16.gmra.mrb[0].mxu0 %v764
      %v1476 = vpop.f32.mrb[0].mxu0
      %v1477 = vadd.f32 %v1188, %v1476
      %v1478 = vpop.f32.mrb[0].mxu0
      %v1479 = vpop.f32.mrb[0].mxu0
      %v1480 = vadd.f32 %v1191, %v1479
      %v1481 = vpop.f32.mrb[0].mxu0
      %1482 = vmatprep.mubr.bf16.mxu0 0
      %1483 = vmatmul.mubr.bf16.gmra.mrb[0].mxu0 %v767
      %v1484 = vpop.f32.mrb[0].mxu0
      %v1485 = vadd.f32 %v1196, %v1484
      %v1486 = vpop.f32.mrb[0].mxu0
      %v1487 = vpop.f32.mrb[0].mxu0
      %v1488 = vadd.f32 %v1199, %v1487
      %v1489 = vpop.f32.mrb[0].mxu0
      %1490 = vmatprep.mubr.bf16.mxu0 0
      %1491 = vmatmul.mubr.bf16.gmra.mrb[0].mxu0 %v770
      %v1492 = vpop.f32.mrb[0].mxu0
      %v1493 = vadd.f32 %v1204, %v1492
      %v1494 = vpop.f32.mrb[0].mxu0
      %v1495 = vpop.f32.mrb[0].mxu0
      %v1496 = vadd.f32 %v1207, %v1495
      %v1497 = vpop.f32.mrb[0].mxu0
      %1498 = vmatprep.mubr.bf16.mxu0 0
      %1499 = vmatmul.mubr.bf16.gmra.mrb[0].mxu0 %v773
      %v1500 = vpop.f32.mrb[0].mxu0
      %v1501 = vadd.f32 %v1212, %v1500
      %v1502 = vpop.f32.mrb[0].mxu0
      %v1503 = vpop.f32.mrb[0].mxu0
      %v1504 = vadd.f32 %v1215, %v1503
      %v1505 = vpop.f32.mrb[0].mxu0
      %1506 = vmatprep.mubr.bf16.mxu0 0
      %1507 = vmatmul.mubr.bf16.gmra.mrb[0].mxu0 %v776
      %v1508 = vpop.f32.mrb[0].mxu0
      %v1509 = vadd.f32 %v1220, %v1508
      %v1510 = vpop.f32.mrb[0].mxu0
      %v1511 = vpop.f32.mrb[0].mxu0
      %v1512 = vadd.f32 %v1223, %v1511
      %v1513 = vpop.f32.mrb[0].mxu0
      %1514 = vmatprep.mubr.bf16.mxu0 0
      %1515 = vmatmul.mubr.bf16.gmra.mrb[0].mxu0 %v779
      %v1516 = vpop.f32.mrb[0].mxu0
      %v1517 = vadd.f32 %v1228, %v1516
      %v1518 = vpop.f32.mrb[0].mxu0
      %v1519 = vpop.f32.mrb[0].mxu0
      %v1520 = vadd.f32 %v1231, %v1519
      %v1521 = vpop.f32.mrb[0].mxu0
      %1522 = vmatprep.mubr.bf16.mxu0 0
      %1523 = vmatmul.mubr.bf16.gmra.mrb[0].mxu0 %v782
      %v1524 = vpop.f32.mrb[0].mxu0
      %v1525 = vadd.f32 %v1236, %v1524
      %v1526 = vpop.f32.mrb[0].mxu0
      %v1527 = vpop.f32.mrb[0].mxu0
      %v1528 = vadd.f32 %v1239, %v1527
      %v1529 = vpop.f32.mrb[0].mxu0
      %1530 = vmatprep.mubr.bf16.mxu0 0
      %1531 = vmatmul.mubr.bf16.gmra.mrb[0].mxu0 %v785
      %v1532 = vpop.f32.mrb[0].mxu0
      %v1533 = vadd.f32 %v1244, %v1532
      %v1534 = vpop.f32.mrb[0].mxu0
      %v1535 = vpop.f32.mrb[0].mxu0
      %v1536 = vadd.f32 %v1247, %v1535
      %v1537 = vpop.f32.mrb[0].mxu0
      %1538 = vmatprep.mubr.bf16.mxu0 0
      %1539 = vmatmul.mubr.bf16.gmra.mrb[0].mxu0 %v788
      %v1540 = vpop.f32.mrb[0].mxu0
      %v1541 = vadd.f32 %v1252, %v1540
      %v1542 = vpop.f32.mrb[0].mxu0
      %v1543 = vpop.f32.mrb[0].mxu0
      %v1544 = vadd.f32 %v1255, %v1543
      %v1545 = vpop.f32.mrb[0].mxu0
      %1546 = vmatprep.mubr.bf16.mxu0 0
      %1547 = vmatmul.mubr.bf16.gmra.mrb[0].mxu0 %v791
      %v1548 = vpop.f32.mrb[0].mxu0
      %v1549 = vadd.f32 %v1260, %v1548
      %v1550 = vpop.f32.mrb[0].mxu0
      %v1551 = vpop.f32.mrb[0].mxu0
      %v1552 = vadd.f32 %v1263, %v1551
      %v1553 = vpop.f32.mrb[0].mxu0
      %1554 = vmatprep.mubr.bf16.mxu0 0
      %1555 = vmatmul.mubr.bf16.gmra.mrb[0].mxu0 %v794
      %v1556 = vpop.f32.mrb[0].mxu0
      %v1557 = vadd.f32 %v1268, %v1556
      %v1558 = vpop.f32.mrb[0].mxu0
      %v1559 = vpop.f32.mrb[0].mxu0
      %v1560 = vadd.f32 %v1271, %v1559
      %v1561 = vpop.f32.mrb[0].mxu0
      %1562 = vmatprep.mubr.bf16.mxu0 0
      %1563 = vmatmul.mubr.bf16.gmra.mrb[0].mxu0 %v797
      %v1564 = vpop.f32.mrb[0].mxu0
      %v1565 = vadd.f32 %v1276, %v1564
      %v1566 = vpop.f32.mrb[0].mxu0
      %v1567 = vpop.f32.mrb[0].mxu0
      %v1568 = vadd.f32 %v1279, %v1567
      %v1569 = vpop.f32.mrb[0].mxu0
      %1570 = vmatprep.mubr.bf16.mxu0 0
      %1571 = vmatmul.mubr.bf16.gmra.mrb[0].mxu0 %v800
      %v1572 = vpop.f32.mrb[0].mxu0
      %v1573 = vadd.f32 %v1284, %v1572
      %v1574 = vpop.f32.mrb[0].mxu0
      %v1575 = vpop.f32.mrb[0].mxu0
      %v1576 = vadd.f32 %v1287, %v1575
      %v1577 = vpop.f32.mrb[0].mxu0
      %1578 = vmatprep.mubr.bf16.mxu0 0
      %1579 = vmatmul.mubr.bf16.gmra.mrb[0].mxu0 %v803
      %v1580 = vpop.f32.mrb[0].mxu0
      %v1581 = vadd.f32 %v1292, %v1580
      %v1582 = vpop.f32.mrb[0].mxu0
      %v1583 = vpop.f32.mrb[0].mxu0
      %v1584 = vadd.f32 %v1295, %v1583
      %v1585 = vpop.f32.mrb[0].mxu0
      %1586 = vmatprep.mubr.bf16.mxu0 0
      %1587 = vmatmul.mubr.bf16.gmra.mrb[0].mxu0 %v806
      %v1588 = vpop.f32.mrb[0].mxu0
      %v1589 = vadd.f32 %v1300, %v1588
      %v1590 = vpop.f32.mrb[0].mxu0
      %v1591 = vpop.f32.mrb[0].mxu0
      %v1592 = vadd.f32 %v1303, %v1591
      %v1593 = vpop.f32.mrb[0].mxu0
      %1594 = vmatprep.mubr.bf16.mxu0 0
      %1595 = vmatmul.mubr.bf16.gmra.mrb[0].mxu0 %v809
      %v1596 = vpop.f32.mrb[0].mxu0
      %v1597 = vadd.f32 %v1308, %v1596
      %v1598 = vpop.f32.mrb[0].mxu0
      %v1599 = vpop.f32.mrb[0].mxu0
      %v1600 = vadd.f32 %v1311, %v1599
      %v1601 = vpop.f32.mrb[0].mxu0
      %1602 = vmatprep.mubr.bf16.mxu0 0
      %1603 = vmatmul.mubr.bf16.gmra.mrb[0].mxu0 %v812
      %v1604 = vpop.f32.mrb[0].mxu0
      %v1605 = vadd.f32 %v1316, %v1604
      %v1606 = vpop.f32.mrb[0].mxu0
      %v1607 = vpop.f32.mrb[0].mxu0
      %v1608 = vadd.f32 %v1319, %v1607
      %v1609 = vpop.f32.mrb[0].mxu0
      %1610 = vmatprep.mubr.bf16.mxu0 0
      %1611 = vmatmul.mubr.bf16.gmra.mrb[0].mxu0 %v815
      %v1612 = vpop.f32.mrb[0].mxu0
      %v1613 = vadd.f32 %v1324, %v1612
      %v1614 = vpop.f32.mrb[0].mxu0
      %v1615 = vpop.f32.mrb[0].mxu0
      %v1616 = vadd.f32 %v1327, %v1615
      %v1617 = vpop.f32.mrb[0].mxu0
      %1618 = vmatprep.mubr.bf16.mxu0 0
      %1619 = vmatmul.mubr.bf16.gmra.mrb[0].mxu0 %v818
      %v1620 = vpop.f32.mrb[0].mxu0
      %v1621 = vadd.f32 %v1332, %v1620
      %v1622 = vpop.f32.mrb[0].mxu0
      %v1623 = vpop.f32.mrb[0].mxu0
      %v1624 = vadd.f32 %v1335, %v1623
      %v1625 = vpop.f32.mrb[0].mxu0
      %1626 = vmatprep.mubr.bf16.mxu0 0
      %1627 = vmatmul.mubr.bf16.gmra.mrb[0].mxu0 %v821
      %v1628 = vpop.f32.mrb[0].mxu0
      %v1629 = vadd.f32 %v1340, %v1628
      %v1630 = vpop.f32.mrb[0].mxu0
      %v1631 = vpop.f32.mrb[0].mxu0
      %v1632 = vadd.f32 %v1343, %v1631
      %v1633 = vpop.f32.mrb[0].mxu0
      %1634 = vmatprep.mubr.bf16.mxu0 0
      %1635 = vmatmul.mubr.bf16.gmra.mrb[0].mxu0 %v824
      %v1636 = vpop.f32.mrb[0].mxu0
      %v1637 = vadd.f32 %v1348, %v1636
      %v1638 = vpop.f32.mrb[0].mxu0
      %v1639 = vpop.f32.mrb[0].mxu0
      %v1640 = vadd.f32 %v1351, %v1639
      %v1641 = vpop.f32.mrb[0].mxu0
      %1642 = vdwg.mxu0
      %v1643 = vmax.f32 %v1389, 0.0
      %v1644 = vmax.f32 %v1392, 0.0
      %v1645 = vmax.f32 %v1397, 0.0
      %v1646 = vmax.f32 %v1400, 0.0
      %v1647 = vmax.f32 %v1405, 0.0
      %v1648 = vmax.f32 %v1408, 0.0
      %v1649 = vmax.f32 %v1413, 0.0
      %v1650 = vmax.f32 %v1416, 0.0
      %v1651 = vmax.f32 %v1421, 0.0
      %v1652 = vmax.f32 %v1424, 0.0
      %v1653 = vmax.f32 %v1429, 0.0
      %v1654 = vmax.f32 %v1432, 0.0
      %v1655 = vmax.f32 %v1437, 0.0
      %v1656 = vmax.f32 %v1440, 0.0
      %v1657 = vmax.f32 %v1445, 0.0
      %v1658 = vmax.f32 %v1448, 0.0
      %v1659 = vmax.f32 %v1453, 0.0
      %v1660 = vmax.f32 %v1456, 0.0
      %v1661 = vmax.f32 %v1461, 0.0
      %v1662 = vmax.f32 %v1464, 0.0
      %v1663 = vmax.f32 %v1469, 0.0
      %v1664 = vmax.f32 %v1472, 0.0
      %v1665 = vmax.f32 %v1477, 0.0
      %v1666 = vmax.f32 %v1480, 0.0
      %v1667 = vmax.f32 %v1485, 0.0
      %v1668 = vmax.f32 %v1488, 0.0
      %v1669 = vmax.f32 %v1493, 0.0
      %v1670 = vmax.f32 %v1496, 0.0
      %v1671 = vmax.f32 %v1501, 0.0
      %v1672 = vmax.f32 %v1504, 0.0
      %v1673 = vmax.f32 %v1509, 0.0
      %v1674 = vmax.f32 %v1512, 0.0
      %v1675 = vmax.f32 %v1517, 0.0
      %v1676 = vmax.f32 %v1520, 0.0
      %v1677 = vmax.f32 %v1525, 0.0
      %v1678 = vmax.f32 %v1528, 0.0
      %v1679 = vmax.f32 %v1533, 0.0
      %v1680 = vmax.f32 %v1536, 0.0
      %v1681 = vmax.f32 %v1541, 0.0
      %v1682 = vmax.f32 %v1544, 0.0
      %v1683 = vmax.f32 %v1549, 0.0
      %v1684 = vmax.f32 %v1552, 0.0
      %v1685 = vmax.f32 %v1557, 0.0
      %v1686 = vmax.f32 %v1560, 0.0
      %v1687 = vmax.f32 %v1565, 0.0
      %v1688 = vmax.f32 %v1568, 0.0
      %v1689 = vmax.f32 %v1573, 0.0
      %v1690 = vmax.f32 %v1576, 0.0
      %v1691 = vmax.f32 %v1581, 0.0
      %v1692 = vmax.f32 %v1584, 0.0
      %v1693 = vmax.f32 %v1589, 0.0
      %v1694 = vmax.f32 %v1592, 0.0
      %v1695 = vmax.f32 %v1597, 0.0
      %v1696 = vmax.f32 %v1600, 0.0
      %v1697 = vmax.f32 %v1605, 0.0
      %v1698 = vmax.f32 %v1608, 0.0
      %v1699 = vmax.f32 %v1613, 0.0
      %v1700 = vmax.f32 %v1616, 0.0
      %v1701 = vmax.f32 %v1621, 0.0
      %v1702 = vmax.f32 %v1624, 0.0
      %v1703 = vmax.f32 %v1629, 0.0
      %v1704 = vmax.f32 %v1632, 0.0
      %v1705 = vmax.f32 %v1637, 0.0
      %v1706 = vmax.f32 %v1640, 0.0
      %v1707 = vpack.c.bf16 %v1644, %v1643
      %v1708 = vpack.c.bf16 %v1646, %v1645
      %v1709 = vpack.c.bf16 %v1648, %v1647
      %v1710 = vpack.c.bf16 %v1650, %v1649
      %v1711 = vpack.c.bf16 %v1652, %v1651
      %v1712 = vpack.c.bf16 %v1654, %v1653
      %v1713 = vpack.c.bf16 %v1656, %v1655
      %v1714 = vpack.c.bf16 %v1658, %v1657
      %v1715 = vpack.c.bf16 %v1660, %v1659
      %v1716 = vpack.c.bf16 %v1662, %v1661
      %v1717 = vpack.c.bf16 %v1664, %v1663
      %v1718 = vpack.c.bf16 %v1666, %v1665
      %v1719 = vpack.c.bf16 %v1668, %v1667
      %v1720 = vpack.c.bf16 %v1670, %v1669
      %v1721 = vpack.c.bf16 %v1672, %v1671
      %v1722 = vpack.c.bf16 %v1674, %v1673
      %v1723 = vpack.c.bf16 %v1676, %v1675
      %v1724 = vpack.c.bf16 %v1678, %v1677
      %v1725 = vpack.c.bf16 %v1680, %v1679
      %v1726 = vpack.c.bf16 %v1682, %v1681
      %v1727 = vpack.c.bf16 %v1684, %v1683
      %v1728 = vpack.c.bf16 %v1686, %v1685
      %v1729 = vpack.c.bf16 %v1688, %v1687
      %v1730 = vpack.c.bf16 %v1690, %v1689
      %v1731 = vpack.c.bf16 %v1692, %v1691
      %v1732 = vpack.c.bf16 %v1694, %v1693
      %v1733 = vpack.c.bf16 %v1696, %v1695
      %v1734 = vpack.c.bf16 %v1698, %v1697
      %v1735 = vpack.c.bf16 %v1700, %v1699
      %v1736 = vpack.c.bf16 %v1702, %v1701
      %v1737 = vpack.c.bf16 %v1704, %v1703
      %v1738 = vpack.c.bf16 %v1706, %v1705
      %vm1739 = vcmask 523264
      %1740 = vst.msk [vmem:[#allocation2] sm:$0xff] %vm1739, %v1707
      %1741 = vst.msk [vmem:[#allocation2 + $0x8] sm:$0xff] %vm1739, %v1708
      %1742 = vst.msk [vmem:[#allocation2 + $0x10] sm:$0xff] %vm1739, %v1709
      %1743 = vst.msk [vmem:[#allocation2 + $0x18] sm:$0xff] %vm1739, %v1710
      %1744 = vst.msk [vmem:[#allocation2 + $0x20] sm:$0xff] %vm1739, %v1711
      %1745 = vst.msk [vmem:[#allocation2 + $0x28] sm:$0xff] %vm1739, %v1712
      %1746 = vst.msk [vmem:[#allocation2 + $0x30] sm:$0xff] %vm1739, %v1713
      %1747 = vst.msk [vmem:[#allocation2 + $0x38] sm:$0xff] %vm1739, %v1714
      %1748 = vst.msk [vmem:[#allocation2 + $0x40] sm:$0xff] %vm1739, %v1715
      %1749 = vst.msk [vmem:[#allocation2 + $0x48] sm:$0xff] %vm1739, %v1716
      %1750 = vst.msk [vmem:[#allocation2 + $0x50] sm:$0xff] %vm1739, %v1717
      %1751 = vst.msk [vmem:[#allocation2 + $0x58] sm:$0xff] %vm1739, %v1718
      %1752 = vst.msk [vmem:[#allocation2 + $0x60] sm:$0xff] %vm1739, %v1719
      %1753 = vst.msk [vmem:[#allocation2 + $0x68] sm:$0xff] %vm1739, %v1720
      %1754 = vst.msk [vmem:[#allocation2 + $0x70] sm:$0xff] %vm1739, %v1721
      %1755 = vst.msk [vmem:[#allocation2 + $0x78] sm:$0xff] %vm1739, %v1722
      %1756 = vst.msk [vmem:[#allocation2 + $0x80] sm:$0xff] %vm1739, %v1723
      %1757 = vst.msk [vmem:[#allocation2 + $0x88] sm:$0xff] %vm1739, %v1724
      %1758 = vst.msk [vmem:[#allocation2 + $0x90] sm:$0xff] %vm1739, %v1725
      %1759 = vst.msk [vmem:[#allocation2 + $0x98] sm:$0xff] %vm1739, %v1726
      %1760 = vst.msk [vmem:[#allocation2 + $0xa0] sm:$0xff] %vm1739, %v1727
      %1761 = vst.msk [vmem:[#allocation2 + $0xa8] sm:$0xff] %vm1739, %v1728
      %1762 = vst.msk [vmem:[#allocation2 + $0xb0] sm:$0xff] %vm1739, %v1729
      %1763 = vst.msk [vmem:[#allocation2 + $0xb8] sm:$0xff] %vm1739, %v1730
      %1764 = vst.msk [vmem:[#allocation2 + $0xc0] sm:$0xff] %vm1739, %v1731
      %1765 = vst.msk [vmem:[#allocation2 + $0xc8] sm:$0xff] %vm1739, %v1732
      %1766 = vst.msk [vmem:[#allocation2 + $0xd0] sm:$0xff] %vm1739, %v1733
      %1767 = vst.msk [vmem:[#allocation2 + $0xd8] sm:$0xff] %vm1739, %v1734
      %1768 = vst.msk [vmem:[#allocation2 + $0xe0] sm:$0xff] %vm1739, %v1735
      %1769 = vst.msk [vmem:[#allocation2 + $0xe8] sm:$0xff] %vm1739, %v1736
      %1770 = vst.msk [vmem:[#allocation2 + $0xf0] sm:$0xff] %vm1739, %v1737
      %1771 = vst.msk [vmem:[#allocation2 + $0xf8] sm:$0xff] %vm1739, %v1738
      %1772 = vst [vmem:[#allocation3] sm:$0xff] 0.0
      %1773 = vst [vmem:[#allocation3 + $0x8] sm:$0xff] 0.0
      %1774 = vst [vmem:[#allocation3 + $0x10] sm:$0xff] 0.0
      %1775 = vst [vmem:[#allocation3 + $0x18] sm:$0xff] 0.0
      %1776 = vst [vmem:[#allocation3 + $0x20] sm:$0xff] 0.0
      %1777 = vst [vmem:[#allocation3 + $0x28] sm:$0xff] 0.0
      %1778 = vst [vmem:[#allocation3 + $0x30] sm:$0xff] 0.0
      %1779 = vst [vmem:[#allocation3 + $0x38] sm:$0xff] 0.0
      %1780 = vst [vmem:[#allocation3 + $0x40] sm:$0xff] 0.0
      %1781 = vst [vmem:[#allocation3 + $0x48] sm:$0xff] 0.0
      %1782 = vst [vmem:[#allocation3 + $0x50] sm:$0xff] 0.0
      %1783 = vst [vmem:[#allocation3 + $0x58] sm:$0xff] 0.0
      %1784 = vst [vmem:[#allocation3 + $0x60] sm:$0xff] 0.0
      %1785 = vst [vmem:[#allocation3 + $0x68] sm:$0xff] 0.0
      %1786 = vst [vmem:[#allocation3 + $0x70] sm:$0xff] 0.0
      %1787 = vst [vmem:[#allocation3 + $0x78] sm:$0xff] 0.0
      %1788 = vst [vmem:[#allocation3 + $0x80] sm:$0xff] 0.0
      %1789 = vst [vmem:[#allocation3 + $0x88] sm:$0xff] 0.0
      %1790 = vst [vmem:[#allocation3 + $0x90] sm:$0xff] 0.0
      %1791 = vst [vmem:[#allocation3 + $0x98] sm:$0xff] 0.0
      %1792 = vst [vmem:[#allocation3 + $0xa0] sm:$0xff] 0.0
      %1793 = vst [vmem:[#allocation3 + $0xa8] sm:$0xff] 0.0
      %1794 = vst [vmem:[#allocation3 + $0xb0] sm:$0xff] 0.0
      %1795 = vst [vmem:[#allocation3 + $0xb8] sm:$0xff] 0.0
      %1796 = vst [vmem:[#allocation3 + $0xc0] sm:$0xff] 0.0
      %1797 = vst [vmem:[#allocation3 + $0xc8] sm:$0xff] 0.0
      %1798 = vst [vmem:[#allocation3 + $0xd0] sm:$0xff] 0.0
      %1799 = vst [vmem:[#allocation3 + $0xd8] sm:$0xff] 0.0
      %1800 = vst [vmem:[#allocation3 + $0xe0] sm:$0xff] 0.0
      %1801 = vst [vmem:[#allocation3 + $0xe8] sm:$0xff] 0.0
      %1802 = vst [vmem:[#allocation3 + $0xf0] sm:$0xff] 0.0
      %1803 = vst [vmem:[#allocation3 + $0xf8] sm:$0xff] 0.0
      %1804 = vst [vmem:[#allocation3 + $0x100] sm:$0xff] 0.0
      %1805 = vst [vmem:[#allocation3 + $0x108] sm:$0xff] 0.0
      %1806 = vst [vmem:[#allocation3 + $0x110] sm:$0xff] 0.0
      %v1807 = vld [vmem:[#allocation2] sm:$0xff]
      %v1808 = vld [vmem:[#allocation2 + $0x8] sm:$0xff]
      %v1809 = vld [vmem:[#allocation2 + $0x10] sm:$0xff]
      %v1810 = vld [vmem:[#allocation2 + $0x18] sm:$0xff]
      %v1811 = vld [vmem:[#allocation2 + $0x20] sm:$0xff]
      %v1812 = vld [vmem:[#allocation2 + $0x28] sm:$0xff]
      %v1813 = vld [vmem:[#allocation2 + $0x30] sm:$0xff]
      %v1814 = vld [vmem:[#allocation2 + $0x38] sm:$0xff]
      %v1815 = vld [vmem:[#allocation2 + $0x40] sm:$0xff]
      %v1816 = vld [vmem:[#allocation2 + $0x48] sm:$0xff]
      %v1817 = vld [vmem:[#allocation2 + $0x50] sm:$0xff]
      %v1818 = vld [vmem:[#allocation2 + $0x58] sm:$0xff]
      %v1819 = vld [vmem:[#allocation2 + $0x60] sm:$0xff]
      %v1820 = vld [vmem:[#allocation2 + $0x68] sm:$0xff]
      %v1821 = vld [vmem:[#allocation2 + $0x70] sm:$0xff]
      %v1822 = vld [vmem:[#allocation2 + $0x78] sm:$0xff]
      %v1823 = vld [vmem:[#allocation2 + $0x80] sm:$0xff]
      %v1824 = vld [vmem:[#allocation2 + $0x88] sm:$0xf]
      %v1825 = vld [vmem:[#allocation2 + $0x88] sm:$0x1f]
      %v1826 = vld [vmem:[#allocation2] sm:$0xfe]
      %vm1827 = vsmask.f32 7424
      %v1829 = vshrl.u32 %v1807, 16
      %v1831 = vshll.u32 %v1807, 16
      %v1833 = vrot.slane %v1831, 1
      %v1834 = vor.u32 %v1829, %v1833
      %v1836 = vshll.u32 %v1808, 16
      %v1838 = vrot.slane %v1836, 1
      %v1839 = vsel %vm1827, %v1834, %v1838
      %v1840 = vshrl.u32 %v1808, 16
      %v1842 = vor.u32 %v1840, %v1838
      %v1844 = vshll.u32 %v1809, 16
      %v1846 = vrot.slane %v1844, 1
      %v1847 = vsel %vm1827, %v1842, %v1846
      %v1848 = vshrl.u32 %v1809, 16
      %v1850 = vor.u32 %v1848, %v1846
      %v1852 = vshll.u32 %v1810, 16
      %v1854 = vrot.slane %v1852, 1
      %v1855 = vsel %vm1827, %v1850, %v1854
      %v1856 = vshrl.u32 %v1810, 16
      %v1858 = vor.u32 %v1856, %v1854
      %v1860 = vshll.u32 %v1811, 16
      %v1862 = vrot.slane %v1860, 1
      %v1863 = vsel %vm1827, %v1858, %v1862
      %v1864 = vshrl.u32 %v1811, 16
      %v1866 = vor.u32 %v1864, %v1862
      %v1868 = vshll.u32 %v1812, 16
      %v1870 = vrot.slane %v1868, 1
      %v1871 = vsel %vm1827, %v1866, %v1870
      %v1872 = vshrl.u32 %v1812, 16
      %v1874 = vor.u32 %v1872, %v1870
      %v1876 = vshll.u32 %v1813, 16
      %v1878 = vrot.slane %v1876, 1
      %v1879 = vsel %vm1827, %v1874, %v1878
      %v1880 = vshrl.u32 %v1813, 16
      %v1882 = vor.u32 %v1880, %v1878
      %v1884 = vshll.u32 %v1814, 16
      %v1886 = vrot.slane %v1884, 1
      %v1887 = vsel %vm1827, %v1882, %v1886
      %v1888 = vshrl.u32 %v1814, 16
      %v1890 = vor.u32 %v1888, %v1886
      %v1892 = vshll.u32 %v1815, 16
      %v1894 = vrot.slane %v1892, 1
      %v1895 = vsel %vm1827, %v1890, %v1894
      %v1896 = vshrl.u32 %v1815, 16
      %v1898 = vor.u32 %v1896, %v1894
      %v1900 = vshll.u32 %v1816, 16
      %v1902 = vrot.slane %v1900, 1
      %v1903 = vsel %vm1827, %v1898, %v1902
      %v1904 = vshrl.u32 %v1816, 16
      %v1906 = vor.u32 %v1904, %v1902
      %v1908 = vshll.u32 %v1817, 16
      %v1910 = vrot.slane %v1908, 1
      %v1911 = vsel %vm1827, %v1906, %v1910
      %v1912 = vshrl.u32 %v1817, 16
      %v1914 = vor.u32 %v1912, %v1910
      %v1916 = vshll.u32 %v1818, 16
      %v1918 = vrot.slane %v1916, 1
      %v1919 = vsel %vm1827, %v1914, %v1918
      %v1920 = vshrl.u32 %v1818, 16
      %v1922 = vor.u32 %v1920, %v1918
      %v1924 = vshll.u32 %v1819, 16
      %v1926 = vrot.slane %v1924, 1
      %v1927 = vsel %vm1827, %v1922, %v1926
      %v1928 = vshrl.u32 %v1819, 16
      %v1930 = vor.u32 %v1928, %v1926
      %v1932 = vshll.u32 %v1820, 16
      %v1934 = vrot.slane %v1932, 1
      %v1935 = vsel %vm1827, %v1930, %v1934
      %v1936 = vshrl.u32 %v1820, 16
      %v1938 = vor.u32 %v1936, %v1934
      %v1940 = vshll.u32 %v1821, 16
      %v1942 = vrot.slane %v1940, 1
      %v1943 = vsel %vm1827, %v1938, %v1942
      %v1944 = vshrl.u32 %v1821, 16
      %v1946 = vor.u32 %v1944, %v1942
      %v1948 = vshll.u32 %v1822, 16
      %v1950 = vrot.slane %v1948, 1
      %v1951 = vsel %vm1827, %v1946, %v1950
      %v1952 = vshrl.u32 %v1822, 16
      %v1954 = vor.u32 %v1952, %v1950
      %v1956 = vshll.u32 %v1823, 16
      %v1958 = vrot.slane %v1956, 1
      %v1959 = vsel %vm1827, %v1954, %v1958
      %v1960 = vshrl.u32 %v1823, 16
      %v1962 = vor.u32 %v1960, %v1958
      %v1964 = vshll.u32 %v1825, 16
      %v1966 = vrot.slane %v1964, 1
      %v1967 = vsel %vm1827, %v1962, %v1966
      %v1968 = vshrl.u32 %v1825, 16
      %v1970 = vor.u32 %v1968, %v1966
      %1971 = vrot.lane.b32.xlu0 %v1839, 64
      %v1972 = vpop.permute.xlu0 %1971
      %1973 = vrot.lane.b32.xlu0 %v1847, 64
      %v1974 = vpop.permute.xlu0 %1973
      %1975 = vrot.lane.b32.xlu0 %v1855, 64
      %v1976 = vpop.permute.xlu0 %1975
      %1977 = vrot.lane.b32.xlu0 %v1863, 64
      %v1978 = vpop.permute.xlu0 %1977
      %1979 = vrot.lane.b32.xlu0 %v1871, 64
      %v1980 = vpop.permute.xlu0 %1979
      %1981 = vrot.lane.b32.xlu0 %v1879, 64
      %v1982 = vpop.permute.xlu0 %1981
      %1983 = vrot.lane.b32.xlu0 %v1887, 64
      %v1984 = vpop.permute.xlu0 %1983
      %1985 = vrot.lane.b32.xlu0 %v1895, 64
      %v1986 = vpop.permute.xlu0 %1985
      %1987 = vrot.lane.b32.xlu0 %v1903, 64
      %v1988 = vpop.permute.xlu0 %1987
      %1989 = vrot.lane.b32.xlu0 %v1911, 64
      %v1990 = vpop.permute.xlu0 %1989
      %1991 = vrot.lane.b32.xlu0 %v1919, 64
      %v1992 = vpop.permute.xlu0 %1991
      %1993 = vrot.lane.b32.xlu0 %v1927, 64
      %v1994 = vpop.permute.xlu0 %1993
      %1995 = vrot.lane.b32.xlu0 %v1935, 64
      %v1996 = vpop.permute.xlu0 %1995
      %1997 = vrot.lane.b32.xlu0 %v1943, 64
      %v1998 = vpop.permute.xlu0 %1997
      %1999 = vrot.lane.b32.xlu0 %v1951, 64
      %v2000 = vpop.permute.xlu0 %1999
      %2001 = vrot.lane.b32.xlu0 %v1959, 64
      %v2002 = vpop.permute.xlu0 %2001
      %2003 = vrot.lane.b32.xlu0 %v1967, 64
      %v2004 = vpop.permute.xlu0 %2003
      %2005 = vrot.lane.b32.xlu0 %v1970, 64
      %v2006 = vpop.permute.xlu0 %2005
      %vm2025 = vcmask 1046528
      %v2026 = vrot.slane %v1826, 1
      %v2027 = vrot.slane %v1808, 1
      %v2028 = vsel %vm2025, %v2026, %v2027
      %v2029 = vrot.slane %v1809, 1
      %v2030 = vsel %vm2025, %v2027, %v2029
      %v2031 = vrot.slane %v1810, 1
      %v2032 = vsel %vm2025, %v2029, %v2031
      %v2033 = vrot.slane %v1811, 1
      %v2034 = vsel %vm2025, %v2031, %v2033
      %v2035 = vrot.slane %v1812, 1
      %v2036 = vsel %vm2025, %v2033, %v2035
      %v2037 = vrot.slane %v1813, 1
      %v2038 = vsel %vm2025, %v2035, %v2037
      %v2039 = vrot.slane %v1814, 1
      %v2040 = vsel %vm2025, %v2037, %v2039
      %v2041 = vrot.slane %v1815, 1
      %v2042 = vsel %vm2025, %v2039, %v2041
      %v2043 = vrot.slane %v1816, 1
      %v2044 = vsel %vm2025, %v2041, %v2043
      %v2045 = vrot.slane %v1817, 1
      %v2046 = vsel %vm2025, %v2043, %v2045
      %v2047 = vrot.slane %v1818, 1
      %v2048 = vsel %vm2025, %v2045, %v2047
      %v2049 = vrot.slane %v1819, 1
      %v2050 = vsel %vm2025, %v2047, %v2049
      %v2051 = vrot.slane %v1820, 1
      %v2052 = vsel %vm2025, %v2049, %v2051
      %v2053 = vrot.slane %v1821, 1
      %v2054 = vsel %vm2025, %v2051, %v2053
      %v2055 = vrot.slane %v1822, 1
      %v2056 = vsel %vm2025, %v2053, %v2055
      %v2057 = vrot.slane %v1823, 1
      %v2058 = vsel %vm2025, %v2055, %v2057
      %v2059 = vrot.slane %v1825, 1
      %v2060 = vsel %vm2025, %v2057, %v2059
      %v2062 = vsel %vm1739, %v1807, %v1972
      %v2065 = vsel %vm1739, %v1808, %v1974
      %v2068 = vsel %vm1739, %v1809, %v1976
      %v2071 = vsel %vm1739, %v1810, %v1978
      %v2074 = vsel %vm1739, %v1811, %v1980
      %v2077 = vsel %vm1739, %v1812, %v1982
      %v2080 = vsel %vm1739, %v1813, %v1984
      %v2083 = vsel %vm1739, %v1814, %v1986
      %v2086 = vsel %vm1739, %v1815, %v1988
      %v2089 = vsel %vm1739, %v1816, %v1990
      %v2092 = vsel %vm1739, %v1817, %v1992
      %v2095 = vsel %vm1739, %v1818, %v1994
      %v2098 = vsel %vm1739, %v1819, %v1996
      %v2101 = vsel %vm1739, %v1820, %v1998
      %v2104 = vsel %vm1739, %v1821, %v2000
      %v2107 = vsel %vm1739, %v1822, %v2002
      %v2110 = vsel %vm1739, %v1823, %v2004
      %v2114 = vsel %vm1739, %v1824, %v2006
      %v2116 = vld [vmem:[#allocation3] sm:$0xff]
      %v2117 = vld [vmem:[#allocation3 + $0x8] sm:$0xff]
      %v2118 = vld [vmem:[#allocation3 + $0x10] sm:$0xff]
      %v2119 = vld [vmem:[#allocation3 + $0x18] sm:$0xff]
      %v2120 = vld [vmem:[#allocation3 + $0x20] sm:$0xff]
      %v2121 = vld [vmem:[#allocation3 + $0x28] sm:$0xff]
      %v2122 = vld [vmem:[#allocation3 + $0x30] sm:$0xff]
      %v2123 = vld [vmem:[#allocation3 + $0x38] sm:$0xff]
      %v2124 = vld [vmem:[#allocation3 + $0x40] sm:$0xff]
      %v2125 = vld [vmem:[#allocation3 + $0x48] sm:$0xff]
      %v2126 = vld [vmem:[#allocation3 + $0x50] sm:$0xff]
      %v2127 = vld [vmem:[#allocation3 + $0x58] sm:$0xff]
      %v2128 = vld [vmem:[#allocation3 + $0x60] sm:$0xff]
      %v2129 = vld [vmem:[#allocation3 + $0x68] sm:$0xff]
      %v2130 = vld [vmem:[#allocation3 + $0x70] sm:$0xff]
      %v2131 = vld [vmem:[#allocation3 + $0x78] sm:$0xff]
      %v2132 = vld [vmem:[#allocation3 + $0x80] sm:$0xff]
      %v2133 = vld [vmem:[#allocation3 + $0x88] sm:$0xff]
      %v2134 = vld [vmem:[#allocation3 + $0x90] sm:$0xff]
      %v2135 = vld [vmem:[#allocation3 + $0x98] sm:$0xff]
      %v2136 = vld [vmem:[#allocation3 + $0xa0] sm:$0xff]
      %v2137 = vld [vmem:[#allocation3 + $0xa8] sm:$0xff]
      %v2138 = vld [vmem:[#allocation3 + $0xb0] sm:$0xff]
      %v2139 = vld [vmem:[#allocation3 + $0xb8] sm:$0xff]
      %v2140 = vld [vmem:[#allocation3 + $0xc0] sm:$0xff]
      %v2141 = vld [vmem:[#allocation3 + $0xc8] sm:$0xff]
      %v2142 = vld [vmem:[#allocation3 + $0xd0] sm:$0xff]
      %v2143 = vld [vmem:[#allocation3 + $0xd8] sm:$0xff]
      %v2144 = vld [vmem:[#allocation3 + $0xe0] sm:$0xff]
      %v2145 = vld [vmem:[#allocation3 + $0xe8] sm:$0xff]
      %v2146 = vld [vmem:[#allocation3 + $0xf0] sm:$0xff]
      %v2147 = vld [vmem:[#allocation3 + $0xf8] sm:$0xff]
      %v2148 = vld [vmem:[#allocation3 + $0x100] sm:$0xff]
      %v2149 = vld [vmem:[#allocation3 + $0x108] sm:$0xff]
      %v2150 = vld [vmem:[#allocation3 + $0x110] sm:$0xff]
      %v2151 = vld [vmem:[%s3] sm:$0xf]
      %v2152 = vld [vmem:[%s3 + $0x4] sm:$0xf]
      %v2153 = vld [vmem:[%s3 + $0x8] sm:$0xf]
      %v2154 = vld [vmem:[%s3 + $0xc] sm:$0xf]
      %v2155 = vld [vmem:[%s3 + $0x10] sm:$0xf]
      %v2156 = vld [vmem:[%s3 + $0x14] sm:$0xf]
      %v2157 = vld [vmem:[%s3 + $0x18] sm:$0xf]
      %v2158 = vld [vmem:[%s3 + $0x1c] sm:$0xf]
      %v2159 = vld [vmem:[%s3 + $0x20] sm:$0xf]
      %v2160 = vld [vmem:[%s3 + $0x24] sm:$0xf]
      %v2161 = vld [vmem:[%s3 + $0x28] sm:$0xf]
      %v2162 = vld [vmem:[%s3 + $0x2c] sm:$0xf]
      %v2163 = vld [vmem:[%s3 + $0x30] sm:$0xf]
      %v2164 = vld [vmem:[%s3 + $0x34] sm:$0xf]
      %v2165 = vld [vmem:[%s3 + $0x38] sm:$0xf]
      %v2166 = vld [vmem:[%s3 + $0x3c] sm:$0xf]
      %v2167 = vld [vmem:[%s3 + $0x40] sm:$0xf]
      %v2168 = vld [vmem:[%s3 + $0x44] sm:$0xf]
      %v2169 = vld [vmem:[%s3 + $0x48] sm:$0xf]
      %v2170 = vld [vmem:[%s3 + $0x4c] sm:$0xf]
      %v2171 = vld [vmem:[%s3 + $0x50] sm:$0xf]
      %v2172 = vld [vmem:[%s3 + $0x54] sm:$0xf]
      %v2173 = vld [vmem:[%s3 + $0x58] sm:$0xf]
      %v2174 = vld [vmem:[%s3 + $0x5c] sm:$0xf]
      %v2199 = vunpack.c.l.b16 %v2151
      %v2200 = vunpack.c.l.b16 %v2152
      %v2201 = vunpack.c.l.b16 %v2153
      %v2202 = vunpack.c.l.b16 %v2154
      %v2203 = vunpack.c.l.b16 %v2155
      %v2204 = vunpack.c.l.b16 %v2156
      %v2205 = vunpack.c.l.b16 %v2157
      %v2206 = vunpack.c.l.b16 %v2158
      %v2207 = vunpack.c.l.b16 %v2159
      %v2208 = vunpack.c.l.b16 %v2160
      %v2209 = vunpack.c.l.b16 %v2161
      %v2210 = vunpack.c.l.b16 %v2162
      %v2211 = vunpack.c.l.b16 %v2163
      %v2212 = vunpack.c.l.b16 %v2164
      %v2213 = vunpack.c.l.b16 %v2165
      %v2214 = vunpack.c.l.b16 %v2166
      %v2215 = vunpack.c.l.b16 %v2167
      %v2216 = vunpack.c.l.b16 %v2168
      %v2217 = vunpack.c.l.b16 %v2169
      %v2218 = vunpack.c.l.b16 %v2170
      %v2219 = vunpack.c.l.b16 %v2171
      %v2220 = vunpack.c.l.b16 %v2172
      %v2221 = vunpack.c.l.b16 %v2173
      %v2222 = vunpack.c.l.b16 %v2174
      %v2223 = vpack.c.b16 %v2200, %v2199
      %v2224 = vpack.c.b16 %v2202, %v2201
      %v2225 = vpack.c.b16 %v2204, %v2203
      %v2226 = vpack.c.b16 %v2206, %v2205
      %v2227 = vpack.c.b16 %v2208, %v2207
      %v2228 = vpack.c.b16 %v2210, %v2209
      %v2229 = vpack.c.b16 %v2212, %v2211
      %v2230 = vpack.c.b16 %v2214, %v2213
      %v2231 = vpack.c.b16 %v2216, %v2215
      %v2232 = vpack.c.b16 %v2218, %v2217
      %v2233 = vpack.c.b16 %v2220, %v2219
      %v2234 = vpack.c.b16 %v2222, %v2221
      %v2248 = vsel %vm1739, %v2028, 0
      %v2251 = vsel %vm1739, %v2030, 0
      %v2254 = vsel %vm1739, %v2032, 0
      %v2257 = vsel %vm1739, %v2034, 0
      %v2260 = vsel %vm1739, %v2036, 0
      %v2263 = vsel %vm1739, %v2038, 0
      %v2266 = vsel %vm1739, %v2040, 0
      %v2269 = vsel %vm1739, %v2042, 0
      %v2272 = vsel %vm1739, %v2044, 0
      %v2275 = vsel %vm1739, %v2046, 0
      %v2278 = vsel %vm1739, %v2048, 0
      %v2281 = vsel %vm1739, %v2050, 0
      %v2284 = vsel %vm1739, %v2052, 0
      %v2287 = vsel %vm1739, %v2054, 0
      %v2290 = vsel %vm1739, %v2056, 0
      %v2293 = vsel %vm1739, %v2058, 0
      %v2296 = vsel %vm1739, %v2060, 0
      %v2299 = vsel %vm1739, %v2059, 0
      %2301 = vmatprep.subr.bf16.mxu0 0
      %2302 = vmatpush1.bf16.msra.mxu0 %v2223
      %2303 = vmatprep.subr.bf16.mxu0 0
      %2304 = vmatpush1.bf16.msra.mxu0 %v2224
      %2305 = vmatprep.subr.bf16.mxu0 0
      %2306 = vmatpush1.bf16.msra.mxu0 %v2225
      %2307 = vmatprep.subr.bf16.mxu0 0
      %2308 = vmatpush1.bf16.msra.mxu0 %v2226
      %2309 = vmatprep.subr.bf16.mxu0 0
      %2310 = vmatpush1.bf16.msra.mxu0 %v2227
      %2311 = vmatprep.subr.bf16.mxu0 0
      %2312 = vmatpush1.bf16.msra.mxu0 %v2228
      %2313 = vmatprep.subr.bf16.mxu0 0
      %2314 = vmatpush1.bf16.msra.mxu0 %v2229
      %2315 = vmatprep.subr.bf16.mxu0 0
      %2316 = vmatpush1.bf16.msra.mxu0 %v2230
      %2317 = vmatprep.subr.bf16.mxu0 0
      %2318 = vmatpush1.bf16.msra.mxu0 %v2231
      %2319 = vmatprep.subr.bf16.mxu0 0
      %2320 = vmatpush1.bf16.msra.mxu0 %v2232
      %2321 = vmatprep.subr.bf16.mxu0 0
      %2322 = vmatpush1.bf16.msra.mxu0 %v2233
      %2323 = vmatprep.subr.bf16.mxu0 0
      %2324 = vmatpush1.bf16.msra.mxu0 %v2234
      %2325 = vmatprep.subr.bf16.mxu0 0
      %2326 = vmatpush1.bf16.msra.mxu0 0
      %2327 = vmatprep.subr.bf16.mxu0 0
      %2328 = vmatpush1.bf16.msra.mxu0 0
      %2329 = vmatprep.subr.bf16.mxu0 0
      %2330 = vmatpush1.bf16.msra.mxu0 0
      %2331 = vmatprep.subr.bf16.mxu0 0
      %2332 = vmatpush1.bf16.msra.mxu0 0
      %2333 = vmatprep.mubr.bf16.mxu0 %v2248
      %2334 = vmatmul.mubr.bf16.gmra.mrb[0].mxu0 %v2062
      %v2335 = vpop.f32.mrb[0].mxu0
      %v2336 = vadd.f32 0.0, %v2335
      %v2337 = vpop.f32.mrb[0].mxu0
      %v2338 = vpop.f32.mrb[0].mxu0
      %v2339 = vadd.f32 0.0, %v2338
      %v2340 = vpop.f32.mrb[0].mxu0
      %2341 = vmatprep.mubr.bf16.mxu0 %v2251
      %2342 = vmatmul.mubr.bf16.gmra.mrb[0].mxu0 %v2065
      %v2343 = vpop.f32.mrb[0].mxu0
      %v2344 = vadd.f32 0.0, %v2343
      %v2345 = vpop.f32.mrb[0].mxu0
      %v2346 = vpop.f32.mrb[0].mxu0
      %v2347 = vadd.f32 0.0, %v2346
      %v2348 = vpop.f32.mrb[0].mxu0
      %2349 = vmatprep.mubr.bf16.mxu0 %v2254
      %2350 = vmatmul.mubr.bf16.gmra.mrb[0].mxu0 %v2068
      %v2351 = vpop.f32.mrb[0].mxu0
      %v2352 = vadd.f32 0.0, %v2351
      %v2353 = vpop.f32.mrb[0].mxu0
      %v2354 = vpop.f32.mrb[0].mxu0
      %v2355 = vadd.f32 0.0, %v2354
      %v2356 = vpop.f32.mrb[0].mxu0
      %2357 = vmatprep.mubr.bf16.mxu0 %v2257
      %2358 = vmatmul.mubr.bf16.gmra.mrb[0].mxu0 %v2071
      %v2359 = vpop.f32.mrb[0].mxu0
      %v2360 = vadd.f32 0.0, %v2359
      %v2361 = vpop.f32.mrb[0].mxu0
      %v2362 = vpop.f32.mrb[0].mxu0
      %v2363 = vadd.f32 0.0, %v2362
      %v2364 = vpop.f32.mrb[0].mxu0
      %2365 = vmatprep.mubr.bf16.mxu0 %v2260
      %2366 = vmatmul.mubr.bf16.gmra.mrb[0].mxu0 %v2074
      %v2367 = vpop.f32.mrb[0].mxu0
      %v2368 = vadd.f32 0.0, %v2367
      %v2369 = vpop.f32.mrb[0].mxu0
      %v2370 = vpop.f32.mrb[0].mxu0
      %v2371 = vadd.f32 0.0, %v2370
      %v2372 = vpop.f32.mrb[0].mxu0
      %2373 = vmatprep.mubr.bf16.mxu0 %v2263
      %2374 = vmatmul.mubr.bf16.gmra.mrb[0].mxu0 %v2077
      %v2375 = vpop.f32.mrb[0].mxu0
      %v2376 = vadd.f32 0.0, %v2375
      %v2377 = vpop.f32.mrb[0].mxu0
      %v2378 = vpop.f32.mrb[0].mxu0
      %v2379 = vadd.f32 0.0, %v2378
      %v2380 = vpop.f32.mrb[0].mxu0
      %2381 = vmatprep.mubr.bf16.mxu0 %v2266
      %2382 = vmatmul.mubr.bf16.gmra.mrb[0].mxu0 %v2080
      %v2383 = vpop.f32.mrb[0].mxu0
      %v2384 = vadd.f32 0.0, %v2383
      %v2385 = vpop.f32.mrb[0].mxu0
      %v2386 = vpop.f32.mrb[0].mxu0
      %v2387 = vadd.f32 0.0, %v2386
      %v2388 = vpop.f32.mrb[0].mxu0
      %2389 = vmatprep.mubr.bf16.mxu0 %v2269
      %2390 = vmatmul.mubr.bf16.gmra.mrb[0].mxu0 %v2083
      %v2391 = vpop.f32.mrb[0].mxu0
      %v2392 = vadd.f32 0.0, %v2391
      %v2393 = vpop.f32.mrb[0].mxu0
      %v2394 = vpop.f32.mrb[0].mxu0
      %v2395 = vadd.f32 0.0, %v2394
      %v2396 = vpop.f32.mrb[0].mxu0
      %2397 = vmatprep.mubr.bf16.mxu0 %v2272
      %2398 = vmatmul.mubr.bf16.gmra.mrb[0].mxu0 %v2086
      %v2399 = vpop.f32.mrb[0].mxu0
      %v2400 = vadd.f32 0.0, %v2399
      %v2401 = vpop.f32.mrb[0].mxu0
      %v2402 = vpop.f32.mrb[0].mxu0
      %v2403 = vadd.f32 0.0, %v2402
      %v2404 = vpop.f32.mrb[0].mxu0
      %2405 = vmatprep.mubr.bf16.mxu0 %v2275
      %2406 = vmatmul.mubr.bf16.gmra.mrb[0].mxu0 %v2089
      %v2407 = vpop.f32.mrb[0].mxu0
      %v2408 = vadd.f32 0.0, %v2407
      %v2409 = vpop.f32.mrb[0].mxu0
      %v2410 = vpop.f32.mrb[0].mxu0
      %v2411 = vadd.f32 0.0, %v2410
      %v2412 = vpop.f32.mrb[0].mxu0
      %2413 = vmatprep.mubr.bf16.mxu0 %v2278
      %2414 = vmatmul.mubr.bf16.gmra.mrb[0].mxu0 %v2092
      %v2415 = vpop.f32.mrb[0].mxu0
      %v2416 = vadd.f32 0.0, %v2415
      %v2417 = vpop.f32.mrb[0].mxu0
      %v2418 = vpop.f32.mrb[0].mxu0
      %v2419 = vadd.f32 0.0, %v2418
      %v2420 = vpop.f32.mrb[0].mxu0
      %2421 = vmatprep.mubr.bf16.mxu0 %v2281
      %2422 = vmatmul.mubr.bf16.gmra.mrb[0].mxu0 %v2095
      %v2423 = vpop.f32.mrb[0].mxu0
      %v2424 = vadd.f32 0.0, %v2423
      %v2425 = vpop.f32.mrb[0].mxu0
      %v2426 = vpop.f32.mrb[0].mxu0
      %v2427 = vadd.f32 0.0, %v2426
      %v2428 = vpop.f32.mrb[0].mxu0
      %2429 = vmatprep.mubr.bf16.mxu0 %v2284
      %2430 = vmatmul.mubr.bf16.gmra.mrb[0].mxu0 %v2098
      %v2431 = vpop.f32.mrb[0].mxu0
      %v2432 = vadd.f32 0.0, %v2431
      %v2433 = vpop.f32.mrb[0].mxu0
      %v2434 = vpop.f32.mrb[0].mxu0
      %v2435 = vadd.f32 0.0, %v2434
      %v2436 = vpop.f32.mrb[0].mxu0
      %2437 = vmatprep.mubr.bf16.mxu0 %v2287
      %2438 = vmatmul.mubr.bf16.gmra.mrb[0].mxu0 %v2101
      %v2439 = vpop.f32.mrb[0].mxu0
      %v2440 = vadd.f32 0.0, %v2439
      %v2441 = vpop.f32.mrb[0].mxu0
      %v2442 = vpop.f32.mrb[0].mxu0
      %v2443 = vadd.f32 0.0, %v2442
      %v2444 = vpop.f32.mrb[0].mxu0
      %2445 = vmatprep.mubr.bf16.mxu0 %v2290
      %2446 = vmatmul.mubr.bf16.gmra.mrb[0].mxu0 %v2104
      %v2447 = vpop.f32.mrb[0].mxu0
      %v2448 = vadd.f32 0.0, %v2447
      %v2449 = vpop.f32.mrb[0].mxu0
      %v2450 = vpop.f32.mrb[0].mxu0
      %v2451 = vadd.f32 0.0, %v2450
      %v2452 = vpop.f32.mrb[0].mxu0
      %2453 = vmatprep.mubr.bf16.mxu0 %v2293
      %2454 = vmatmul.mubr.bf16.gmra.mrb[0].mxu0 %v2107
      %v2455 = vpop.f32.mrb[0].mxu0
      %v2456 = vadd.f32 0.0, %v2455
      %v2457 = vpop.f32.mrb[0].mxu0
      %v2458 = vpop.f32.mrb[0].mxu0
      %v2459 = vadd.f32 0.0, %v2458
      %v2460 = vpop.f32.mrb[0].mxu0
      %2461 = vmatprep.mubr.bf16.mxu0 %v2296
      %2462 = vmatmul.mubr.bf16.gmra.mrb[0].mxu0 %v2110
      %v2463 = vpop.f32.mrb[0].mxu0
      %v2464 = vadd.f32 0.0, %v2463
      %v2465 = vpop.f32.mrb[0].mxu0
      %v2466 = vpop.f32.mrb[0].mxu0
      %v2467 = vadd.f32 0.0, %v2466
      %v2468 = vpop.f32.mrb[0].mxu0
      %2469 = vmatprep.mubr.bf16.mxu0 %v2299
      %2470 = vmatmul.mubr.bf16.gmra.mrb[0].mxu0 %v2114
      %v2471 = vpop.f32.mrb[0].mxu0
      %v2472 = vadd.f32 0.0, %v2471
      %v2473 = vpop.f32.mrb[0].mxu0
      %v2474 = vpop.f32.mrb[0].mxu0
      %v2475 = vpop.f32.mrb[0].mxu0
      %2476 = vdwg.mxu0
      %v2477 = vadd.f32 %v2116, %v2336
      %v2478 = vadd.f32 %v2117, %v2339
      %v2479 = vadd.f32 %v2118, %v2344
      %v2480 = vadd.f32 %v2119, %v2347
      %v2481 = vadd.f32 %v2120, %v2352
      %v2482 = vadd.f32 %v2121, %v2355
      %v2483 = vadd.f32 %v2122, %v2360
      %v2484 = vadd.f32 %v2123, %v2363
      %v2485 = vadd.f32 %v2124, %v2368
      %v2486 = vadd.f32 %v2125, %v2371
      %v2487 = vadd.f32 %v2126, %v2376
      %v2488 = vadd.f32 %v2127, %v2379
      %v2489 = vadd.f32 %v2128, %v2384
      %v2490 = vadd.f32 %v2129, %v2387
      %v2491 = vadd.f32 %v2130, %v2392
      %v2492 = vadd.f32 %v2131, %v2395
      %v2493 = vadd.f32 %v2132, %v2400
      %v2494 = vadd.f32 %v2133, %v2403
      %v2495 = vadd.f32 %v2134, %v2408
      %v2496 = vadd.f32 %v2135, %v2411
      %v2497 = vadd.f32 %v2136, %v2416
      %v2498 = vadd.f32 %v2137, %v2419
      %v2499 = vadd.f32 %v2138, %v2424
      %v2500 = vadd.f32 %v2139, %v2427
      %v2501 = vadd.f32 %v2140, %v2432
      %v2502 = vadd.f32 %v2141, %v2435
      %v2503 = vadd.f32 %v2142, %v2440
      %v2504 = vadd.f32 %v2143, %v2443
      %v2505 = vadd.f32 %v2144, %v2448
      %v2506 = vadd.f32 %v2145, %v2451
      %v2507 = vadd.f32 %v2146, %v2456
      %v2508 = vadd.f32 %v2147, %v2459
      %v2509 = vadd.f32 %v2148, %v2464
      %v2510 = vadd.f32 %v2149, %v2467
      %v2511 = vadd.f32 %v2150, %v2472
      %2512 = vst [vmem:[#allocation3] sm:$0xff] %v2477
      %2513 = vst [vmem:[#allocation3 + $0x8] sm:$0xff] %v2478
      %2514 = vst [vmem:[#allocation3 + $0x10] sm:$0xff] %v2479
      %2515 = vst [vmem:[#allocation3 + $0x18] sm:$0xff] %v2480
      %2516 = vst [vmem:[#allocation3 + $0x20] sm:$0xff] %v2481
      %2517 = vst [vmem:[#allocation3 + $0x28] sm:$0xff] %v2482
      %2518 = vst [vmem:[#allocation3 + $0x30] sm:$0xff] %v2483
      %2519 = vst [vmem:[#allocation3 + $0x38] sm:$0xff] %v2484
      %2520 = vst [vmem:[#allocation3 + $0x40] sm:$0xff] %v2485
      %2521 = vst [vmem:[#allocation3 + $0x48] sm:$0xff] %v2486
      %2522 = vst [vmem:[#allocation3 + $0x50] sm:$0xff] %v2487
      %2523 = vst [vmem:[#allocation3 + $0x58] sm:$0xff] %v2488
      %2524 = vst [vmem:[#allocation3 + $0x60] sm:$0xff] %v2489
      %2525 = vst [vmem:[#allocation3 + $0x68] sm:$0xff] %v2490
      %2526 = vst [vmem:[#allocation3 + $0x70] sm:$0xff] %v2491
      %2527 = vst [vmem:[#allocation3 + $0x78] sm:$0xff] %v2492
      %2528 = vst [vmem:[#allocation3 + $0x80] sm:$0xff] %v2493
      %2529 = vst [vmem:[#allocation3 + $0x88] sm:$0xff] %v2494
      %2530 = vst [vmem:[#allocation3 + $0x90] sm:$0xff] %v2495
      %2531 = vst [vmem:[#allocation3 + $0x98] sm:$0xff] %v2496
      %2532 = vst [vmem:[#allocation3 + $0xa0] sm:$0xff] %v2497
      %2533 = vst [vmem:[#allocation3 + $0xa8] sm:$0xff] %v2498
      %2534 = vst [vmem:[#allocation3 + $0xb0] sm:$0xff] %v2499
      %2535 = vst [vmem:[#allocation3 + $0xb8] sm:$0xff] %v2500
      %2536 = vst [vmem:[#allocation3 + $0xc0] sm:$0xff] %v2501
      %2537 = vst [vmem:[#allocation3 + $0xc8] sm:$0xff] %v2502
      %2538 = vst [vmem:[#allocation3 + $0xd0] sm:$0xff] %v2503
      %2539 = vst [vmem:[#allocation3 + $0xd8] sm:$0xff] %v2504
      %2540 = vst [vmem:[#allocation3 + $0xe0] sm:$0xff] %v2505
      %2541 = vst [vmem:[#allocation3 + $0xe8] sm:$0xff] %v2506
      %2542 = vst [vmem:[#allocation3 + $0xf0] sm:$0xff] %v2507
      %2543 = vst [vmem:[#allocation3 + $0xf8] sm:$0xff] %v2508
      %2544 = vst [vmem:[#allocation3 + $0x100] sm:$0xff] %v2509
      %2545 = vst [vmem:[#allocation3 + $0x108] sm:$0xff] %v2510
      %2546 = vst [vmem:[#allocation3 + $0x110] sm:$0xff] %v2511
      %v2547 = vld [vmem:[#allocation2] sm:$0xe0]
      %v2548 = vld [vmem:[#allocation2 + $0x8] sm:$0xff]
      %v2549 = vld [vmem:[#allocation2 + $0x10] sm:$0xff]
      %v2550 = vld [vmem:[#allocation2 + $0x18] sm:$0xff]
      %v2551 = vld [vmem:[#allocation2 + $0x20] sm:$0xff]
      %v2552 = vld [vmem:[#allocation2 + $0x28] sm:$0xff]
      %v2553 = vld [vmem:[#allocation2 + $0x30] sm:$0xff]
      %v2554 = vld [vmem:[#allocation2 + $0x38] sm:$0xff]
      %v2555 = vld [vmem:[#allocation2 + $0x40] sm:$0xff]
      %v2556 = vld [vmem:[#allocation2 + $0x48] sm:$0xff]
      %v2557 = vld [vmem:[#allocation2 + $0x50] sm:$0xff]
      %v2558 = vld [vmem:[#allocation2 + $0x58] sm:$0xff]
      %v2559 = vld [vmem:[#allocation2 + $0x60] sm:$0xff]
      %v2560 = vld [vmem:[#allocation2 + $0x68] sm:$0xff]
      %v2561 = vld [vmem:[#allocation2 + $0x70] sm:$0xff]
      %v2562 = vld [vmem:[#allocation2 + $0x78] sm:$0xff]
      %v2563 = vld [vmem:[#allocation2 + $0x80] sm:$0xff]
      %v2564 = vld [vmem:[#allocation2 + $0x88] sm:$0xff]
      %v2565 = vld [vmem:[#allocation2 + $0x90] sm:$0x1]
      %v2566 = vld [vmem:[#allocation2 + $0x90] sm:$0x3]
      %v2567 = vld [vmem:[#allocation2] sm:$0xc0]
      %v2569 = vshrl.u32 %v2547, 16
      %v2571 = vshll.u32 %v2547, 16
      %v2573 = vrot.slane %v2571, 1
      %v2574 = vor.u32 %v2569, %v2573
      %v2576 = vshll.u32 %v2548, 16
      %v2578 = vrot.slane %v2576, 1
      %v2579 = vsel %vm1827, %v2574, %v2578
      %v2580 = vshrl.u32 %v2548, 16
      %v2582 = vor.u32 %v2580, %v2578
      %v2584 = vshll.u32 %v2549, 16
      %v2586 = vrot.slane %v2584, 1
      %v2587 = vsel %vm1827, %v2582, %v2586
      %v2588 = vshrl.u32 %v2549, 16
      %v2590 = vor.u32 %v2588, %v2586
      %v2592 = vshll.u32 %v2550, 16
      %v2594 = vrot.slane %v2592, 1
      %v2595 = vsel %vm1827, %v2590, %v2594
      %v2596 = vshrl.u32 %v2550, 16
      %v2598 = vor.u32 %v2596, %v2594
      %v2600 = vshll.u32 %v2551, 16
      %v2602 = vrot.slane %v2600, 1
      %v2603 = vsel %vm1827, %v2598, %v2602
      %v2604 = vshrl.u32 %v2551, 16
      %v2606 = vor.u32 %v2604, %v2602
      %v2608 = vshll.u32 %v2552, 16
      %v2610 = vrot.slane %v2608, 1
      %v2611 = vsel %vm1827, %v2606, %v2610
      %v2612 = vshrl.u32 %v2552, 16
      %v2614 = vor.u32 %v2612, %v2610
      %v2616 = vshll.u32 %v2553, 16
      %v2618 = vrot.slane %v2616, 1
      %v2619 = vsel %vm1827, %v2614, %v2618
      %v2620 = vshrl.u32 %v2553, 16
      %v2622 = vor.u32 %v2620, %v2618
      %v2624 = vshll.u32 %v2554, 16
      %v2626 = vrot.slane %v2624, 1
      %v2627 = vsel %vm1827, %v2622, %v2626
      %v2628 = vshrl.u32 %v2554, 16
      %v2630 = vor.u32 %v2628, %v2626
      %v2632 = vshll.u32 %v2555, 16
      %v2634 = vrot.slane %v2632, 1
      %v2635 = vsel %vm1827, %v2630, %v2634
      %v2636 = vshrl.u32 %v2555, 16
      %v2638 = vor.u32 %v2636, %v2634
      %v2640 = vshll.u32 %v2556, 16
      %v2642 = vrot.slane %v2640, 1
      %v2643 = vsel %vm1827, %v2638, %v2642
      %v2644 = vshrl.u32 %v2556, 16
      %v2646 = vor.u32 %v2644, %v2642
      %v2648 = vshll.u32 %v2557, 16
      %v2650 = vrot.slane %v2648, 1
      %v2651 = vsel %vm1827, %v2646, %v2650
      %v2652 = vshrl.u32 %v2557, 16
      %v2654 = vor.u32 %v2652, %v2650
      %v2656 = vshll.u32 %v2558, 16
      %v2658 = vrot.slane %v2656, 1
      %v2659 = vsel %vm1827, %v2654, %v2658
      %v2660 = vshrl.u32 %v2558, 16
      %v2662 = vor.u32 %v2660, %v2658
      %v2664 = vshll.u32 %v2559, 16
      %v2666 = vrot.slane %v2664, 1
      %v2667 = vsel %vm1827, %v2662, %v2666
      %v2668 = vshrl.u32 %v2559, 16
      %v2670 = vor.u32 %v2668, %v2666
      %v2672 = vshll.u32 %v2560, 16
      %v2674 = vrot.slane %v2672, 1
      %v2675 = vsel %vm1827, %v2670, %v2674
      %v2676 = vshrl.u32 %v2560, 16
      %v2678 = vor.u32 %v2676, %v2674
      %v2680 = vshll.u32 %v2561, 16
      %v2682 = vrot.slane %v2680, 1
      %v2683 = vsel %vm1827, %v2678, %v2682
      %v2684 = vshrl.u32 %v2561, 16
      %v2686 = vor.u32 %v2684, %v2682
      %v2688 = vshll.u32 %v2562, 16
      %v2690 = vrot.slane %v2688, 1
      %v2691 = vsel %vm1827, %v2686, %v2690
      %v2692 = vshrl.u32 %v2562, 16
      %v2694 = vor.u32 %v2692, %v2690
      %v2696 = vshll.u32 %v2563, 16
      %v2698 = vrot.slane %v2696, 1
      %v2699 = vsel %vm1827, %v2694, %v2698
      %v2700 = vshrl.u32 %v2563, 16
      %v2702 = vor.u32 %v2700, %v2698
      %v2704 = vshll.u32 %v2564, 16
      %v2706 = vrot.slane %v2704, 1
      %v2707 = vsel %vm1827, %v2702, %v2706
      %v2708 = vshrl.u32 %v2564, 16
      %v2710 = vor.u32 %v2708, %v2706
      %v2712 = vshll.u32 %v2566, 16
      %v2714 = vrot.slane %v2712, 1
      %v2715 = vsel %vm1827, %v2710, %v2714
      %v2716 = vshrl.u32 %v2566, 16
      %v2718 = vor.u32 %v2716, %v2714
      %2719 = vrot.lane.b32.xlu0 %v2579, 64
      %v2720 = vpop.permute.xlu0 %2719
      %2721 = vrot.lane.b32.xlu0 %v2587, 64
      %v2722 = vpop.permute.xlu0 %2721
      %2723 = vrot.lane.b32.xlu0 %v2595, 64
      %v2724 = vpop.permute.xlu0 %2723
      %2725 = vrot.lane.b32.xlu0 %v2603, 64
      %v2726 = vpop.permute.xlu0 %2725
      %2727 = vrot.lane.b32.xlu0 %v2611, 64
      %v2728 = vpop.permute.xlu0 %2727
      %2729 = vrot.lane.b32.xlu0 %v2619, 64
      %v2730 = vpop.permute.xlu0 %2729
      %2731 = vrot.lane.b32.xlu0 %v2627, 64
      %v2732 = vpop.permute.xlu0 %2731
      %2733 = vrot.lane.b32.xlu0 %v2635, 64
      %v2734 = vpop.permute.xlu0 %2733
      %2735 = vrot.lane.b32.xlu0 %v2643, 64
      %v2736 = vpop.permute.xlu0 %2735
      %2737 = vrot.lane.b32.xlu0 %v2651, 64
      %v2738 = vpop.permute.xlu0 %2737
      %2739 = vrot.lane.b32.xlu0 %v2659, 64
      %v2740 = vpop.permute.xlu0 %2739
      %2741 = vrot.lane.b32.xlu0 %v2667, 64
      %v2742 = vpop.permute.xlu0 %2741
      %2743 = vrot.lane.b32.xlu0 %v2675, 64
      %v2744 = vpop.permute.xlu0 %2743
      %2745 = vrot.lane.b32.xlu0 %v2683, 64
      %v2746 = vpop.permute.xlu0 %2745
      %2747 = vrot.lane.b32.xlu0 %v2691, 64
      %v2748 = vpop.permute.xlu0 %2747
      %2749 = vrot.lane.b32.xlu0 %v2699, 64
      %v2750 = vpop.permute.xlu0 %2749
      %2751 = vrot.lane.b32.xlu0 %v2707, 64
      %v2752 = vpop.permute.xlu0 %2751
      %2753 = vrot.lane.b32.xlu0 %v2715, 64
      %v2754 = vpop.permute.xlu0 %2753
      %2755 = vrot.lane.b32.xlu0 %v2718, 64
      %v2756 = vpop.permute.xlu0 %2755
      %v2776 = vrot.slane %v2567, 1
      %v2777 = vrot.slane %v2548, 1
      %v2778 = vsel %vm2025, %v2776, %v2777
      %v2779 = vrot.slane %v2549, 1
      %v2780 = vsel %vm2025, %v2777, %v2779
      %v2781 = vrot.slane %v2550, 1
      %v2782 = vsel %vm2025, %v2779, %v2781
      %v2783 = vrot.slane %v2551, 1
      %v2784 = vsel %vm2025, %v2781, %v2783
      %v2785 = vrot.slane %v2552, 1
      %v2786 = vsel %vm2025, %v2783, %v2785
      %v2787 = vrot.slane %v2553, 1
      %v2788 = vsel %vm2025, %v2785, %v2787
      %v2789 = vrot.slane %v2554, 1
      %v2790 = vsel %vm2025, %v2787, %v2789
      %v2791 = vrot.slane %v2555, 1
      %v2792 = vsel %vm2025, %v2789, %v2791
      %v2793 = vrot.slane %v2556, 1
      %v2794 = vsel %vm2025, %v2791, %v2793
      %v2795 = vrot.slane %v2557, 1
      %v2796 = vsel %vm2025, %v2793, %v2795
      %v2797 = vrot.slane %v2558, 1
      %v2798 = vsel %vm2025, %v2795, %v2797
      %v2799 = vrot.slane %v2559, 1
      %v2800 = vsel %vm2025, %v2797, %v2799
      %v2801 = vrot.slane %v2560, 1
      %v2802 = vsel %vm2025, %v2799, %v2801
      %v2803 = vrot.slane %v2561, 1
      %v2804 = vsel %vm2025, %v2801, %v2803
      %v2805 = vrot.slane %v2562, 1
      %v2806 = vsel %vm2025, %v2803, %v2805
      %v2807 = vrot.slane %v2563, 1
      %v2808 = vsel %vm2025, %v2805, %v2807
      %v2809 = vrot.slane %v2564, 1
      %v2810 = vsel %vm2025, %v2807, %v2809
      %v2811 = vrot.slane %v2566, 1
      %v2812 = vsel %vm2025, %v2809, %v2811
      %v2814 = vsel %vm1739, %v2547, %v2720
      %v2816 = vsel %vm1739, %v2548, %v2722
      %v2818 = vsel %vm1739, %v2549, %v2724
      %v2820 = vsel %vm1739, %v2550, %v2726
      %v2822 = vsel %vm1739, %v2551, %v2728
      %v2824 = vsel %vm1739, %v2552, %v2730
      %v2826 = vsel %vm1739, %v2553, %v2732
      %v2828 = vsel %vm1739, %v2554, %v2734
      %v2830 = vsel %vm1739, %v2555, %v2736
      %v2832 = vsel %vm1739, %v2556, %v2738
      %v2834 = vsel %vm1739, %v2557, %v2740
      %v2836 = vsel %vm1739, %v2558, %v2742
      %v2838 = vsel %vm1739, %v2559, %v2744
      %v2840 = vsel %vm1739, %v2560, %v2746
      %v2842 = vsel %vm1739, %v2561, %v2748
      %v2844 = vsel %vm1739, %v2562, %v2750
      %v2846 = vsel %vm1739, %v2563, %v2752
      %v2848 = vsel %vm1739, %v2564, %v2754
      %v2851 = vsel %vm1739, %v2565, %v2756
      %v2852 = vld [vmem:[#allocation3] sm:$0xff]
      %v2853 = vld [vmem:[#allocation3 + $0x8] sm:$0xff]
      %v2854 = vld [vmem:[#allocation3 + $0x10] sm:$0xff]
      %v2855 = vld [vmem:[#allocation3 + $0x18] sm:$0xff]
      %v2856 = vld [vmem:[#allocation3 + $0x20] sm:$0xff]
      %v2857 = vld [vmem:[#allocation3 + $0x28] sm:$0xff]
      %v2858 = vld [vmem:[#allocation3 + $0x30] sm:$0xff]
      %v2859 = vld [vmem:[#allocation3 + $0x38] sm:$0xff]
      %v2860 = vld [vmem:[#allocation3 + $0x40] sm:$0xff]
      %v2861 = vld [vmem:[#allocation3 + $0x48] sm:$0xff]
      %v2862 = vld [vmem:[#allocation3 + $0x50] sm:$0xff]
      %v2863 = vld [vmem:[#allocation3 + $0x58] sm:$0xff]
      %v2864 = vld [vmem:[#allocation3 + $0x60] sm:$0xff]
      %v2865 = vld [vmem:[#allocation3 + $0x68] sm:$0xff]
      %v2866 = vld [vmem:[#allocation3 + $0x70] sm:$0xff]
      %v2867 = vld [vmem:[#allocation3 + $0x78] sm:$0xff]
      %v2868 = vld [vmem:[#allocation3 + $0x80] sm:$0xff]
      %v2869 = vld [vmem:[#allocation3 + $0x88] sm:$0xff]
      %v2870 = vld [vmem:[#allocation3 + $0x90] sm:$0xff]
      %v2871 = vld [vmem:[#allocation3 + $0x98] sm:$0xff]
      %v2872 = vld [vmem:[#allocation3 + $0xa0] sm:$0xff]
      %v2873 = vld [vmem:[#allocation3 + $0xa8] sm:$0xff]
      %v2874 = vld [vmem:[#allocation3 + $0xb0] sm:$0xff]
      %v2875 = vld [vmem:[#allocation3 + $0xb8] sm:$0xff]
      %v2876 = vld [vmem:[#allocation3 + $0xc0] sm:$0xff]
      %v2877 = vld [vmem:[#allocation3 + $0xc8] sm:$0xff]
      %v2878 = vld [vmem:[#allocation3 + $0xd0] sm:$0xff]
      %v2879 = vld [vmem:[#allocation3 + $0xd8] sm:$0xff]
      %v2880 = vld [vmem:[#allocation3 + $0xe0] sm:$0xff]
      %v2881 = vld [vmem:[#allocation3 + $0xe8] sm:$0xff]
      %v2882 = vld [vmem:[#allocation3 + $0xf0] sm:$0xff]
      %v2883 = vld [vmem:[#allocation3 + $0xf8] sm:$0xff]
      %v2884 = vld [vmem:[#allocation3 + $0x100] sm:$0xff]
      %v2885 = vld [vmem:[#allocation3 + $0x108] sm:$0xff]
      %v2886 = vld [vmem:[#allocation3 + $0x110] sm:$0xff]
      %s2887 = scalar_lea.vmem %s3, 96
      %v2888 = vld [vmem:[%s2887] sm:$0xf]
      %v2889 = vld [vmem:[%s2887 + $0x4] sm:$0xf]
      %v2890 = vld [vmem:[%s2887 + $0x8] sm:$0xf]
      %v2891 = vld [vmem:[%s2887 + $0xc] sm:$0xf]
      %v2892 = vld [vmem:[%s2887 + $0x10] sm:$0xf]
      %v2893 = vld [vmem:[%s2887 + $0x14] sm:$0xf]
      %v2894 = vld [vmem:[%s2887 + $0x18] sm:$0xf]
      %v2895 = vld [vmem:[%s2887 + $0x1c] sm:$0xf]
      %v2896 = vld [vmem:[%s2887 + $0x20] sm:$0xf]
      %v2897 = vld [vmem:[%s2887 + $0x24] sm:$0xf]
      %v2898 = vld [vmem:[%s2887 + $0x28] sm:$0xf]
      %v2899 = vld [vmem:[%s2887 + $0x2c] sm:$0xf]
      %v2900 = vld [vmem:[%s2887 + $0x30] sm:$0xf]
      %v2901 = vld [vmem:[%s2887 + $0x34] sm:$0xf]
      %v2902 = vld [vmem:[%s2887 + $0x38] sm:$0xf]
      %v2903 = vld [vmem:[%s2887 + $0x3c] sm:$0xf]
      %v2904 = vld [vmem:[%s2887 + $0x40] sm:$0xf]
      %v2905 = vld [vmem:[%s2887 + $0x44] sm:$0xf]
      %v2906 = vld [vmem:[%s2887 + $0x48] sm:$0xf]
      %v2907 = vld [vmem:[%s2887 + $0x4c] sm:$0xf]
      %v2908 = vld [vmem:[%s2887 + $0x50] sm:$0xf]
      %v2909 = vld [vmem:[%s2887 + $0x54] sm:$0xf]
      %v2910 = vld [vmem:[%s2887 + $0x58] sm:$0xf]
      %v2911 = vld [vmem:[%s2887 + $0x5c] sm:$0xf]
      %vm2931 = vcmask 1042432
      %v2932 = vrot.slane %v2814, 5
      %v2933 = vrot.slane %v2816, 5
      %v2934 = vsel %vm2931, %v2932, %v2933
      %v2935 = vrot.slane %v2778, 5
      %v2936 = vrot.slane %v2780, 5
      %v2937 = vsel %vm2931, %v2935, %v2936
      %v2938 = vrot.slane %v2818, 5
      %v2939 = vsel %vm2931, %v2933, %v2938
      %v2940 = vrot.slane %v2782, 5
      %v2941 = vsel %vm2931, %v2936, %v2940
      %v2942 = vrot.slane %v2820, 5
      %v2943 = vsel %vm2931, %v2938, %v2942
      %v2944 = vrot.slane %v2784, 5
      %v2945 = vsel %vm2931, %v2940, %v2944
      %v2946 = vrot.slane %v2822, 5
      %v2947 = vsel %vm2931, %v2942, %v2946
      %v2948 = vrot.slane %v2786, 5
      %v2949 = vsel %vm2931, %v2944, %v2948
      %v2950 = vrot.slane %v2824, 5
      %v2951 = vsel %vm2931, %v2946, %v2950
      %v2952 = vrot.slane %v2788, 5
      %v2953 = vsel %vm2931, %v2948, %v2952
      %v2954 = vrot.slane %v2826, 5
      %v2955 = vsel %vm2931, %v2950, %v2954
      %v2956 = vrot.slane %v2790, 5
      %v2957 = vsel %vm2931, %v2952, %v2956
      %v2958 = vrot.slane %v2828, 5
      %v2959 = vsel %vm2931, %v2954, %v2958
      %v2960 = vrot.slane %v2792, 5
      %v2961 = vsel %vm2931, %v2956, %v2960
      %v2962 = vrot.slane %v2830, 5
      %v2963 = vsel %vm2931, %v2958, %v2962
      %v2964 = vrot.slane %v2794, 5
      %v2965 = vsel %vm2931, %v2960, %v2964
      %v2966 = vrot.slane %v2832, 5
      %v2967 = vsel %vm2931, %v2962, %v2966
      %v2968 = vrot.slane %v2796, 5
      %v2969 = vsel %vm2931, %v2964, %v2968
      %v2970 = vrot.slane %v2834, 5
      %v2971 = vsel %vm2931, %v2966, %v2970
      %v2972 = vrot.slane %v2798, 5
      %v2973 = vsel %vm2931, %v2968, %v2972
      %v2974 = vrot.slane %v2836, 5
      %v2975 = vsel %vm2931, %v2970, %v2974
      %v2976 = vrot.slane %v2800, 5
      %v2977 = vsel %vm2931, %v2972, %v2976
      %v2978 = vrot.slane %v2838, 5
      %v2979 = vsel %vm2931, %v2974, %v2978
      %v2980 = vrot.slane %v2802, 5
      %v2981 = vsel %vm2931, %v2976, %v2980
      %v2982 = vrot.slane %v2840, 5
      %v2983 = vsel %vm2931, %v2978, %v2982
      %v2984 = vrot.slane %v2804, 5
      %v2985 = vsel %vm2931, %v2980, %v2984
      %v2986 = vrot.slane %v2842, 5
      %v2987 = vsel %vm2931, %v2982, %v2986
      %v2988 = vrot.slane %v2806, 5
      %v2989 = vsel %vm2931, %v2984, %v2988
      %v2990 = vrot.slane %v2844, 5
      %v2991 = vsel %vm2931, %v2986, %v2990
      %v2992 = vrot.slane %v2808, 5
      %v2993 = vsel %vm2931, %v2988, %v2992
      %v2994 = vrot.slane %v2846, 5
      %v2995 = vsel %vm2931, %v2990, %v2994
      %v2996 = vrot.slane %v2810, 5
      %v2997 = vsel %vm2931, %v2992, %v2996
      %v2998 = vrot.slane %v2848, 5
      %v2999 = vsel %vm2931, %v2994, %v2998
      %v3000 = vrot.slane %v2812, 5
      %v3001 = vsel %vm2931, %v2996, %v3000
      %v3002 = vrot.slane %v2851, 5
      %v3003 = vsel %vm2931, %v2998, %v3002
      %v3004 = vrot.slane %v2811, 5
      %v3005 = vsel %vm2931, %v3000, %v3004
      %v3048 = vunpack.c.l.b16 %v2888
      %v3049 = vunpack.c.l.b16 %v2889
      %v3050 = vunpack.c.l.b16 %v2890
      %v3051 = vunpack.c.l.b16 %v2891
      %v3052 = vunpack.c.l.b16 %v2892
      %v3053 = vunpack.c.l.b16 %v2893
      %v3054 = vunpack.c.l.b16 %v2894
      %v3055 = vunpack.c.l.b16 %v2895
      %v3056 = vunpack.c.l.b16 %v2896
      %v3057 = vunpack.c.l.b16 %v2897
      %v3058 = vunpack.c.l.b16 %v2898
      %v3059 = vunpack.c.l.b16 %v2899
      %v3060 = vunpack.c.l.b16 %v2900
      %v3061 = vunpack.c.l.b16 %v2901
      %v3062 = vunpack.c.l.b16 %v2902
      %v3063 = vunpack.c.l.b16 %v2903
      %v3064 = vunpack.c.l.b16 %v2904
      %v3065 = vunpack.c.l.b16 %v2905
      %v3066 = vunpack.c.l.b16 %v2906
      %v3067 = vunpack.c.l.b16 %v2907
      %v3068 = vunpack.c.l.b16 %v2908
      %v3069 = vunpack.c.l.b16 %v2909
      %v3070 = vunpack.c.l.b16 %v2910
      %v3071 = vunpack.c.l.b16 %v2911
      %v3072 = vpack.c.b16 %v3049, %v3048
      %v3073 = vpack.c.b16 %v3051, %v3050
      %v3074 = vpack.c.b16 %v3053, %v3052
      %v3075 = vpack.c.b16 %v3055, %v3054
      %v3076 = vpack.c.b16 %v3057, %v3056
      %v3077 = vpack.c.b16 %v3059, %v3058
      %v3078 = vpack.c.b16 %v3061, %v3060
      %v3079 = vpack.c.b16 %v3063, %v3062
      %v3080 = vpack.c.b16 %v3065, %v3064
      %v3081 = vpack.c.b16 %v3067, %v3066
      %v3082 = vpack.c.b16 %v3069, %v3068
      %v3083 = vpack.c.b16 %v3071, %v3070
      %v3097 = vsel %vm1739, %v2937, 0
      %v3100 = vsel %vm1739, %v2941, 0
      %v3103 = vsel %vm1739, %v2945, 0
      %v3106 = vsel %vm1739, %v2949, 0
      %v3109 = vsel %vm1739, %v2953, 0
      %v3112 = vsel %vm1739, %v2957, 0
      %v3115 = vsel %vm1739, %v2961, 0
      %v3118 = vsel %vm1739, %v2965, 0
      %v3121 = vsel %vm1739, %v2969, 0
      %v3124 = vsel %vm1739, %v2973, 0
      %v3127 = vsel %vm1739, %v2977, 0
      %v3130 = vsel %vm1739, %v2981, 0
      %v3133 = vsel %vm1739, %v2985, 0
      %v3136 = vsel %vm1739, %v2989, 0
      %v3139 = vsel %vm1739, %v2993, 0
      %v3142 = vsel %vm1739, %v2997, 0
      %v3145 = vsel %vm1739, %v3001, 0
      %v3148 = vsel %vm1739, %v3005, 0
      %3150 = vmatprep.subr.bf16.mxu0 0
      %3151 = vmatpush1.bf16.msra.mxu0 %v3072
      %3152 = vmatprep.subr.bf16.mxu0 0
      %3153 = vmatpush1.bf16.msra.mxu0 %v3073
      %3154 = vmatprep.subr.bf16.mxu0 0
      %3155 = vmatpush1.bf16.msra.mxu0 %v3074
      %3156 = vmatprep.subr.bf16.mxu0 0
      %3157 = vmatpush1.bf16.msra.mxu0 %v3075
      %3158 = vmatprep.subr.bf16.mxu0 0
      %3159 = vmatpush1.bf16.msra.mxu0 %v3076
      %3160 = vmatprep.subr.bf16.mxu0 0
      %3161 = vmatpush1.bf16.msra.mxu0 %v3077
      %3162 = vmatprep.subr.bf16.mxu0 0
      %3163 = vmatpush1.bf16.msra.mxu0 %v3078
      %3164 = vmatprep.subr.bf16.mxu0 0
      %3165 = vmatpush1.bf16.msra.mxu0 %v3079
      %3166 = vmatprep.subr.bf16.mxu0 0
      %3167 = vmatpush1.bf16.msra.mxu0 %v3080
      %3168 = vmatprep.subr.bf16.mxu0 0
      %3169 = vmatpush1.bf16.msra.mxu0 %v3081
      %3170 = vmatprep.subr.bf16.mxu0 0
      %3171 = vmatpush1.bf16.msra.mxu0 %v3082
      %3172 = vmatprep.subr.bf16.mxu0 0
      %3173 = vmatpush1.bf16.msra.mxu0 %v3083
      %3174 = vmatprep.subr.bf16.mxu0 0
      %3175 = vmatpush1.bf16.msra.mxu0 0
      %3176 = vmatprep.subr.bf16.mxu0 0
      %3177 = vmatpush1.bf16.msra.mxu0 0
      %3178 = vmatprep.subr.bf16.mxu0 0
      %3179 = vmatpush1.bf16.msra.mxu0 0
      %3180 = vmatprep.subr.bf16.mxu0 0
      %3181 = vmatpush1.bf16.msra.mxu0 0
      %3182 = vmatprep.mubr.bf16.mxu0 %v3097
      %3183 = vmatmul.mubr.bf16.gmra.mrb[0].mxu0 %v2934
      %v3184 = vpop.f32.mrb[0].mxu0
      %v3185 = vadd.f32 0.0, %v3184
      %v3186 = vpop.f32.mrb[0].mxu0
      %v3187 = vpop.f32.mrb[0].mxu0
      %v3188 = vadd.f32 0.0, %v3187
      %v3189 = vpop.f32.mrb[0].mxu0
      %3190 = vmatprep.mubr.bf16.mxu0 %v3100
      %3191 = vmatmul.mubr.bf16.gmra.mrb[0].mxu0 %v2939
      %v3192 = vpop.f32.mrb[0].mxu0
      %v3193 = vadd.f32 0.0, %v3192
      %v3194 = vpop.f32.mrb[0].mxu0
      %v3195 = vpop.f32.mrb[0].mxu0
      %v3196 = vadd.f32 0.0, %v3195
      %v3197 = vpop.f32.mrb[0].mxu0
      %3198 = vmatprep.mubr.bf16.mxu0 %v3103
      %3199 = vmatmul.mubr.bf16.gmra.mrb[0].mxu0 %v2943
      %v3200 = vpop.f32.mrb[0].mxu0
      %v3201 = vadd.f32 0.0, %v3200
      %v3202 = vpop.f32.mrb[0].mxu0
      %v3203 = vpop.f32.mrb[0].mxu0
      %v3204 = vadd.f32 0.0, %v3203
      %v3205 = vpop.f32.mrb[0].mxu0
      %3206 = vmatprep.mubr.bf16.mxu0 %v3106
      %3207 = vmatmul.mubr.bf16.gmra.mrb[0].mxu0 %v2947
      %v3208 = vpop.f32.mrb[0].mxu0
      %v3209 = vadd.f32 0.0, %v3208
      %v3210 = vpop.f32.mrb[0].mxu0
      %v3211 = vpop.f32.mrb[0].mxu0
      %v3212 = vadd.f32 0.0, %v3211
      %v3213 = vpop.f32.mrb[0].mxu0
      %3214 = vmatprep.mubr.bf16.mxu0 %v3109
      %3215 = vmatmul.mubr.bf16.gmra.mrb[0].mxu0 %v2951
      %v3216 = vpop.f32.mrb[0].mxu0
      %v3217 = vadd.f32 0.0, %v3216
      %v3218 = vpop.f32.mrb[0].mxu0
      %v3219 = vpop.f32.mrb[0].mxu0
      %v3220 = vadd.f32 0.0, %v3219
      %v3221 = vpop.f32.mrb[0].mxu0
      %3222 = vmatprep.mubr.bf16.mxu0 %v3112
      %3223 = vmatmul.mubr.bf16.gmra.mrb[0].mxu0 %v2955
      %v3224 = vpop.f32.mrb[0].mxu0
      %v3225 = vadd.f32 0.0, %v3224
      %v3226 = vpop.f32.mrb[0].mxu0
      %v3227 = vpop.f32.mrb[0].mxu0
      %v3228 = vadd.f32 0.0, %v3227
      %v3229 = vpop.f32.mrb[0].mxu0
      %3230 = vmatprep.mubr.bf16.mxu0 %v3115
      %3231 = vmatmul.mubr.bf16.gmra.mrb[0].mxu0 %v2959
      %v3232 = vpop.f32.mrb[0].mxu0
      %v3233 = vadd.f32 0.0, %v3232
      %v3234 = vpop.f32.mrb[0].mxu0
      %v3235 = vpop.f32.mrb[0].mxu0
      %v3236 = vadd.f32 0.0, %v3235
      %v3237 = vpop.f32.mrb[0].mxu0
      %3238 = vmatprep.mubr.bf16.mxu0 %v3118
      %3239 = vmatmul.mubr.bf16.gmra.mrb[0].mxu0 %v2963
      %v3240 = vpop.f32.mrb[0].mxu0
      %v3241 = vadd.f32 0.0, %v3240
      %v3242 = vpop.f32.mrb[0].mxu0
      %v3243 = vpop.f32.mrb[0].mxu0
      %v3244 = vadd.f32 0.0, %v3243
      %v3245 = vpop.f32.mrb[0].mxu0
      %3246 = vmatprep.mubr.bf16.mxu0 %v3121
      %3247 = vmatmul.mubr.bf16.gmra.mrb[0].mxu0 %v2967
      %v3248 = vpop.f32.mrb[0].mxu0
      %v3249 = vadd.f32 0.0, %v3248
      %v3250 = vpop.f32.mrb[0].mxu0
      %v3251 = vpop.f32.mrb[0].mxu0
      %v3252 = vadd.f32 0.0, %v3251
      %v3253 = vpop.f32.mrb[0].mxu0
      %3254 = vmatprep.mubr.bf16.mxu0 %v3124
      %3255 = vmatmul.mubr.bf16.gmra.mrb[0].mxu0 %v2971
      %v3256 = vpop.f32.mrb[0].mxu0
      %v3257 = vadd.f32 0.0, %v3256
      %v3258 = vpop.f32.mrb[0].mxu0
      %v3259 = vpop.f32.mrb[0].mxu0
      %v3260 = vadd.f32 0.0, %v3259
      %v3261 = vpop.f32.mrb[0].mxu0
      %3262 = vmatprep.mubr.bf16.mxu0 %v3127
      %3263 = vmatmul.mubr.bf16.gmra.mrb[0].mxu0 %v2975
      %v3264 = vpop.f32.mrb[0].mxu0
      %v3265 = vadd.f32 0.0, %v3264
      %v3266 = vpop.f32.mrb[0].mxu0
      %v3267 = vpop.f32.mrb[0].mxu0
      %v3268 = vadd.f32 0.0, %v3267
      %v3269 = vpop.f32.mrb[0].mxu0
      %3270 = vmatprep.mubr.bf16.mxu0 %v3130
      %3271 = vmatmul.mubr.bf16.gmra.mrb[0].mxu0 %v2979
      %v3272 = vpop.f32.mrb[0].mxu0
      %v3273 = vadd.f32 0.0, %v3272
      %v3274 = vpop.f32.mrb[0].mxu0
      %v3275 = vpop.f32.mrb[0].mxu0
      %v3276 = vadd.f32 0.0, %v3275
      %v3277 = vpop.f32.mrb[0].mxu0
      %3278 = vmatprep.mubr.bf16.mxu0 %v3133
      %3279 = vmatmul.mubr.bf16.gmra.mrb[0].mxu0 %v2983
      %v3280 = vpop.f32.mrb[0].mxu0
      %v3281 = vadd.f32 0.0, %v3280
      %v3282 = vpop.f32.mrb[0].mxu0
      %v3283 = vpop.f32.mrb[0].mxu0
      %v3284 = vadd.f32 0.0, %v3283
      %v3285 = vpop.f32.mrb[0].mxu0
      %3286 = vmatprep.mubr.bf16.mxu0 %v3136
      %3287 = vmatmul.mubr.bf16.gmra.mrb[0].mxu0 %v2987
      %v3288 = vpop.f32.mrb[0].mxu0
      %v3289 = vadd.f32 0.0, %v3288
      %v3290 = vpop.f32.mrb[0].mxu0
      %v3291 = vpop.f32.mrb[0].mxu0
      %v3292 = vadd.f32 0.0, %v3291
      %v3293 = vpop.f32.mrb[0].mxu0
      %3294 = vmatprep.mubr.bf16.mxu0 %v3139
      %3295 = vmatmul.mubr.bf16.gmra.mrb[0].mxu0 %v2991
      %v3296 = vpop.f32.mrb[0].mxu0
      %v3297 = vadd.f32 0.0, %v3296
      %v3298 = vpop.f32.mrb[0].mxu0
      %v3299 = vpop.f32.mrb[0].mxu0
      %v3300 = vadd.f32 0.0, %v3299
      %v3301 = vpop.f32.mrb[0].mxu0
      %3302 = vmatprep.mubr.bf16.mxu0 %v3142
      %3303 = vmatmul.mubr.bf16.gmra.mrb[0].mxu0 %v2995
      %v3304 = vpop.f32.mrb[0].mxu0
      %v3305 = vadd.f32 0.0, %v3304
      %v3306 = vpop.f32.mrb[0].mxu0
      %v3307 = vpop.f32.mrb[0].mxu0
      %v3308 = vadd.f32 0.0, %v3307
      %v3309 = vpop.f32.mrb[0].mxu0
      %3310 = vmatprep.mubr.bf16.mxu0 %v3145
      %3311 = vmatmul.mubr.bf16.gmra.mrb[0].mxu0 %v2999
      %v3312 = vpop.f32.mrb[0].mxu0
      %v3313 = vadd.f32 0.0, %v3312
      %v3314 = vpop.f32.mrb[0].mxu0
      %v3315 = vpop.f32.mrb[0].mxu0
      %v3316 = vadd.f32 0.0, %v3315
      %v3317 = vpop.f32.mrb[0].mxu0
      %3318 = vmatprep.mubr.bf16.mxu0 %v3148
      %3319 = vmatmul.mubr.bf16.gmra.mrb[0].mxu0 %v3003
      %v3320 = vpop.f32.mrb[0].mxu0
      %v3321 = vadd.f32 0.0, %v3320
      %v3322 = vpop.f32.mrb[0].mxu0
      %v3323 = vpop.f32.mrb[0].mxu0
      %v3324 = vpop.f32.mrb[0].mxu0
      %3325 = vdwg.mxu0
      %v3326 = vadd.f32 %v2852, %v3185
      %v3327 = vadd.f32 %v2853, %v3188
      %v3328 = vadd.f32 %v2854, %v3193
      %v3329 = vadd.f32 %v2855, %v3196
      %v3330 = vadd.f32 %v2856, %v3201
      %v3331 = vadd.f32 %v2857, %v3204
      %v3332 = vadd.f32 %v2858, %v3209
      %v3333 = vadd.f32 %v2859, %v3212
      %v3334 = vadd.f32 %v2860, %v3217
      %v3335 = vadd.f32 %v2861, %v3220
      %v3336 = vadd.f32 %v2862, %v3225
      %v3337 = vadd.f32 %v2863, %v3228
      %v3338 = vadd.f32 %v2864, %v3233
      %v3339 = vadd.f32 %v2865, %v3236
      %v3340 = vadd.f32 %v2866, %v3241
      %v3341 = vadd.f32 %v2867, %v3244
      %v3342 = vadd.f32 %v2868, %v3249
      %v3343 = vadd.f32 %v2869, %v3252
      %v3344 = vadd.f32 %v2870, %v3257
      %v3345 = vadd.f32 %v2871, %v3260
      %v3346 = vadd.f32 %v2872, %v3265
      %v3347 = vadd.f32 %v2873, %v3268
      %v3348 = vadd.f32 %v2874, %v3273
      %v3349 = vadd.f32 %v2875, %v3276
      %v3350 = vadd.f32 %v2876, %v3281
      %v3351 = vadd.f32 %v2877, %v3284
      %v3352 = vadd.f32 %v2878, %v3289
      %v3353 = vadd.f32 %v2879, %v3292
      %v3354 = vadd.f32 %v2880, %v3297
      %v3355 = vadd.f32 %v2881, %v3300
      %v3356 = vadd.f32 %v2882, %v3305
      %v3357 = vadd.f32 %v2883, %v3308
      %v3358 = vadd.f32 %v2884, %v3313
      %v3359 = vadd.f32 %v2885, %v3316
      %v3360 = vadd.f32 %v2886, %v3321
      %3361 = vst [vmem:[#allocation3] sm:$0xff] %v3326
      %3362 = vst [vmem:[#allocation3 + $0x8] sm:$0xff] %v3327
      %3363 = vst [vmem:[#allocation3 + $0x10] sm:$0xff] %v3328
      %3364 = vst [vmem:[#allocation3 + $0x18] sm:$0xff] %v3329
      %3365 = vst [vmem:[#allocation3 + $0x20] sm:$0xff] %v3330
      %3366 = vst [vmem:[#allocation3 + $0x28] sm:$0xff] %v3331
      %3367 = vst [vmem:[#allocation3 + $0x30] sm:$0xff] %v3332
      %3368 = vst [vmem:[#allocation3 + $0x38] sm:$0xff] %v3333
      %3369 = vst [vmem:[#allocation3 + $0x40] sm:$0xff] %v3334
      %3370 = vst [vmem:[#allocation3 + $0x48] sm:$0xff] %v3335
      %3371 = vst [vmem:[#allocation3 + $0x50] sm:$0xff] %v3336
      %3372 = vst [vmem:[#allocation3 + $0x58] sm:$0xff] %v3337
      %3373 = vst [vmem:[#allocation3 + $0x60] sm:$0xff] %v3338
      %3374 = vst [vmem:[#allocation3 + $0x68] sm:$0xff] %v3339
      %3375 = vst [vmem:[#allocation3 + $0x70] sm:$0xff] %v3340
      %3376 = vst [vmem:[#allocation3 + $0x78] sm:$0xff] %v3341
      %3377 = vst [vmem:[#allocation3 + $0x80] sm:$0xff] %v3342
      %3378 = vst [vmem:[#allocation3 + $0x88] sm:$0xff] %v3343
      %3379 = vst [vmem:[#allocation3 + $0x90] sm:$0xff] %v3344
      %3380 = vst [vmem:[#allocation3 + $0x98] sm:$0xff] %v3345
      %3381 = vst [vmem:[#allocation3 + $0xa0] sm:$0xff] %v3346
      %3382 = vst [vmem:[#allocation3 + $0xa8] sm:$0xff] %v3347
      %3383 = vst [vmem:[#allocation3 + $0xb0] sm:$0xff] %v3348
      %3384 = vst [vmem:[#allocation3 + $0xb8] sm:$0xff] %v3349
      %3385 = vst [vmem:[#allocation3 + $0xc0] sm:$0xff] %v3350
      %3386 = vst [vmem:[#allocation3 + $0xc8] sm:$0xff] %v3351
      %3387 = vst [vmem:[#allocation3 + $0xd0] sm:$0xff] %v3352
      %3388 = vst [vmem:[#allocation3 + $0xd8] sm:$0xff] %v3353
      %3389 = vst [vmem:[#allocation3 + $0xe0] sm:$0xff] %v3354
      %3390 = vst [vmem:[#allocation3 + $0xe8] sm:$0xff] %v3355
      %3391 = vst [vmem:[#allocation3 + $0xf0] sm:$0xff] %v3356
      %3392 = vst [vmem:[#allocation3 + $0xf8] sm:$0xff] %v3357
      %3393 = vst [vmem:[#allocation3 + $0x100] sm:$0xff] %v3358
      %3394 = vst [vmem:[#allocation3 + $0x108] sm:$0xff] %v3359
      %3395 = vst [vmem:[#allocation3 + $0x110] sm:$0xff] %v3360
      %v3396 = vld [vmem:[#allocation2 + $0x8] sm:$0xfc]
      %v3397 = vld [vmem:[#allocation2 + $0x10] sm:$0xff]
      %v3398 = vld [vmem:[#allocation2 + $0x18] sm:$0xff]
      %v3399 = vld [vmem:[#allocation2 + $0x20] sm:$0xff]
      %v3400 = vld [vmem:[#allocation2 + $0x28] sm:$0xff]
      %v3401 = vld [vmem:[#allocation2 + $0x30] sm:$0xff]
      %v3402 = vld [vmem:[#allocation2 + $0x38] sm:$0xff]
      %v3403 = vld [vmem:[#allocation2 + $0x40] sm:$0xff]
      %v3404 = vld [vmem:[#allocation2 + $0x48] sm:$0xff]
      %v3405 = vld [vmem:[#allocation2 + $0x50] sm:$0xff]
      %v3406 = vld [vmem:[#allocation2 + $0x58] sm:$0xff]
      %v3407 = vld [vmem:[#allocation2 + $0x60] sm:$0xff]
      %v3408 = vld [vmem:[#allocation2 + $0x68] sm:$0xff]
      %v3409 = vld [vmem:[#allocation2 + $0x70] sm:$0xff]
      %v3410 = vld [vmem:[#allocation2 + $0x78] sm:$0xff]
      %v3411 = vld [vmem:[#allocation2 + $0x80] sm:$0xff]
      %v3412 = vld [vmem:[#allocation2 + $0x88] sm:$0xff]
      %v3413 = vld [vmem:[#allocation2 + $0x90] sm:$0x3f]
      %v3414 = vld [vmem:[#allocation2 + $0x90] sm:$0x7f]
      %v3415 = vld [vmem:[#allocation2 + $0x8] sm:$0xf8]
      %v3417 = vshrl.u32 %v3396, 16
      %v3419 = vshll.u32 %v3396, 16
      %v3421 = vrot.slane %v3419, 1
      %v3422 = vor.u32 %v3417, %v3421
      %v3424 = vshll.u32 %v3397, 16
      %v3426 = vrot.slane %v3424, 1
      %v3427 = vsel %vm1827, %v3422, %v3426
      %v3428 = vshrl.u32 %v3397, 16
      %v3430 = vor.u32 %v3428, %v3426
      %v3432 = vshll.u32 %v3398, 16
      %v3434 = vrot.slane %v3432, 1
      %v3435 = vsel %vm1827, %v3430, %v3434
      %v3436 = vshrl.u32 %v3398, 16
      %v3438 = vor.u32 %v3436, %v3434
      %v3440 = vshll.u32 %v3399, 16
      %v3442 = vrot.slane %v3440, 1
      %v3443 = vsel %vm1827, %v3438, %v3442
      %v3444 = vshrl.u32 %v3399, 16
      %v3446 = vor.u32 %v3444, %v3442
      %v3448 = vshll.u32 %v3400, 16
      %v3450 = vrot.slane %v3448, 1
      %v3451 = vsel %vm1827, %v3446, %v3450
      %v3452 = vshrl.u32 %v3400, 16
      %v3454 = vor.u32 %v3452, %v3450
      %v3456 = vshll.u32 %v3401, 16
      %v3458 = vrot.slane %v3456, 1
      %v3459 = vsel %vm1827, %v3454, %v3458
      %v3460 = vshrl.u32 %v3401, 16
      %v3462 = vor.u32 %v3460, %v3458
      %v3464 = vshll.u32 %v3402, 16
      %v3466 = vrot.slane %v3464, 1
      %v3467 = vsel %vm1827, %v3462, %v3466
      %v3468 = vshrl.u32 %v3402, 16
      %v3470 = vor.u32 %v3468, %v3466
      %v3472 = vshll.u32 %v3403, 16
      %v3474 = vrot.slane %v3472, 1
      %v3475 = vsel %vm1827, %v3470, %v3474
      %v3476 = vshrl.u32 %v3403, 16
      %v3478 = vor.u32 %v3476, %v3474
      %v3480 = vshll.u32 %v3404, 16
      %v3482 = vrot.slane %v3480, 1
      %v3483 = vsel %vm1827, %v3478, %v3482
      %v3484 = vshrl.u32 %v3404, 16
      %v3486 = vor.u32 %v3484, %v3482
      %v3488 = vshll.u32 %v3405, 16
      %v3490 = vrot.slane %v3488, 1
      %v3491 = vsel %vm1827, %v3486, %v3490
      %v3492 = vshrl.u32 %v3405, 16
      %v3494 = vor.u32 %v3492, %v3490
      %v3496 = vshll.u32 %v3406, 16
      %v3498 = vrot.slane %v3496, 1
      %v3499 = vsel %vm1827, %v3494, %v3498
      %v3500 = vshrl.u32 %v3406, 16
      %v3502 = vor.u32 %v3500, %v3498
      %v3504 = vshll.u32 %v3407, 16
      %v3506 = vrot.slane %v3504, 1
      %v3507 = vsel %vm1827, %v3502, %v3506
      %v3508 = vshrl.u32 %v3407, 16
      %v3510 = vor.u32 %v3508, %v3506
      %v3512 = vshll.u32 %v3408, 16
      %v3514 = vrot.slane %v3512, 1
      %v3515 = vsel %vm1827, %v3510, %v3514
      %v3516 = vshrl.u32 %v3408, 16
      %v3518 = vor.u32 %v3516, %v3514
      %v3520 = vshll.u32 %v3409, 16
      %v3522 = vrot.slane %v3520, 1
      %v3523 = vsel %vm1827, %v3518, %v3522
      %v3524 = vshrl.u32 %v3409, 16
      %v3526 = vor.u32 %v3524, %v3522
      %v3528 = vshll.u32 %v3410, 16
      %v3530 = vrot.slane %v3528, 1
      %v3531 = vsel %vm1827, %v3526, %v3530
      %v3532 = vshrl.u32 %v3410, 16
      %v3534 = vor.u32 %v3532, %v3530
      %v3536 = vshll.u32 %v3411, 16
      %v3538 = vrot.slane %v3536, 1
      %v3539 = vsel %vm1827, %v3534, %v3538
      %v3540 = vshrl.u32 %v3411, 16
      %v3542 = vor.u32 %v3540, %v3538
      %v3544 = vshll.u32 %v3412, 16
      %v3546 = vrot.slane %v3544, 1
      %v3547 = vsel %vm1827, %v3542, %v3546
      %v3548 = vshrl.u32 %v3412, 16
      %v3550 = vor.u32 %v3548, %v3546
      %v3552 = vshll.u32 %v3414, 16
      %v3554 = vrot.slane %v3552, 1
      %v3555 = vsel %vm1827, %v3550, %v3554
      %v3556 = vshrl.u32 %v3414, 16
      %v3558 = vor.u32 %v3556, %v3554
      %3559 = vrot.lane.b32.xlu0 %v3427, 64
      %v3560 = vpop.permute.xlu0 %3559
      %3561 = vrot.lane.b32.xlu0 %v3435, 64
      %v3562 = vpop.permute.xlu0 %3561
      %3563 = vrot.lane.b32.xlu0 %v3443, 64
      %v3564 = vpop.permute.xlu0 %3563
      %3565 = vrot.lane.b32.xlu0 %v3451, 64
      %v3566 = vpop.permute.xlu0 %3565
      %3567 = vrot.lane.b32.xlu0 %v3459, 64
      %v3568 = vpop.permute.xlu0 %3567
      %3569 = vrot.lane.b32.xlu0 %v3467, 64
      %v3570 = vpop.permute.xlu0 %3569
      %3571 = vrot.lane.b32.xlu0 %v3475, 64
      %v3572 = vpop.permute.xlu0 %3571
      %3573 = vrot.lane.b32.xlu0 %v3483, 64
      %v3574 = vpop.permute.xlu0 %3573
      %3575 = vrot.lane.b32.xlu0 %v3491, 64
      %v3576 = vpop.permute.xlu0 %3575
      %3577 = vrot.lane.b32.xlu0 %v3499, 64
      %v3578 = vpop.permute.xlu0 %3577
      %3579 = vrot.lane.b32.xlu0 %v3507, 64
      %v3580 = vpop.permute.xlu0 %3579
      %3581 = vrot.lane.b32.xlu0 %v3515, 64
      %v3582 = vpop.permute.xlu0 %3581
      %3583 = vrot.lane.b32.xlu0 %v3523, 64
      %v3584 = vpop.permute.xlu0 %3583
      %3585 = vrot.lane.b32.xlu0 %v3531, 64
      %v3586 = vpop.permute.xlu0 %3585
      %3587 = vrot.lane.b32.xlu0 %v3539, 64
      %v3588 = vpop.permute.xlu0 %3587
      %3589 = vrot.lane.b32.xlu0 %v3547, 64
      %v3590 = vpop.permute.xlu0 %3589
      %3591 = vrot.lane.b32.xlu0 %v3555, 64
      %v3592 = vpop.permute.xlu0 %3591
      %3593 = vrot.lane.b32.xlu0 %v3558, 64
      %v3594 = vpop.permute.xlu0 %3593
      %v3613 = vrot.slane %v3415, 1
      %v3614 = vrot.slane %v3397, 1
      %v3615 = vsel %vm2025, %v3613, %v3614
      %v3616 = vrot.slane %v3398, 1
      %v3617 = vsel %vm2025, %v3614, %v3616
      %v3618 = vrot.slane %v3399, 1
      %v3619 = vsel %vm2025, %v3616, %v3618
      %v3620 = vrot.slane %v3400, 1
      %v3621 = vsel %vm2025, %v3618, %v3620
      %v3622 = vrot.slane %v3401, 1
      %v3623 = vsel %vm2025, %v3620, %v3622
      %v3624 = vrot.slane %v3402, 1
      %v3625 = vsel %vm2025, %v3622, %v3624
      %v3626 = vrot.slane %v3403, 1
      %v3627 = vsel %vm2025, %v3624, %v3626
      %v3628 = vrot.slane %v3404, 1
      %v3629 = vsel %vm2025, %v3626, %v3628
      %v3630 = vrot.slane %v3405, 1
      %v3631 = vsel %vm2025, %v3628, %v3630
      %v3632 = vrot.slane %v3406, 1
      %v3633 = vsel %vm2025, %v3630, %v3632
      %v3634 = vrot.slane %v3407, 1
      %v3635 = vsel %vm2025, %v3632, %v3634
      %v3636 = vrot.slane %v3408, 1
      %v3637 = vsel %vm2025, %v3634, %v3636
      %v3638 = vrot.slane %v3409, 1
      %v3639 = vsel %vm2025, %v3636, %v3638
      %v3640 = vrot.slane %v3410, 1
      %v3641 = vsel %vm2025, %v3638, %v3640
      %v3642 = vrot.slane %v3411, 1
      %v3643 = vsel %vm2025, %v3640, %v3642
      %v3644 = vrot.slane %v3412, 1
      %v3645 = vsel %vm2025, %v3642, %v3644
      %v3646 = vrot.slane %v3414, 1
      %v3647 = vsel %vm2025, %v3644, %v3646
      %v3649 = vsel %vm1739, %v3396, %v3560
      %v3651 = vsel %vm1739, %v3397, %v3562
      %v3653 = vsel %vm1739, %v3398, %v3564
      %v3655 = vsel %vm1739, %v3399, %v3566
      %v3657 = vsel %vm1739, %v3400, %v3568
      %v3659 = vsel %vm1739, %v3401, %v3570
      %v3661 = vsel %vm1739, %v3402, %v3572
      %v3663 = vsel %vm1739, %v3403, %v3574
      %v3665 = vsel %vm1739, %v3404, %v3576
      %v3667 = vsel %vm1739, %v3405, %v3578
      %v3669 = vsel %vm1739, %v3406, %v3580
      %v3671 = vsel %vm1739, %v3407, %v3582
      %v3673 = vsel %vm1739, %v3408, %v3584
      %v3675 = vsel %vm1739, %v3409, %v3586
      %v3677 = vsel %vm1739, %v3410, %v3588
      %v3679 = vsel %vm1739, %v3411, %v3590
      %v3681 = vsel %vm1739, %v3412, %v3592
      %v3684 = vsel %vm1739, %v3413, %v3594
      %v3685 = vld [vmem:[#allocation3] sm:$0xff]
      %v3686 = vld [vmem:[#allocation3 + $0x8] sm:$0xff]
      %v3687 = vld [vmem:[#allocation3 + $0x10] sm:$0xff]
      %v3688 = vld [vmem:[#allocation3 + $0x18] sm:$0xff]
      %v3689 = vld [vmem:[#allocation3 + $0x20] sm:$0xff]
      %v3690 = vld [vmem:[#allocation3 + $0x28] sm:$0xff]
      %v3691 = vld [vmem:[#allocation3 + $0x30] sm:$0xff]
      %v3692 = vld [vmem:[#allocation3 + $0x38] sm:$0xff]
      %v3693 = vld [vmem:[#allocation3 + $0x40] sm:$0xff]
      %v3694 = vld [vmem:[#allocation3 + $0x48] sm:$0xff]
      %v3695 = vld [vmem:[#allocation3 + $0x50] sm:$0xff]
      %v3696 = vld [vmem:[#allocation3 + $0x58] sm:$0xff]
      %v3697 = vld [vmem:[#allocation3 + $0x60] sm:$0xff]
      %v3698 = vld [vmem:[#allocation3 + $0x68] sm:$0xff]
      %v3699 = vld [vmem:[#allocation3 + $0x70] sm:$0xff]
      %v3700 = vld [vmem:[#allocation3 + $0x78] sm:$0xff]
      %v3701 = vld [vmem:[#allocation3 + $0x80] sm:$0xff]
      %v3702 = vld [vmem:[#allocation3 + $0x88] sm:$0xff]
      %v3703 = vld [vmem:[#allocation3 + $0x90] sm:$0xff]
      %v3704 = vld [vmem:[#allocation3 + $0x98] sm:$0xff]
      %v3705 = vld [vmem:[#allocation3 + $0xa0] sm:$0xff]
      %v3706 = vld [vmem:[#allocation3 + $0xa8] sm:$0xff]
      %v3707 = vld [vmem:[#allocation3 + $0xb0] sm:$0xff]
      %v3708 = vld [vmem:[#allocation3 + $0xb8] sm:$0xff]
      %v3709 = vld [vmem:[#allocation3 + $0xc0] sm:$0xff]
      %v3710 = vld [vmem:[#allocation3 + $0xc8] sm:$0xff]
      %v3711 = vld [vmem:[#allocation3 + $0xd0] sm:$0xff]
      %v3712 = vld [vmem:[#allocation3 + $0xd8] sm:$0xff]
      %v3713 = vld [vmem:[#allocation3 + $0xe0] sm:$0xff]
      %v3714 = vld [vmem:[#allocation3 + $0xe8] sm:$0xff]
      %v3715 = vld [vmem:[#allocation3 + $0xf0] sm:$0xff]
      %v3716 = vld [vmem:[#allocation3 + $0xf8] sm:$0xff]
      %v3717 = vld [vmem:[#allocation3 + $0x100] sm:$0xff]
      %v3718 = vld [vmem:[#allocation3 + $0x108] sm:$0xff]
      %v3719 = vld [vmem:[#allocation3 + $0x110] sm:$0xff]
      %s3720 = scalar_lea.vmem %s3, 192
      %v3721 = vld [vmem:[%s3720] sm:$0xf]
      %v3722 = vld [vmem:[%s3720 + $0x4] sm:$0xf]
      %v3723 = vld [vmem:[%s3720 + $0x8] sm:$0xf]
      %v3724 = vld [vmem:[%s3720 + $0xc] sm:$0xf]
      %v3725 = vld [vmem:[%s3720 + $0x10] sm:$0xf]
      %v3726 = vld [vmem:[%s3720 + $0x14] sm:$0xf]
      %v3727 = vld [vmem:[%s3720 + $0x18] sm:$0xf]
      %v3728 = vld [vmem:[%s3720 + $0x1c] sm:$0xf]
      %v3729 = vld [vmem:[%s3720 + $0x20] sm:$0xf]
      %v3730 = vld [vmem:[%s3720 + $0x24] sm:$0xf]
      %v3731 = vld [vmem:[%s3720 + $0x28] sm:$0xf]
      %v3732 = vld [vmem:[%s3720 + $0x2c] sm:$0xf]
      %v3733 = vld [vmem:[%s3720 + $0x30] sm:$0xf]
      %v3734 = vld [vmem:[%s3720 + $0x34] sm:$0xf]
      %v3735 = vld [vmem:[%s3720 + $0x38] sm:$0xf]
      %v3736 = vld [vmem:[%s3720 + $0x3c] sm:$0xf]
      %v3737 = vld [vmem:[%s3720 + $0x40] sm:$0xf]
      %v3738 = vld [vmem:[%s3720 + $0x44] sm:$0xf]
      %v3739 = vld [vmem:[%s3720 + $0x48] sm:$0xf]
      %v3740 = vld [vmem:[%s3720 + $0x4c] sm:$0xf]
      %v3741 = vld [vmem:[%s3720 + $0x50] sm:$0xf]
      %v3742 = vld [vmem:[%s3720 + $0x54] sm:$0xf]
      %v3743 = vld [vmem:[%s3720 + $0x58] sm:$0xf]
      %v3744 = vld [vmem:[%s3720 + $0x5c] sm:$0xf]
      %vm3763 = vcmask 1045504
      %v3764 = vrot.slane %v3649, 2
      %v3765 = vrot.slane %v3651, 2
      %v3766 = vsel %vm3763, %v3764, %v3765
      %v3767 = vrot.slane %v3615, 2
      %v3768 = vrot.slane %v3617, 2
      %v3769 = vsel %vm3763, %v3767, %v3768
      %v3770 = vrot.slane %v3653, 2
      %v3771 = vsel %vm3763, %v3765, %v3770
      %v3772 = vrot.slane %v3619, 2
      %v3773 = vsel %vm3763, %v3768, %v3772
      %v3774 = vrot.slane %v3655, 2
      %v3775 = vsel %vm3763, %v3770, %v3774
      %v3776 = vrot.slane %v3621, 2
      %v3777 = vsel %vm3763, %v3772, %v3776
      %v3778 = vrot.slane %v3657, 2
      %v3779 = vsel %vm3763, %v3774, %v3778
      %v3780 = vrot.slane %v3623, 2
      %v3781 = vsel %vm3763, %v3776, %v3780
      %v3782 = vrot.slane %v3659, 2
      %v3783 = vsel %vm3763, %v3778, %v3782
      %v3784 = vrot.slane %v3625, 2
      %v3785 = vsel %vm3763, %v3780, %v3784
      %v3786 = vrot.slane %v3661, 2
      %v3787 = vsel %vm3763, %v3782, %v3786
      %v3788 = vrot.slane %v3627, 2
      %v3789 = vsel %vm3763, %v3784, %v3788
      %v3790 = vrot.slane %v3663, 2
      %v3791 = vsel %vm3763, %v3786, %v3790
      %v3792 = vrot.slane %v3629, 2
      %v3793 = vsel %vm3763, %v3788, %v3792
      %v3794 = vrot.slane %v3665, 2
      %v3795 = vsel %vm3763, %v3790, %v3794
      %v3796 = vrot.slane %v3631, 2
      %v3797 = vsel %vm3763, %v3792, %v3796
      %v3798 = vrot.slane %v3667, 2
      %v3799 = vsel %vm3763, %v3794, %v3798
      %v3800 = vrot.slane %v3633, 2
      %v3801 = vsel %vm3763, %v3796, %v3800
      %v3802 = vrot.slane %v3669, 2
      %v3803 = vsel %vm3763, %v3798, %v3802
      %v3804 = vrot.slane %v3635, 2
      %v3805 = vsel %vm3763, %v3800, %v3804
      %v3806 = vrot.slane %v3671, 2
      %v3807 = vsel %vm3763, %v3802, %v3806
      %v3808 = vrot.slane %v3637, 2
      %v3809 = vsel %vm3763, %v3804, %v3808
      %v3810 = vrot.slane %v3673, 2
      %v3811 = vsel %vm3763, %v3806, %v3810
      %v3812 = vrot.slane %v3639, 2
      %v3813 = vsel %vm3763, %v3808, %v3812
      %v3814 = vrot.slane %v3675, 2
      %v3815 = vsel %vm3763, %v3810, %v3814
      %v3816 = vrot.slane %v3641, 2
      %v3817 = vsel %vm3763, %v3812, %v3816
      %v3818 = vrot.slane %v3677, 2
      %v3819 = vsel %vm3763, %v3814, %v3818
      %v3820 = vrot.slane %v3643, 2
      %v3821 = vsel %vm3763, %v3816, %v3820
      %v3822 = vrot.slane %v3679, 2
      %v3823 = vsel %vm3763, %v3818, %v3822
      %v3824 = vrot.slane %v3645, 2
      %v3825 = vsel %vm3763, %v3820, %v3824
      %v3826 = vrot.slane %v3681, 2
      %v3827 = vsel %vm3763, %v3822, %v3826
      %v3828 = vrot.slane %v3647, 2
      %v3829 = vsel %vm3763, %v3824, %v3828
      %v3830 = vrot.slane %v3684, 2
      %v3831 = vsel %vm3763, %v3826, %v3830
      %v3832 = vrot.slane %v3646, 2
      %v3833 = vsel %vm3763, %v3828, %v3832
      %v3876 = vunpack.c.l.b16 %v3721
      %v3877 = vunpack.c.l.b16 %v3722
      %v3878 = vunpack.c.l.b16 %v3723
      %v3879 = vunpack.c.l.b16 %v3724
      %v3880 = vunpack.c.l.b16 %v3725
      %v3881 = vunpack.c.l.b16 %v3726
      %v3882 = vunpack.c.l.b16 %v3727
      %v3883 = vunpack.c.l.b16 %v3728
      %v3884 = vunpack.c.l.b16 %v3729
      %v3885 = vunpack.c.l.b16 %v3730
      %v3886 = vunpack.c.l.b16 %v3731
      %v3887 = vunpack.c.l.b16 %v3732
      %v3888 = vunpack.c.l.b16 %v3733
      %v3889 = vunpack.c.l.b16 %v3734
      %v3890 = vunpack.c.l.b16 %v3735
      %v3891 = vunpack.c.l.b16 %v3736
      %v3892 = vunpack.c.l.b16 %v3737
      %v3893 = vunpack.c.l.b16 %v3738
      %v3894 = vunpack.c.l.b16 %v3739
      %v3895 = vunpack.c.l.b16 %v3740
      %v3896 = vunpack.c.l.b16 %v3741
      %v3897 = vunpack.c.l.b16 %v3742
      %v3898 = vunpack.c.l.b16 %v3743
      %v3899 = vunpack.c.l.b16 %v3744
      %v3900 = vpack.c.b16 %v3877, %v3876
      %v3901 = vpack.c.b16 %v3879, %v3878
      %v3902 = vpack.c.b16 %v3881, %v3880
      %v3903 = vpack.c.b16 %v3883, %v3882
      %v3904 = vpack.c.b16 %v3885, %v3884
      %v3905 = vpack.c.b16 %v3887, %v3886
      %v3906 = vpack.c.b16 %v3889, %v3888
      %v3907 = vpack.c.b16 %v3891, %v3890
      %v3908 = vpack.c.b16 %v3893, %v3892
      %v3909 = vpack.c.b16 %v3895, %v3894
      %v3910 = vpack.c.b16 %v3897, %v3896
      %v3911 = vpack.c.b16 %v3899, %v3898
      %v3925 = vsel %vm1739, %v3769, 0
      %v3928 = vsel %vm1739, %v3773, 0
      %v3931 = vsel %vm1739, %v3777, 0
      %v3934 = vsel %vm1739, %v3781, 0
      %v3937 = vsel %vm1739, %v3785, 0
      %v3940 = vsel %vm1739, %v3789, 0
      %v3943 = vsel %vm1739, %v3793, 0
      %v3946 = vsel %vm1739, %v3797, 0
      %v3949 = vsel %vm1739, %v3801, 0
      %v3952 = vsel %vm1739, %v3805, 0
      %v3955 = vsel %vm1739, %v3809, 0
      %v3958 = vsel %vm1739, %v3813, 0
      %v3961 = vsel %vm1739, %v3817, 0
      %v3964 = vsel %vm1739, %v3821, 0
      %v3967 = vsel %vm1739, %v3825, 0
      %v3970 = vsel %vm1739, %v3829, 0
      %v3973 = vsel %vm1739, %v3833, 0
      %v3976 = vsel %vm1739, %v3832, 0
      %3978 = vmatprep.subr.bf16.mxu0 0
      %3979 = vmatpush1.bf16.msra.mxu0 %v3900
      %3980 = vmatprep.subr.bf16.mxu0 0
      %3981 = vmatpush1.bf16.msra.mxu0 %v3901
      %3982 = vmatprep.subr.bf16.mxu0 0
      %3983 = vmatpush1.bf16.msra.mxu0 %v3902
      %3984 = vmatprep.subr.bf16.mxu0 0
      %3985 = vmatpush1.bf16.msra.mxu0 %v3903
      %3986 = vmatprep.subr.bf16.mxu0 0
      %3987 = vmatpush1.bf16.msra.mxu0 %v3904
      %3988 = vmatprep.subr.bf16.mxu0 0
      %3989 = vmatpush1.bf16.msra.mxu0 %v3905
      %3990 = vmatprep.subr.bf16.mxu0 0
      %3991 = vmatpush1.bf16.msra.mxu0 %v3906
      %3992 = vmatprep.subr.bf16.mxu0 0
      %3993 = vmatpush1.bf16.msra.mxu0 %v3907
      %3994 = vmatprep.subr.bf16.mxu0 0
      %3995 = vmatpush1.bf16.msra.mxu0 %v3908
      %3996 = vmatprep.subr.bf16.mxu0 0
      %3997 = vmatpush1.bf16.msra.mxu0 %v3909
      %3998 = vmatprep.subr.bf16.mxu0 0
      %3999 = vmatpush1.bf16.msra.mxu0 %v3910
      %4000 = vmatprep.subr.bf16.mxu0 0
      %4001 = vmatpush1.bf16.msra.mxu0 %v3911
      %4002 = vmatprep.subr.bf16.mxu0 0
      %4003 = vmatpush1.bf16.msra.mxu0 0
      %4004 = vmatprep.subr.bf16.mxu0 0
      %4005 = vmatpush1.bf16.msra.mxu0 0
      %4006 = vmatprep.subr.bf16.mxu0 0
      %4007 = vmatpush1.bf16.msra.mxu0 0
      %4008 = vmatprep.subr.bf16.mxu0 0
      %4009 = vmatpush1.bf16.msra.mxu0 0
      %4010 = vmatprep.mubr.bf16.mxu0 %v3925
      %4011 = vmatmul.mubr.bf16.gmra.mrb[0].mxu0 %v3766
      %v4012 = vpop.f32.mrb[0].mxu0
      %v4013 = vadd.f32 0.0, %v4012
      %v4014 = vpop.f32.mrb[0].mxu0
      %v4015 = vpop.f32.mrb[0].mxu0
      %v4016 = vadd.f32 0.0, %v4015
      %v4017 = vpop.f32.mrb[0].mxu0
      %4018 = vmatprep.mubr.bf16.mxu0 %v3928
      %4019 = vmatmul.mubr.bf16.gmra.mrb[0].mxu0 %v3771
      %v4020 = vpop.f32.mrb[0].mxu0
      %v4021 = vadd.f32 0.0, %v4020
      %v4022 = vpop.f32.mrb[0].mxu0
      %v4023 = vpop.f32.mrb[0].mxu0
      %v4024 = vadd.f32 0.0, %v4023
      %v4025 = vpop.f32.mrb[0].mxu0
      %4026 = vmatprep.mubr.bf16.mxu0 %v3931
      %4027 = vmatmul.mubr.bf16.gmra.mrb[0].mxu0 %v3775
      %v4028 = vpop.f32.mrb[0].mxu0
      %v4029 = vadd.f32 0.0, %v4028
      %v4030 = vpop.f32.mrb[0].mxu0
      %v4031 = vpop.f32.mrb[0].mxu0
      %v4032 = vadd.f32 0.0, %v4031
      %v4033 = vpop.f32.mrb[0].mxu0
      %4034 = vmatprep.mubr.bf16.mxu0 %v3934
      %4035 = vmatmul.mubr.bf16.gmra.mrb[0].mxu0 %v3779
      %v4036 = vpop.f32.mrb[0].mxu0
      %v4037 = vadd.f32 0.0, %v4036
      %v4038 = vpop.f32.mrb[0].mxu0
      %v4039 = vpop.f32.mrb[0].mxu0
      %v4040 = vadd.f32 0.0, %v4039
      %v4041 = vpop.f32.mrb[0].mxu0
      %4042 = vmatprep.mubr.bf16.mxu0 %v3937
      %4043 = vmatmul.mubr.bf16.gmra.mrb[0].mxu0 %v3783
      %v4044 = vpop.f32.mrb[0].mxu0
      %v4045 = vadd.f32 0.0, %v4044
      %v4046 = vpop.f32.mrb[0].mxu0
      %v4047 = vpop.f32.mrb[0].mxu0
      %v4048 = vadd.f32 0.0, %v4047
      %v4049 = vpop.f32.mrb[0].mxu0
      %4050 = vmatprep.mubr.bf16.mxu0 %v3940
      %4051 = vmatmul.mubr.bf16.gmra.mrb[0].mxu0 %v3787
      %v4052 = vpop.f32.mrb[0].mxu0
      %v4053 = vadd.f32 0.0, %v4052
      %v4054 = vpop.f32.mrb[0].mxu0
      %v4055 = vpop.f32.mrb[0].mxu0
      %v4056 = vadd.f32 0.0, %v4055
      %v4057 = vpop.f32.mrb[0].mxu0
      %4058 = vmatprep.mubr.bf16.mxu0 %v3943
      %4059 = vmatmul.mubr.bf16.gmra.mrb[0].mxu0 %v3791
      %v4060 = vpop.f32.mrb[0].mxu0
      %v4061 = vadd.f32 0.0, %v4060
      %v4062 = vpop.f32.mrb[0].mxu0
      %v4063 = vpop.f32.mrb[0].mxu0
      %v4064 = vadd.f32 0.0, %v4063
      %v4065 = vpop.f32.mrb[0].mxu0
      %4066 = vmatprep.mubr.bf16.mxu0 %v3946
      %4067 = vmatmul.mubr.bf16.gmra.mrb[0].mxu0 %v3795
      %v4068 = vpop.f32.mrb[0].mxu0
      %v4069 = vadd.f32 0.0, %v4068
      %v4070 = vpop.f32.mrb[0].mxu0
      %v4071 = vpop.f32.mrb[0].mxu0
      %v4072 = vadd.f32 0.0, %v4071
      %v4073 = vpop.f32.mrb[0].mxu0
      %4074 = vmatprep.mubr.bf16.mxu0 %v3949
      %4075 = vmatmul.mubr.bf16.gmra.mrb[0].mxu0 %v3799
      %v4076 = vpop.f32.mrb[0].mxu0
      %v4077 = vadd.f32 0.0, %v4076
      %v4078 = vpop.f32.mrb[0].mxu0
      %v4079 = vpop.f32.mrb[0].mxu0
      %v4080 = vadd.f32 0.0, %v4079
      %v4081 = vpop.f32.mrb[0].mxu0
      %4082 = vmatprep.mubr.bf16.mxu0 %v3952
      %4083 = vmatmul.mubr.bf16.gmra.mrb[0].mxu0 %v3803
      %v4084 = vpop.f32.mrb[0].mxu0
      %v4085 = vadd.f32 0.0, %v4084
      %v4086 = vpop.f32.mrb[0].mxu0
      %v4087 = vpop.f32.mrb[0].mxu0
      %v4088 = vadd.f32 0.0, %v4087
      %v4089 = vpop.f32.mrb[0].mxu0
      %4090 = vmatprep.mubr.bf16.mxu0 %v3955
      %4091 = vmatmul.mubr.bf16.gmra.mrb[0].mxu0 %v3807
      %v4092 = vpop.f32.mrb[0].mxu0
      %v4093 = vadd.f32 0.0, %v4092
      %v4094 = vpop.f32.mrb[0].mxu0
      %v4095 = vpop.f32.mrb[0].mxu0
      %v4096 = vadd.f32 0.0, %v4095
      %v4097 = vpop.f32.mrb[0].mxu0
      %4098 = vmatprep.mubr.bf16.mxu0 %v3958
      %4099 = vmatmul.mubr.bf16.gmra.mrb[0].mxu0 %v3811
      %v4100 = vpop.f32.mrb[0].mxu0
      %v4101 = vadd.f32 0.0, %v4100
      %v4102 = vpop.f32.mrb[0].mxu0
      %v4103 = vpop.f32.mrb[0].mxu0
      %v4104 = vadd.f32 0.0, %v4103
      %v4105 = vpop.f32.mrb[0].mxu0
      %4106 = vmatprep.mubr.bf16.mxu0 %v3961
      %4107 = vmatmul.mubr.bf16.gmra.mrb[0].mxu0 %v3815
      %v4108 = vpop.f32.mrb[0].mxu0
      %v4109 = vadd.f32 0.0, %v4108
      %v4110 = vpop.f32.mrb[0].mxu0
      %v4111 = vpop.f32.mrb[0].mxu0
      %v4112 = vadd.f32 0.0, %v4111
      %v4113 = vpop.f32.mrb[0].mxu0
      %4114 = vmatprep.mubr.bf16.mxu0 %v3964
      %4115 = vmatmul.mubr.bf16.gmra.mrb[0].mxu0 %v3819
      %v4116 = vpop.f32.mrb[0].mxu0
      %v4117 = vadd.f32 0.0, %v4116
      %v4118 = vpop.f32.mrb[0].mxu0
      %v4119 = vpop.f32.mrb[0].mxu0
      %v4120 = vadd.f32 0.0, %v4119
      %v4121 = vpop.f32.mrb[0].mxu0
      %4122 = vmatprep.mubr.bf16.mxu0 %v3967
      %4123 = vmatmul.mubr.bf16.gmra.mrb[0].mxu0 %v3823
      %v4124 = vpop.f32.mrb[0].mxu0
      %v4125 = vadd.f32 0.0, %v4124
      %v4126 = vpop.f32.mrb[0].mxu0
      %v4127 = vpop.f32.mrb[0].mxu0
      %v4128 = vadd.f32 0.0, %v4127
      %v4129 = vpop.f32.mrb[0].mxu0
      %4130 = vmatprep.mubr.bf16.mxu0 %v3970
      %4131 = vmatmul.mubr.bf16.gmra.mrb[0].mxu0 %v3827
      %v4132 = vpop.f32.mrb[0].mxu0
      %v4133 = vadd.f32 0.0, %v4132
      %v4134 = vpop.f32.mrb[0].mxu0
      %v4135 = vpop.f32.mrb[0].mxu0
      %v4136 = vadd.f32 0.0, %v4135
      %v4137 = vpop.f32.mrb[0].mxu0
      %4138 = vmatprep.mubr.bf16.mxu0 %v3973
      %4139 = vmatmul.mubr.bf16.gmra.mrb[0].mxu0 %v3831
      %v4140 = vpop.f32.mrb[0].mxu0
      %v4141 = vadd.f32 0.0, %v4140
      %v4142 = vpop.f32.mrb[0].mxu0
      %v4143 = vpop.f32.mrb[0].mxu0
      %v4144 = vadd.f32 0.0, %v4143
      %v4145 = vpop.f32.mrb[0].mxu0
      %4146 = vmatprep.mubr.bf16.mxu0 %v3976
      %4147 = vmatmul.mubr.bf16.gmra.mrb[0].mxu0 %v3830
      %v4148 = vpop.f32.mrb[0].mxu0
      %v4149 = vadd.f32 0.0, %v4148
      %v4150 = vpop.f32.mrb[0].mxu0
      %v4151 = vpop.f32.mrb[0].mxu0
      %v4152 = vpop.f32.mrb[0].mxu0
      %4153 = vdwg.mxu0
      %v4154 = vadd.f32 %v3685, %v4013
      %v4155 = vadd.f32 %v3686, %v4016
      %v4156 = vadd.f32 %v3687, %v4021
      %v4157 = vadd.f32 %v3688, %v4024
      %v4158 = vadd.f32 %v3689, %v4029
      %v4159 = vadd.f32 %v3690, %v4032
      %v4160 = vadd.f32 %v3691, %v4037
      %v4161 = vadd.f32 %v3692, %v4040
      %v4162 = vadd.f32 %v3693, %v4045
      %v4163 = vadd.f32 %v3694, %v4048
      %v4164 = vadd.f32 %v3695, %v4053
      %v4165 = vadd.f32 %v3696, %v4056
      %v4166 = vadd.f32 %v3697, %v4061
      %v4167 = vadd.f32 %v3698, %v4064
      %v4168 = vadd.f32 %v3699, %v4069
      %v4169 = vadd.f32 %v3700, %v4072
      %v4170 = vadd.f32 %v3701, %v4077
      %v4171 = vadd.f32 %v3702, %v4080
      %v4172 = vadd.f32 %v3703, %v4085
      %v4173 = vadd.f32 %v3704, %v4088
      %v4174 = vadd.f32 %v3705, %v4093
      %v4175 = vadd.f32 %v3706, %v4096
      %v4176 = vadd.f32 %v3707, %v4101
      %v4177 = vadd.f32 %v3708, %v4104
      %v4178 = vadd.f32 %v3709, %v4109
      %v4179 = vadd.f32 %v3710, %v4112
      %v4180 = vadd.f32 %v3711, %v4117
      %v4181 = vadd.f32 %v3712, %v4120
      %v4182 = vadd.f32 %v3713, %v4125
      %v4183 = vadd.f32 %v3714, %v4128
      %v4184 = vadd.f32 %v3715, %v4133
      %v4185 = vadd.f32 %v3716, %v4136
      %v4186 = vadd.f32 %v3717, %v4141
      %v4187 = vadd.f32 %v3718, %v4144
      %v4188 = vadd.f32 %v3719, %v4149
      %4189 = vst [vmem:[#allocation3] sm:$0xff] %v4154
      %4190 = vst [vmem:[#allocation3 + $0x8] sm:$0xff] %v4155
      %4191 = vst [vmem:[#allocation3 + $0x10] sm:$0xff] %v4156
      %4192 = vst [vmem:[#allocation3 + $0x18] sm:$0xff] %v4157
      %4193 = vst [vmem:[#allocation3 + $0x20] sm:$0xff] %v4158
      %4194 = vst [vmem:[#allocation3 + $0x28] sm:$0xff] %v4159
      %4195 = vst [vmem:[#allocation3 + $0x30] sm:$0xff] %v4160
      %4196 = vst [vmem:[#allocation3 + $0x38] sm:$0xff] %v4161
      %4197 = vst [vmem:[#allocation3 + $0x40] sm:$0xff] %v4162
      %4198 = vst [vmem:[#allocation3 + $0x48] sm:$0xff] %v4163
      %4199 = vst [vmem:[#allocation3 + $0x50] sm:$0xff] %v4164
      %4200 = vst [vmem:[#allocation3 + $0x58] sm:$0xff] %v4165
      %4201 = vst [vmem:[#allocation3 + $0x60] sm:$0xff] %v4166
      %4202 = vst [vmem:[#allocation3 + $0x68] sm:$0xff] %v4167
      %4203 = vst [vmem:[#allocation3 + $0x70] sm:$0xff] %v4168
      %4204 = vst [vmem:[#allocation3 + $0x78] sm:$0xff] %v4169
      %4205 = vst [vmem:[#allocation3 + $0x80] sm:$0xff] %v4170
      %4206 = vst [vmem:[#allocation3 + $0x88] sm:$0xff] %v4171
      %4207 = vst [vmem:[#allocation3 + $0x90] sm:$0xff] %v4172
      %4208 = vst [vmem:[#allocation3 + $0x98] sm:$0xff] %v4173
      %4209 = vst [vmem:[#allocation3 + $0xa0] sm:$0xff] %v4174
      %4210 = vst [vmem:[#allocation3 + $0xa8] sm:$0xff] %v4175
      %4211 = vst [vmem:[#allocation3 + $0xb0] sm:$0xff] %v4176
      %4212 = vst [vmem:[#allocation3 + $0xb8] sm:$0xff] %v4177
      %4213 = vst [vmem:[#allocation3 + $0xc0] sm:$0xff] %v4178
      %4214 = vst [vmem:[#allocation3 + $0xc8] sm:$0xff] %v4179
      %4215 = vst [vmem:[#allocation3 + $0xd0] sm:$0xff] %v4180
      %4216 = vst [vmem:[#allocation3 + $0xd8] sm:$0xff] %v4181
      %4217 = vst [vmem:[#allocation3 + $0xe0] sm:$0xff] %v4182
      %4218 = vst [vmem:[#allocation3 + $0xe8] sm:$0xff] %v4183
      %4219 = vst [vmem:[#allocation3 + $0xf0] sm:$0xff] %v4184
      %4220 = vst [vmem:[#allocation3 + $0xf8] sm:$0xff] %v4185
      %4221 = vst [vmem:[#allocation3 + $0x100] sm:$0xff] %v4186
      %4222 = vst [vmem:[#allocation3 + $0x108] sm:$0xff] %v4187
      %4223 = vst [vmem:[#allocation3 + $0x110] sm:$0xff] %v4188
      %v4224 = vld [vmem:[#allocation2 + $0x30] sm:$0xfc]
      %v4225 = vld [vmem:[#allocation2 + $0x38] sm:$0xff]
      %v4226 = vld [vmem:[#allocation2 + $0x40] sm:$0xff]
      %v4227 = vld [vmem:[#allocation2 + $0x48] sm:$0xff]
      %v4228 = vld [vmem:[#allocation2 + $0x50] sm:$0xff]
      %v4229 = vld [vmem:[#allocation2 + $0x58] sm:$0xff]
      %v4230 = vld [vmem:[#allocation2 + $0x60] sm:$0xff]
      %v4231 = vld [vmem:[#allocation2 + $0x68] sm:$0xff]
      %v4232 = vld [vmem:[#allocation2 + $0x70] sm:$0xff]
      %v4233 = vld [vmem:[#allocation2 + $0x78] sm:$0xff]
      %v4234 = vld [vmem:[#allocation2 + $0x80] sm:$0xff]
      %v4235 = vld [vmem:[#allocation2 + $0x88] sm:$0xff]
      %v4236 = vld [vmem:[#allocation2 + $0x90] sm:$0xff]
      %v4237 = vld [vmem:[#allocation2 + $0x98] sm:$0xff]
      %v4238 = vld [vmem:[#allocation2 + $0xa0] sm:$0xff]
      %v4239 = vld [vmem:[#allocation2 + $0xa8] sm:$0xff]
      %v4240 = vld [vmem:[#allocation2 + $0xb0] sm:$0xff]
      %v4241 = vld [vmem:[#allocation2 + $0xb8] sm:$0x3f]
      %v4242 = vld [vmem:[#allocation2 + $0xb8] sm:$0x7f]
      %v4243 = vld [vmem:[#allocation2 + $0x30] sm:$0xf8]
      %v4245 = vshrl.u32 %v4224, 16
      %v4247 = vshll.u32 %v4224, 16
      %v4249 = vrot.slane %v4247, 1
      %v4250 = vor.u32 %v4245, %v4249
      %v4252 = vshll.u32 %v4225, 16
      %v4254 = vrot.slane %v4252, 1
      %v4255 = vsel %vm1827, %v4250, %v4254
      %v4256 = vshrl.u32 %v4225, 16
      %v4258 = vor.u32 %v4256, %v4254
      %v4260 = vshll.u32 %v4226, 16
      %v4262 = vrot.slane %v4260, 1
      %v4263 = vsel %vm1827, %v4258, %v4262
      %v4264 = vshrl.u32 %v4226, 16
      %v4266 = vor.u32 %v4264, %v4262
      %v4268 = vshll.u32 %v4227, 16
      %v4270 = vrot.slane %v4268, 1
      %v4271 = vsel %vm1827, %v4266, %v4270
      %v4272 = vshrl.u32 %v4227, 16
      %v4274 = vor.u32 %v4272, %v4270
      %v4276 = vshll.u32 %v4228, 16
      %v4278 = vrot.slane %v4276, 1
      %v4279 = vsel %vm1827, %v4274, %v4278
      %v4280 = vshrl.u32 %v4228, 16
      %v4282 = vor.u32 %v4280, %v4278
      %v4284 = vshll.u32 %v4229, 16
      %v4286 = vrot.slane %v4284, 1
      %v4287 = vsel %vm1827, %v4282, %v4286
      %v4288 = vshrl.u32 %v4229, 16
      %v4290 = vor.u32 %v4288, %v4286
      %v4292 = vshll.u32 %v4230, 16
      %v4294 = vrot.slane %v4292, 1
      %v4295 = vsel %vm1827, %v4290, %v4294
      %v4296 = vshrl.u32 %v4230, 16
      %v4298 = vor.u32 %v4296, %v4294
      %v4300 = vshll.u32 %v4231, 16
      %v4302 = vrot.slane %v4300, 1
      %v4303 = vsel %vm1827, %v4298, %v4302
      %v4304 = vshrl.u32 %v4231, 16
      %v4306 = vor.u32 %v4304, %v4302
      %v4308 = vshll.u32 %v4232, 16
      %v4310 = vrot.slane %v4308, 1
      %v4311 = vsel %vm1827, %v4306, %v4310
      %v4312 = vshrl.u32 %v4232, 16
      %v4314 = vor.u32 %v4312, %v4310
      %v4316 = vshll.u32 %v4233, 16
      %v4318 = vrot.slane %v4316, 1
      %v4319 = vsel %vm1827, %v4314, %v4318
      %v4320 = vshrl.u32 %v4233, 16
      %v4322 = vor.u32 %v4320, %v4318
      %v4324 = vshll.u32 %v4234, 16
      %v4326 = vrot.slane %v4324, 1
      %v4327 = vsel %vm1827, %v4322, %v4326
      %v4328 = vshrl.u32 %v4234, 16
      %v4330 = vor.u32 %v4328, %v4326
      %v4332 = vshll.u32 %v4235, 16
      %v4334 = vrot.slane %v4332, 1
      %v4335 = vsel %vm1827, %v4330, %v4334
      %v4336 = vshrl.u32 %v4235, 16
      %v4338 = vor.u32 %v4336, %v4334
      %v4340 = vshll.u32 %v4236, 16
      %v4342 = vrot.slane %v4340, 1
      %v4343 = vsel %vm1827, %v4338, %v4342
      %v4344 = vshrl.u32 %v4236, 16
      %v4346 = vor.u32 %v4344, %v4342
      %v4348 = vshll.u32 %v4237, 16
      %v4350 = vrot.slane %v4348, 1
      %v4351 = vsel %vm1827, %v4346, %v4350
      %v4352 = vshrl.u32 %v4237, 16
      %v4354 = vor.u32 %v4352, %v4350
      %v4356 = vshll.u32 %v4238, 16
      %v4358 = vrot.slane %v4356, 1
      %v4359 = vsel %vm1827, %v4354, %v4358
      %v4360 = vshrl.u32 %v4238, 16
      %v4362 = vor.u32 %v4360, %v4358
      %v4364 = vshll.u32 %v4239, 16
      %v4366 = vrot.slane %v4364, 1
      %v4367 = vsel %vm1827, %v4362, %v4366
      %v4368 = vshrl.u32 %v4239, 16
      %v4370 = vor.u32 %v4368, %v4366
      %v4372 = vshll.u32 %v4240, 16
      %v4374 = vrot.slane %v4372, 1
      %v4375 = vsel %vm1827, %v4370, %v4374
      %v4376 = vshrl.u32 %v4240, 16
      %v4378 = vor.u32 %v4376, %v4374
      %v4380 = vshll.u32 %v4242, 16
      %v4382 = vrot.slane %v4380, 1
      %v4383 = vsel %vm1827, %v4378, %v4382
      %v4384 = vshrl.u32 %v4242, 16
      %v4386 = vor.u32 %v4384, %v4382
      %4387 = vrot.lane.b32.xlu0 %v4255, 64
      %v4388 = vpop.permute.xlu0 %4387
      %4389 = vrot.lane.b32.xlu0 %v4263, 64
      %v4390 = vpop.permute.xlu0 %4389
      %4391 = vrot.lane.b32.xlu0 %v4271, 64
      %v4392 = vpop.permute.xlu0 %4391
      %4393 = vrot.lane.b32.xlu0 %v4279, 64
      %v4394 = vpop.permute.xlu0 %4393
      %4395 = vrot.lane.b32.xlu0 %v4287, 64
      %v4396 = vpop.permute.xlu0 %4395
      %4397 = vrot.lane.b32.xlu0 %v4295, 64
      %v4398 = vpop.permute.xlu0 %4397
      %4399 = vrot.lane.b32.xlu0 %v4303, 64
      %v4400 = vpop.permute.xlu0 %4399
      %4401 = vrot.lane.b32.xlu0 %v4311, 64
      %v4402 = vpop.permute.xlu0 %4401
      %4403 = vrot.lane.b32.xlu0 %v4319, 64
      %v4404 = vpop.permute.xlu0 %4403
      %4405 = vrot.lane.b32.xlu0 %v4327, 64
      %v4406 = vpop.permute.xlu0 %4405
      %4407 = vrot.lane.b32.xlu0 %v4335, 64
      %v4408 = vpop.permute.xlu0 %4407
      %4409 = vrot.lane.b32.xlu0 %v4343, 64
      %v4410 = vpop.permute.xlu0 %4409
      %4411 = vrot.lane.b32.xlu0 %v4351, 64
      %v4412 = vpop.permute.xlu0 %4411
      %4413 = vrot.lane.b32.xlu0 %v4359, 64
      %v4414 = vpop.permute.xlu0 %4413
      %4415 = vrot.lane.b32.xlu0 %v4367, 64
      %v4416 = vpop.permute.xlu0 %4415
      %4417 = vrot.lane.b32.xlu0 %v4375, 64
      %v4418 = vpop.permute.xlu0 %4417
      %4419 = vrot.lane.b32.xlu0 %v4383, 64
      %v4420 = vpop.permute.xlu0 %4419
      %4421 = vrot.lane.b32.xlu0 %v4386, 64
      %v4422 = vpop.permute.xlu0 %4421
      %v4441 = vrot.slane %v4243, 1
      %v4442 = vrot.slane %v4225, 1
      %v4443 = vsel %vm2025, %v4441, %v4442
      %v4444 = vrot.slane %v4226, 1
      %v4445 = vsel %vm2025, %v4442, %v4444
      %v4446 = vrot.slane %v4227, 1
      %v4447 = vsel %vm2025, %v4444, %v4446
      %v4448 = vrot.slane %v4228, 1
      %v4449 = vsel %vm2025, %v4446, %v4448
      %v4450 = vrot.slane %v4229, 1
      %v4451 = vsel %vm2025, %v4448, %v4450
      %v4452 = vrot.slane %v4230, 1
      %v4453 = vsel %vm2025, %v4450, %v4452
      %v4454 = vrot.slane %v4231, 1
      %v4455 = vsel %vm2025, %v4452, %v4454
      %v4456 = vrot.slane %v4232, 1
      %v4457 = vsel %vm2025, %v4454, %v4456
      %v4458 = vrot.slane %v4233, 1
      %v4459 = vsel %vm2025, %v4456, %v4458
      %v4460 = vrot.slane %v4234, 1
      %v4461 = vsel %vm2025, %v4458, %v4460
      %v4462 = vrot.slane %v4235, 1
      %v4463 = vsel %vm2025, %v4460, %v4462
      %v4464 = vrot.slane %v4236, 1
      %v4465 = vsel %vm2025, %v4462, %v4464
      %v4466 = vrot.slane %v4237, 1
      %v4467 = vsel %vm2025, %v4464, %v4466
      %v4468 = vrot.slane %v4238, 1
      %v4469 = vsel %vm2025, %v4466, %v4468
      %v4470 = vrot.slane %v4239, 1
      %v4471 = vsel %vm2025, %v4468, %v4470
      %v4472 = vrot.slane %v4240, 1
      %v4473 = vsel %vm2025, %v4470, %v4472
      %v4474 = vrot.slane %v4242, 1
      %v4475 = vsel %vm2025, %v4472, %v4474
      %v4477 = vsel %vm1739, %v4224, %v4388
      %v4479 = vsel %vm1739, %v4225, %v4390
      %v4481 = vsel %vm1739, %v4226, %v4392
      %v4483 = vsel %vm1739, %v4227, %v4394
      %v4485 = vsel %vm1739, %v4228, %v4396
      %v4487 = vsel %vm1739, %v4229, %v4398
      %v4489 = vsel %vm1739, %v4230, %v4400
      %v4491 = vsel %vm1739, %v4231, %v4402
      %v4493 = vsel %vm1739, %v4232, %v4404
      %v4495 = vsel %vm1739, %v4233, %v4406
      %v4497 = vsel %vm1739, %v4234, %v4408
      %v4499 = vsel %vm1739, %v4235, %v4410
      %v4501 = vsel %vm1739, %v4236, %v4412
      %v4503 = vsel %vm1739, %v4237, %v4414
      %v4505 = vsel %vm1739, %v4238, %v4416
      %v4507 = vsel %vm1739, %v4239, %v4418
      %v4509 = vsel %vm1739, %v4240, %v4420
      %v4512 = vsel %vm1739, %v4241, %v4422
      %v4513 = vld [vmem:[#allocation3] sm:$0xff]
      %v4514 = vld [vmem:[#allocation3 + $0x8] sm:$0xff]
      %v4515 = vld [vmem:[#allocation3 + $0x10] sm:$0xff]
      %v4516 = vld [vmem:[#allocation3 + $0x18] sm:$0xff]
      %v4517 = vld [vmem:[#allocation3 + $0x20] sm:$0xff]
      %v4518 = vld [vmem:[#allocation3 + $0x28] sm:$0xff]
      %v4519 = vld [vmem:[#allocation3 + $0x30] sm:$0xff]
      %v4520 = vld [vmem:[#allocation3 + $0x38] sm:$0xff]
      %v4521 = vld [vmem:[#allocation3 + $0x40] sm:$0xff]
      %v4522 = vld [vmem:[#allocation3 + $0x48] sm:$0xff]
      %v4523 = vld [vmem:[#allocation3 + $0x50] sm:$0xff]
      %v4524 = vld [vmem:[#allocation3 + $0x58] sm:$0xff]
      %v4525 = vld [vmem:[#allocation3 + $0x60] sm:$0xff]
      %v4526 = vld [vmem:[#allocation3 + $0x68] sm:$0xff]
      %v4527 = vld [vmem:[#allocation3 + $0x70] sm:$0xff]
      %v4528 = vld [vmem:[#allocation3 + $0x78] sm:$0xff]
      %v4529 = vld [vmem:[#allocation3 + $0x80] sm:$0xff]
      %v4530 = vld [vmem:[#allocation3 + $0x88] sm:$0xff]
      %v4531 = vld [vmem:[#allocation3 + $0x90] sm:$0xff]
      %v4532 = vld [vmem:[#allocation3 + $0x98] sm:$0xff]
      %v4533 = vld [vmem:[#allocation3 + $0xa0] sm:$0xff]
      %v4534 = vld [vmem:[#allocation3 + $0xa8] sm:$0xff]
      %v4535 = vld [vmem:[#allocation3 + $0xb0] sm:$0xff]
      %v4536 = vld [vmem:[#allocation3 + $0xb8] sm:$0xff]
      %v4537 = vld [vmem:[#allocation3 + $0xc0] sm:$0xff]
      %v4538 = vld [vmem:[#allocation3 + $0xc8] sm:$0xff]
      %v4539 = vld [vmem:[#allocation3 + $0xd0] sm:$0xff]
      %v4540 = vld [vmem:[#allocation3 + $0xd8] sm:$0xff]
      %v4541 = vld [vmem:[#allocation3 + $0xe0] sm:$0xff]
      %v4542 = vld [vmem:[#allocation3 + $0xe8] sm:$0xff]
      %v4543 = vld [vmem:[#allocation3 + $0xf0] sm:$0xff]
      %v4544 = vld [vmem:[#allocation3 + $0xf8] sm:$0xff]
      %v4545 = vld [vmem:[#allocation3 + $0x100] sm:$0xff]
      %v4546 = vld [vmem:[#allocation3 + $0x108] sm:$0xff]
      %v4547 = vld [vmem:[#allocation3 + $0x110] sm:$0xff]
      %s4548 = scalar_lea.vmem %s3, 288
      %v4549 = vld [vmem:[%s4548] sm:$0xf]
      %v4550 = vld [vmem:[%s4548 + $0x4] sm:$0xf]
      %v4551 = vld [vmem:[%s4548 + $0x8] sm:$0xf]
      %v4552 = vld [vmem:[%s4548 + $0xc] sm:$0xf]
      %v4553 = vld [vmem:[%s4548 + $0x10] sm:$0xf]
      %v4554 = vld [vmem:[%s4548 + $0x14] sm:$0xf]
      %v4555 = vld [vmem:[%s4548 + $0x18] sm:$0xf]
      %v4556 = vld [vmem:[%s4548 + $0x1c] sm:$0xf]
      %v4557 = vld [vmem:[%s4548 + $0x20] sm:$0xf]
      %v4558 = vld [vmem:[%s4548 + $0x24] sm:$0xf]
      %v4559 = vld [vmem:[%s4548 + $0x28] sm:$0xf]
      %v4560 = vld [vmem:[%s4548 + $0x2c] sm:$0xf]
      %v4561 = vld [vmem:[%s4548 + $0x30] sm:$0xf]
      %v4562 = vld [vmem:[%s4548 + $0x34] sm:$0xf]
      %v4563 = vld [vmem:[%s4548 + $0x38] sm:$0xf]
      %v4564 = vld [vmem:[%s4548 + $0x3c] sm:$0xf]
      %v4565 = vld [vmem:[%s4548 + $0x40] sm:$0xf]
      %v4566 = vld [vmem:[%s4548 + $0x44] sm:$0xf]
      %v4567 = vld [vmem:[%s4548 + $0x48] sm:$0xf]
      %v4568 = vld [vmem:[%s4548 + $0x4c] sm:$0xf]
      %v4569 = vld [vmem:[%s4548 + $0x50] sm:$0xf]
      %v4570 = vld [vmem:[%s4548 + $0x54] sm:$0xf]
      %v4571 = vld [vmem:[%s4548 + $0x58] sm:$0xf]
      %v4572 = vld [vmem:[%s4548 + $0x5c] sm:$0xf]
      %v4591 = vrot.slane %v4477, 2
      %v4592 = vrot.slane %v4479, 2
      %v4593 = vsel %vm3763, %v4591, %v4592
      %v4594 = vrot.slane %v4443, 2
      %v4595 = vrot.slane %v4445, 2
      %v4596 = vsel %vm3763, %v4594, %v4595
      %v4597 = vrot.slane %v4481, 2
      %v4598 = vsel %vm3763, %v4592, %v4597
      %v4599 = vrot.slane %v4447, 2
      %v4600 = vsel %vm3763, %v4595, %v4599
      %v4601 = vrot.slane %v4483, 2
      %v4602 = vsel %vm3763, %v4597, %v4601
      %v4603 = vrot.slane %v4449, 2
      %v4604 = vsel %vm3763, %v4599, %v4603
      %v4605 = vrot.slane %v4485, 2
      %v4606 = vsel %vm3763, %v4601, %v4605
      %v4607 = vrot.slane %v4451, 2
      %v4608 = vsel %vm3763, %v4603, %v4607
      %v4609 = vrot.slane %v4487, 2
      %v4610 = vsel %vm3763, %v4605, %v4609
      %v4611 = vrot.slane %v4453, 2
      %v4612 = vsel %vm3763, %v4607, %v4611
      %v4613 = vrot.slane %v4489, 2
      %v4614 = vsel %vm3763, %v4609, %v4613
      %v4615 = vrot.slane %v4455, 2
      %v4616 = vsel %vm3763, %v4611, %v4615
      %v4617 = vrot.slane %v4491, 2
      %v4618 = vsel %vm3763, %v4613, %v4617
      %v4619 = vrot.slane %v4457, 2
      %v4620 = vsel %vm3763, %v4615, %v4619
      %v4621 = vrot.slane %v4493, 2
      %v4622 = vsel %vm3763, %v4617, %v4621
      %v4623 = vrot.slane %v4459, 2
      %v4624 = vsel %vm3763, %v4619, %v4623
      %v4625 = vrot.slane %v4495, 2
      %v4626 = vsel %vm3763, %v4621, %v4625
      %v4627 = vrot.slane %v4461, 2
      %v4628 = vsel %vm3763, %v4623, %v4627
      %v4629 = vrot.slane %v4497, 2
      %v4630 = vsel %vm3763, %v4625, %v4629
      %v4631 = vrot.slane %v4463, 2
      %v4632 = vsel %vm3763, %v4627, %v4631
      %v4633 = vrot.slane %v4499, 2
      %v4634 = vsel %vm3763, %v4629, %v4633
      %v4635 = vrot.slane %v4465, 2
      %v4636 = vsel %vm3763, %v4631, %v4635
      %v4637 = vrot.slane %v4501, 2
      %v4638 = vsel %vm3763, %v4633, %v4637
      %v4639 = vrot.slane %v4467, 2
      %v4640 = vsel %vm3763, %v4635, %v4639
      %v4641 = vrot.slane %v4503, 2
      %v4642 = vsel %vm3763, %v4637, %v4641
      %v4643 = vrot.slane %v4469, 2
      %v4644 = vsel %vm3763, %v4639, %v4643
      %v4645 = vrot.slane %v4505, 2
      %v4646 = vsel %vm3763, %v4641, %v4645
      %v4647 = vrot.slane %v4471, 2
      %v4648 = vsel %vm3763, %v4643, %v4647
      %v4649 = vrot.slane %v4507, 2
      %v4650 = vsel %vm3763, %v4645, %v4649
      %v4651 = vrot.slane %v4473, 2
      %v4652 = vsel %vm3763, %v4647, %v4651
      %v4653 = vrot.slane %v4509, 2
      %v4654 = vsel %vm3763, %v4649, %v4653
      %v4655 = vrot.slane %v4475, 2
      %v4656 = vsel %vm3763, %v4651, %v4655
      %v4657 = vrot.slane %v4512, 2
      %v4658 = vsel %vm3763, %v4653, %v4657
      %v4659 = vrot.slane %v4474, 2
      %v4660 = vsel %vm3763, %v4655, %v4659
      %v4703 = vunpack.c.l.b16 %v4549
      %v4704 = vunpack.c.l.b16 %v4550
      %v4705 = vunpack.c.l.b16 %v4551
      %v4706 = vunpack.c.l.b16 %v4552
      %v4707 = vunpack.c.l.b16 %v4553
      %v4708 = vunpack.c.l.b16 %v4554
      %v4709 = vunpack.c.l.b16 %v4555
      %v4710 = vunpack.c.l.b16 %v4556
      %v4711 = vunpack.c.l.b16 %v4557
      %v4712 = vunpack.c.l.b16 %v4558
      %v4713 = vunpack.c.l.b16 %v4559
      %v4714 = vunpack.c.l.b16 %v4560
      %v4715 = vunpack.c.l.b16 %v4561
      %v4716 = vunpack.c.l.b16 %v4562
      %v4717 = vunpack.c.l.b16 %v4563
      %v4718 = vunpack.c.l.b16 %v4564
      %v4719 = vunpack.c.l.b16 %v4565
      %v4720 = vunpack.c.l.b16 %v4566
      %v4721 = vunpack.c.l.b16 %v4567
      %v4722 = vunpack.c.l.b16 %v4568
      %v4723 = vunpack.c.l.b16 %v4569
      %v4724 = vunpack.c.l.b16 %v4570
      %v4725 = vunpack.c.l.b16 %v4571
      %v4726 = vunpack.c.l.b16 %v4572
      %v4727 = vpack.c.b16 %v4704, %v4703
      %v4728 = vpack.c.b16 %v4706, %v4705
      %v4729 = vpack.c.b16 %v4708, %v4707
      %v4730 = vpack.c.b16 %v4710, %v4709
      %v4731 = vpack.c.b16 %v4712, %v4711
      %v4732 = vpack.c.b16 %v4714, %v4713
      %v4733 = vpack.c.b16 %v4716, %v4715
      %v4734 = vpack.c.b16 %v4718, %v4717
      %v4735 = vpack.c.b16 %v4720, %v4719
      %v4736 = vpack.c.b16 %v4722, %v4721
      %v4737 = vpack.c.b16 %v4724, %v4723
      %v4738 = vpack.c.b16 %v4726, %v4725
      %v4752 = vsel %vm1739, %v4596, 0
      %v4755 = vsel %vm1739, %v4600, 0
      %v4758 = vsel %vm1739, %v4604, 0
      %v4761 = vsel %vm1739, %v4608, 0
      %v4764 = vsel %vm1739, %v4612, 0
      %v4767 = vsel %vm1739, %v4616, 0
      %v4770 = vsel %vm1739, %v4620, 0
      %v4773 = vsel %vm1739, %v4624, 0
      %v4776 = vsel %vm1739, %v4628, 0
      %v4779 = vsel %vm1739, %v4632, 0
      %v4782 = vsel %vm1739, %v4636, 0
      %v4785 = vsel %vm1739, %v4640, 0
      %v4788 = vsel %vm1739, %v4644, 0
      %v4791 = vsel %vm1739, %v4648, 0
      %v4794 = vsel %vm1739, %v4652, 0
      %v4797 = vsel %vm1739, %v4656, 0
      %v4800 = vsel %vm1739, %v4660, 0
      %v4803 = vsel %vm1739, %v4659, 0
      %4805 = vmatprep.subr.bf16.mxu0 0
      %4806 = vmatpush1.bf16.msra.mxu0 %v4727
      %4807 = vmatprep.subr.bf16.mxu0 0
      %4808 = vmatpush1.bf16.msra.mxu0 %v4728
      %4809 = vmatprep.subr.bf16.mxu0 0
      %4810 = vmatpush1.bf16.msra.mxu0 %v4729
      %4811 = vmatprep.subr.bf16.mxu0 0
      %4812 = vmatpush1.bf16.msra.mxu0 %v4730
      %4813 = vmatprep.subr.bf16.mxu0 0
      %4814 = vmatpush1.bf16.msra.mxu0 %v4731
      %4815 = vmatprep.subr.bf16.mxu0 0
      %4816 = vmatpush1.bf16.msra.mxu0 %v4732
      %4817 = vmatprep.subr.bf16.mxu0 0
      %4818 = vmatpush1.bf16.msra.mxu0 %v4733
      %4819 = vmatprep.subr.bf16.mxu0 0
      %4820 = vmatpush1.bf16.msra.mxu0 %v4734
      %4821 = vmatprep.subr.bf16.mxu0 0
      %4822 = vmatpush1.bf16.msra.mxu0 %v4735
      %4823 = vmatprep.subr.bf16.mxu0 0
      %4824 = vmatpush1.bf16.msra.mxu0 %v4736
      %4825 = vmatprep.subr.bf16.mxu0 0
      %4826 = vmatpush1.bf16.msra.mxu0 %v4737
      %4827 = vmatprep.subr.bf16.mxu0 0
      %4828 = vmatpush1.bf16.msra.mxu0 %v4738
      %4829 = vmatprep.subr.bf16.mxu0 0
      %4830 = vmatpush1.bf16.msra.mxu0 0
      %4831 = vmatprep.subr.bf16.mxu0 0
      %4832 = vmatpush1.bf16.msra.mxu0 0
      %4833 = vmatprep.subr.bf16.mxu0 0
      %4834 = vmatpush1.bf16.msra.mxu0 0
      %4835 = vmatprep.subr.bf16.mxu0 0
      %4836 = vmatpush1.bf16.msra.mxu0 0
      %4837 = vmatprep.mubr.bf16.mxu0 %v4752
      %4838 = vmatmul.mubr.bf16.gmra.mrb[0].mxu0 %v4593
      %v4839 = vpop.f32.mrb[0].mxu0
      %v4840 = vadd.f32 0.0, %v4839
      %v4841 = vpop.f32.mrb[0].mxu0
      %v4842 = vpop.f32.mrb[0].mxu0
      %v4843 = vadd.f32 0.0, %v4842
      %v4844 = vpop.f32.mrb[0].mxu0
      %4845 = vmatprep.mubr.bf16.mxu0 %v4755
      %4846 = vmatmul.mubr.bf16.gmra.mrb[0].mxu0 %v4598
      %v4847 = vpop.f32.mrb[0].mxu0
      %v4848 = vadd.f32 0.0, %v4847
      %v4849 = vpop.f32.mrb[0].mxu0
      %v4850 = vpop.f32.mrb[0].mxu0
      %v4851 = vadd.f32 0.0, %v4850
      %v4852 = vpop.f32.mrb[0].mxu0
      %4853 = vmatprep.mubr.bf16.mxu0 %v4758
      %4854 = vmatmul.mubr.bf16.gmra.mrb[0].mxu0 %v4602
      %v4855 = vpop.f32.mrb[0].mxu0
      %v4856 = vadd.f32 0.0, %v4855
      %v4857 = vpop.f32.mrb[0].mxu0
      %v4858 = vpop.f32.mrb[0].mxu0
      %v4859 = vadd.f32 0.0, %v4858
      %v4860 = vpop.f32.mrb[0].mxu0
      %4861 = vmatprep.mubr.bf16.mxu0 %v4761
      %4862 = vmatmul.mubr.bf16.gmra.mrb[0].mxu0 %v4606
      %v4863 = vpop.f32.mrb[0].mxu0
      %v4864 = vadd.f32 0.0, %v4863
      %v4865 = vpop.f32.mrb[0].mxu0
      %v4866 = vpop.f32.mrb[0].mxu0
      %v4867 = vadd.f32 0.0, %v4866
      %v4868 = vpop.f32.mrb[0].mxu0
      %4869 = vmatprep.mubr.bf16.mxu0 %v4764
      %4870 = vmatmul.mubr.bf16.gmra.mrb[0].mxu0 %v4610
      %v4871 = vpop.f32.mrb[0].mxu0
      %v4872 = vadd.f32 0.0, %v4871
      %v4873 = vpop.f32.mrb[0].mxu0
      %v4874 = vpop.f32.mrb[0].mxu0
      %v4875 = vadd.f32 0.0, %v4874
      %v4876 = vpop.f32.mrb[0].mxu0
      %4877 = vmatprep.mubr.bf16.mxu0 %v4767
      %4878 = vmatmul.mubr.bf16.gmra.mrb[0].mxu0 %v4614
      %v4879 = vpop.f32.mrb[0].mxu0
      %v4880 = vadd.f32 0.0, %v4879
      %v4881 = vpop.f32.mrb[0].mxu0
      %v4882 = vpop.f32.mrb[0].mxu0
      %v4883 = vadd.f32 0.0, %v4882
      %v4884 = vpop.f32.mrb[0].mxu0
      %4885 = vmatprep.mubr.bf16.mxu0 %v4770
      %4886 = vmatmul.mubr.bf16.gmra.mrb[0].mxu0 %v4618
      %v4887 = vpop.f32.mrb[0].mxu0
      %v4888 = vadd.f32 0.0, %v4887
      %v4889 = vpop.f32.mrb[0].mxu0
      %v4890 = vpop.f32.mrb[0].mxu0
      %v4891 = vadd.f32 0.0, %v4890
      %v4892 = vpop.f32.mrb[0].mxu0
      %4893 = vmatprep.mubr.bf16.mxu0 %v4773
      %4894 = vmatmul.mubr.bf16.gmra.mrb[0].mxu0 %v4622
      %v4895 = vpop.f32.mrb[0].mxu0
      %v4896 = vadd.f32 0.0, %v4895
      %v4897 = vpop.f32.mrb[0].mxu0
      %v4898 = vpop.f32.mrb[0].mxu0
      %v4899 = vadd.f32 0.0, %v4898
      %v4900 = vpop.f32.mrb[0].mxu0
      %4901 = vmatprep.mubr.bf16.mxu0 %v4776
      %4902 = vmatmul.mubr.bf16.gmra.mrb[0].mxu0 %v4626
      %v4903 = vpop.f32.mrb[0].mxu0
      %v4904 = vadd.f32 0.0, %v4903
      %v4905 = vpop.f32.mrb[0].mxu0
      %v4906 = vpop.f32.mrb[0].mxu0
      %v4907 = vadd.f32 0.0, %v4906
      %v4908 = vpop.f32.mrb[0].mxu0
      %4909 = vmatprep.mubr.bf16.mxu0 %v4779
      %4910 = vmatmul.mubr.bf16.gmra.mrb[0].mxu0 %v4630
      %v4911 = vpop.f32.mrb[0].mxu0
      %v4912 = vadd.f32 0.0, %v4911
      %v4913 = vpop.f32.mrb[0].mxu0
      %v4914 = vpop.f32.mrb[0].mxu0
      %v4915 = vadd.f32 0.0, %v4914
      %v4916 = vpop.f32.mrb[0].mxu0
      %4917 = vmatprep.mubr.bf16.mxu0 %v4782
      %4918 = vmatmul.mubr.bf16.gmra.mrb[0].mxu0 %v4634
      %v4919 = vpop.f32.mrb[0].mxu0
      %v4920 = vadd.f32 0.0, %v4919
      %v4921 = vpop.f32.mrb[0].mxu0
      %v4922 = vpop.f32.mrb[0].mxu0
      %v4923 = vadd.f32 0.0, %v4922
      %v4924 = vpop.f32.mrb[0].mxu0
      %4925 = vmatprep.mubr.bf16.mxu0 %v4785
      %4926 = vmatmul.mubr.bf16.gmra.mrb[0].mxu0 %v4638
      %v4927 = vpop.f32.mrb[0].mxu0
      %v4928 = vadd.f32 0.0, %v4927
      %v4929 = vpop.f32.mrb[0].mxu0
      %v4930 = vpop.f32.mrb[0].mxu0
      %v4931 = vadd.f32 0.0, %v4930
      %v4932 = vpop.f32.mrb[0].mxu0
      %4933 = vmatprep.mubr.bf16.mxu0 %v4788
      %4934 = vmatmul.mubr.bf16.gmra.mrb[0].mxu0 %v4642
      %v4935 = vpop.f32.mrb[0].mxu0
      %v4936 = vadd.f32 0.0, %v4935
      %v4937 = vpop.f32.mrb[0].mxu0
      %v4938 = vpop.f32.mrb[0].mxu0
      %v4939 = vadd.f32 0.0, %v4938
      %v4940 = vpop.f32.mrb[0].mxu0
      %4941 = vmatprep.mubr.bf16.mxu0 %v4791
      %4942 = vmatmul.mubr.bf16.gmra.mrb[0].mxu0 %v4646
      %v4943 = vpop.f32.mrb[0].mxu0
      %v4944 = vadd.f32 0.0, %v4943
      %v4945 = vpop.f32.mrb[0].mxu0
      %v4946 = vpop.f32.mrb[0].mxu0
      %v4947 = vadd.f32 0.0, %v4946
      %v4948 = vpop.f32.mrb[0].mxu0
      %4949 = vmatprep.mubr.bf16.mxu0 %v4794
      %4950 = vmatmul.mubr.bf16.gmra.mrb[0].mxu0 %v4650
      %v4951 = vpop.f32.mrb[0].mxu0
      %v4952 = vadd.f32 0.0, %v4951
      %v4953 = vpop.f32.mrb[0].mxu0
      %v4954 = vpop.f32.mrb[0].mxu0
      %v4955 = vadd.f32 0.0, %v4954
      %v4956 = vpop.f32.mrb[0].mxu0
      %4957 = vmatprep.mubr.bf16.mxu0 %v4797
      %4958 = vmatmul.mubr.bf16.gmra.mrb[0].mxu0 %v4654
      %v4959 = vpop.f32.mrb[0].mxu0
      %v4960 = vadd.f32 0.0, %v4959
      %v4961 = vpop.f32.mrb[0].mxu0
      %v4962 = vpop.f32.mrb[0].mxu0
      %v4963 = vadd.f32 0.0, %v4962
      %v4964 = vpop.f32.mrb[0].mxu0
      %4965 = vmatprep.mubr.bf16.mxu0 %v4800
      %4966 = vmatmul.mubr.bf16.gmra.mrb[0].mxu0 %v4658
      %v4967 = vpop.f32.mrb[0].mxu0
      %v4968 = vadd.f32 0.0, %v4967
      %v4969 = vpop.f32.mrb[0].mxu0
      %v4970 = vpop.f32.mrb[0].mxu0
      %v4971 = vadd.f32 0.0, %v4970
      %v4972 = vpop.f32.mrb[0].mxu0
      %4973 = vmatprep.mubr.bf16.mxu0 %v4803
      %4974 = vmatmul.mubr.bf16.gmra.mrb[0].mxu0 %v4657
      %v4975 = vpop.f32.mrb[0].mxu0
      %v4976 = vadd.f32 0.0, %v4975
      %v4977 = vpop.f32.mrb[0].mxu0
      %v4978 = vpop.f32.mrb[0].mxu0
      %v4979 = vpop.f32.mrb[0].mxu0
      %4980 = vdwg.mxu0
      %v4981 = vadd.f32 %v4513, %v4840
      %v4982 = vadd.f32 %v4514, %v4843
      %v4983 = vadd.f32 %v4515, %v4848
      %v4984 = vadd.f32 %v4516, %v4851
      %v4985 = vadd.f32 %v4517, %v4856
      %v4986 = vadd.f32 %v4518, %v4859
      %v4987 = vadd.f32 %v4519, %v4864
      %v4988 = vadd.f32 %v4520, %v4867
      %v4989 = vadd.f32 %v4521, %v4872
      %v4990 = vadd.f32 %v4522, %v4875
      %v4991 = vadd.f32 %v4523, %v4880
      %v4992 = vadd.f32 %v4524, %v4883
      %v4993 = vadd.f32 %v4525, %v4888
      %v4994 = vadd.f32 %v4526, %v4891
      %v4995 = vadd.f32 %v4527, %v4896
      %v4996 = vadd.f32 %v4528, %v4899
      %v4997 = vadd.f32 %v4529, %v4904
      %v4998 = vadd.f32 %v4530, %v4907
      %v4999 = vadd.f32 %v4531, %v4912
      %v5000 = vadd.f32 %v4532, %v4915
      %v5001 = vadd.f32 %v4533, %v4920
      %v5002 = vadd.f32 %v4534, %v4923
      %v5003 = vadd.f32 %v4535, %v4928
      %v5004 = vadd.f32 %v4536, %v4931
      %v5005 = vadd.f32 %v4537, %v4936
      %v5006 = vadd.f32 %v4538, %v4939
      %v5007 = vadd.f32 %v4539, %v4944
      %v5008 = vadd.f32 %v4540, %v4947
      %v5009 = vadd.f32 %v4541, %v4952
      %v5010 = vadd.f32 %v4542, %v4955
      %v5011 = vadd.f32 %v4543, %v4960
      %v5012 = vadd.f32 %v4544, %v4963
      %v5013 = vadd.f32 %v4545, %v4968
      %v5014 = vadd.f32 %v4546, %v4971
      %v5015 = vadd.f32 %v4547, %v4976
      %5016 = vst [vmem:[#allocation3] sm:$0xff] %v4981
      %5017 = vst [vmem:[#allocation3 + $0x8] sm:$0xff] %v4982
      %5018 = vst [vmem:[#allocation3 + $0x10] sm:$0xff] %v4983
      %5019 = vst [vmem:[#allocation3 + $0x18] sm:$0xff] %v4984
      %5020 = vst [vmem:[#allocation3 + $0x20] sm:$0xff] %v4985
      %5021 = vst [vmem:[#allocation3 + $0x28] sm:$0xff] %v4986
      %5022 = vst [vmem:[#allocation3 + $0x30] sm:$0xff] %v4987
      %5023 = vst [vmem:[#allocation3 + $0x38] sm:$0xff] %v4988
      %5024 = vst [vmem:[#allocation3 + $0x40] sm:$0xff] %v4989
      %5025 = vst [vmem:[#allocation3 + $0x48] sm:$0xff] %v4990
      %5026 = vst [vmem:[#allocation3 + $0x50] sm:$0xff] %v4991
      %5027 = vst [vmem:[#allocation3 + $0x58] sm:$0xff] %v4992
      %5028 = vst [vmem:[#allocation3 + $0x60] sm:$0xff] %v4993
      %5029 = vst [vmem:[#allocation3 + $0x68] sm:$0xff] %v4994
      %5030 = vst [vmem:[#allocation3 + $0x70] sm:$0xff] %v4995
      %5031 = vst [vmem:[#allocation3 + $0x78] sm:$0xff] %v4996
      %5032 = vst [vmem:[#allocation3 + $0x80] sm:$0xff] %v4997
      %5033 = vst [vmem:[#allocation3 + $0x88] sm:$0xff] %v4998
      %5034 = vst [vmem:[#allocation3 + $0x90] sm:$0xff] %v4999
      %5035 = vst [vmem:[#allocation3 + $0x98] sm:$0xff] %v5000
      %5036 = vst [vmem:[#allocation3 + $0xa0] sm:$0xff] %v5001
      %5037 = vst [vmem:[#allocation3 + $0xa8] sm:$0xff] %v5002
      %5038 = vst [vmem:[#allocation3 + $0xb0] sm:$0xff] %v5003
      %5039 = vst [vmem:[#allocation3 + $0xb8] sm:$0xff] %v5004
      %5040 = vst [vmem:[#allocation3 + $0xc0] sm:$0xff] %v5005
      %5041 = vst [vmem:[#allocation3 + $0xc8] sm:$0xff] %v5006
      %5042 = vst [vmem:[#allocation3 + $0xd0] sm:$0xff] %v5007
      %5043 = vst [vmem:[#allocation3 + $0xd8] sm:$0xff] %v5008
      %5044 = vst [vmem:[#allocation3 + $0xe0] sm:$0xff] %v5009
      %5045 = vst [vmem:[#allocation3 + $0xe8] sm:$0xff] %v5010
      %5046 = vst [vmem:[#allocation3 + $0xf0] sm:$0xff] %v5011
      %5047 = vst [vmem:[#allocation3 + $0xf8] sm:$0xff] %v5012
      %5048 = vst [vmem:[#allocation3 + $0x100] sm:$0xff] %v5013
      %5049 = vst [vmem:[#allocation3 + $0x108] sm:$0xff] %v5014
      %5050 = vst [vmem:[#allocation3 + $0x110] sm:$0xff] %v5015
      %v5051 = vld [vmem:[#allocation2 + $0x30] sm:$0x80]
      %v5052 = vld [vmem:[#allocation2 + $0x38] sm:$0xff]
      %v5053 = vld [vmem:[#allocation2 + $0x40] sm:$0xff]
      %v5054 = vld [vmem:[#allocation2 + $0x48] sm:$0xff]
      %v5055 = vld [vmem:[#allocation2 + $0x50] sm:$0xff]
      %v5056 = vld [vmem:[#allocation2 + $0x58] sm:$0xff]
      %v5057 = vld [vmem:[#allocation2 + $0x60] sm:$0xff]
      %v5058 = vld [vmem:[#allocation2 + $0x68] sm:$0xff]
      %v5059 = vld [vmem:[#allocation2 + $0x70] sm:$0xff]
      %v5060 = vld [vmem:[#allocation2 + $0x78] sm:$0xff]
      %v5061 = vld [vmem:[#allocation2 + $0x80] sm:$0xff]
      %v5062 = vld [vmem:[#allocation2 + $0x88] sm:$0xff]
      %v5063 = vld [vmem:[#allocation2 + $0x90] sm:$0xff]
      %v5064 = vld [vmem:[#allocation2 + $0x98] sm:$0xff]
      %v5065 = vld [vmem:[#allocation2 + $0xa0] sm:$0xff]
      %v5066 = vld [vmem:[#allocation2 + $0xa8] sm:$0xff]
      %v5067 = vld [vmem:[#allocation2 + $0xb0] sm:$0xff]
      %v5068 = vld [vmem:[#allocation2 + $0xb8] sm:$0xff]
      %v5069 = vld [vmem:[#allocation2 + $0xc0] sm:$0x7]
      %v5070 = vld [vmem:[#allocation2 + $0xc0] sm:$0xf]
      %v5072 = vshrl.u32 %v5051, 16
      %v5075 = vshll.u32 %v5052, 16
      %v5077 = vrot.slane %v5075, 1
      %v5078 = vsel %vm1827, %v5072, %v5077
      %v5079 = vshrl.u32 %v5052, 16
      %v5081 = vor.u32 %v5079, %v5077
      %v5083 = vshll.u32 %v5053, 16
      %v5085 = vrot.slane %v5083, 1
      %v5086 = vsel %vm1827, %v5081, %v5085
      %v5087 = vshrl.u32 %v5053, 16
      %v5089 = vor.u32 %v5087, %v5085
      %v5091 = vshll.u32 %v5054, 16
      %v5093 = vrot.slane %v5091, 1
      %v5094 = vsel %vm1827, %v5089, %v5093
      %v5095 = vshrl.u32 %v5054, 16
      %v5097 = vor.u32 %v5095, %v5093
      %v5099 = vshll.u32 %v5055, 16
      %v5101 = vrot.slane %v5099, 1
      %v5102 = vsel %vm1827, %v5097, %v5101
      %v5103 = vshrl.u32 %v5055, 16
      %v5105 = vor.u32 %v5103, %v5101
      %v5107 = vshll.u32 %v5056, 16
      %v5109 = vrot.slane %v5107, 1
      %v5110 = vsel %vm1827, %v5105, %v5109
      %v5111 = vshrl.u32 %v5056, 16
      %v5113 = vor.u32 %v5111, %v5109
      %v5115 = vshll.u32 %v5057, 16
      %v5117 = vrot.slane %v5115, 1
      %v5118 = vsel %vm1827, %v5113, %v5117
      %v5119 = vshrl.u32 %v5057, 16
      %v5121 = vor.u32 %v5119, %v5117
      %v5123 = vshll.u32 %v5058, 16
      %v5125 = vrot.slane %v5123, 1
      %v5126 = vsel %vm1827, %v5121, %v5125
      %v5127 = vshrl.u32 %v5058, 16
      %v5129 = vor.u32 %v5127, %v5125
      %v5131 = vshll.u32 %v5059, 16
      %v5133 = vrot.slane %v5131, 1
      %v5134 = vsel %vm1827, %v5129, %v5133
      %v5135 = vshrl.u32 %v5059, 16
      %v5137 = vor.u32 %v5135, %v5133
      %v5139 = vshll.u32 %v5060, 16
      %v5141 = vrot.slane %v5139, 1
      %v5142 = vsel %vm1827, %v5137, %v5141
      %v5143 = vshrl.u32 %v5060, 16
      %v5145 = vor.u32 %v5143, %v5141
      %v5147 = vshll.u32 %v5061, 16
      %v5149 = vrot.slane %v5147, 1
      %v5150 = vsel %vm1827, %v5145, %v5149
      %v5151 = vshrl.u32 %v5061, 16
      %v5153 = vor.u32 %v5151, %v5149
      %v5155 = vshll.u32 %v5062, 16
      %v5157 = vrot.slane %v5155, 1
      %v5158 = vsel %vm1827, %v5153, %v5157
      %v5159 = vshrl.u32 %v5062, 16
      %v5161 = vor.u32 %v5159, %v5157
      %v5163 = vshll.u32 %v5063, 16
      %v5165 = vrot.slane %v5163, 1
      %v5166 = vsel %vm1827, %v5161, %v5165
      %v5167 = vshrl.u32 %v5063, 16
      %v5169 = vor.u32 %v5167, %v5165
      %v5171 = vshll.u32 %v5064, 16
      %v5173 = vrot.slane %v5171, 1
      %v5174 = vsel %vm1827, %v5169, %v5173
      %v5175 = vshrl.u32 %v5064, 16
      %v5177 = vor.u32 %v5175, %v5173
      %v5179 = vshll.u32 %v5065, 16
      %v5181 = vrot.slane %v5179, 1
      %v5182 = vsel %vm1827, %v5177, %v5181
      %v5183 = vshrl.u32 %v5065, 16
      %v5185 = vor.u32 %v5183, %v5181
      %v5187 = vshll.u32 %v5066, 16
      %v5189 = vrot.slane %v5187, 1
      %v5190 = vsel %vm1827, %v5185, %v5189
      %v5191 = vshrl.u32 %v5066, 16
      %v5193 = vor.u32 %v5191, %v5189
      %v5195 = vshll.u32 %v5067, 16
      %v5197 = vrot.slane %v5195, 1
      %v5198 = vsel %vm1827, %v5193, %v5197
      %v5199 = vshrl.u32 %v5067, 16
      %v5201 = vor.u32 %v5199, %v5197
      %v5203 = vshll.u32 %v5068, 16
      %v5205 = vrot.slane %v5203, 1
      %v5206 = vsel %vm1827, %v5201, %v5205
      %v5207 = vshrl.u32 %v5068, 16
      %v5209 = vor.u32 %v5207, %v5205
      %v5211 = vshll.u32 %v5070, 16
      %v5213 = vrot.slane %v5211, 1
      %v5214 = vsel %vm1827, %v5209, %v5213
      %v5215 = vshrl.u32 %v5070, 16
      %v5217 = vor.u32 %v5215, %v5213
      %5218 = vrot.lane.b32.xlu0 %v5078, 64
      %v5219 = vpop.permute.xlu0 %5218
      %5220 = vrot.lane.b32.xlu0 %v5086, 64
      %v5221 = vpop.permute.xlu0 %5220
      %5222 = vrot.lane.b32.xlu0 %v5094, 64
      %v5223 = vpop.permute.xlu0 %5222
      %5224 = vrot.lane.b32.xlu0 %v5102, 64
      %v5225 = vpop.permute.xlu0 %5224
      %5226 = vrot.lane.b32.xlu0 %v5110, 64
      %v5227 = vpop.permute.xlu0 %5226
      %5228 = vrot.lane.b32.xlu0 %v5118, 64
      %v5229 = vpop.permute.xlu0 %5228
      %5230 = vrot.lane.b32.xlu0 %v5126, 64
      %v5231 = vpop.permute.xlu0 %5230
      %5232 = vrot.lane.b32.xlu0 %v5134, 64
      %v5233 = vpop.permute.xlu0 %5232
      %5234 = vrot.lane.b32.xlu0 %v5142, 64
      %v5235 = vpop.permute.xlu0 %5234
      %5236 = vrot.lane.b32.xlu0 %v5150, 64
      %v5237 = vpop.permute.xlu0 %5236
      %5238 = vrot.lane.b32.xlu0 %v5158, 64
      %v5239 = vpop.permute.xlu0 %5238
      %5240 = vrot.lane.b32.xlu0 %v5166, 64
      %v5241 = vpop.permute.xlu0 %5240
      %5242 = vrot.lane.b32.xlu0 %v5174, 64
      %v5243 = vpop.permute.xlu0 %5242
      %5244 = vrot.lane.b32.xlu0 %v5182, 64
      %v5245 = vpop.permute.xlu0 %5244
      %5246 = vrot.lane.b32.xlu0 %v5190, 64
      %v5247 = vpop.permute.xlu0 %5246
      %5248 = vrot.lane.b32.xlu0 %v5198, 64
      %v5249 = vpop.permute.xlu0 %5248
      %5250 = vrot.lane.b32.xlu0 %v5206, 64
      %v5251 = vpop.permute.xlu0 %5250
      %5252 = vrot.lane.b32.xlu0 %v5214, 64
      %v5253 = vpop.permute.xlu0 %5252
      %5254 = vrot.lane.b32.xlu0 %v5217, 64
      %v5255 = vpop.permute.xlu0 %5254
      %v5274 = vrot.slane %v5052, 1
      %v5275 = vrot.slane %v5053, 1
      %v5276 = vsel %vm2025, %v5274, %v5275
      %v5277 = vrot.slane %v5054, 1
      %v5278 = vsel %vm2025, %v5275, %v5277
      %v5279 = vrot.slane %v5055, 1
      %v5280 = vsel %vm2025, %v5277, %v5279
      %v5281 = vrot.slane %v5056, 1
      %v5282 = vsel %vm2025, %v5279, %v5281
      %v5283 = vrot.slane %v5057, 1
      %v5284 = vsel %vm2025, %v5281, %v5283
      %v5285 = vrot.slane %v5058, 1
      %v5286 = vsel %vm2025, %v5283, %v5285
      %v5287 = vrot.slane %v5059, 1
      %v5288 = vsel %vm2025, %v5285, %v5287
      %v5289 = vrot.slane %v5060, 1
      %v5290 = vsel %vm2025, %v5287, %v5289
      %v5291 = vrot.slane %v5061, 1
      %v5292 = vsel %vm2025, %v5289, %v5291
      %v5293 = vrot.slane %v5062, 1
      %v5294 = vsel %vm2025, %v5291, %v5293
      %v5295 = vrot.slane %v5063, 1
      %v5296 = vsel %vm2025, %v5293, %v5295
      %v5297 = vrot.slane %v5064, 1
      %v5298 = vsel %vm2025, %v5295, %v5297
      %v5299 = vrot.slane %v5065, 1
      %v5300 = vsel %vm2025, %v5297, %v5299
      %v5301 = vrot.slane %v5066, 1
      %v5302 = vsel %vm2025, %v5299, %v5301
      %v5303 = vrot.slane %v5067, 1
      %v5304 = vsel %vm2025, %v5301, %v5303
      %v5305 = vrot.slane %v5068, 1
      %v5306 = vsel %vm2025, %v5303, %v5305
      %v5307 = vrot.slane %v5070, 1
      %v5308 = vsel %vm2025, %v5305, %v5307
      %v5310 = vsel %vm1739, %v5051, %v5219
      %v5312 = vsel %vm1739, %v5052, %v5221
      %v5314 = vsel %vm1739, %v5053, %v5223
      %v5316 = vsel %vm1739, %v5054, %v5225
      %v5318 = vsel %vm1739, %v5055, %v5227
      %v5320 = vsel %vm1739, %v5056, %v5229
      %v5322 = vsel %vm1739, %v5057, %v5231
      %v5324 = vsel %vm1739, %v5058, %v5233
      %v5326 = vsel %vm1739, %v5059, %v5235
      %v5328 = vsel %vm1739, %v5060, %v5237
      %v5330 = vsel %vm1739, %v5061, %v5239
      %v5332 = vsel %vm1739, %v5062, %v5241
      %v5334 = vsel %vm1739, %v5063, %v5243
      %v5336 = vsel %vm1739, %v5064, %v5245
      %v5338 = vsel %vm1739, %v5065, %v5247
      %v5340 = vsel %vm1739, %v5066, %v5249
      %v5342 = vsel %vm1739, %v5067, %v5251
      %v5344 = vsel %vm1739, %v5068, %v5253
      %v5347 = vsel %vm1739, %v5069, %v5255
      %v5348 = vld [vmem:[#allocation3] sm:$0xff]
      %v5349 = vld [vmem:[#allocation3 + $0x8] sm:$0xff]
      %v5350 = vld [vmem:[#allocation3 + $0x10] sm:$0xff]
      %v5351 = vld [vmem:[#allocation3 + $0x18] sm:$0xff]
      %v5352 = vld [vmem:[#allocation3 + $0x20] sm:$0xff]
      %v5353 = vld [vmem:[#allocation3 + $0x28] sm:$0xff]
      %v5354 = vld [vmem:[#allocation3 + $0x30] sm:$0xff]
      %v5355 = vld [vmem:[#allocation3 + $0x38] sm:$0xff]
      %v5356 = vld [vmem:[#allocation3 + $0x40] sm:$0xff]
      %v5357 = vld [vmem:[#allocation3 + $0x48] sm:$0xff]
      %v5358 = vld [vmem:[#allocation3 + $0x50] sm:$0xff]
      %v5359 = vld [vmem:[#allocation3 + $0x58] sm:$0xff]
      %v5360 = vld [vmem:[#allocation3 + $0x60] sm:$0xff]
      %v5361 = vld [vmem:[#allocation3 + $0x68] sm:$0xff]
      %v5362 = vld [vmem:[#allocation3 + $0x70] sm:$0xff]
      %v5363 = vld [vmem:[#allocation3 + $0x78] sm:$0xff]
      %v5364 = vld [vmem:[#allocation3 + $0x80] sm:$0xff]
      %v5365 = vld [vmem:[#allocation3 + $0x88] sm:$0xff]
      %v5366 = vld [vmem:[#allocation3 + $0x90] sm:$0xff]
      %v5367 = vld [vmem:[#allocation3 + $0x98] sm:$0xff]
      %v5368 = vld [vmem:[#allocation3 + $0xa0] sm:$0xff]
      %v5369 = vld [vmem:[#allocation3 + $0xa8] sm:$0xff]
      %v5370 = vld [vmem:[#allocation3 + $0xb0] sm:$0xff]
      %v5371 = vld [vmem:[#allocation3 + $0xb8] sm:$0xff]
      %v5372 = vld [vmem:[#allocation3 + $0xc0] sm:$0xff]
      %v5373 = vld [vmem:[#allocation3 + $0xc8] sm:$0xff]
      %v5374 = vld [vmem:[#allocation3 + $0xd0] sm:$0xff]
      %v5375 = vld [vmem:[#allocation3 + $0xd8] sm:$0xff]
      %v5376 = vld [vmem:[#allocation3 + $0xe0] sm:$0xff]
      %v5377 = vld [vmem:[#allocation3 + $0xe8] sm:$0xff]
      %v5378 = vld [vmem:[#allocation3 + $0xf0] sm:$0xff]
      %v5379 = vld [vmem:[#allocation3 + $0xf8] sm:$0xff]
      %v5380 = vld [vmem:[#allocation3 + $0x100] sm:$0xff]
      %v5381 = vld [vmem:[#allocation3 + $0x108] sm:$0xff]
      %v5382 = vld [vmem:[#allocation3 + $0x110] sm:$0xff]
      %s5383 = scalar_lea.vmem %s3, 384
      %v5384 = vld [vmem:[%s5383] sm:$0xf]
      %v5385 = vld [vmem:[%s5383 + $0x4] sm:$0xf]
      %v5386 = vld [vmem:[%s5383 + $0x8] sm:$0xf]
      %v5387 = vld [vmem:[%s5383 + $0xc] sm:$0xf]
      %v5388 = vld [vmem:[%s5383 + $0x10] sm:$0xf]
      %v5389 = vld [vmem:[%s5383 + $0x14] sm:$0xf]
      %v5390 = vld [vmem:[%s5383 + $0x18] sm:$0xf]
      %v5391 = vld [vmem:[%s5383 + $0x1c] sm:$0xf]
      %v5392 = vld [vmem:[%s5383 + $0x20] sm:$0xf]
      %v5393 = vld [vmem:[%s5383 + $0x24] sm:$0xf]
      %v5394 = vld [vmem:[%s5383 + $0x28] sm:$0xf]
      %v5395 = vld [vmem:[%s5383 + $0x2c] sm:$0xf]
      %v5396 = vld [vmem:[%s5383 + $0x30] sm:$0xf]
      %v5397 = vld [vmem:[%s5383 + $0x34] sm:$0xf]
      %v5398 = vld [vmem:[%s5383 + $0x38] sm:$0xf]
      %v5399 = vld [vmem:[%s5383 + $0x3c] sm:$0xf]
      %v5400 = vld [vmem:[%s5383 + $0x40] sm:$0xf]
      %v5401 = vld [vmem:[%s5383 + $0x44] sm:$0xf]
      %v5402 = vld [vmem:[%s5383 + $0x48] sm:$0xf]
      %v5403 = vld [vmem:[%s5383 + $0x4c] sm:$0xf]
      %v5404 = vld [vmem:[%s5383 + $0x50] sm:$0xf]
      %v5405 = vld [vmem:[%s5383 + $0x54] sm:$0xf]
      %v5406 = vld [vmem:[%s5383 + $0x58] sm:$0xf]
      %v5407 = vld [vmem:[%s5383 + $0x5c] sm:$0xf]
      %vm5427 = vcmask 1040384
      %v5428 = vrot.slane %v5310, 7
      %v5429 = vrot.slane %v5312, 7
      %v5430 = vsel %vm5427, %v5428, %v5429
      %v5431 = vrot.slane %v5274, 7
      %v5432 = vrot.slane %v5276, 7
      %v5433 = vsel %vm5427, %v5431, %v5432
      %v5434 = vrot.slane %v5314, 7
      %v5435 = vsel %vm5427, %v5429, %v5434
      %v5436 = vrot.slane %v5278, 7
      %v5437 = vsel %vm5427, %v5432, %v5436
      %v5438 = vrot.slane %v5316, 7
      %v5439 = vsel %vm5427, %v5434, %v5438
      %v5440 = vrot.slane %v5280, 7
      %v5441 = vsel %vm5427, %v5436, %v5440
      %v5442 = vrot.slane %v5318, 7
      %v5443 = vsel %vm5427, %v5438, %v5442
      %v5444 = vrot.slane %v5282, 7
      %v5445 = vsel %vm5427, %v5440, %v5444
      %v5446 = vrot.slane %v5320, 7
      %v5447 = vsel %vm5427, %v5442, %v5446
      %v5448 = vrot.slane %v5284, 7
      %v5449 = vsel %vm5427, %v5444, %v5448
      %v5450 = vrot.slane %v5322, 7
      %v5451 = vsel %vm5427, %v5446, %v5450
      %v5452 = vrot.slane %v5286, 7
      %v5453 = vsel %vm5427, %v5448, %v5452
      %v5454 = vrot.slane %v5324, 7
      %v5455 = vsel %vm5427, %v5450, %v5454
      %v5456 = vrot.slane %v5288, 7
      %v5457 = vsel %vm5427, %v5452, %v5456
      %v5458 = vrot.slane %v5326, 7
      %v5459 = vsel %vm5427, %v5454, %v5458
      %v5460 = vrot.slane %v5290, 7
      %v5461 = vsel %vm5427, %v5456, %v5460
      %v5462 = vrot.slane %v5328, 7
      %v5463 = vsel %vm5427, %v5458, %v5462
      %v5464 = vrot.slane %v5292, 7
      %v5465 = vsel %vm5427, %v5460, %v5464
      %v5466 = vrot.slane %v5330, 7
      %v5467 = vsel %vm5427, %v5462, %v5466
      %v5468 = vrot.slane %v5294, 7
      %v5469 = vsel %vm5427, %v5464, %v5468
      %v5470 = vrot.slane %v5332, 7
      %v5471 = vsel %vm5427, %v5466, %v5470
      %v5472 = vrot.slane %v5296, 7
      %v5473 = vsel %vm5427, %v5468, %v5472
      %v5474 = vrot.slane %v5334, 7
      %v5475 = vsel %vm5427, %v5470, %v5474
      %v5476 = vrot.slane %v5298, 7
      %v5477 = vsel %vm5427, %v5472, %v5476
      %v5478 = vrot.slane %v5336, 7
      %v5479 = vsel %vm5427, %v5474, %v5478
      %v5480 = vrot.slane %v5300, 7
      %v5481 = vsel %vm5427, %v5476, %v5480
      %v5482 = vrot.slane %v5338, 7
      %v5483 = vsel %vm5427, %v5478, %v5482
      %v5484 = vrot.slane %v5302, 7
      %v5485 = vsel %vm5427, %v5480, %v5484
      %v5486 = vrot.slane %v5340, 7
      %v5487 = vsel %vm5427, %v5482, %v5486
      %v5488 = vrot.slane %v5304, 7
      %v5489 = vsel %vm5427, %v5484, %v5488
      %v5490 = vrot.slane %v5342, 7
      %v5491 = vsel %vm5427, %v5486, %v5490
      %v5492 = vrot.slane %v5306, 7
      %v5493 = vsel %vm5427, %v5488, %v5492
      %v5494 = vrot.slane %v5344, 7
      %v5495 = vsel %vm5427, %v5490, %v5494
      %v5496 = vrot.slane %v5308, 7
      %v5497 = vsel %vm5427, %v5492, %v5496
      %v5498 = vrot.slane %v5347, 7
      %v5499 = vsel %vm5427, %v5494, %v5498
      %v5500 = vrot.slane %v5307, 7
      %v5501 = vsel %vm5427, %v5496, %v5500
      %v5544 = vunpack.c.l.b16 %v5384
      %v5545 = vunpack.c.l.b16 %v5385
      %v5546 = vunpack.c.l.b16 %v5386
      %v5547 = vunpack.c.l.b16 %v5387
      %v5548 = vunpack.c.l.b16 %v5388
      %v5549 = vunpack.c.l.b16 %v5389
      %v5550 = vunpack.c.l.b16 %v5390
      %v5551 = vunpack.c.l.b16 %v5391
      %v5552 = vunpack.c.l.b16 %v5392
      %v5553 = vunpack.c.l.b16 %v5393
      %v5554 = vunpack.c.l.b16 %v5394
      %v5555 = vunpack.c.l.b16 %v5395
      %v5556 = vunpack.c.l.b16 %v5396
      %v5557 = vunpack.c.l.b16 %v5397
      %v5558 = vunpack.c.l.b16 %v5398
      %v5559 = vunpack.c.l.b16 %v5399
      %v5560 = vunpack.c.l.b16 %v5400
      %v5561 = vunpack.c.l.b16 %v5401
      %v5562 = vunpack.c.l.b16 %v5402
      %v5563 = vunpack.c.l.b16 %v5403
      %v5564 = vunpack.c.l.b16 %v5404
      %v5565 = vunpack.c.l.b16 %v5405
      %v5566 = vunpack.c.l.b16 %v5406
      %v5567 = vunpack.c.l.b16 %v5407
      %v5568 = vpack.c.b16 %v5545, %v5544
      %v5569 = vpack.c.b16 %v5547, %v5546
      %v5570 = vpack.c.b16 %v5549, %v5548
      %v5571 = vpack.c.b16 %v5551, %v5550
      %v5572 = vpack.c.b16 %v5553, %v5552
      %v5573 = vpack.c.b16 %v5555, %v5554
      %v5574 = vpack.c.b16 %v5557, %v5556
      %v5575 = vpack.c.b16 %v5559, %v5558
      %v5576 = vpack.c.b16 %v5561, %v5560
      %v5577 = vpack.c.b16 %v5563, %v5562
      %v5578 = vpack.c.b16 %v5565, %v5564
      %v5579 = vpack.c.b16 %v5567, %v5566
      %v5593 = vsel %vm1739, %v5433, 0
      %v5596 = vsel %vm1739, %v5437, 0
      %v5599 = vsel %vm1739, %v5441, 0
      %v5602 = vsel %vm1739, %v5445, 0
      %v5605 = vsel %vm1739, %v5449, 0
      %v5608 = vsel %vm1739, %v5453, 0
      %v5611 = vsel %vm1739, %v5457, 0
      %v5614 = vsel %vm1739, %v5461, 0
      %v5617 = vsel %vm1739, %v5465, 0
      %v5620 = vsel %vm1739, %v5469, 0
      %v5623 = vsel %vm1739, %v5473, 0
      %v5626 = vsel %vm1739, %v5477, 0
      %v5629 = vsel %vm1739, %v5481, 0
      %v5632 = vsel %vm1739, %v5485, 0
      %v5635 = vsel %vm1739, %v5489, 0
      %v5638 = vsel %vm1739, %v5493, 0
      %v5641 = vsel %vm1739, %v5497, 0
      %v5644 = vsel %vm1739, %v5501, 0
      %5646 = vmatprep.subr.bf16.mxu0 0
      %5647 = vmatpush1.bf16.msra.mxu0 %v5568
      %5648 = vmatprep.subr.bf16.mxu0 0
      %5649 = vmatpush1.bf16.msra.mxu0 %v5569
      %5650 = vmatprep.subr.bf16.mxu0 0
      %5651 = vmatpush1.bf16.msra.mxu0 %v5570
      %5652 = vmatprep.subr.bf16.mxu0 0
      %5653 = vmatpush1.bf16.msra.mxu0 %v5571
      %5654 = vmatprep.subr.bf16.mxu0 0
      %5655 = vmatpush1.bf16.msra.mxu0 %v5572
      %5656 = vmatprep.subr.bf16.mxu0 0
      %5657 = vmatpush1.bf16.msra.mxu0 %v5573
      %5658 = vmatprep.subr.bf16.mxu0 0
      %5659 = vmatpush1.bf16.msra.mxu0 %v5574
      %5660 = vmatprep.subr.bf16.mxu0 0
      %5661 = vmatpush1.bf16.msra.mxu0 %v5575
      %5662 = vmatprep.subr.bf16.mxu0 0
      %5663 = vmatpush1.bf16.msra.mxu0 %v5576
      %5664 = vmatprep.subr.bf16.mxu0 0
      %5665 = vmatpush1.bf16.msra.mxu0 %v5577
      %5666 = vmatprep.subr.bf16.mxu0 0
      %5667 = vmatpush1.bf16.msra.mxu0 %v5578
      %5668 = vmatprep.subr.bf16.mxu0 0
      %5669 = vmatpush1.bf16.msra.mxu0 %v5579
      %5670 = vmatprep.subr.bf16.mxu0 0
      %5671 = vmatpush1.bf16.msra.mxu0 0
      %5672 = vmatprep.subr.bf16.mxu0 0
      %5673 = vmatpush1.bf16.msra.mxu0 0
      %5674 = vmatprep.subr.bf16.mxu0 0
      %5675 = vmatpush1.bf16.msra.mxu0 0
      %5676 = vmatprep.subr.bf16.mxu0 0
      %5677 = vmatpush1.bf16.msra.mxu0 0
      %5678 = vmatprep.mubr.bf16.mxu0 %v5593
      %5679 = vmatmul.mubr.bf16.gmra.mrb[0].mxu0 %v5430
      %v5680 = vpop.f32.mrb[0].mxu0
      %v5681 = vadd.f32 0.0, %v5680
      %v5682 = vpop.f32.mrb[0].mxu0
      %v5683 = vpop.f32.mrb[0].mxu0
      %v5684 = vadd.f32 0.0, %v5683
      %v5685 = vpop.f32.mrb[0].mxu0
      %5686 = vmatprep.mubr.bf16.mxu0 %v5596
      %5687 = vmatmul.mubr.bf16.gmra.mrb[0].mxu0 %v5435
      %v5688 = vpop.f32.mrb[0].mxu0
      %v5689 = vadd.f32 0.0, %v5688
      %v5690 = vpop.f32.mrb[0].mxu0
      %v5691 = vpop.f32.mrb[0].mxu0
      %v5692 = vadd.f32 0.0, %v5691
      %v5693 = vpop.f32.mrb[0].mxu0
      %5694 = vmatprep.mubr.bf16.mxu0 %v5599
      %5695 = vmatmul.mubr.bf16.gmra.mrb[0].mxu0 %v5439
      %v5696 = vpop.f32.mrb[0].mxu0
      %v5697 = vadd.f32 0.0, %v5696
      %v5698 = vpop.f32.mrb[0].mxu0
      %v5699 = vpop.f32.mrb[0].mxu0
      %v5700 = vadd.f32 0.0, %v5699
      %v5701 = vpop.f32.mrb[0].mxu0
      %5702 = vmatprep.mubr.bf16.mxu0 %v5602
      %5703 = vmatmul.mubr.bf16.gmra.mrb[0].mxu0 %v5443
      %v5704 = vpop.f32.mrb[0].mxu0
      %v5705 = vadd.f32 0.0, %v5704
      %v5706 = vpop.f32.mrb[0].mxu0
      %v5707 = vpop.f32.mrb[0].mxu0
      %v5708 = vadd.f32 0.0, %v5707
      %v5709 = vpop.f32.mrb[0].mxu0
      %5710 = vmatprep.mubr.bf16.mxu0 %v5605
      %5711 = vmatmul.mubr.bf16.gmra.mrb[0].mxu0 %v5447
      %v5712 = vpop.f32.mrb[0].mxu0
      %v5713 = vadd.f32 0.0, %v5712
      %v5714 = vpop.f32.mrb[0].mxu0
      %v5715 = vpop.f32.mrb[0].mxu0
      %v5716 = vadd.f32 0.0, %v5715
      %v5717 = vpop.f32.mrb[0].mxu0
      %5718 = vmatprep.mubr.bf16.mxu0 %v5608
      %5719 = vmatmul.mubr.bf16.gmra.mrb[0].mxu0 %v5451
      %v5720 = vpop.f32.mrb[0].mxu0
      %v5721 = vadd.f32 0.0, %v5720
      %v5722 = vpop.f32.mrb[0].mxu0
      %v5723 = vpop.f32.mrb[0].mxu0
      %v5724 = vadd.f32 0.0, %v5723
      %v5725 = vpop.f32.mrb[0].mxu0
      %5726 = vmatprep.mubr.bf16.mxu0 %v5611
      %5727 = vmatmul.mubr.bf16.gmra.mrb[0].mxu0 %v5455
      %v5728 = vpop.f32.mrb[0].mxu0
      %v5729 = vadd.f32 0.0, %v5728
      %v5730 = vpop.f32.mrb[0].mxu0
      %v5731 = vpop.f32.mrb[0].mxu0
      %v5732 = vadd.f32 0.0, %v5731
      %v5733 = vpop.f32.mrb[0].mxu0
      %5734 = vmatprep.mubr.bf16.mxu0 %v5614
      %5735 = vmatmul.mubr.bf16.gmra.mrb[0].mxu0 %v5459
      %v5736 = vpop.f32.mrb[0].mxu0
      %v5737 = vadd.f32 0.0, %v5736
      %v5738 = vpop.f32.mrb[0].mxu0
      %v5739 = vpop.f32.mrb[0].mxu0
      %v5740 = vadd.f32 0.0, %v5739
      %v5741 = vpop.f32.mrb[0].mxu0
      %5742 = vmatprep.mubr.bf16.mxu0 %v5617
      %5743 = vmatmul.mubr.bf16.gmra.mrb[0].mxu0 %v5463
      %v5744 = vpop.f32.mrb[0].mxu0
      %v5745 = vadd.f32 0.0, %v5744
      %v5746 = vpop.f32.mrb[0].mxu0
      %v5747 = vpop.f32.mrb[0].mxu0
      %v5748 = vadd.f32 0.0, %v5747
      %v5749 = vpop.f32.mrb[0].mxu0
      %5750 = vmatprep.mubr.bf16.mxu0 %v5620
      %5751 = vmatmul.mubr.bf16.gmra.mrb[0].mxu0 %v5467
      %v5752 = vpop.f32.mrb[0].mxu0
      %v5753 = vadd.f32 0.0, %v5752
      %v5754 = vpop.f32.mrb[0].mxu0
      %v5755 = vpop.f32.mrb[0].mxu0
      %v5756 = vadd.f32 0.0, %v5755
      %v5757 = vpop.f32.mrb[0].mxu0
      %5758 = vmatprep.mubr.bf16.mxu0 %v5623
      %5759 = vmatmul.mubr.bf16.gmra.mrb[0].mxu0 %v5471
      %v5760 = vpop.f32.mrb[0].mxu0
      %v5761 = vadd.f32 0.0, %v5760
      %v5762 = vpop.f32.mrb[0].mxu0
      %v5763 = vpop.f32.mrb[0].mxu0
      %v5764 = vadd.f32 0.0, %v5763
      %v5765 = vpop.f32.mrb[0].mxu0
      %5766 = vmatprep.mubr.bf16.mxu0 %v5626
      %5767 = vmatmul.mubr.bf16.gmra.mrb[0].mxu0 %v5475
      %v5768 = vpop.f32.mrb[0].mxu0
      %v5769 = vadd.f32 0.0, %v5768
      %v5770 = vpop.f32.mrb[0].mxu0
      %v5771 = vpop.f32.mrb[0].mxu0
      %v5772 = vadd.f32 0.0, %v5771
      %v5773 = vpop.f32.mrb[0].mxu0
      %5774 = vmatprep.mubr.bf16.mxu0 %v5629
      %5775 = vmatmul.mubr.bf16.gmra.mrb[0].mxu0 %v5479
      %v5776 = vpop.f32.mrb[0].mxu0
      %v5777 = vadd.f32 0.0, %v5776
      %v5778 = vpop.f32.mrb[0].mxu0
      %v5779 = vpop.f32.mrb[0].mxu0
      %v5780 = vadd.f32 0.0, %v5779
      %v5781 = vpop.f32.mrb[0].mxu0
      %5782 = vmatprep.mubr.bf16.mxu0 %v5632
      %5783 = vmatmul.mubr.bf16.gmra.mrb[0].mxu0 %v5483
      %v5784 = vpop.f32.mrb[0].mxu0
      %v5785 = vadd.f32 0.0, %v5784
      %v5786 = vpop.f32.mrb[0].mxu0
      %v5787 = vpop.f32.mrb[0].mxu0
      %v5788 = vadd.f32 0.0, %v5787
      %v5789 = vpop.f32.mrb[0].mxu0
      %5790 = vmatprep.mubr.bf16.mxu0 %v5635
      %5791 = vmatmul.mubr.bf16.gmra.mrb[0].mxu0 %v5487
      %v5792 = vpop.f32.mrb[0].mxu0
      %v5793 = vadd.f32 0.0, %v5792
      %v5794 = vpop.f32.mrb[0].mxu0
      %v5795 = vpop.f32.mrb[0].mxu0
      %v5796 = vadd.f32 0.0, %v5795
      %v5797 = vpop.f32.mrb[0].mxu0
      %5798 = vmatprep.mubr.bf16.mxu0 %v5638
      %5799 = vmatmul.mubr.bf16.gmra.mrb[0].mxu0 %v5491
      %v5800 = vpop.f32.mrb[0].mxu0
      %v5801 = vadd.f32 0.0, %v5800
      %v5802 = vpop.f32.mrb[0].mxu0
      %v5803 = vpop.f32.mrb[0].mxu0
      %v5804 = vadd.f32 0.0, %v5803
      %v5805 = vpop.f32.mrb[0].mxu0
      %5806 = vmatprep.mubr.bf16.mxu0 %v5641
      %5807 = vmatmul.mubr.bf16.gmra.mrb[0].mxu0 %v5495
      %v5808 = vpop.f32.mrb[0].mxu0
      %v5809 = vadd.f32 0.0, %v5808
      %v5810 = vpop.f32.mrb[0].mxu0
      %v5811 = vpop.f32.mrb[0].mxu0
      %v5812 = vadd.f32 0.0, %v5811
      %v5813 = vpop.f32.mrb[0].mxu0
      %5814 = vmatprep.mubr.bf16.mxu0 %v5644
      %5815 = vmatmul.mubr.bf16.gmra.mrb[0].mxu0 %v5499
      %v5816 = vpop.f32.mrb[0].mxu0
      %v5817 = vadd.f32 0.0, %v5816
      %v5818 = vpop.f32.mrb[0].mxu0
      %v5819 = vpop.f32.mrb[0].mxu0
      %v5820 = vpop.f32.mrb[0].mxu0
      %5821 = vdwg.mxu0
      %v5822 = vadd.f32 %v5348, %v5681
      %v5823 = vadd.f32 %v5349, %v5684
      %v5824 = vadd.f32 %v5350, %v5689
      %v5825 = vadd.f32 %v5351, %v5692
      %v5826 = vadd.f32 %v5352, %v5697
      %v5827 = vadd.f32 %v5353, %v5700
      %v5828 = vadd.f32 %v5354, %v5705
      %v5829 = vadd.f32 %v5355, %v5708
      %v5830 = vadd.f32 %v5356, %v5713
      %v5831 = vadd.f32 %v5357, %v5716
      %v5832 = vadd.f32 %v5358, %v5721
      %v5833 = vadd.f32 %v5359, %v5724
      %v5834 = vadd.f32 %v5360, %v5729
      %v5835 = vadd.f32 %v5361, %v5732
      %v5836 = vadd.f32 %v5362, %v5737
      %v5837 = vadd.f32 %v5363, %v5740
      %v5838 = vadd.f32 %v5364, %v5745
      %v5839 = vadd.f32 %v5365, %v5748
      %v5840 = vadd.f32 %v5366, %v5753
      %v5841 = vadd.f32 %v5367, %v5756
      %v5842 = vadd.f32 %v5368, %v5761
      %v5843 = vadd.f32 %v5369, %v5764
      %v5844 = vadd.f32 %v5370, %v5769
      %v5845 = vadd.f32 %v5371, %v5772
      %v5846 = vadd.f32 %v5372, %v5777
      %v5847 = vadd.f32 %v5373, %v5780
      %v5848 = vadd.f32 %v5374, %v5785
      %v5849 = vadd.f32 %v5375, %v5788
      %v5850 = vadd.f32 %v5376, %v5793
      %v5851 = vadd.f32 %v5377, %v5796
      %v5852 = vadd.f32 %v5378, %v5801
      %v5853 = vadd.f32 %v5379, %v5804
      %v5854 = vadd.f32 %v5380, %v5809
      %v5855 = vadd.f32 %v5381, %v5812
      %v5856 = vadd.f32 %v5382, %v5817
      %5857 = vst [vmem:[#allocation3] sm:$0xff] %v5822
      %5858 = vst [vmem:[#allocation3 + $0x8] sm:$0xff] %v5823
      %5859 = vst [vmem:[#allocation3 + $0x10] sm:$0xff] %v5824
      %5860 = vst [vmem:[#allocation3 + $0x18] sm:$0xff] %v5825
      %5861 = vst [vmem:[#allocation3 + $0x20] sm:$0xff] %v5826
      %5862 = vst [vmem:[#allocation3 + $0x28] sm:$0xff] %v5827
      %5863 = vst [vmem:[#allocation3 + $0x30] sm:$0xff] %v5828
      %5864 = vst [vmem:[#allocation3 + $0x38] sm:$0xff] %v5829
      %5865 = vst [vmem:[#allocation3 + $0x40] sm:$0xff] %v5830
      %5866 = vst [vmem:[#allocation3 + $0x48] sm:$0xff] %v5831
      %5867 = vst [vmem:[#allocation3 + $0x50] sm:$0xff] %v5832
      %5868 = vst [vmem:[#allocation3 + $0x58] sm:$0xff] %v5833
      %5869 = vst [vmem:[#allocation3 + $0x60] sm:$0xff] %v5834
      %5870 = vst [vmem:[#allocation3 + $0x68] sm:$0xff] %v5835
      %5871 = vst [vmem:[#allocation3 + $0x70] sm:$0xff] %v5836
      %5872 = vst [vmem:[#allocation3 + $0x78] sm:$0xff] %v5837
      %5873 = vst [vmem:[#allocation3 + $0x80] sm:$0xff] %v5838
      %5874 = vst [vmem:[#allocation3 + $0x88] sm:$0xff] %v5839
      %5875 = vst [vmem:[#allocation3 + $0x90] sm:$0xff] %v5840
      %5876 = vst [vmem:[#allocation3 + $0x98] sm:$0xff] %v5841
      %5877 = vst [vmem:[#allocation3 + $0xa0] sm:$0xff] %v5842
      %5878 = vst [vmem:[#allocation3 + $0xa8] sm:$0xff] %v5843
      %5879 = vst [vmem:[#allocation3 + $0xb0] sm:$0xff] %v5844
      %5880 = vst [vmem:[#allocation3 + $0xb8] sm:$0xff] %v5845
      %5881 = vst [vmem:[#allocation3 + $0xc0] sm:$0xff] %v5846
      %5882 = vst [vmem:[#allocation3 + $0xc8] sm:$0xff] %v5847
      %5883 = vst [vmem:[#allocation3 + $0xd0] sm:$0xff] %v5848
      %5884 = vst [vmem:[#allocation3 + $0xd8] sm:$0xff] %v5849
      %5885 = vst [vmem:[#allocation3 + $0xe0] sm:$0xff] %v5850
      %5886 = vst [vmem:[#allocation3 + $0xe8] sm:$0xff] %v5851
      %5887 = vst [vmem:[#allocation3 + $0xf0] sm:$0xff] %v5852
      %5888 = vst [vmem:[#allocation3 + $0xf8] sm:$0xff] %v5853
      %5889 = vst [vmem:[#allocation3 + $0x100] sm:$0xff] %v5854
      %5890 = vst [vmem:[#allocation3 + $0x108] sm:$0xff] %v5855
      %5891 = vst [vmem:[#allocation3 + $0x110] sm:$0xff] %v5856
      %v5892 = vld [vmem:[#allocation2 + $0x38] sm:$0xf0]
      %v5893 = vld [vmem:[#allocation2 + $0x40] sm:$0xff]
      %v5894 = vld [vmem:[#allocation2 + $0x48] sm:$0xff]
      %v5895 = vld [vmem:[#allocation2 + $0x50] sm:$0xff]
      %v5896 = vld [vmem:[#allocation2 + $0x58] sm:$0xff]
      %v5897 = vld [vmem:[#allocation2 + $0x60] sm:$0xff]
      %v5898 = vld [vmem:[#allocation2 + $0x68] sm:$0xff]
      %v5899 = vld [vmem:[#allocation2 + $0x70] sm:$0xff]
      %v5900 = vld [vmem:[#allocation2 + $0x78] sm:$0xff]
      %v5901 = vld [vmem:[#allocation2 + $0x80] sm:$0xff]
      %v5902 = vld [vmem:[#allocation2 + $0x88] sm:$0xff]
      %v5903 = vld [vmem:[#allocation2 + $0x90] sm:$0xff]
      %v5904 = vld [vmem:[#allocation2 + $0x98] sm:$0xff]
      %v5905 = vld [vmem:[#allocation2 + $0xa0] sm:$0xff]
      %v5906 = vld [vmem:[#allocation2 + $0xa8] sm:$0xff]
      %v5907 = vld [vmem:[#allocation2 + $0xb0] sm:$0xff]
      %v5908 = vld [vmem:[#allocation2 + $0xb8] sm:$0xff]
      %v5909 = vld [vmem:[#allocation2 + $0xc0] sm:$0xff]
      %v5910 = vld [vmem:[#allocation2 + $0xc8] sm:$0x1]
      %v5911 = vld [vmem:[#allocation2 + $0x38] sm:$0xe0]
      %v5913 = vshrl.u32 %v5892, 16
      %v5915 = vshll.u32 %v5892, 16
      %v5917 = vrot.slane %v5915, 1
      %v5918 = vor.u32 %v5913, %v5917
      %v5920 = vshll.u32 %v5893, 16
      %v5922 = vrot.slane %v5920, 1
      %v5923 = vsel %vm1827, %v5918, %v5922
      %v5924 = vshrl.u32 %v5893, 16
      %v5926 = vor.u32 %v5924, %v5922
      %v5928 = vshll.u32 %v5894, 16
      %v5930 = vrot.slane %v5928, 1
      %v5931 = vsel %vm1827, %v5926, %v5930
      %v5932 = vshrl.u32 %v5894, 16
      %v5934 = vor.u32 %v5932, %v5930
      %v5936 = vshll.u32 %v5895, 16
      %v5938 = vrot.slane %v5936, 1
      %v5939 = vsel %vm1827, %v5934, %v5938
      %v5940 = vshrl.u32 %v5895, 16
      %v5942 = vor.u32 %v5940, %v5938
      %v5944 = vshll.u32 %v5896, 16
      %v5946 = vrot.slane %v5944, 1
      %v5947 = vsel %vm1827, %v5942, %v5946
      %v5948 = vshrl.u32 %v5896, 16
      %v5950 = vor.u32 %v5948, %v5946
      %v5952 = vshll.u32 %v5897, 16
      %v5954 = vrot.slane %v5952, 1
      %v5955 = vsel %vm1827, %v5950, %v5954
      %v5956 = vshrl.u32 %v5897, 16
      %v5958 = vor.u32 %v5956, %v5954
      %v5960 = vshll.u32 %v5898, 16
      %v5962 = vrot.slane %v5960, 1
      %v5963 = vsel %vm1827, %v5958, %v5962
      %v5964 = vshrl.u32 %v5898, 16
      %v5966 = vor.u32 %v5964, %v5962
      %v5968 = vshll.u32 %v5899, 16
      %v5970 = vrot.slane %v5968, 1
      %v5971 = vsel %vm1827, %v5966, %v5970
      %v5972 = vshrl.u32 %v5899, 16
      %v5974 = vor.u32 %v5972, %v5970
      %v5976 = vshll.u32 %v5900, 16
      %v5978 = vrot.slane %v5976, 1
      %v5979 = vsel %vm1827, %v5974, %v5978
      %v5980 = vshrl.u32 %v5900, 16
      %v5982 = vor.u32 %v5980, %v5978
      %v5984 = vshll.u32 %v5901, 16
      %v5986 = vrot.slane %v5984, 1
      %v5987 = vsel %vm1827, %v5982, %v5986
      %v5988 = vshrl.u32 %v5901, 16
      %v5990 = vor.u32 %v5988, %v5986
      %v5992 = vshll.u32 %v5902, 16
      %v5994 = vrot.slane %v5992, 1
      %v5995 = vsel %vm1827, %v5990, %v5994
      %v5996 = vshrl.u32 %v5902, 16
      %v5998 = vor.u32 %v5996, %v5994
      %v6000 = vshll.u32 %v5903, 16
      %v6002 = vrot.slane %v6000, 1
      %v6003 = vsel %vm1827, %v5998, %v6002
      %v6004 = vshrl.u32 %v5903, 16
      %v6006 = vor.u32 %v6004, %v6002
      %v6008 = vshll.u32 %v5904, 16
      %v6010 = vrot.slane %v6008, 1
      %v6011 = vsel %vm1827, %v6006, %v6010
      %v6012 = vshrl.u32 %v5904, 16
      %v6014 = vor.u32 %v6012, %v6010
      %v6016 = vshll.u32 %v5905, 16
      %v6018 = vrot.slane %v6016, 1
      %v6019 = vsel %vm1827, %v6014, %v6018
      %v6020 = vshrl.u32 %v5905, 16
      %v6022 = vor.u32 %v6020, %v6018
      %v6024 = vshll.u32 %v5906, 16
      %v6026 = vrot.slane %v6024, 1
      %v6027 = vsel %vm1827, %v6022, %v6026
      %v6028 = vshrl.u32 %v5906, 16
      %v6030 = vor.u32 %v6028, %v6026
      %v6032 = vshll.u32 %v5907, 16
      %v6034 = vrot.slane %v6032, 1
      %v6035 = vsel %vm1827, %v6030, %v6034
      %v6036 = vshrl.u32 %v5907, 16
      %v6038 = vor.u32 %v6036, %v6034
      %v6040 = vshll.u32 %v5908, 16
      %v6042 = vrot.slane %v6040, 1
      %v6043 = vsel %vm1827, %v6038, %v6042
      %v6044 = vshrl.u32 %v5908, 16
      %v6046 = vor.u32 %v6044, %v6042
      %v6048 = vshll.u32 %v5909, 16
      %v6050 = vrot.slane %v6048, 1
      %v6051 = vsel %vm1827, %v6046, %v6050
      %v6052 = vshrl.u32 %v5909, 16
      %v6054 = vor.u32 %v6052, %v6050
      %v6056 = vshll.u32 %v5910, 16
      %v6058 = vrot.slane %v6056, 1
      %v6059 = vsel %vm1827, %v6054, %v6058
      %6060 = vrot.lane.b32.xlu0 %v5923, 64
      %v6061 = vpop.permute.xlu0 %6060
      %6062 = vrot.lane.b32.xlu0 %v5931, 64
      %v6063 = vpop.permute.xlu0 %6062
      %6064 = vrot.lane.b32.xlu0 %v5939, 64
      %v6065 = vpop.permute.xlu0 %6064
      %6066 = vrot.lane.b32.xlu0 %v5947, 64
      %v6067 = vpop.permute.xlu0 %6066
      %6068 = vrot.lane.b32.xlu0 %v5955, 64
      %v6069 = vpop.permute.xlu0 %6068
      %6070 = vrot.lane.b32.xlu0 %v5963, 64
      %v6071 = vpop.permute.xlu0 %6070
      %6072 = vrot.lane.b32.xlu0 %v5971, 64
      %v6073 = vpop.permute.xlu0 %6072
      %6074 = vrot.lane.b32.xlu0 %v5979, 64
      %v6075 = vpop.permute.xlu0 %6074
      %6076 = vrot.lane.b32.xlu0 %v5987, 64
      %v6077 = vpop.permute.xlu0 %6076
      %6078 = vrot.lane.b32.xlu0 %v5995, 64
      %v6079 = vpop.permute.xlu0 %6078
      %6080 = vrot.lane.b32.xlu0 %v6003, 64
      %v6081 = vpop.permute.xlu0 %6080
      %6082 = vrot.lane.b32.xlu0 %v6011, 64
      %v6083 = vpop.permute.xlu0 %6082
      %6084 = vrot.lane.b32.xlu0 %v6019, 64
      %v6085 = vpop.permute.xlu0 %6084
      %6086 = vrot.lane.b32.xlu0 %v6027, 64
      %v6087 = vpop.permute.xlu0 %6086
      %6088 = vrot.lane.b32.xlu0 %v6035, 64
      %v6089 = vpop.permute.xlu0 %6088
      %6090 = vrot.lane.b32.xlu0 %v6043, 64
      %v6091 = vpop.permute.xlu0 %6090
      %6092 = vrot.lane.b32.xlu0 %v6051, 64
      %v6093 = vpop.permute.xlu0 %6092
      %6094 = vrot.lane.b32.xlu0 %v6059, 64
      %v6095 = vpop.permute.xlu0 %6094
      %v6115 = vrot.slane %v5911, 1
      %v6116 = vrot.slane %v5893, 1
      %v6117 = vsel %vm2025, %v6115, %v6116
      %v6118 = vrot.slane %v5894, 1
      %v6119 = vsel %vm2025, %v6116, %v6118
      %v6120 = vrot.slane %v5895, 1
      %v6121 = vsel %vm2025, %v6118, %v6120
      %v6122 = vrot.slane %v5896, 1
      %v6123 = vsel %vm2025, %v6120, %v6122
      %v6124 = vrot.slane %v5897, 1
      %v6125 = vsel %vm2025, %v6122, %v6124
      %v6126 = vrot.slane %v5898, 1
      %v6127 = vsel %vm2025, %v6124, %v6126
      %v6128 = vrot.slane %v5899, 1
      %v6129 = vsel %vm2025, %v6126, %v6128
      %v6130 = vrot.slane %v5900, 1
      %v6131 = vsel %vm2025, %v6128, %v6130
      %v6132 = vrot.slane %v5901, 1
      %v6133 = vsel %vm2025, %v6130, %v6132
      %v6134 = vrot.slane %v5902, 1
      %v6135 = vsel %vm2025, %v6132, %v6134
      %v6136 = vrot.slane %v5903, 1
      %v6137 = vsel %vm2025, %v6134, %v6136
      %v6138 = vrot.slane %v5904, 1
      %v6139 = vsel %vm2025, %v6136, %v6138
      %v6140 = vrot.slane %v5905, 1
      %v6141 = vsel %vm2025, %v6138, %v6140
      %v6142 = vrot.slane %v5906, 1
      %v6143 = vsel %vm2025, %v6140, %v6142
      %v6144 = vrot.slane %v5907, 1
      %v6145 = vsel %vm2025, %v6142, %v6144
      %v6146 = vrot.slane %v5908, 1
      %v6147 = vsel %vm2025, %v6144, %v6146
      %v6148 = vrot.slane %v5909, 1
      %v6149 = vsel %vm2025, %v6146, %v6148
      %v6150 = vrot.slane %v5910, 1
      %v6151 = vsel %vm2025, %v6148, %v6150
      %v6153 = vsel %vm1739, %v5892, %v6061
      %v6155 = vsel %vm1739, %v5893, %v6063
      %v6157 = vsel %vm1739, %v5894, %v6065
      %v6159 = vsel %vm1739, %v5895, %v6067
      %v6161 = vsel %vm1739, %v5896, %v6069
      %v6163 = vsel %vm1739, %v5897, %v6071
      %v6165 = vsel %vm1739, %v5898, %v6073
      %v6167 = vsel %vm1739, %v5899, %v6075
      %v6169 = vsel %vm1739, %v5900, %v6077
      %v6171 = vsel %vm1739, %v5901, %v6079
      %v6173 = vsel %vm1739, %v5902, %v6081
      %v6175 = vsel %vm1739, %v5903, %v6083
      %v6177 = vsel %vm1739, %v5904, %v6085
      %v6179 = vsel %vm1739, %v5905, %v6087
      %v6181 = vsel %vm1739, %v5906, %v6089
      %v6183 = vsel %vm1739, %v5907, %v6091
      %v6185 = vsel %vm1739, %v5908, %v6093
      %v6187 = vsel %vm1739, %v5909, %v6095
      %v6188 = vld [vmem:[#allocation3] sm:$0xff]
      %v6189 = vld [vmem:[#allocation3 + $0x8] sm:$0xff]
      %v6190 = vld [vmem:[#allocation3 + $0x10] sm:$0xff]
      %v6191 = vld [vmem:[#allocation3 + $0x18] sm:$0xff]
      %v6192 = vld [vmem:[#allocation3 + $0x20] sm:$0xff]
      %v6193 = vld [vmem:[#allocation3 + $0x28] sm:$0xff]
      %v6194 = vld [vmem:[#allocation3 + $0x30] sm:$0xff]
      %v6195 = vld [vmem:[#allocation3 + $0x38] sm:$0xff]
      %v6196 = vld [vmem:[#allocation3 + $0x40] sm:$0xff]
      %v6197 = vld [vmem:[#allocation3 + $0x48] sm:$0xff]
      %v6198 = vld [vmem:[#allocation3 + $0x50] sm:$0xff]
      %v6199 = vld [vmem:[#allocation3 + $0x58] sm:$0xff]
      %v6200 = vld [vmem:[#allocation3 + $0x60] sm:$0xff]
      %v6201 = vld [vmem:[#allocation3 + $0x68] sm:$0xff]
      %v6202 = vld [vmem:[#allocation3 + $0x70] sm:$0xff]
      %v6203 = vld [vmem:[#allocation3 + $0x78] sm:$0xff]
      %v6204 = vld [vmem:[#allocation3 + $0x80] sm:$0xff]
      %v6205 = vld [vmem:[#allocation3 + $0x88] sm:$0xff]
      %v6206 = vld [vmem:[#allocation3 + $0x90] sm:$0xff]
      %v6207 = vld [vmem:[#allocation3 + $0x98] sm:$0xff]
      %v6208 = vld [vmem:[#allocation3 + $0xa0] sm:$0xff]
      %v6209 = vld [vmem:[#allocation3 + $0xa8] sm:$0xff]
      %v6210 = vld [vmem:[#allocation3 + $0xb0] sm:$0xff]
      %v6211 = vld [vmem:[#allocation3 + $0xb8] sm:$0xff]
      %v6212 = vld [vmem:[#allocation3 + $0xc0] sm:$0xff]
      %v6213 = vld [vmem:[#allocation3 + $0xc8] sm:$0xff]
      %v6214 = vld [vmem:[#allocation3 + $0xd0] sm:$0xff]
      %v6215 = vld [vmem:[#allocation3 + $0xd8] sm:$0xff]
      %v6216 = vld [vmem:[#allocation3 + $0xe0] sm:$0xff]
      %v6217 = vld [vmem:[#allocation3 + $0xe8] sm:$0xff]
      %v6218 = vld [vmem:[#allocation3 + $0xf0] sm:$0xff]
      %v6219 = vld [vmem:[#allocation3 + $0xf8] sm:$0xff]
      %v6220 = vld [vmem:[#allocation3 + $0x100] sm:$0xff]
      %v6221 = vld [vmem:[#allocation3 + $0x108] sm:$0xff]
      %v6222 = vld [vmem:[#allocation3 + $0x110] sm:$0xff]
      %s6223 = scalar_lea.vmem %s3, 480
      %v6224 = vld [vmem:[%s6223] sm:$0xf]
      %v6225 = vld [vmem:[%s6223 + $0x4] sm:$0xf]
      %v6226 = vld [vmem:[%s6223 + $0x8] sm:$0xf]
      %v6227 = vld [vmem:[%s6223 + $0xc] sm:$0xf]
      %v6228 = vld [vmem:[%s6223 + $0x10] sm:$0xf]
      %v6229 = vld [vmem:[%s6223 + $0x14] sm:$0xf]
      %v6230 = vld [vmem:[%s6223 + $0x18] sm:$0xf]
      %v6231 = vld [vmem:[%s6223 + $0x1c] sm:$0xf]
      %v6232 = vld [vmem:[%s6223 + $0x20] sm:$0xf]
      %v6233 = vld [vmem:[%s6223 + $0x24] sm:$0xf]
      %v6234 = vld [vmem:[%s6223 + $0x28] sm:$0xf]
      %v6235 = vld [vmem:[%s6223 + $0x2c] sm:$0xf]
      %v6236 = vld [vmem:[%s6223 + $0x30] sm:$0xf]
      %v6237 = vld [vmem:[%s6223 + $0x34] sm:$0xf]
      %v6238 = vld [vmem:[%s6223 + $0x38] sm:$0xf]
      %v6239 = vld [vmem:[%s6223 + $0x3c] sm:$0xf]
      %v6240 = vld [vmem:[%s6223 + $0x40] sm:$0xf]
      %v6241 = vld [vmem:[%s6223 + $0x44] sm:$0xf]
      %v6242 = vld [vmem:[%s6223 + $0x48] sm:$0xf]
      %v6243 = vld [vmem:[%s6223 + $0x4c] sm:$0xf]
      %v6244 = vld [vmem:[%s6223 + $0x50] sm:$0xf]
      %v6245 = vld [vmem:[%s6223 + $0x54] sm:$0xf]
      %v6246 = vld [vmem:[%s6223 + $0x58] sm:$0xf]
      %v6247 = vld [vmem:[%s6223 + $0x5c] sm:$0xf]
      %vm6266 = vcmask 1043456
      %v6267 = vrot.slane %v6153, 4
      %v6268 = vrot.slane %v6155, 4
      %v6269 = vsel %vm6266, %v6267, %v6268
      %v6270 = vrot.slane %v6117, 4
      %v6271 = vrot.slane %v6119, 4
      %v6272 = vsel %vm6266, %v6270, %v6271
      %v6273 = vrot.slane %v6157, 4
      %v6274 = vsel %vm6266, %v6268, %v6273
      %v6275 = vrot.slane %v6121, 4
      %v6276 = vsel %vm6266, %v6271, %v6275
      %v6277 = vrot.slane %v6159, 4
      %v6278 = vsel %vm6266, %v6273, %v6277
      %v6279 = vrot.slane %v6123, 4
      %v6280 = vsel %vm6266, %v6275, %v6279
      %v6281 = vrot.slane %v6161, 4
      %v6282 = vsel %vm6266, %v6277, %v6281
      %v6283 = vrot.slane %v6125, 4
      %v6284 = vsel %vm6266, %v6279, %v6283
      %v6285 = vrot.slane %v6163, 4
      %v6286 = vsel %vm6266, %v6281, %v6285
      %v6287 = vrot.slane %v6127, 4
      %v6288 = vsel %vm6266, %v6283, %v6287
      %v6289 = vrot.slane %v6165, 4
      %v6290 = vsel %vm6266, %v6285, %v6289
      %v6291 = vrot.slane %v6129, 4
      %v6292 = vsel %vm6266, %v6287, %v6291
      %v6293 = vrot.slane %v6167, 4
      %v6294 = vsel %vm6266, %v6289, %v6293
      %v6295 = vrot.slane %v6131, 4
      %v6296 = vsel %vm6266, %v6291, %v6295
      %v6297 = vrot.slane %v6169, 4
      %v6298 = vsel %vm6266, %v6293, %v6297
      %v6299 = vrot.slane %v6133, 4
      %v6300 = vsel %vm6266, %v6295, %v6299
      %v6301 = vrot.slane %v6171, 4
      %v6302 = vsel %vm6266, %v6297, %v6301
      %v6303 = vrot.slane %v6135, 4
      %v6304 = vsel %vm6266, %v6299, %v6303
      %v6305 = vrot.slane %v6173, 4
      %v6306 = vsel %vm6266, %v6301, %v6305
      %v6307 = vrot.slane %v6137, 4
      %v6308 = vsel %vm6266, %v6303, %v6307
      %v6309 = vrot.slane %v6175, 4
      %v6310 = vsel %vm6266, %v6305, %v6309
      %v6311 = vrot.slane %v6139, 4
      %v6312 = vsel %vm6266, %v6307, %v6311
      %v6313 = vrot.slane %v6177, 4
      %v6314 = vsel %vm6266, %v6309, %v6313
      %v6315 = vrot.slane %v6141, 4
      %v6316 = vsel %vm6266, %v6311, %v6315
      %v6317 = vrot.slane %v6179, 4
      %v6318 = vsel %vm6266, %v6313, %v6317
      %v6319 = vrot.slane %v6143, 4
      %v6320 = vsel %vm6266, %v6315, %v6319
      %v6321 = vrot.slane %v6181, 4
      %v6322 = vsel %vm6266, %v6317, %v6321
      %v6323 = vrot.slane %v6145, 4
      %v6324 = vsel %vm6266, %v6319, %v6323
      %v6325 = vrot.slane %v6183, 4
      %v6326 = vsel %vm6266, %v6321, %v6325
      %v6327 = vrot.slane %v6147, 4
      %v6328 = vsel %vm6266, %v6323, %v6327
      %v6329 = vrot.slane %v6185, 4
      %v6330 = vsel %vm6266, %v6325, %v6329
      %v6331 = vrot.slane %v6149, 4
      %v6332 = vsel %vm6266, %v6327, %v6331
      %v6333 = vrot.slane %v6187, 4
      %v6334 = vsel %vm6266, %v6329, %v6333
      %v6335 = vrot.slane %v6151, 4
      %v6336 = vsel %vm6266, %v6331, %v6335
      %v6379 = vunpack.c.l.b16 %v6224
      %v6380 = vunpack.c.l.b16 %v6225
      %v6381 = vunpack.c.l.b16 %v6226
      %v6382 = vunpack.c.l.b16 %v6227
      %v6383 = vunpack.c.l.b16 %v6228
      %v6384 = vunpack.c.l.b16 %v6229
      %v6385 = vunpack.c.l.b16 %v6230
      %v6386 = vunpack.c.l.b16 %v6231
      %v6387 = vunpack.c.l.b16 %v6232
      %v6388 = vunpack.c.l.b16 %v6233
      %v6389 = vunpack.c.l.b16 %v6234
      %v6390 = vunpack.c.l.b16 %v6235
      %v6391 = vunpack.c.l.b16 %v6236
      %v6392 = vunpack.c.l.b16 %v6237
      %v6393 = vunpack.c.l.b16 %v6238
      %v6394 = vunpack.c.l.b16 %v6239
      %v6395 = vunpack.c.l.b16 %v6240
      %v6396 = vunpack.c.l.b16 %v6241
      %v6397 = vunpack.c.l.b16 %v6242
      %v6398 = vunpack.c.l.b16 %v6243
      %v6399 = vunpack.c.l.b16 %v6244
      %v6400 = vunpack.c.l.b16 %v6245
      %v6401 = vunpack.c.l.b16 %v6246
      %v6402 = vunpack.c.l.b16 %v6247
      %v6403 = vpack.c.b16 %v6380, %v6379
      %v6404 = vpack.c.b16 %v6382, %v6381
      %v6405 = vpack.c.b16 %v6384, %v6383
      %v6406 = vpack.c.b16 %v6386, %v6385
      %v6407 = vpack.c.b16 %v6388, %v6387
      %v6408 = vpack.c.b16 %v6390, %v6389
      %v6409 = vpack.c.b16 %v6392, %v6391
      %v6410 = vpack.c.b16 %v6394, %v6393
      %v6411 = vpack.c.b16 %v6396, %v6395
      %v6412 = vpack.c.b16 %v6398, %v6397
      %v6413 = vpack.c.b16 %v6400, %v6399
      %v6414 = vpack.c.b16 %v6402, %v6401
      %v6428 = vsel %vm1739, %v6272, 0
      %v6431 = vsel %vm1739, %v6276, 0
      %v6434 = vsel %vm1739, %v6280, 0
      %v6437 = vsel %vm1739, %v6284, 0
      %v6440 = vsel %vm1739, %v6288, 0
      %v6443 = vsel %vm1739, %v6292, 0
      %v6446 = vsel %vm1739, %v6296, 0
      %v6449 = vsel %vm1739, %v6300, 0
      %v6452 = vsel %vm1739, %v6304, 0
      %v6455 = vsel %vm1739, %v6308, 0
      %v6458 = vsel %vm1739, %v6312, 0
      %v6461 = vsel %vm1739, %v6316, 0
      %v6464 = vsel %vm1739, %v6320, 0
      %v6467 = vsel %vm1739, %v6324, 0
      %v6470 = vsel %vm1739, %v6328, 0
      %v6473 = vsel %vm1739, %v6332, 0
      %v6476 = vsel %vm1739, %v6336, 0
      %v6479 = vsel %vm1739, %v6335, 0
      %6481 = vmatprep.subr.bf16.mxu0 0
      %6482 = vmatpush1.bf16.msra.mxu0 %v6403
      %6483 = vmatprep.subr.bf16.mxu0 0
      %6484 = vmatpush1.bf16.msra.mxu0 %v6404
      %6485 = vmatprep.subr.bf16.mxu0 0
      %6486 = vmatpush1.bf16.msra.mxu0 %v6405
      %6487 = vmatprep.subr.bf16.mxu0 0
      %6488 = vmatpush1.bf16.msra.mxu0 %v6406
      %6489 = vmatprep.subr.bf16.mxu0 0
      %6490 = vmatpush1.bf16.msra.mxu0 %v6407
      %6491 = vmatprep.subr.bf16.mxu0 0
      %6492 = vmatpush1.bf16.msra.mxu0 %v6408
      %6493 = vmatprep.subr.bf16.mxu0 0
      %6494 = vmatpush1.bf16.msra.mxu0 %v6409
      %6495 = vmatprep.subr.bf16.mxu0 0
      %6496 = vmatpush1.bf16.msra.mxu0 %v6410
      %6497 = vmatprep.subr.bf16.mxu0 0
      %6498 = vmatpush1.bf16.msra.mxu0 %v6411
      %6499 = vmatprep.subr.bf16.mxu0 0
      %6500 = vmatpush1.bf16.msra.mxu0 %v6412
      %6501 = vmatprep.subr.bf16.mxu0 0
      %6502 = vmatpush1.bf16.msra.mxu0 %v6413
      %6503 = vmatprep.subr.bf16.mxu0 0
      %6504 = vmatpush1.bf16.msra.mxu0 %v6414
      %6505 = vmatprep.subr.bf16.mxu0 0
      %6506 = vmatpush1.bf16.msra.mxu0 0
      %6507 = vmatprep.subr.bf16.mxu0 0
      %6508 = vmatpush1.bf16.msra.mxu0 0
      %6509 = vmatprep.subr.bf16.mxu0 0
      %6510 = vmatpush1.bf16.msra.mxu0 0
      %6511 = vmatprep.subr.bf16.mxu0 0
      %6512 = vmatpush1.bf16.msra.mxu0 0
      %6513 = vmatprep.mubr.bf16.mxu0 %v6428
      %6514 = vmatmul.mubr.bf16.gmra.mrb[0].mxu0 %v6269
      %v6515 = vpop.f32.mrb[0].mxu0
      %v6516 = vadd.f32 0.0, %v6515
      %v6517 = vpop.f32.mrb[0].mxu0
      %v6518 = vpop.f32.mrb[0].mxu0
      %v6519 = vadd.f32 0.0, %v6518
      %v6520 = vpop.f32.mrb[0].mxu0
      %6521 = vmatprep.mubr.bf16.mxu0 %v6431
      %6522 = vmatmul.mubr.bf16.gmra.mrb[0].mxu0 %v6274
      %v6523 = vpop.f32.mrb[0].mxu0
      %v6524 = vadd.f32 0.0, %v6523
      %v6525 = vpop.f32.mrb[0].mxu0
      %v6526 = vpop.f32.mrb[0].mxu0
      %v6527 = vadd.f32 0.0, %v6526
      %v6528 = vpop.f32.mrb[0].mxu0
      %6529 = vmatprep.mubr.bf16.mxu0 %v6434
      %6530 = vmatmul.mubr.bf16.gmra.mrb[0].mxu0 %v6278
      %v6531 = vpop.f32.mrb[0].mxu0
      %v6532 = vadd.f32 0.0, %v6531
      %v6533 = vpop.f32.mrb[0].mxu0
      %v6534 = vpop.f32.mrb[0].mxu0
      %v6535 = vadd.f32 0.0, %v6534
      %v6536 = vpop.f32.mrb[0].mxu0
      %6537 = vmatprep.mubr.bf16.mxu0 %v6437
      %6538 = vmatmul.mubr.bf16.gmra.mrb[0].mxu0 %v6282
      %v6539 = vpop.f32.mrb[0].mxu0
      %v6540 = vadd.f32 0.0, %v6539
      %v6541 = vpop.f32.mrb[0].mxu0
      %v6542 = vpop.f32.mrb[0].mxu0
      %v6543 = vadd.f32 0.0, %v6542
      %v6544 = vpop.f32.mrb[0].mxu0
      %6545 = vmatprep.mubr.bf16.mxu0 %v6440
      %6546 = vmatmul.mubr.bf16.gmra.mrb[0].mxu0 %v6286
      %v6547 = vpop.f32.mrb[0].mxu0
      %v6548 = vadd.f32 0.0, %v6547
      %v6549 = vpop.f32.mrb[0].mxu0
      %v6550 = vpop.f32.mrb[0].mxu0
      %v6551 = vadd.f32 0.0, %v6550
      %v6552 = vpop.f32.mrb[0].mxu0
      %6553 = vmatprep.mubr.bf16.mxu0 %v6443
      %6554 = vmatmul.mubr.bf16.gmra.mrb[0].mxu0 %v6290
      %v6555 = vpop.f32.mrb[0].mxu0
      %v6556 = vadd.f32 0.0, %v6555
      %v6557 = vpop.f32.mrb[0].mxu0
      %v6558 = vpop.f32.mrb[0].mxu0
      %v6559 = vadd.f32 0.0, %v6558
      %v6560 = vpop.f32.mrb[0].mxu0
      %6561 = vmatprep.mubr.bf16.mxu0 %v6446
      %6562 = vmatmul.mubr.bf16.gmra.mrb[0].mxu0 %v6294
      %v6563 = vpop.f32.mrb[0].mxu0
      %v6564 = vadd.f32 0.0, %v6563
      %v6565 = vpop.f32.mrb[0].mxu0
      %v6566 = vpop.f32.mrb[0].mxu0
      %v6567 = vadd.f32 0.0, %v6566
      %v6568 = vpop.f32.mrb[0].mxu0
      %6569 = vmatprep.mubr.bf16.mxu0 %v6449
      %6570 = vmatmul.mubr.bf16.gmra.mrb[0].mxu0 %v6298
      %v6571 = vpop.f32.mrb[0].mxu0
      %v6572 = vadd.f32 0.0, %v6571
      %v6573 = vpop.f32.mrb[0].mxu0
      %v6574 = vpop.f32.mrb[0].mxu0
      %v6575 = vadd.f32 0.0, %v6574
      %v6576 = vpop.f32.mrb[0].mxu0
      %6577 = vmatprep.mubr.bf16.mxu0 %v6452
      %6578 = vmatmul.mubr.bf16.gmra.mrb[0].mxu0 %v6302
      %v6579 = vpop.f32.mrb[0].mxu0
      %v6580 = vadd.f32 0.0, %v6579
      %v6581 = vpop.f32.mrb[0].mxu0
      %v6582 = vpop.f32.mrb[0].mxu0
      %v6583 = vadd.f32 0.0, %v6582
      %v6584 = vpop.f32.mrb[0].mxu0
      %6585 = vmatprep.mubr.bf16.mxu0 %v6455
      %6586 = vmatmul.mubr.bf16.gmra.mrb[0].mxu0 %v6306
      %v6587 = vpop.f32.mrb[0].mxu0
      %v6588 = vadd.f32 0.0, %v6587
      %v6589 = vpop.f32.mrb[0].mxu0
      %v6590 = vpop.f32.mrb[0].mxu0
      %v6591 = vadd.f32 0.0, %v6590
      %v6592 = vpop.f32.mrb[0].mxu0
      %6593 = vmatprep.mubr.bf16.mxu0 %v6458
      %6594 = vmatmul.mubr.bf16.gmra.mrb[0].mxu0 %v6310
      %v6595 = vpop.f32.mrb[0].mxu0
      %v6596 = vadd.f32 0.0, %v6595
      %v6597 = vpop.f32.mrb[0].mxu0
      %v6598 = vpop.f32.mrb[0].mxu0
      %v6599 = vadd.f32 0.0, %v6598
      %v6600 = vpop.f32.mrb[0].mxu0
      %6601 = vmatprep.mubr.bf16.mxu0 %v6461
      %6602 = vmatmul.mubr.bf16.gmra.mrb[0].mxu0 %v6314
      %v6603 = vpop.f32.mrb[0].mxu0
      %v6604 = vadd.f32 0.0, %v6603
      %v6605 = vpop.f32.mrb[0].mxu0
      %v6606 = vpop.f32.mrb[0].mxu0
      %v6607 = vadd.f32 0.0, %v6606
      %v6608 = vpop.f32.mrb[0].mxu0
      %6609 = vmatprep.mubr.bf16.mxu0 %v6464
      %6610 = vmatmul.mubr.bf16.gmra.mrb[0].mxu0 %v6318
      %v6611 = vpop.f32.mrb[0].mxu0
      %v6612 = vadd.f32 0.0, %v6611
      %v6613 = vpop.f32.mrb[0].mxu0
      %v6614 = vpop.f32.mrb[0].mxu0
      %v6615 = vadd.f32 0.0, %v6614
      %v6616 = vpop.f32.mrb[0].mxu0
      %6617 = vmatprep.mubr.bf16.mxu0 %v6467
      %6618 = vmatmul.mubr.bf16.gmra.mrb[0].mxu0 %v6322
      %v6619 = vpop.f32.mrb[0].mxu0
      %v6620 = vadd.f32 0.0, %v6619
      %v6621 = vpop.f32.mrb[0].mxu0
      %v6622 = vpop.f32.mrb[0].mxu0
      %v6623 = vadd.f32 0.0, %v6622
      %v6624 = vpop.f32.mrb[0].mxu0
      %6625 = vmatprep.mubr.bf16.mxu0 %v6470
      %6626 = vmatmul.mubr.bf16.gmra.mrb[0].mxu0 %v6326
      %v6627 = vpop.f32.mrb[0].mxu0
      %v6628 = vadd.f32 0.0, %v6627
      %v6629 = vpop.f32.mrb[0].mxu0
      %v6630 = vpop.f32.mrb[0].mxu0
      %v6631 = vadd.f32 0.0, %v6630
      %v6632 = vpop.f32.mrb[0].mxu0
      %6633 = vmatprep.mubr.bf16.mxu0 %v6473
      %6634 = vmatmul.mubr.bf16.gmra.mrb[0].mxu0 %v6330
      %v6635 = vpop.f32.mrb[0].mxu0
      %v6636 = vadd.f32 0.0, %v6635
      %v6637 = vpop.f32.mrb[0].mxu0
      %v6638 = vpop.f32.mrb[0].mxu0
      %v6639 = vadd.f32 0.0, %v6638
      %v6640 = vpop.f32.mrb[0].mxu0
      %6641 = vmatprep.mubr.bf16.mxu0 %v6476
      %6642 = vmatmul.mubr.bf16.gmra.mrb[0].mxu0 %v6334
      %v6643 = vpop.f32.mrb[0].mxu0
      %v6644 = vadd.f32 0.0, %v6643
      %v6645 = vpop.f32.mrb[0].mxu0
      %v6646 = vpop.f32.mrb[0].mxu0
      %v6647 = vadd.f32 0.0, %v6646
      %v6648 = vpop.f32.mrb[0].mxu0
      %6649 = vmatprep.mubr.bf16.mxu0 %v6479
      %6650 = vmatmul.mubr.bf16.gmra.mrb[0].mxu0 %v6333
      %v6651 = vpop.f32.mrb[0].mxu0
      %v6652 = vadd.f32 0.0, %v6651
      %v6653 = vpop.f32.mrb[0].mxu0
      %v6654 = vpop.f32.mrb[0].mxu0
      %v6655 = vpop.f32.mrb[0].mxu0
      %6656 = vdwg.mxu0
      %v6657 = vadd.f32 %v6188, %v6516
      %v6658 = vadd.f32 %v6189, %v6519
      %v6659 = vadd.f32 %v6190, %v6524
      %v6660 = vadd.f32 %v6191, %v6527
      %v6661 = vadd.f32 %v6192, %v6532
      %v6662 = vadd.f32 %v6193, %v6535
      %v6663 = vadd.f32 %v6194, %v6540
      %v6664 = vadd.f32 %v6195, %v6543
      %v6665 = vadd.f32 %v6196, %v6548
      %v6666 = vadd.f32 %v6197, %v6551
      %v6667 = vadd.f32 %v6198, %v6556
      %v6668 = vadd.f32 %v6199, %v6559
      %v6669 = vadd.f32 %v6200, %v6564
      %v6670 = vadd.f32 %v6201, %v6567
      %v6671 = vadd.f32 %v6202, %v6572
      %v6672 = vadd.f32 %v6203, %v6575
      %v6673 = vadd.f32 %v6204, %v6580
      %v6674 = vadd.f32 %v6205, %v6583
      %v6675 = vadd.f32 %v6206, %v6588
      %v6676 = vadd.f32 %v6207, %v6591
      %v6677 = vadd.f32 %v6208, %v6596
      %v6678 = vadd.f32 %v6209, %v6599
      %v6679 = vadd.f32 %v6210, %v6604
      %v6680 = vadd.f32 %v6211, %v6607
      %v6681 = vadd.f32 %v6212, %v6612
      %v6682 = vadd.f32 %v6213, %v6615
      %v6683 = vadd.f32 %v6214, %v6620
      %v6684 = vadd.f32 %v6215, %v6623
      %v6685 = vadd.f32 %v6216, %v6628
      %v6686 = vadd.f32 %v6217, %v6631
      %v6687 = vadd.f32 %v6218, %v6636
      %v6688 = vadd.f32 %v6219, %v6639
      %v6689 = vadd.f32 %v6220, %v6644
      %v6690 = vadd.f32 %v6221, %v6647
      %v6691 = vadd.f32 %v6222, %v6652
      %6692 = vst [vmem:[#allocation3] sm:$0xff] %v6657
      %6693 = vst [vmem:[#allocation3 + $0x8] sm:$0xff] %v6658
      %6694 = vst [vmem:[#allocation3 + $0x10] sm:$0xff] %v6659
      %6695 = vst [vmem:[#allocation3 + $0x18] sm:$0xff] %v6660
      %6696 = vst [vmem:[#allocation3 + $0x20] sm:$0xff] %v6661
      %6697 = vst [vmem:[#allocation3 + $0x28] sm:$0xff] %v6662
      %6698 = vst [vmem:[#allocation3 + $0x30] sm:$0xff] %v6663
      %6699 = vst [vmem:[#allocation3 + $0x38] sm:$0xff] %v6664
      %6700 = vst [vmem:[#allocation3 + $0x40] sm:$0xff] %v6665
      %6701 = vst [vmem:[#allocation3 + $0x48] sm:$0xff] %v6666
      %6702 = vst [vmem:[#allocation3 + $0x50] sm:$0xff] %v6667
      %6703 = vst [vmem:[#allocation3 + $0x58] sm:$0xff] %v6668
      %6704 = vst [vmem:[#allocation3 + $0x60] sm:$0xff] %v6669
      %6705 = vst [vmem:[#allocation3 + $0x68] sm:$0xff] %v6670
      %6706 = vst [vmem:[#allocation3 + $0x70] sm:$0xff] %v6671
      %6707 = vst [vmem:[#allocation3 + $0x78] sm:$0xff] %v6672
      %6708 = vst [vmem:[#allocation3 + $0x80] sm:$0xff] %v6673
      %6709 = vst [vmem:[#allocation3 + $0x88] sm:$0xff] %v6674
      %6710 = vst [vmem:[#allocation3 + $0x90] sm:$0xff] %v6675
      %6711 = vst [vmem:[#allocation3 + $0x98] sm:$0xff] %v6676
      %6712 = vst [vmem:[#allocation3 + $0xa0] sm:$0xff] %v6677
      %6713 = vst [vmem:[#allocation3 + $0xa8] sm:$0xff] %v6678
      %6714 = vst [vmem:[#allocation3 + $0xb0] sm:$0xff] %v6679
      %6715 = vst [vmem:[#allocation3 + $0xb8] sm:$0xff] %v6680
      %6716 = vst [vmem:[#allocation3 + $0xc0] sm:$0xff] %v6681
      %6717 = vst [vmem:[#allocation3 + $0xc8] sm:$0xff] %v6682
      %6718 = vst [vmem:[#allocation3 + $0xd0] sm:$0xff] %v6683
      %6719 = vst [vmem:[#allocation3 + $0xd8] sm:$0xff] %v6684
      %6720 = vst [vmem:[#allocation3 + $0xe0] sm:$0xff] %v6685
      %6721 = vst [vmem:[#allocation3 + $0xe8] sm:$0xff] %v6686
      %6722 = vst [vmem:[#allocation3 + $0xf0] sm:$0xff] %v6687
      %6723 = vst [vmem:[#allocation3 + $0xf8] sm:$0xff] %v6688
      %6724 = vst [vmem:[#allocation3 + $0x100] sm:$0xff] %v6689
      %6725 = vst [vmem:[#allocation3 + $0x108] sm:$0xff] %v6690
      %6726 = vst [vmem:[#allocation3 + $0x110] sm:$0xff] %v6691
      %v6727 = vld [vmem:[#allocation2 + $0x60] sm:$0xf0]
      %v6728 = vld [vmem:[#allocation2 + $0x68] sm:$0xff]
      %v6729 = vld [vmem:[#allocation2 + $0x70] sm:$0xff]
      %v6730 = vld [vmem:[#allocation2 + $0x78] sm:$0xff]
      %v6731 = vld [vmem:[#allocation2 + $0x80] sm:$0xff]
      %v6732 = vld [vmem:[#allocation2 + $0x88] sm:$0xff]
      %v6733 = vld [vmem:[#allocation2 + $0x90] sm:$0xff]
      %v6734 = vld [vmem:[#allocation2 + $0x98] sm:$0xff]
      %v6735 = vld [vmem:[#allocation2 + $0xa0] sm:$0xff]
      %v6736 = vld [vmem:[#allocation2 + $0xa8] sm:$0xff]
      %v6737 = vld [vmem:[#allocation2 + $0xb0] sm:$0xff]
      %v6738 = vld [vmem:[#allocation2 + $0xb8] sm:$0xff]
      %v6739 = vld [vmem:[#allocation2 + $0xc0] sm:$0xff]
      %v6740 = vld [vmem:[#allocation2 + $0xc8] sm:$0xff]
      %v6741 = vld [vmem:[#allocation2 + $0xd0] sm:$0xff]
      %v6742 = vld [vmem:[#allocation2 + $0xd8] sm:$0xff]
      %v6743 = vld [vmem:[#allocation2 + $0xe0] sm:$0xff]
      %v6744 = vld [vmem:[#allocation2 + $0xe8] sm:$0xff]
      %v6745 = vld [vmem:[#allocation2 + $0xf0] sm:$0x1]
      %v6746 = vld [vmem:[#allocation2 + $0x60] sm:$0xe0]
      %v6748 = vshrl.u32 %v6727, 16
      %v6750 = vshll.u32 %v6727, 16
      %v6752 = vrot.slane %v6750, 1
      %v6753 = vor.u32 %v6748, %v6752
      %v6755 = vshll.u32 %v6728, 16
      %v6757 = vrot.slane %v6755, 1
      %v6758 = vsel %vm1827, %v6753, %v6757
      %v6759 = vshrl.u32 %v6728, 16
      %v6761 = vor.u32 %v6759, %v6757
      %v6763 = vshll.u32 %v6729, 16
      %v6765 = vrot.slane %v6763, 1
      %v6766 = vsel %vm1827, %v6761, %v6765
      %v6767 = vshrl.u32 %v6729, 16
      %v6769 = vor.u32 %v6767, %v6765
      %v6771 = vshll.u32 %v6730, 16
      %v6773 = vrot.slane %v6771, 1
      %v6774 = vsel %vm1827, %v6769, %v6773
      %v6775 = vshrl.u32 %v6730, 16
      %v6777 = vor.u32 %v6775, %v6773
      %v6779 = vshll.u32 %v6731, 16
      %v6781 = vrot.slane %v6779, 1
      %v6782 = vsel %vm1827, %v6777, %v6781
      %v6783 = vshrl.u32 %v6731, 16
      %v6785 = vor.u32 %v6783, %v6781
      %v6787 = vshll.u32 %v6732, 16
      %v6789 = vrot.slane %v6787, 1
      %v6790 = vsel %vm1827, %v6785, %v6789
      %v6791 = vshrl.u32 %v6732, 16
      %v6793 = vor.u32 %v6791, %v6789
      %v6795 = vshll.u32 %v6733, 16
      %v6797 = vrot.slane %v6795, 1
      %v6798 = vsel %vm1827, %v6793, %v6797
      %v6799 = vshrl.u32 %v6733, 16
      %v6801 = vor.u32 %v6799, %v6797
      %v6803 = vshll.u32 %v6734, 16
      %v6805 = vrot.slane %v6803, 1
      %v6806 = vsel %vm1827, %v6801, %v6805
      %v6807 = vshrl.u32 %v6734, 16
      %v6809 = vor.u32 %v6807, %v6805
      %v6811 = vshll.u32 %v6735, 16
      %v6813 = vrot.slane %v6811, 1
      %v6814 = vsel %vm1827, %v6809, %v6813
      %v6815 = vshrl.u32 %v6735, 16
      %v6817 = vor.u32 %v6815, %v6813
      %v6819 = vshll.u32 %v6736, 16
      %v6821 = vrot.slane %v6819, 1
      %v6822 = vsel %vm1827, %v6817, %v6821
      %v6823 = vshrl.u32 %v6736, 16
      %v6825 = vor.u32 %v6823, %v6821
      %v6827 = vshll.u32 %v6737, 16
      %v6829 = vrot.slane %v6827, 1
      %v6830 = vsel %vm1827, %v6825, %v6829
      %v6831 = vshrl.u32 %v6737, 16
      %v6833 = vor.u32 %v6831, %v6829
      %v6835 = vshll.u32 %v6738, 16
      %v6837 = vrot.slane %v6835, 1
      %v6838 = vsel %vm1827, %v6833, %v6837
      %v6839 = vshrl.u32 %v6738, 16
      %v6841 = vor.u32 %v6839, %v6837
      %v6843 = vshll.u32 %v6739, 16
      %v6845 = vrot.slane %v6843, 1
      %v6846 = vsel %vm1827, %v6841, %v6845
      %v6847 = vshrl.u32 %v6739, 16
      %v6849 = vor.u32 %v6847, %v6845
      %v6851 = vshll.u32 %v6740, 16
      %v6853 = vrot.slane %v6851, 1
      %v6854 = vsel %vm1827, %v6849, %v6853
      %v6855 = vshrl.u32 %v6740, 16
      %v6857 = vor.u32 %v6855, %v6853
      %v6859 = vshll.u32 %v6741, 16
      %v6861 = vrot.slane %v6859, 1
      %v6862 = vsel %vm1827, %v6857, %v6861
      %v6863 = vshrl.u32 %v6741, 16
      %v6865 = vor.u32 %v6863, %v6861
      %v6867 = vshll.u32 %v6742, 16
      %v6869 = vrot.slane %v6867, 1
      %v6870 = vsel %vm1827, %v6865, %v6869
      %v6871 = vshrl.u32 %v6742, 16
      %v6873 = vor.u32 %v6871, %v6869
      %v6875 = vshll.u32 %v6743, 16
      %v6877 = vrot.slane %v6875, 1
      %v6878 = vsel %vm1827, %v6873, %v6877
      %v6879 = vshrl.u32 %v6743, 16
      %v6881 = vor.u32 %v6879, %v6877
      %v6883 = vshll.u32 %v6744, 16
      %v6885 = vrot.slane %v6883, 1
      %v6886 = vsel %vm1827, %v6881, %v6885
      %v6887 = vshrl.u32 %v6744, 16
      %v6889 = vor.u32 %v6887, %v6885
      %v6891 = vshll.u32 %v6745, 16
      %v6893 = vrot.slane %v6891, 1
      %v6894 = vsel %vm1827, %v6889, %v6893
      %6895 = vrot.lane.b32.xlu0 %v6758, 64
      %v6896 = vpop.permute.xlu0 %6895
      %6897 = vrot.lane.b32.xlu0 %v6766, 64
      %v6898 = vpop.permute.xlu0 %6897
      %6899 = vrot.lane.b32.xlu0 %v6774, 64
      %v6900 = vpop.permute.xlu0 %6899
      %6901 = vrot.lane.b32.xlu0 %v6782, 64
      %v6902 = vpop.permute.xlu0 %6901
      %6903 = vrot.lane.b32.xlu0 %v6790, 64
      %v6904 = vpop.permute.xlu0 %6903
      %6905 = vrot.lane.b32.xlu0 %v6798, 64
      %v6906 = vpop.permute.xlu0 %6905
      %6907 = vrot.lane.b32.xlu0 %v6806, 64
      %v6908 = vpop.permute.xlu0 %6907
      %6909 = vrot.lane.b32.xlu0 %v6814, 64
      %v6910 = vpop.permute.xlu0 %6909
      %6911 = vrot.lane.b32.xlu0 %v6822, 64
      %v6912 = vpop.permute.xlu0 %6911
      %6913 = vrot.lane.b32.xlu0 %v6830, 64
      %v6914 = vpop.permute.xlu0 %6913
      %6915 = vrot.lane.b32.xlu0 %v6838, 64
      %v6916 = vpop.permute.xlu0 %6915
      %6917 = vrot.lane.b32.xlu0 %v6846, 64
      %v6918 = vpop.permute.xlu0 %6917
      %6919 = vrot.lane.b32.xlu0 %v6854, 64
      %v6920 = vpop.permute.xlu0 %6919
      %6921 = vrot.lane.b32.xlu0 %v6862, 64
      %v6922 = vpop.permute.xlu0 %6921
      %6923 = vrot.lane.b32.xlu0 %v6870, 64
      %v6924 = vpop.permute.xlu0 %6923
      %6925 = vrot.lane.b32.xlu0 %v6878, 64
      %v6926 = vpop.permute.xlu0 %6925
      %6927 = vrot.lane.b32.xlu0 %v6886, 64
      %v6928 = vpop.permute.xlu0 %6927
      %6929 = vrot.lane.b32.xlu0 %v6894, 64
      %v6930 = vpop.permute.xlu0 %6929
      %v6950 = vrot.slane %v6746, 1
      %v6951 = vrot.slane %v6728, 1
      %v6952 = vsel %vm2025, %v6950, %v6951
      %v6953 = vrot.slane %v6729, 1
      %v6954 = vsel %vm2025, %v6951, %v6953
      %v6955 = vrot.slane %v6730, 1
      %v6956 = vsel %vm2025, %v6953, %v6955
      %v6957 = vrot.slane %v6731, 1
      %v6958 = vsel %vm2025, %v6955, %v6957
      %v6959 = vrot.slane %v6732, 1
      %v6960 = vsel %vm2025, %v6957, %v6959
      %v6961 = vrot.slane %v6733, 1
      %v6962 = vsel %vm2025, %v6959, %v6961
      %v6963 = vrot.slane %v6734, 1
      %v6964 = vsel %vm2025, %v6961, %v6963
      %v6965 = vrot.slane %v6735, 1
      %v6966 = vsel %vm2025, %v6963, %v6965
      %v6967 = vrot.slane %v6736, 1
      %v6968 = vsel %vm2025, %v6965, %v6967
      %v6969 = vrot.slane %v6737, 1
      %v6970 = vsel %vm2025, %v6967, %v6969
      %v6971 = vrot.slane %v6738, 1
      %v6972 = vsel %vm2025, %v6969, %v6971
      %v6973 = vrot.slane %v6739, 1
      %v6974 = vsel %vm2025, %v6971, %v6973
      %v6975 = vrot.slane %v6740, 1
      %v6976 = vsel %vm2025, %v6973, %v6975
      %v6977 = vrot.slane %v6741, 1
      %v6978 = vsel %vm2025, %v6975, %v6977
      %v6979 = vrot.slane %v6742, 1
      %v6980 = vsel %vm2025, %v6977, %v6979
      %v6981 = vrot.slane %v6743, 1
      %v6982 = vsel %vm2025, %v6979, %v6981
      %v6983 = vrot.slane %v6744, 1
      %v6984 = vsel %vm2025, %v6981, %v6983
      %v6985 = vrot.slane %v6745, 1
      %v6986 = vsel %vm2025, %v6983, %v6985
      %v6988 = vsel %vm1739, %v6727, %v6896
      %v6990 = vsel %vm1739, %v6728, %v6898
      %v6992 = vsel %vm1739, %v6729, %v6900
      %v6994 = vsel %vm1739, %v6730, %v6902
      %v6996 = vsel %vm1739, %v6731, %v6904
      %v6998 = vsel %vm1739, %v6732, %v6906
      %v7000 = vsel %vm1739, %v6733, %v6908
      %v7002 = vsel %vm1739, %v6734, %v6910
      %v7004 = vsel %vm1739, %v6735, %v6912
      %v7006 = vsel %vm1739, %v6736, %v6914
      %v7008 = vsel %vm1739, %v6737, %v6916
      %v7010 = vsel %vm1739, %v6738, %v6918
      %v7012 = vsel %vm1739, %v6739, %v6920
      %v7014 = vsel %vm1739, %v6740, %v6922
      %v7016 = vsel %vm1739, %v6741, %v6924
      %v7018 = vsel %vm1739, %v6742, %v6926
      %v7020 = vsel %vm1739, %v6743, %v6928
      %v7022 = vsel %vm1739, %v6744, %v6930
      %v7023 = vld [vmem:[#allocation3] sm:$0xff]
      %v7024 = vld [vmem:[#allocation3 + $0x8] sm:$0xff]
      %v7025 = vld [vmem:[#allocation3 + $0x10] sm:$0xff]
      %v7026 = vld [vmem:[#allocation3 + $0x18] sm:$0xff]
      %v7027 = vld [vmem:[#allocation3 + $0x20] sm:$0xff]
      %v7028 = vld [vmem:[#allocation3 + $0x28] sm:$0xff]
      %v7029 = vld [vmem:[#allocation3 + $0x30] sm:$0xff]
      %v7030 = vld [vmem:[#allocation3 + $0x38] sm:$0xff]
      %v7031 = vld [vmem:[#allocation3 + $0x40] sm:$0xff]
      %v7032 = vld [vmem:[#allocation3 + $0x48] sm:$0xff]
      %v7033 = vld [vmem:[#allocation3 + $0x50] sm:$0xff]
      %v7034 = vld [vmem:[#allocation3 + $0x58] sm:$0xff]
      %v7035 = vld [vmem:[#allocation3 + $0x60] sm:$0xff]
      %v7036 = vld [vmem:[#allocation3 + $0x68] sm:$0xff]
      %v7037 = vld [vmem:[#allocation3 + $0x70] sm:$0xff]
      %v7038 = vld [vmem:[#allocation3 + $0x78] sm:$0xff]
      %v7039 = vld [vmem:[#allocation3 + $0x80] sm:$0xff]
      %v7040 = vld [vmem:[#allocation3 + $0x88] sm:$0xff]
      %v7041 = vld [vmem:[#allocation3 + $0x90] sm:$0xff]
      %v7042 = vld [vmem:[#allocation3 + $0x98] sm:$0xff]
      %v7043 = vld [vmem:[#allocation3 + $0xa0] sm:$0xff]
      %v7044 = vld [vmem:[#allocation3 + $0xa8] sm:$0xff]
      %v7045 = vld [vmem:[#allocation3 + $0xb0] sm:$0xff]
      %v7046 = vld [vmem:[#allocation3 + $0xb8] sm:$0xff]
      %v7047 = vld [vmem:[#allocation3 + $0xc0] sm:$0xff]
      %v7048 = vld [vmem:[#allocation3 + $0xc8] sm:$0xff]
      %v7049 = vld [vmem:[#allocation3 + $0xd0] sm:$0xff]
      %v7050 = vld [vmem:[#allocation3 + $0xd8] sm:$0xff]
      %v7051 = vld [vmem:[#allocation3 + $0xe0] sm:$0xff]
      %v7052 = vld [vmem:[#allocation3 + $0xe8] sm:$0xff]
      %v7053 = vld [vmem:[#allocation3 + $0xf0] sm:$0xff]
      %v7054 = vld [vmem:[#allocation3 + $0xf8] sm:$0xff]
      %v7055 = vld [vmem:[#allocation3 + $0x100] sm:$0xff]
      %v7056 = vld [vmem:[#allocation3 + $0x108] sm:$0xff]
      %v7057 = vld [vmem:[#allocation3 + $0x110] sm:$0xff]
      %s7058 = scalar_lea.vmem %s3, 576
      %v7059 = vld [vmem:[%s7058] sm:$0xf]
      %v7060 = vld [vmem:[%s7058 + $0x4] sm:$0xf]
      %v7061 = vld [vmem:[%s7058 + $0x8] sm:$0xf]
      %v7062 = vld [vmem:[%s7058 + $0xc] sm:$0xf]
      %v7063 = vld [vmem:[%s7058 + $0x10] sm:$0xf]
      %v7064 = vld [vmem:[%s7058 + $0x14] sm:$0xf]
      %v7065 = vld [vmem:[%s7058 + $0x18] sm:$0xf]
      %v7066 = vld [vmem:[%s7058 + $0x1c] sm:$0xf]
      %v7067 = vld [vmem:[%s7058 + $0x20] sm:$0xf]
      %v7068 = vld [vmem:[%s7058 + $0x24] sm:$0xf]
      %v7069 = vld [vmem:[%s7058 + $0x28] sm:$0xf]
      %v7070 = vld [vmem:[%s7058 + $0x2c] sm:$0xf]
      %v7071 = vld [vmem:[%s7058 + $0x30] sm:$0xf]
      %v7072 = vld [vmem:[%s7058 + $0x34] sm:$0xf]
      %v7073 = vld [vmem:[%s7058 + $0x38] sm:$0xf]
      %v7074 = vld [vmem:[%s7058 + $0x3c] sm:$0xf]
      %v7075 = vld [vmem:[%s7058 + $0x40] sm:$0xf]
      %v7076 = vld [vmem:[%s7058 + $0x44] sm:$0xf]
      %v7077 = vld [vmem:[%s7058 + $0x48] sm:$0xf]
      %v7078 = vld [vmem:[%s7058 + $0x4c] sm:$0xf]
      %v7079 = vld [vmem:[%s7058 + $0x50] sm:$0xf]
      %v7080 = vld [vmem:[%s7058 + $0x54] sm:$0xf]
      %v7081 = vld [vmem:[%s7058 + $0x58] sm:$0xf]
      %v7082 = vld [vmem:[%s7058 + $0x5c] sm:$0xf]
      %v7101 = vrot.slane %v6988, 4
      %v7102 = vrot.slane %v6990, 4
      %v7103 = vsel %vm6266, %v7101, %v7102
      %v7104 = vrot.slane %v6952, 4
      %v7105 = vrot.slane %v6954, 4
      %v7106 = vsel %vm6266, %v7104, %v7105
      %v7107 = vrot.slane %v6992, 4
      %v7108 = vsel %vm6266, %v7102, %v7107
      %v7109 = vrot.slane %v6956, 4
      %v7110 = vsel %vm6266, %v7105, %v7109
      %v7111 = vrot.slane %v6994, 4
      %v7112 = vsel %vm6266, %v7107, %v7111
      %v7113 = vrot.slane %v6958, 4
      %v7114 = vsel %vm6266, %v7109, %v7113
      %v7115 = vrot.slane %v6996, 4
      %v7116 = vsel %vm6266, %v7111, %v7115
      %v7117 = vrot.slane %v6960, 4
      %v7118 = vsel %vm6266, %v7113, %v7117
      %v7119 = vrot.slane %v6998, 4
      %v7120 = vsel %vm6266, %v7115, %v7119
      %v7121 = vrot.slane %v6962, 4
      %v7122 = vsel %vm6266, %v7117, %v7121
      %v7123 = vrot.slane %v7000, 4
      %v7124 = vsel %vm6266, %v7119, %v7123
      %v7125 = vrot.slane %v6964, 4
      %v7126 = vsel %vm6266, %v7121, %v7125
      %v7127 = vrot.slane %v7002, 4
      %v7128 = vsel %vm6266, %v7123, %v7127
      %v7129 = vrot.slane %v6966, 4
      %v7130 = vsel %vm6266, %v7125, %v7129
      %v7131 = vrot.slane %v7004, 4
      %v7132 = vsel %vm6266, %v7127, %v7131
      %v7133 = vrot.slane %v6968, 4
      %v7134 = vsel %vm6266, %v7129, %v7133
      %v7135 = vrot.slane %v7006, 4
      %v7136 = vsel %vm6266, %v7131, %v7135
      %v7137 = vrot.slane %v6970, 4
      %v7138 = vsel %vm6266, %v7133, %v7137
      %v7139 = vrot.slane %v7008, 4
      %v7140 = vsel %vm6266, %v7135, %v7139
      %v7141 = vrot.slane %v6972, 4
      %v7142 = vsel %vm6266, %v7137, %v7141
      %v7143 = vrot.slane %v7010, 4
      %v7144 = vsel %vm6266, %v7139, %v7143
      %v7145 = vrot.slane %v6974, 4
      %v7146 = vsel %vm6266, %v7141, %v7145
      %v7147 = vrot.slane %v7012, 4
      %v7148 = vsel %vm6266, %v7143, %v7147
      %v7149 = vrot.slane %v6976, 4
      %v7150 = vsel %vm6266, %v7145, %v7149
      %v7151 = vrot.slane %v7014, 4
      %v7152 = vsel %vm6266, %v7147, %v7151
      %v7153 = vrot.slane %v6978, 4
      %v7154 = vsel %vm6266, %v7149, %v7153
      %v7155 = vrot.slane %v7016, 4
      %v7156 = vsel %vm6266, %v7151, %v7155
      %v7157 = vrot.slane %v6980, 4
      %v7158 = vsel %vm6266, %v7153, %v7157
      %v7159 = vrot.slane %v7018, 4
      %v7160 = vsel %vm6266, %v7155, %v7159
      %v7161 = vrot.slane %v6982, 4
      %v7162 = vsel %vm6266, %v7157, %v7161
      %v7163 = vrot.slane %v7020, 4
      %v7164 = vsel %vm6266, %v7159, %v7163
      %v7165 = vrot.slane %v6984, 4
      %v7166 = vsel %vm6266, %v7161, %v7165
      %v7167 = vrot.slane %v7022, 4
      %v7168 = vsel %vm6266, %v7163, %v7167
      %v7169 = vrot.slane %v6986, 4
      %v7170 = vsel %vm6266, %v7165, %v7169
      %v7213 = vunpack.c.l.b16 %v7059
      %v7214 = vunpack.c.l.b16 %v7060
      %v7215 = vunpack.c.l.b16 %v7061
      %v7216 = vunpack.c.l.b16 %v7062
      %v7217 = vunpack.c.l.b16 %v7063
      %v7218 = vunpack.c.l.b16 %v7064
      %v7219 = vunpack.c.l.b16 %v7065
      %v7220 = vunpack.c.l.b16 %v7066
      %v7221 = vunpack.c.l.b16 %v7067
      %v7222 = vunpack.c.l.b16 %v7068
      %v7223 = vunpack.c.l.b16 %v7069
      %v7224 = vunpack.c.l.b16 %v7070
      %v7225 = vunpack.c.l.b16 %v7071
      %v7226 = vunpack.c.l.b16 %v7072
      %v7227 = vunpack.c.l.b16 %v7073
      %v7228 = vunpack.c.l.b16 %v7074
      %v7229 = vunpack.c.l.b16 %v7075
      %v7230 = vunpack.c.l.b16 %v7076
      %v7231 = vunpack.c.l.b16 %v7077
      %v7232 = vunpack.c.l.b16 %v7078
      %v7233 = vunpack.c.l.b16 %v7079
      %v7234 = vunpack.c.l.b16 %v7080
      %v7235 = vunpack.c.l.b16 %v7081
      %v7236 = vunpack.c.l.b16 %v7082
      %v7237 = vpack.c.b16 %v7214, %v7213
      %v7238 = vpack.c.b16 %v7216, %v7215
      %v7239 = vpack.c.b16 %v7218, %v7217
      %v7240 = vpack.c.b16 %v7220, %v7219
      %v7241 = vpack.c.b16 %v7222, %v7221
      %v7242 = vpack.c.b16 %v7224, %v7223
      %v7243 = vpack.c.b16 %v7226, %v7225
      %v7244 = vpack.c.b16 %v7228, %v7227
      %v7245 = vpack.c.b16 %v7230, %v7229
      %v7246 = vpack.c.b16 %v7232, %v7231
      %v7247 = vpack.c.b16 %v7234, %v7233
      %v7248 = vpack.c.b16 %v7236, %v7235
      %v7262 = vsel %vm1739, %v7106, 0
      %v7265 = vsel %vm1739, %v7110, 0
      %v7268 = vsel %vm1739, %v7114, 0
      %v7271 = vsel %vm1739, %v7118, 0
      %v7274 = vsel %vm1739, %v7122, 0
      %v7277 = vsel %vm1739, %v7126, 0
      %v7280 = vsel %vm1739, %v7130, 0
      %v7283 = vsel %vm1739, %v7134, 0
      %v7286 = vsel %vm1739, %v7138, 0
      %v7289 = vsel %vm1739, %v7142, 0
      %v7292 = vsel %vm1739, %v7146, 0
      %v7295 = vsel %vm1739, %v7150, 0
      %v7298 = vsel %vm1739, %v7154, 0
      %v7301 = vsel %vm1739, %v7158, 0
      %v7304 = vsel %vm1739, %v7162, 0
      %v7307 = vsel %vm1739, %v7166, 0
      %v7310 = vsel %vm1739, %v7170, 0
      %v7313 = vsel %vm1739, %v7169, 0
      %7315 = vmatprep.subr.bf16.mxu0 0
      %7316 = vmatpush1.bf16.msra.mxu0 %v7237
      %7317 = vmatprep.subr.bf16.mxu0 0
      %7318 = vmatpush1.bf16.msra.mxu0 %v7238
      %7319 = vmatprep.subr.bf16.mxu0 0
      %7320 = vmatpush1.bf16.msra.mxu0 %v7239
      %7321 = vmatprep.subr.bf16.mxu0 0
      %7322 = vmatpush1.bf16.msra.mxu0 %v7240
      %7323 = vmatprep.subr.bf16.mxu0 0
      %7324 = vmatpush1.bf16.msra.mxu0 %v7241
      %7325 = vmatprep.subr.bf16.mxu0 0
      %7326 = vmatpush1.bf16.msra.mxu0 %v7242
      %7327 = vmatprep.subr.bf16.mxu0 0
      %7328 = vmatpush1.bf16.msra.mxu0 %v7243
      %7329 = vmatprep.subr.bf16.mxu0 0
      %7330 = vmatpush1.bf16.msra.mxu0 %v7244
      %7331 = vmatprep.subr.bf16.mxu0 0
      %7332 = vmatpush1.bf16.msra.mxu0 %v7245
      %7333 = vmatprep.subr.bf16.mxu0 0
      %7334 = vmatpush1.bf16.msra.mxu0 %v7246
      %7335 = vmatprep.subr.bf16.mxu0 0
      %7336 = vmatpush1.bf16.msra.mxu0 %v7247
      %7337 = vmatprep.subr.bf16.mxu0 0
      %7338 = vmatpush1.bf16.msra.mxu0 %v7248
      %7339 = vmatprep.subr.bf16.mxu0 0
      %7340 = vmatpush1.bf16.msra.mxu0 0
      %7341 = vmatprep.subr.bf16.mxu0 0
      %7342 = vmatpush1.bf16.msra.mxu0 0
      %7343 = vmatprep.subr.bf16.mxu0 0
      %7344 = vmatpush1.bf16.msra.mxu0 0
      %7345 = vmatprep.subr.bf16.mxu0 0
      %7346 = vmatpush1.bf16.msra.mxu0 0
      %7347 = vmatprep.mubr.bf16.mxu0 %v7262
      %7348 = vmatmul.mubr.bf16.gmra.mrb[0].mxu0 %v7103
      %v7349 = vpop.f32.mrb[0].mxu0
      %v7350 = vadd.f32 0.0, %v7349
      %v7351 = vpop.f32.mrb[0].mxu0
      %v7352 = vpop.f32.mrb[0].mxu0
      %v7353 = vadd.f32 0.0, %v7352
      %v7354 = vpop.f32.mrb[0].mxu0
      %7355 = vmatprep.mubr.bf16.mxu0 %v7265
      %7356 = vmatmul.mubr.bf16.gmra.mrb[0].mxu0 %v7108
      %v7357 = vpop.f32.mrb[0].mxu0
      %v7358 = vadd.f32 0.0, %v7357
      %v7359 = vpop.f32.mrb[0].mxu0
      %v7360 = vpop.f32.mrb[0].mxu0
      %v7361 = vadd.f32 0.0, %v7360
      %v7362 = vpop.f32.mrb[0].mxu0
      %7363 = vmatprep.mubr.bf16.mxu0 %v7268
      %7364 = vmatmul.mubr.bf16.gmra.mrb[0].mxu0 %v7112
      %v7365 = vpop.f32.mrb[0].mxu0
      %v7366 = vadd.f32 0.0, %v7365
      %v7367 = vpop.f32.mrb[0].mxu0
      %v7368 = vpop.f32.mrb[0].mxu0
      %v7369 = vadd.f32 0.0, %v7368
      %v7370 = vpop.f32.mrb[0].mxu0
      %7371 = vmatprep.mubr.bf16.mxu0 %v7271
      %7372 = vmatmul.mubr.bf16.gmra.mrb[0].mxu0 %v7116
      %v7373 = vpop.f32.mrb[0].mxu0
      %v7374 = vadd.f32 0.0, %v7373
      %v7375 = vpop.f32.mrb[0].mxu0
      %v7376 = vpop.f32.mrb[0].mxu0
      %v7377 = vadd.f32 0.0, %v7376
      %v7378 = vpop.f32.mrb[0].mxu0
      %7379 = vmatprep.mubr.bf16.mxu0 %v7274
      %7380 = vmatmul.mubr.bf16.gmra.mrb[0].mxu0 %v7120
      %v7381 = vpop.f32.mrb[0].mxu0
      %v7382 = vadd.f32 0.0, %v7381
      %v7383 = vpop.f32.mrb[0].mxu0
      %v7384 = vpop.f32.mrb[0].mxu0
      %v7385 = vadd.f32 0.0, %v7384
      %v7386 = vpop.f32.mrb[0].mxu0
      %7387 = vmatprep.mubr.bf16.mxu0 %v7277
      %7388 = vmatmul.mubr.bf16.gmra.mrb[0].mxu0 %v7124
      %v7389 = vpop.f32.mrb[0].mxu0
      %v7390 = vadd.f32 0.0, %v7389
      %v7391 = vpop.f32.mrb[0].mxu0
      %v7392 = vpop.f32.mrb[0].mxu0
      %v7393 = vadd.f32 0.0, %v7392
      %v7394 = vpop.f32.mrb[0].mxu0
      %7395 = vmatprep.mubr.bf16.mxu0 %v7280
      %7396 = vmatmul.mubr.bf16.gmra.mrb[0].mxu0 %v7128
      %v7397 = vpop.f32.mrb[0].mxu0
      %v7398 = vadd.f32 0.0, %v7397
      %v7399 = vpop.f32.mrb[0].mxu0
      %v7400 = vpop.f32.mrb[0].mxu0
      %v7401 = vadd.f32 0.0, %v7400
      %v7402 = vpop.f32.mrb[0].mxu0
      %7403 = vmatprep.mubr.bf16.mxu0 %v7283
      %7404 = vmatmul.mubr.bf16.gmra.mrb[0].mxu0 %v7132
      %v7405 = vpop.f32.mrb[0].mxu0
      %v7406 = vadd.f32 0.0, %v7405
      %v7407 = vpop.f32.mrb[0].mxu0
      %v7408 = vpop.f32.mrb[0].mxu0
      %v7409 = vadd.f32 0.0, %v7408
      %v7410 = vpop.f32.mrb[0].mxu0
      %7411 = vmatprep.mubr.bf16.mxu0 %v7286
      %7412 = vmatmul.mubr.bf16.gmra.mrb[0].mxu0 %v7136
      %v7413 = vpop.f32.mrb[0].mxu0
      %v7414 = vadd.f32 0.0, %v7413
      %v7415 = vpop.f32.mrb[0].mxu0
      %v7416 = vpop.f32.mrb[0].mxu0
      %v7417 = vadd.f32 0.0, %v7416
      %v7418 = vpop.f32.mrb[0].mxu0
      %7419 = vmatprep.mubr.bf16.mxu0 %v7289
      %7420 = vmatmul.mubr.bf16.gmra.mrb[0].mxu0 %v7140
      %v7421 = vpop.f32.mrb[0].mxu0
      %v7422 = vadd.f32 0.0, %v7421
      %v7423 = vpop.f32.mrb[0].mxu0
      %v7424 = vpop.f32.mrb[0].mxu0
      %v7425 = vadd.f32 0.0, %v7424
      %v7426 = vpop.f32.mrb[0].mxu0
      %7427 = vmatprep.mubr.bf16.mxu0 %v7292
      %7428 = vmatmul.mubr.bf16.gmra.mrb[0].mxu0 %v7144
      %v7429 = vpop.f32.mrb[0].mxu0
      %v7430 = vadd.f32 0.0, %v7429
      %v7431 = vpop.f32.mrb[0].mxu0
      %v7432 = vpop.f32.mrb[0].mxu0
      %v7433 = vadd.f32 0.0, %v7432
      %v7434 = vpop.f32.mrb[0].mxu0
      %7435 = vmatprep.mubr.bf16.mxu0 %v7295
      %7436 = vmatmul.mubr.bf16.gmra.mrb[0].mxu0 %v7148
      %v7437 = vpop.f32.mrb[0].mxu0
      %v7438 = vadd.f32 0.0, %v7437
      %v7439 = vpop.f32.mrb[0].mxu0
      %v7440 = vpop.f32.mrb[0].mxu0
      %v7441 = vadd.f32 0.0, %v7440
      %v7442 = vpop.f32.mrb[0].mxu0
      %7443 = vmatprep.mubr.bf16.mxu0 %v7298
      %7444 = vmatmul.mubr.bf16.gmra.mrb[0].mxu0 %v7152
      %v7445 = vpop.f32.mrb[0].mxu0
      %v7446 = vadd.f32 0.0, %v7445
      %v7447 = vpop.f32.mrb[0].mxu0
      %v7448 = vpop.f32.mrb[0].mxu0
      %v7449 = vadd.f32 0.0, %v7448
      %v7450 = vpop.f32.mrb[0].mxu0
      %7451 = vmatprep.mubr.bf16.mxu0 %v7301
      %7452 = vmatmul.mubr.bf16.gmra.mrb[0].mxu0 %v7156
      %v7453 = vpop.f32.mrb[0].mxu0
      %v7454 = vadd.f32 0.0, %v7453
      %v7455 = vpop.f32.mrb[0].mxu0
      %v7456 = vpop.f32.mrb[0].mxu0
      %v7457 = vadd.f32 0.0, %v7456
      %v7458 = vpop.f32.mrb[0].mxu0
      %7459 = vmatprep.mubr.bf16.mxu0 %v7304
      %7460 = vmatmul.mubr.bf16.gmra.mrb[0].mxu0 %v7160
      %v7461 = vpop.f32.mrb[0].mxu0
      %v7462 = vadd.f32 0.0, %v7461
      %v7463 = vpop.f32.mrb[0].mxu0
      %v7464 = vpop.f32.mrb[0].mxu0
      %v7465 = vadd.f32 0.0, %v7464
      %v7466 = vpop.f32.mrb[0].mxu0
      %7467 = vmatprep.mubr.bf16.mxu0 %v7307
      %7468 = vmatmul.mubr.bf16.gmra.mrb[0].mxu0 %v7164
      %v7469 = vpop.f32.mrb[0].mxu0
      %v7470 = vadd.f32 0.0, %v7469
      %v7471 = vpop.f32.mrb[0].mxu0
      %v7472 = vpop.f32.mrb[0].mxu0
      %v7473 = vadd.f32 0.0, %v7472
      %v7474 = vpop.f32.mrb[0].mxu0
      %7475 = vmatprep.mubr.bf16.mxu0 %v7310
      %7476 = vmatmul.mubr.bf16.gmra.mrb[0].mxu0 %v7168
      %v7477 = vpop.f32.mrb[0].mxu0
      %v7478 = vadd.f32 0.0, %v7477
      %v7479 = vpop.f32.mrb[0].mxu0
      %v7480 = vpop.f32.mrb[0].mxu0
      %v7481 = vadd.f32 0.0, %v7480
      %v7482 = vpop.f32.mrb[0].mxu0
      %7483 = vmatprep.mubr.bf16.mxu0 %v7313
      %7484 = vmatmul.mubr.bf16.gmra.mrb[0].mxu0 %v7167
      %v7485 = vpop.f32.mrb[0].mxu0
      %v7486 = vadd.f32 0.0, %v7485
      %v7487 = vpop.f32.mrb[0].mxu0
      %v7488 = vpop.f32.mrb[0].mxu0
      %v7489 = vpop.f32.mrb[0].mxu0
      %7490 = vdwg.mxu0
      %v7491 = vadd.f32 %v7023, %v7350
      %v7492 = vadd.f32 %v7024, %v7353
      %v7493 = vadd.f32 %v7025, %v7358
      %v7494 = vadd.f32 %v7026, %v7361
      %v7495 = vadd.f32 %v7027, %v7366
      %v7496 = vadd.f32 %v7028, %v7369
      %v7497 = vadd.f32 %v7029, %v7374
      %v7498 = vadd.f32 %v7030, %v7377
      %v7499 = vadd.f32 %v7031, %v7382
      %v7500 = vadd.f32 %v7032, %v7385
      %v7501 = vadd.f32 %v7033, %v7390
      %v7502 = vadd.f32 %v7034, %v7393
      %v7503 = vadd.f32 %v7035, %v7398
      %v7504 = vadd.f32 %v7036, %v7401
      %v7505 = vadd.f32 %v7037, %v7406
      %v7506 = vadd.f32 %v7038, %v7409
      %v7507 = vadd.f32 %v7039, %v7414
      %v7508 = vadd.f32 %v7040, %v7417
      %v7509 = vadd.f32 %v7041, %v7422
      %v7510 = vadd.f32 %v7042, %v7425
      %v7511 = vadd.f32 %v7043, %v7430
      %v7512 = vadd.f32 %v7044, %v7433
      %v7513 = vadd.f32 %v7045, %v7438
      %v7514 = vadd.f32 %v7046, %v7441
      %v7515 = vadd.f32 %v7047, %v7446
      %v7516 = vadd.f32 %v7048, %v7449
      %v7517 = vadd.f32 %v7049, %v7454
      %v7518 = vadd.f32 %v7050, %v7457
      %v7519 = vadd.f32 %v7051, %v7462
      %v7520 = vadd.f32 %v7052, %v7465
      %v7521 = vadd.f32 %v7053, %v7470
      %v7522 = vadd.f32 %v7054, %v7473
      %v7523 = vadd.f32 %v7055, %v7478
      %v7524 = vadd.f32 %v7056, %v7481
      %v7525 = vadd.f32 %v7057, %v7486
      %7526 = vst [vmem:[#allocation3] sm:$0xff] %v7491
      %7527 = vst [vmem:[#allocation3 + $0x8] sm:$0xff] %v7492
      %7528 = vst [vmem:[#allocation3 + $0x10] sm:$0xff] %v7493
      %7529 = vst [vmem:[#allocation3 + $0x18] sm:$0xff] %v7494
      %7530 = vst [vmem:[#allocation3 + $0x20] sm:$0xff] %v7495
      %7531 = vst [vmem:[#allocation3 + $0x28] sm:$0xff] %v7496
      %7532 = vst [vmem:[#allocation3 + $0x30] sm:$0xff] %v7497
      %7533 = vst [vmem:[#allocation3 + $0x38] sm:$0xff] %v7498
      %7534 = vst [vmem:[#allocation3 + $0x40] sm:$0xff] %v7499
      %7535 = vst [vmem:[#allocation3 + $0x48] sm:$0xff] %v7500
      %7536 = vst [vmem:[#allocation3 + $0x50] sm:$0xff] %v7501
      %7537 = vst [vmem:[#allocation3 + $0x58] sm:$0xff] %v7502
      %7538 = vst [vmem:[#allocation3 + $0x60] sm:$0xff] %v7503
      %7539 = vst [vmem:[#allocation3 + $0x68] sm:$0xff] %v7504
      %7540 = vst [vmem:[#allocation3 + $0x70] sm:$0xff] %v7505
      %7541 = vst [vmem:[#allocation3 + $0x78] sm:$0xff] %v7506
      %7542 = vst [vmem:[#allocation3 + $0x80] sm:$0xff] %v7507
      %7543 = vst [vmem:[#allocation3 + $0x88] sm:$0xff] %v7508
      %7544 = vst [vmem:[#allocation3 + $0x90] sm:$0xff] %v7509
      %7545 = vst [vmem:[#allocation3 + $0x98] sm:$0xff] %v7510
      %7546 = vst [vmem:[#allocation3 + $0xa0] sm:$0xff] %v7511
      %7547 = vst [vmem:[#allocation3 + $0xa8] sm:$0xff] %v7512
      %7548 = vst [vmem:[#allocation3 + $0xb0] sm:$0xff] %v7513
      %7549 = vst [vmem:[#allocation3 + $0xb8] sm:$0xff] %v7514
      %7550 = vst [vmem:[#allocation3 + $0xc0] sm:$0xff] %v7515
      %7551 = vst [vmem:[#allocation3 + $0xc8] sm:$0xff] %v7516
      %7552 = vst [vmem:[#allocation3 + $0xd0] sm:$0xff] %v7517
      %7553 = vst [vmem:[#allocation3 + $0xd8] sm:$0xff] %v7518
      %7554 = vst [vmem:[#allocation3 + $0xe0] sm:$0xff] %v7519
      %7555 = vst [vmem:[#allocation3 + $0xe8] sm:$0xff] %v7520
      %7556 = vst [vmem:[#allocation3 + $0xf0] sm:$0xff] %v7521
      %7557 = vst [vmem:[#allocation3 + $0xf8] sm:$0xff] %v7522
      %7558 = vst [vmem:[#allocation3 + $0x100] sm:$0xff] %v7523
      %7559 = vst [vmem:[#allocation3 + $0x108] sm:$0xff] %v7524
      %7560 = vst [vmem:[#allocation3 + $0x110] sm:$0xff] %v7525
      %v7561 = vld [vmem:[#allocation2 + $0x68] sm:$0xfe]
      %v7562 = vld [vmem:[#allocation2 + $0x70] sm:$0xff]
      %v7563 = vld [vmem:[#allocation2 + $0x78] sm:$0xff]
      %v7564 = vld [vmem:[#allocation2 + $0x80] sm:$0xff]
      %v7565 = vld [vmem:[#allocation2 + $0x88] sm:$0xff]
      %v7566 = vld [vmem:[#allocation2 + $0x90] sm:$0xff]
      %v7567 = vld [vmem:[#allocation2 + $0x98] sm:$0xff]
      %v7568 = vld [vmem:[#allocation2 + $0xa0] sm:$0xff]
      %v7569 = vld [vmem:[#allocation2 + $0xa8] sm:$0xff]
      %v7570 = vld [vmem:[#allocation2 + $0xb0] sm:$0xff]
      %v7571 = vld [vmem:[#allocation2 + $0xb8] sm:$0xff]
      %v7572 = vld [vmem:[#allocation2 + $0xc0] sm:$0xff]
      %v7573 = vld [vmem:[#allocation2 + $0xc8] sm:$0xff]
      %v7574 = vld [vmem:[#allocation2 + $0xd0] sm:$0xff]
      %v7575 = vld [vmem:[#allocation2 + $0xd8] sm:$0xff]
      %v7576 = vld [vmem:[#allocation2 + $0xe0] sm:$0xff]
      %v7577 = vld [vmem:[#allocation2 + $0xe8] sm:$0xff]
      %v7578 = vld [vmem:[#allocation2 + $0xf0] sm:$0x1f]
      %v7579 = vld [vmem:[#allocation2 + $0xf0] sm:$0x3f]
      %v7580 = vld [vmem:[#allocation2 + $0x68] sm:$0xfc]
      %v7582 = vshrl.u32 %v7561, 16
      %v7584 = vshll.u32 %v7561, 16
      %v7586 = vrot.slane %v7584, 1
      %v7587 = vor.u32 %v7582, %v7586
      %v7589 = vshll.u32 %v7562, 16
      %v7591 = vrot.slane %v7589, 1
      %v7592 = vsel %vm1827, %v7587, %v7591
      %v7593 = vshrl.u32 %v7562, 16
      %v7595 = vor.u32 %v7593, %v7591
      %v7597 = vshll.u32 %v7563, 16
      %v7599 = vrot.slane %v7597, 1
      %v7600 = vsel %vm1827, %v7595, %v7599
      %v7601 = vshrl.u32 %v7563, 16
      %v7603 = vor.u32 %v7601, %v7599
      %v7605 = vshll.u32 %v7564, 16
      %v7607 = vrot.slane %v7605, 1
      %v7608 = vsel %vm1827, %v7603, %v7607
      %v7609 = vshrl.u32 %v7564, 16
      %v7611 = vor.u32 %v7609, %v7607
      %v7613 = vshll.u32 %v7565, 16
      %v7615 = vrot.slane %v7613, 1
      %v7616 = vsel %vm1827, %v7611, %v7615
      %v7617 = vshrl.u32 %v7565, 16
      %v7619 = vor.u32 %v7617, %v7615
      %v7621 = vshll.u32 %v7566, 16
      %v7623 = vrot.slane %v7621, 1
      %v7624 = vsel %vm1827, %v7619, %v7623
      %v7625 = vshrl.u32 %v7566, 16
      %v7627 = vor.u32 %v7625, %v7623
      %v7629 = vshll.u32 %v7567, 16
      %v7631 = vrot.slane %v7629, 1
      %v7632 = vsel %vm1827, %v7627, %v7631
      %v7633 = vshrl.u32 %v7567, 16
      %v7635 = vor.u32 %v7633, %v7631
      %v7637 = vshll.u32 %v7568, 16
      %v7639 = vrot.slane %v7637, 1
      %v7640 = vsel %vm1827, %v7635, %v7639
      %v7641 = vshrl.u32 %v7568, 16
      %v7643 = vor.u32 %v7641, %v7639
      %v7645 = vshll.u32 %v7569, 16
      %v7647 = vrot.slane %v7645, 1
      %v7648 = vsel %vm1827, %v7643, %v7647
      %v7649 = vshrl.u32 %v7569, 16
      %v7651 = vor.u32 %v7649, %v7647
      %v7653 = vshll.u32 %v7570, 16
      %v7655 = vrot.slane %v7653, 1
      %v7656 = vsel %vm1827, %v7651, %v7655
      %v7657 = vshrl.u32 %v7570, 16
      %v7659 = vor.u32 %v7657, %v7655
      %v7661 = vshll.u32 %v7571, 16
      %v7663 = vrot.slane %v7661, 1
      %v7664 = vsel %vm1827, %v7659, %v7663
      %v7665 = vshrl.u32 %v7571, 16
      %v7667 = vor.u32 %v7665, %v7663
      %v7669 = vshll.u32 %v7572, 16
      %v7671 = vrot.slane %v7669, 1
      %v7672 = vsel %vm1827, %v7667, %v7671
      %v7673 = vshrl.u32 %v7572, 16
      %v7675 = vor.u32 %v7673, %v7671
      %v7677 = vshll.u32 %v7573, 16
      %v7679 = vrot.slane %v7677, 1
      %v7680 = vsel %vm1827, %v7675, %v7679
      %v7681 = vshrl.u32 %v7573, 16
      %v7683 = vor.u32 %v7681, %v7679
      %v7685 = vshll.u32 %v7574, 16
      %v7687 = vrot.slane %v7685, 1
      %v7688 = vsel %vm1827, %v7683, %v7687
      %v7689 = vshrl.u32 %v7574, 16
      %v7691 = vor.u32 %v7689, %v7687
      %v7693 = vshll.u32 %v7575, 16
      %v7695 = vrot.slane %v7693, 1
      %v7696 = vsel %vm1827, %v7691, %v7695
      %v7697 = vshrl.u32 %v7575, 16
      %v7699 = vor.u32 %v7697, %v7695
      %v7701 = vshll.u32 %v7576, 16
      %v7703 = vrot.slane %v7701, 1
      %v7704 = vsel %vm1827, %v7699, %v7703
      %v7705 = vshrl.u32 %v7576, 16
      %v7707 = vor.u32 %v7705, %v7703
      %v7709 = vshll.u32 %v7577, 16
      %v7711 = vrot.slane %v7709, 1
      %v7712 = vsel %vm1827, %v7707, %v7711
      %v7713 = vshrl.u32 %v7577, 16
      %v7715 = vor.u32 %v7713, %v7711
      %v7717 = vshll.u32 %v7579, 16
      %v7719 = vrot.slane %v7717, 1
      %v7720 = vsel %vm1827, %v7715, %v7719
      %v7721 = vshrl.u32 %v7579, 16
      %v7723 = vor.u32 %v7721, %v7719
      %7724 = vrot.lane.b32.xlu0 %v7592, 64
      %v7725 = vpop.permute.xlu0 %7724
      %7726 = vrot.lane.b32.xlu0 %v7600, 64
      %v7727 = vpop.permute.xlu0 %7726
      %7728 = vrot.lane.b32.xlu0 %v7608, 64
      %v7729 = vpop.permute.xlu0 %7728
      %7730 = vrot.lane.b32.xlu0 %v7616, 64
      %v7731 = vpop.permute.xlu0 %7730
      %7732 = vrot.lane.b32.xlu0 %v7624, 64
      %v7733 = vpop.permute.xlu0 %7732
      %7734 = vrot.lane.b32.xlu0 %v7632, 64
      %v7735 = vpop.permute.xlu0 %7734
      %7736 = vrot.lane.b32.xlu0 %v7640, 64
      %v7737 = vpop.permute.xlu0 %7736
      %7738 = vrot.lane.b32.xlu0 %v7648, 64
      %v7739 = vpop.permute.xlu0 %7738
      %7740 = vrot.lane.b32.xlu0 %v7656, 64
      %v7741 = vpop.permute.xlu0 %7740
      %7742 = vrot.lane.b32.xlu0 %v7664, 64
      %v7743 = vpop.permute.xlu0 %7742
      %7744 = vrot.lane.b32.xlu0 %v7672, 64
      %v7745 = vpop.permute.xlu0 %7744
      %7746 = vrot.lane.b32.xlu0 %v7680, 64
      %v7747 = vpop.permute.xlu0 %7746
      %7748 = vrot.lane.b32.xlu0 %v7688, 64
      %v7749 = vpop.permute.xlu0 %7748
      %7750 = vrot.lane.b32.xlu0 %v7696, 64
      %v7751 = vpop.permute.xlu0 %7750
      %7752 = vrot.lane.b32.xlu0 %v7704, 64
      %v7753 = vpop.permute.xlu0 %7752
      %7754 = vrot.lane.b32.xlu0 %v7712, 64
      %v7755 = vpop.permute.xlu0 %7754
      %7756 = vrot.lane.b32.xlu0 %v7720, 64
      %v7757 = vpop.permute.xlu0 %7756
      %7758 = vrot.lane.b32.xlu0 %v7723, 64
      %v7759 = vpop.permute.xlu0 %7758
      %v7778 = vrot.slane %v7580, 1
      %v7779 = vrot.slane %v7562, 1
      %v7780 = vsel %vm2025, %v7778, %v7779
      %v7781 = vrot.slane %v7563, 1
      %v7782 = vsel %vm2025, %v7779, %v7781
      %v7783 = vrot.slane %v7564, 1
      %v7784 = vsel %vm2025, %v7781, %v7783
      %v7785 = vrot.slane %v7565, 1
      %v7786 = vsel %vm2025, %v7783, %v7785
      %v7787 = vrot.slane %v7566, 1
      %v7788 = vsel %vm2025, %v7785, %v7787
      %v7789 = vrot.slane %v7567, 1
      %v7790 = vsel %vm2025, %v7787, %v7789
      %v7791 = vrot.slane %v7568, 1
      %v7792 = vsel %vm2025, %v7789, %v7791
      %v7793 = vrot.slane %v7569, 1
      %v7794 = vsel %vm2025, %v7791, %v7793
      %v7795 = vrot.slane %v7570, 1
      %v7796 = vsel %vm2025, %v7793, %v7795
      %v7797 = vrot.slane %v7571, 1
      %v7798 = vsel %vm2025, %v7795, %v7797
      %v7799 = vrot.slane %v7572, 1
      %v7800 = vsel %vm2025, %v7797, %v7799
      %v7801 = vrot.slane %v7573, 1
      %v7802 = vsel %vm2025, %v7799, %v7801
      %v7803 = vrot.slane %v7574, 1
      %v7804 = vsel %vm2025, %v7801, %v7803
      %v7805 = vrot.slane %v7575, 1
      %v7806 = vsel %vm2025, %v7803, %v7805
      %v7807 = vrot.slane %v7576, 1
      %v7808 = vsel %vm2025, %v7805, %v7807
      %v7809 = vrot.slane %v7577, 1
      %v7810 = vsel %vm2025, %v7807, %v7809
      %v7811 = vrot.slane %v7579, 1
      %v7812 = vsel %vm2025, %v7809, %v7811
      %v7814 = vsel %vm1739, %v7561, %v7725
      %v7816 = vsel %vm1739, %v7562, %v7727
      %v7818 = vsel %vm1739, %v7563, %v7729
      %v7820 = vsel %vm1739, %v7564, %v7731
      %v7822 = vsel %vm1739, %v7565, %v7733
      %v7824 = vsel %vm1739, %v7566, %v7735
      %v7826 = vsel %vm1739, %v7567, %v7737
      %v7828 = vsel %vm1739, %v7568, %v7739
      %v7830 = vsel %vm1739, %v7569, %v7741
      %v7832 = vsel %vm1739, %v7570, %v7743
      %v7834 = vsel %vm1739, %v7571, %v7745
      %v7836 = vsel %vm1739, %v7572, %v7747
      %v7838 = vsel %vm1739, %v7573, %v7749
      %v7840 = vsel %vm1739, %v7574, %v7751
      %v7842 = vsel %vm1739, %v7575, %v7753
      %v7844 = vsel %vm1739, %v7576, %v7755
      %v7846 = vsel %vm1739, %v7577, %v7757
      %v7849 = vsel %vm1739, %v7578, %v7759
      %v7850 = vld [vmem:[#allocation3] sm:$0xff]
      %v7851 = vld [vmem:[#allocation3 + $0x8] sm:$0xff]
      %v7852 = vld [vmem:[#allocation3 + $0x10] sm:$0xff]
      %v7853 = vld [vmem:[#allocation3 + $0x18] sm:$0xff]
      %v7854 = vld [vmem:[#allocation3 + $0x20] sm:$0xff]
      %v7855 = vld [vmem:[#allocation3 + $0x28] sm:$0xff]
      %v7856 = vld [vmem:[#allocation3 + $0x30] sm:$0xff]
      %v7857 = vld [vmem:[#allocation3 + $0x38] sm:$0xff]
      %v7858 = vld [vmem:[#allocation3 + $0x40] sm:$0xff]
      %v7859 = vld [vmem:[#allocation3 + $0x48] sm:$0xff]
      %v7860 = vld [vmem:[#allocation3 + $0x50] sm:$0xff]
      %v7861 = vld [vmem:[#allocation3 + $0x58] sm:$0xff]
      %v7862 = vld [vmem:[#allocation3 + $0x60] sm:$0xff]
      %v7863 = vld [vmem:[#allocation3 + $0x68] sm:$0xff]
      %v7864 = vld [vmem:[#allocation3 + $0x70] sm:$0xff]
      %v7865 = vld [vmem:[#allocation3 + $0x78] sm:$0xff]
      %v7866 = vld [vmem:[#allocation3 + $0x80] sm:$0xff]
      %v7867 = vld [vmem:[#allocation3 + $0x88] sm:$0xff]
      %v7868 = vld [vmem:[#allocation3 + $0x90] sm:$0xff]
      %v7869 = vld [vmem:[#allocation3 + $0x98] sm:$0xff]
      %v7870 = vld [vmem:[#allocation3 + $0xa0] sm:$0xff]
      %v7871 = vld [vmem:[#allocation3 + $0xa8] sm:$0xff]
      %v7872 = vld [vmem:[#allocation3 + $0xb0] sm:$0xff]
      %v7873 = vld [vmem:[#allocation3 + $0xb8] sm:$0xff]
      %v7874 = vld [vmem:[#allocation3 + $0xc0] sm:$0xff]
      %v7875 = vld [vmem:[#allocation3 + $0xc8] sm:$0xff]
      %v7876 = vld [vmem:[#allocation3 + $0xd0] sm:$0xff]
      %v7877 = vld [vmem:[#allocation3 + $0xd8] sm:$0xff]
      %v7878 = vld [vmem:[#allocation3 + $0xe0] sm:$0xff]
      %v7879 = vld [vmem:[#allocation3 + $0xe8] sm:$0xff]
      %v7880 = vld [vmem:[#allocation3 + $0xf0] sm:$0xff]
      %v7881 = vld [vmem:[#allocation3 + $0xf8] sm:$0xff]
      %v7882 = vld [vmem:[#allocation3 + $0x100] sm:$0xff]
      %v7883 = vld [vmem:[#allocation3 + $0x108] sm:$0xff]
      %v7884 = vld [vmem:[#allocation3 + $0x110] sm:$0xff]
      %s7885 = scalar_lea.vmem %s3, 672
      %v7886 = vld [vmem:[%s7885] sm:$0xf]
      %v7887 = vld [vmem:[%s7885 + $0x4] sm:$0xf]
      %v7888 = vld [vmem:[%s7885 + $0x8] sm:$0xf]
      %v7889 = vld [vmem:[%s7885 + $0xc] sm:$0xf]
      %v7890 = vld [vmem:[%s7885 + $0x10] sm:$0xf]
      %v7891 = vld [vmem:[%s7885 + $0x14] sm:$0xf]
      %v7892 = vld [vmem:[%s7885 + $0x18] sm:$0xf]
      %v7893 = vld [vmem:[%s7885 + $0x1c] sm:$0xf]
      %v7894 = vld [vmem:[%s7885 + $0x20] sm:$0xf]
      %v7895 = vld [vmem:[%s7885 + $0x24] sm:$0xf]
      %v7896 = vld [vmem:[%s7885 + $0x28] sm:$0xf]
      %v7897 = vld [vmem:[%s7885 + $0x2c] sm:$0xf]
      %v7898 = vld [vmem:[%s7885 + $0x30] sm:$0xf]
      %v7899 = vld [vmem:[%s7885 + $0x34] sm:$0xf]
      %v7900 = vld [vmem:[%s7885 + $0x38] sm:$0xf]
      %v7901 = vld [vmem:[%s7885 + $0x3c] sm:$0xf]
      %v7902 = vld [vmem:[%s7885 + $0x40] sm:$0xf]
      %v7903 = vld [vmem:[%s7885 + $0x44] sm:$0xf]
      %v7904 = vld [vmem:[%s7885 + $0x48] sm:$0xf]
      %v7905 = vld [vmem:[%s7885 + $0x4c] sm:$0xf]
      %v7906 = vld [vmem:[%s7885 + $0x50] sm:$0xf]
      %v7907 = vld [vmem:[%s7885 + $0x54] sm:$0xf]
      %v7908 = vld [vmem:[%s7885 + $0x58] sm:$0xf]
      %v7909 = vld [vmem:[%s7885 + $0x5c] sm:$0xf]
      %v7928 = vrot.slane %v7814, 1
      %v7929 = vrot.slane %v7816, 1
      %v7930 = vsel %vm2025, %v7928, %v7929
      %v7931 = vrot.slane %v7780, 1
      %v7932 = vrot.slane %v7782, 1
      %v7933 = vsel %vm2025, %v7931, %v7932
      %v7934 = vrot.slane %v7818, 1
      %v7935 = vsel %vm2025, %v7929, %v7934
      %v7936 = vrot.slane %v7784, 1
      %v7937 = vsel %vm2025, %v7932, %v7936
      %v7938 = vrot.slane %v7820, 1
      %v7939 = vsel %vm2025, %v7934, %v7938
      %v7940 = vrot.slane %v7786, 1
      %v7941 = vsel %vm2025, %v7936, %v7940
      %v7942 = vrot.slane %v7822, 1
      %v7943 = vsel %vm2025, %v7938, %v7942
      %v7944 = vrot.slane %v7788, 1
      %v7945 = vsel %vm2025, %v7940, %v7944
      %v7946 = vrot.slane %v7824, 1
      %v7947 = vsel %vm2025, %v7942, %v7946
      %v7948 = vrot.slane %v7790, 1
      %v7949 = vsel %vm2025, %v7944, %v7948
      %v7950 = vrot.slane %v7826, 1
      %v7951 = vsel %vm2025, %v7946, %v7950
      %v7952 = vrot.slane %v7792, 1
      %v7953 = vsel %vm2025, %v7948, %v7952
      %v7954 = vrot.slane %v7828, 1
      %v7955 = vsel %vm2025, %v7950, %v7954
      %v7956 = vrot.slane %v7794, 1
      %v7957 = vsel %vm2025, %v7952, %v7956
      %v7958 = vrot.slane %v7830, 1
      %v7959 = vsel %vm2025, %v7954, %v7958
      %v7960 = vrot.slane %v7796, 1
      %v7961 = vsel %vm2025, %v7956, %v7960
      %v7962 = vrot.slane %v7832, 1
      %v7963 = vsel %vm2025, %v7958, %v7962
      %v7964 = vrot.slane %v7798, 1
      %v7965 = vsel %vm2025, %v7960, %v7964
      %v7966 = vrot.slane %v7834, 1
      %v7967 = vsel %vm2025, %v7962, %v7966
      %v7968 = vrot.slane %v7800, 1
      %v7969 = vsel %vm2025, %v7964, %v7968
      %v7970 = vrot.slane %v7836, 1
      %v7971 = vsel %vm2025, %v7966, %v7970
      %v7972 = vrot.slane %v7802, 1
      %v7973 = vsel %vm2025, %v7968, %v7972
      %v7974 = vrot.slane %v7838, 1
      %v7975 = vsel %vm2025, %v7970, %v7974
      %v7976 = vrot.slane %v7804, 1
      %v7977 = vsel %vm2025, %v7972, %v7976
      %v7978 = vrot.slane %v7840, 1
      %v7979 = vsel %vm2025, %v7974, %v7978
      %v7980 = vrot.slane %v7806, 1
      %v7981 = vsel %vm2025, %v7976, %v7980
      %v7982 = vrot.slane %v7842, 1
      %v7983 = vsel %vm2025, %v7978, %v7982
      %v7984 = vrot.slane %v7808, 1
      %v7985 = vsel %vm2025, %v7980, %v7984
      %v7986 = vrot.slane %v7844, 1
      %v7987 = vsel %vm2025, %v7982, %v7986
      %v7988 = vrot.slane %v7810, 1
      %v7989 = vsel %vm2025, %v7984, %v7988
      %v7990 = vrot.slane %v7846, 1
      %v7991 = vsel %vm2025, %v7986, %v7990
      %v7992 = vrot.slane %v7812, 1
      %v7993 = vsel %vm2025, %v7988, %v7992
      %v7994 = vrot.slane %v7849, 1
      %v7995 = vsel %vm2025, %v7990, %v7994
      %v7996 = vrot.slane %v7811, 1
      %v7997 = vsel %vm2025, %v7992, %v7996
      %v8040 = vunpack.c.l.b16 %v7886
      %v8041 = vunpack.c.l.b16 %v7887
      %v8042 = vunpack.c.l.b16 %v7888
      %v8043 = vunpack.c.l.b16 %v7889
      %v8044 = vunpack.c.l.b16 %v7890
      %v8045 = vunpack.c.l.b16 %v7891
      %v8046 = vunpack.c.l.b16 %v7892
      %v8047 = vunpack.c.l.b16 %v7893
      %v8048 = vunpack.c.l.b16 %v7894
      %v8049 = vunpack.c.l.b16 %v7895
      %v8050 = vunpack.c.l.b16 %v7896
      %v8051 = vunpack.c.l.b16 %v7897
      %v8052 = vunpack.c.l.b16 %v7898
      %v8053 = vunpack.c.l.b16 %v7899
      %v8054 = vunpack.c.l.b16 %v7900
      %v8055 = vunpack.c.l.b16 %v7901
      %v8056 = vunpack.c.l.b16 %v7902
      %v8057 = vunpack.c.l.b16 %v7903
      %v8058 = vunpack.c.l.b16 %v7904
      %v8059 = vunpack.c.l.b16 %v7905
      %v8060 = vunpack.c.l.b16 %v7906
      %v8061 = vunpack.c.l.b16 %v7907
      %v8062 = vunpack.c.l.b16 %v7908
      %v8063 = vunpack.c.l.b16 %v7909
      %v8064 = vpack.c.b16 %v8041, %v8040
      %v8065 = vpack.c.b16 %v8043, %v8042
      %v8066 = vpack.c.b16 %v8045, %v8044
      %v8067 = vpack.c.b16 %v8047, %v8046
      %v8068 = vpack.c.b16 %v8049, %v8048
      %v8069 = vpack.c.b16 %v8051, %v8050
      %v8070 = vpack.c.b16 %v8053, %v8052
      %v8071 = vpack.c.b16 %v8055, %v8054
      %v8072 = vpack.c.b16 %v8057, %v8056
      %v8073 = vpack.c.b16 %v8059, %v8058
      %v8074 = vpack.c.b16 %v8061, %v8060
      %v8075 = vpack.c.b16 %v8063, %v8062
      %v8089 = vsel %vm1739, %v7933, 0
      %v8092 = vsel %vm1739, %v7937, 0
      %v8095 = vsel %vm1739, %v7941, 0
      %v8098 = vsel %vm1739, %v7945, 0
      %v8101 = vsel %vm1739, %v7949, 0
      %v8104 = vsel %vm1739, %v7953, 0
      %v8107 = vsel %vm1739, %v7957, 0
      %v8110 = vsel %vm1739, %v7961, 0
      %v8113 = vsel %vm1739, %v7965, 0
      %v8116 = vsel %vm1739, %v7969, 0
      %v8119 = vsel %vm1739, %v7973, 0
      %v8122 = vsel %vm1739, %v7977, 0
      %v8125 = vsel %vm1739, %v7981, 0
      %v8128 = vsel %vm1739, %v7985, 0
      %v8131 = vsel %vm1739, %v7989, 0
      %v8134 = vsel %vm1739, %v7993, 0
      %v8137 = vsel %vm1739, %v7997, 0
      %v8140 = vsel %vm1739, %v7996, 0
      %8142 = vmatprep.subr.bf16.mxu0 0
      %8143 = vmatpush1.bf16.msra.mxu0 %v8064
      %8144 = vmatprep.subr.bf16.mxu0 0
      %8145 = vmatpush1.bf16.msra.mxu0 %v8065
      %8146 = vmatprep.subr.bf16.mxu0 0
      %8147 = vmatpush1.bf16.msra.mxu0 %v8066
      %8148 = vmatprep.subr.bf16.mxu0 0
      %8149 = vmatpush1.bf16.msra.mxu0 %v8067
      %8150 = vmatprep.subr.bf16.mxu0 0
      %8151 = vmatpush1.bf16.msra.mxu0 %v8068
      %8152 = vmatprep.subr.bf16.mxu0 0
      %8153 = vmatpush1.bf16.msra.mxu0 %v8069
      %8154 = vmatprep.subr.bf16.mxu0 0
      %8155 = vmatpush1.bf16.msra.mxu0 %v8070
      %8156 = vmatprep.subr.bf16.mxu0 0
      %8157 = vmatpush1.bf16.msra.mxu0 %v8071
      %8158 = vmatprep.subr.bf16.mxu0 0
      %8159 = vmatpush1.bf16.msra.mxu0 %v8072
      %8160 = vmatprep.subr.bf16.mxu0 0
      %8161 = vmatpush1.bf16.msra.mxu0 %v8073
      %8162 = vmatprep.subr.bf16.mxu0 0
      %8163 = vmatpush1.bf16.msra.mxu0 %v8074
      %8164 = vmatprep.subr.bf16.mxu0 0
      %8165 = vmatpush1.bf16.msra.mxu0 %v8075
      %8166 = vmatprep.subr.bf16.mxu0 0
      %8167 = vmatpush1.bf16.msra.mxu0 0
      %8168 = vmatprep.subr.bf16.mxu0 0
      %8169 = vmatpush1.bf16.msra.mxu0 0
      %8170 = vmatprep.subr.bf16.mxu0 0
      %8171 = vmatpush1.bf16.msra.mxu0 0
      %8172 = vmatprep.subr.bf16.mxu0 0
      %8173 = vmatpush1.bf16.msra.mxu0 0
      %8174 = vmatprep.mubr.bf16.mxu0 %v8089
      %8175 = vmatmul.mubr.bf16.gmra.mrb[0].mxu0 %v7930
      %v8176 = vpop.f32.mrb[0].mxu0
      %v8177 = vadd.f32 0.0, %v8176
      %v8178 = vpop.f32.mrb[0].mxu0
      %v8179 = vpop.f32.mrb[0].mxu0
      %v8180 = vadd.f32 0.0, %v8179
      %v8181 = vpop.f32.mrb[0].mxu0
      %8182 = vmatprep.mubr.bf16.mxu0 %v8092
      %8183 = vmatmul.mubr.bf16.gmra.mrb[0].mxu0 %v7935
      %v8184 = vpop.f32.mrb[0].mxu0
      %v8185 = vadd.f32 0.0, %v8184
      %v8186 = vpop.f32.mrb[0].mxu0
      %v8187 = vpop.f32.mrb[0].mxu0
      %v8188 = vadd.f32 0.0, %v8187
      %v8189 = vpop.f32.mrb[0].mxu0
      %8190 = vmatprep.mubr.bf16.mxu0 %v8095
      %8191 = vmatmul.mubr.bf16.gmra.mrb[0].mxu0 %v7939
      %v8192 = vpop.f32.mrb[0].mxu0
      %v8193 = vadd.f32 0.0, %v8192
      %v8194 = vpop.f32.mrb[0].mxu0
      %v8195 = vpop.f32.mrb[0].mxu0
      %v8196 = vadd.f32 0.0, %v8195
      %v8197 = vpop.f32.mrb[0].mxu0
      %8198 = vmatprep.mubr.bf16.mxu0 %v8098
      %8199 = vmatmul.mubr.bf16.gmra.mrb[0].mxu0 %v7943
      %v8200 = vpop.f32.mrb[0].mxu0
      %v8201 = vadd.f32 0.0, %v8200
      %v8202 = vpop.f32.mrb[0].mxu0
      %v8203 = vpop.f32.mrb[0].mxu0
      %v8204 = vadd.f32 0.0, %v8203
      %v8205 = vpop.f32.mrb[0].mxu0
      %8206 = vmatprep.mubr.bf16.mxu0 %v8101
      %8207 = vmatmul.mubr.bf16.gmra.mrb[0].mxu0 %v7947
      %v8208 = vpop.f32.mrb[0].mxu0
      %v8209 = vadd.f32 0.0, %v8208
      %v8210 = vpop.f32.mrb[0].mxu0
      %v8211 = vpop.f32.mrb[0].mxu0
      %v8212 = vadd.f32 0.0, %v8211
      %v8213 = vpop.f32.mrb[0].mxu0
      %8214 = vmatprep.mubr.bf16.mxu0 %v8104
      %8215 = vmatmul.mubr.bf16.gmra.mrb[0].mxu0 %v7951
      %v8216 = vpop.f32.mrb[0].mxu0
      %v8217 = vadd.f32 0.0, %v8216
      %v8218 = vpop.f32.mrb[0].mxu0
      %v8219 = vpop.f32.mrb[0].mxu0
      %v8220 = vadd.f32 0.0, %v8219
      %v8221 = vpop.f32.mrb[0].mxu0
      %8222 = vmatprep.mubr.bf16.mxu0 %v8107
      %8223 = vmatmul.mubr.bf16.gmra.mrb[0].mxu0 %v7955
      %v8224 = vpop.f32.mrb[0].mxu0
      %v8225 = vadd.f32 0.0, %v8224
      %v8226 = vpop.f32.mrb[0].mxu0
      %v8227 = vpop.f32.mrb[0].mxu0
      %v8228 = vadd.f32 0.0, %v8227
      %v8229 = vpop.f32.mrb[0].mxu0
      %8230 = vmatprep.mubr.bf16.mxu0 %v8110
      %8231 = vmatmul.mubr.bf16.gmra.mrb[0].mxu0 %v7959
      %v8232 = vpop.f32.mrb[0].mxu0
      %v8233 = vadd.f32 0.0, %v8232
      %v8234 = vpop.f32.mrb[0].mxu0
      %v8235 = vpop.f32.mrb[0].mxu0
      %v8236 = vadd.f32 0.0, %v8235
      %v8237 = vpop.f32.mrb[0].mxu0
      %8238 = vmatprep.mubr.bf16.mxu0 %v8113
      %8239 = vmatmul.mubr.bf16.gmra.mrb[0].mxu0 %v7963
      %v8240 = vpop.f32.mrb[0].mxu0
      %v8241 = vadd.f32 0.0, %v8240
      %v8242 = vpop.f32.mrb[0].mxu0
      %v8243 = vpop.f32.mrb[0].mxu0
      %v8244 = vadd.f32 0.0, %v8243
      %v8245 = vpop.f32.mrb[0].mxu0
      %8246 = vmatprep.mubr.bf16.mxu0 %v8116
      %8247 = vmatmul.mubr.bf16.gmra.mrb[0].mxu0 %v7967
      %v8248 = vpop.f32.mrb[0].mxu0
      %v8249 = vadd.f32 0.0, %v8248
      %v8250 = vpop.f32.mrb[0].mxu0
      %v8251 = vpop.f32.mrb[0].mxu0
      %v8252 = vadd.f32 0.0, %v8251
      %v8253 = vpop.f32.mrb[0].mxu0
      %8254 = vmatprep.mubr.bf16.mxu0 %v8119
      %8255 = vmatmul.mubr.bf16.gmra.mrb[0].mxu0 %v7971
      %v8256 = vpop.f32.mrb[0].mxu0
      %v8257 = vadd.f32 0.0, %v8256
      %v8258 = vpop.f32.mrb[0].mxu0
      %v8259 = vpop.f32.mrb[0].mxu0
      %v8260 = vadd.f32 0.0, %v8259
      %v8261 = vpop.f32.mrb[0].mxu0
      %8262 = vmatprep.mubr.bf16.mxu0 %v8122
      %8263 = vmatmul.mubr.bf16.gmra.mrb[0].mxu0 %v7975
      %v8264 = vpop.f32.mrb[0].mxu0
      %v8265 = vadd.f32 0.0, %v8264
      %v8266 = vpop.f32.mrb[0].mxu0
      %v8267 = vpop.f32.mrb[0].mxu0
      %v8268 = vadd.f32 0.0, %v8267
      %v8269 = vpop.f32.mrb[0].mxu0
      %8270 = vmatprep.mubr.bf16.mxu0 %v8125
      %8271 = vmatmul.mubr.bf16.gmra.mrb[0].mxu0 %v7979
      %v8272 = vpop.f32.mrb[0].mxu0
      %v8273 = vadd.f32 0.0, %v8272
      %v8274 = vpop.f32.mrb[0].mxu0
      %v8275 = vpop.f32.mrb[0].mxu0
      %v8276 = vadd.f32 0.0, %v8275
      %v8277 = vpop.f32.mrb[0].mxu0
      %8278 = vmatprep.mubr.bf16.mxu0 %v8128
      %8279 = vmatmul.mubr.bf16.gmra.mrb[0].mxu0 %v7983
      %v8280 = vpop.f32.mrb[0].mxu0
      %v8281 = vadd.f32 0.0, %v8280
      %v8282 = vpop.f32.mrb[0].mxu0
      %v8283 = vpop.f32.mrb[0].mxu0
      %v8284 = vadd.f32 0.0, %v8283
      %v8285 = vpop.f32.mrb[0].mxu0
      %8286 = vmatprep.mubr.bf16.mxu0 %v8131
      %8287 = vmatmul.mubr.bf16.gmra.mrb[0].mxu0 %v7987
      %v8288 = vpop.f32.mrb[0].mxu0
      %v8289 = vadd.f32 0.0, %v8288
      %v8290 = vpop.f32.mrb[0].mxu0
      %v8291 = vpop.f32.mrb[0].mxu0
      %v8292 = vadd.f32 0.0, %v8291
      %v8293 = vpop.f32.mrb[0].mxu0
      %8294 = vmatprep.mubr.bf16.mxu0 %v8134
      %8295 = vmatmul.mubr.bf16.gmra.mrb[0].mxu0 %v7991
      %v8296 = vpop.f32.mrb[0].mxu0
      %v8297 = vadd.f32 0.0, %v8296
      %v8298 = vpop.f32.mrb[0].mxu0
      %v8299 = vpop.f32.mrb[0].mxu0
      %v8300 = vadd.f32 0.0, %v8299
      %v8301 = vpop.f32.mrb[0].mxu0
      %8302 = vmatprep.mubr.bf16.mxu0 %v8137
      %8303 = vmatmul.mubr.bf16.gmra.mrb[0].mxu0 %v7995
      %v8304 = vpop.f32.mrb[0].mxu0
      %v8305 = vadd.f32 0.0, %v8304
      %v8306 = vpop.f32.mrb[0].mxu0
      %v8307 = vpop.f32.mrb[0].mxu0
      %v8308 = vadd.f32 0.0, %v8307
      %v8309 = vpop.f32.mrb[0].mxu0
      %8310 = vmatprep.mubr.bf16.mxu0 %v8140
      %8311 = vmatmul.mubr.bf16.gmra.mrb[0].mxu0 %v7994
      %v8312 = vpop.f32.mrb[0].mxu0
      %v8313 = vadd.f32 0.0, %v8312
      %v8314 = vpop.f32.mrb[0].mxu0
      %v8315 = vpop.f32.mrb[0].mxu0
      %v8316 = vpop.f32.mrb[0].mxu0
      %8317 = vdwg.mxu0
      %v8318 = vadd.f32 %v7850, %v8177
      %v8319 = vadd.f32 %v7851, %v8180
      %v8320 = vadd.f32 %v7852, %v8185
      %v8321 = vadd.f32 %v7853, %v8188
      %v8322 = vadd.f32 %v7854, %v8193
      %v8323 = vadd.f32 %v7855, %v8196
      %v8324 = vadd.f32 %v7856, %v8201
      %v8325 = vadd.f32 %v7857, %v8204
      %v8326 = vadd.f32 %v7858, %v8209
      %v8327 = vadd.f32 %v7859, %v8212
      %v8328 = vadd.f32 %v7860, %v8217
      %v8329 = vadd.f32 %v7861, %v8220
      %v8330 = vadd.f32 %v7862, %v8225
      %v8331 = vadd.f32 %v7863, %v8228
      %v8332 = vadd.f32 %v7864, %v8233
      %v8333 = vadd.f32 %v7865, %v8236
      %v8334 = vadd.f32 %v7866, %v8241
      %v8335 = vadd.f32 %v7867, %v8244
      %v8336 = vadd.f32 %v7868, %v8249
      %v8337 = vadd.f32 %v7869, %v8252
      %v8338 = vadd.f32 %v7870, %v8257
      %v8339 = vadd.f32 %v7871, %v8260
      %v8340 = vadd.f32 %v7872, %v8265
      %v8341 = vadd.f32 %v7873, %v8268
      %v8342 = vadd.f32 %v7874, %v8273
      %v8343 = vadd.f32 %v7875, %v8276
      %v8344 = vadd.f32 %v7876, %v8281
      %v8345 = vadd.f32 %v7877, %v8284
      %v8346 = vadd.f32 %v7878, %v8289
      %v8347 = vadd.f32 %v7879, %v8292
      %v8348 = vadd.f32 %v7880, %v8297
      %v8349 = vadd.f32 %v7881, %v8300
      %v8350 = vadd.f32 %v7882, %v8305
      %v8351 = vadd.f32 %v7883, %v8308
      %v8352 = vadd.f32 %v7884, %v8313
      %8353 = vst [vmem:[#allocation3] sm:$0xff] %v8318
      %8354 = vst [vmem:[#allocation3 + $0x8] sm:$0xff] %v8319
      %8355 = vst [vmem:[#allocation3 + $0x10] sm:$0xff] %v8320
      %8356 = vst [vmem:[#allocation3 + $0x18] sm:$0xff] %v8321
      %8357 = vst [vmem:[#allocation3 + $0x20] sm:$0xff] %v8322
      %8358 = vst [vmem:[#allocation3 + $0x28] sm:$0xff] %v8323
      %8359 = vst [vmem:[#allocation3 + $0x30] sm:$0xff] %v8324
      %8360 = vst [vmem:[#allocation3 + $0x38] sm:$0xff] %v8325
      %8361 = vst [vmem:[#allocation3 + $0x40] sm:$0xff] %v8326
      %8362 = vst [vmem:[#allocation3 + $0x48] sm:$0xff] %v8327
      %8363 = vst [vmem:[#allocation3 + $0x50] sm:$0xff] %v8328
      %8364 = vst [vmem:[#allocation3 + $0x58] sm:$0xff] %v8329
      %8365 = vst [vmem:[#allocation3 + $0x60] sm:$0xff] %v8330
      %8366 = vst [vmem:[#allocation3 + $0x68] sm:$0xff] %v8331
      %8367 = vst [vmem:[#allocation3 + $0x70] sm:$0xff] %v8332
      %8368 = vst [vmem:[#allocation3 + $0x78] sm:$0xff] %v8333
      %8369 = vst [vmem:[#allocation3 + $0x80] sm:$0xff] %v8334
      %8370 = vst [vmem:[#allocation3 + $0x88] sm:$0xff] %v8335
      %8371 = vst [vmem:[#allocation3 + $0x90] sm:$0xff] %v8336
      %8372 = vst [vmem:[#allocation3 + $0x98] sm:$0xff] %v8337
      %8373 = vst [vmem:[#allocation3 + $0xa0] sm:$0xff] %v8338
      %8374 = vst [vmem:[#allocation3 + $0xa8] sm:$0xff] %v8339
      %8375 = vst [vmem:[#allocation3 + $0xb0] sm:$0xff] %v8340
      %8376 = vst [vmem:[#allocation3 + $0xb8] sm:$0xff] %v8341
      %8377 = vst [vmem:[#allocation3 + $0xc0] sm:$0xff] %v8342
      %8378 = vst [vmem:[#allocation3 + $0xc8] sm:$0xff] %v8343
      %8379 = vst [vmem:[#allocation3 + $0xd0] sm:$0xff] %v8344
      %8380 = vst [vmem:[#allocation3 + $0xd8] sm:$0xff] %v8345
      %8381 = vst [vmem:[#allocation3 + $0xe0] sm:$0xff] %v8346
      %8382 = vst [vmem:[#allocation3 + $0xe8] sm:$0xff] %v8347
      %8383 = vst [vmem:[#allocation3 + $0xf0] sm:$0xff] %v8348
      %8384 = vst [vmem:[#allocation3 + $0xf8] sm:$0xff] %v8349
      %8385 = vst [vmem:[#allocation3 + $0x100] sm:$0xff] %v8350
      %8386 = vst [vmem:[#allocation3 + $0x108] sm:$0xff] %v8351
      %8387 = vst [vmem:[#allocation3 + $0x110] sm:$0xff] %v8352
      %v8388 = vld [vmem:[#allocation2 + $0x68] sm:$0xc0]
      %v8389 = vld [vmem:[#allocation2 + $0x70] sm:$0xff]
      %v8390 = vld [vmem:[#allocation2 + $0x78] sm:$0xff]
      %v8391 = vld [vmem:[#allocation2 + $0x80] sm:$0xff]
      %v8392 = vld [vmem:[#allocation2 + $0x88] sm:$0xff]
      %v8393 = vld [vmem:[#allocation2 + $0x90] sm:$0xff]
      %v8394 = vld [vmem:[#allocation2 + $0x98] sm:$0xff]
      %v8395 = vld [vmem:[#allocation2 + $0xa0] sm:$0xff]
      %v8396 = vld [vmem:[#allocation2 + $0xa8] sm:$0xff]
      %v8397 = vld [vmem:[#allocation2 + $0xb0] sm:$0xff]
      %v8398 = vld [vmem:[#allocation2 + $0xb8] sm:$0xff]
      %v8399 = vld [vmem:[#allocation2 + $0xc0] sm:$0xff]
      %v8400 = vld [vmem:[#allocation2 + $0xc8] sm:$0xff]
      %v8401 = vld [vmem:[#allocation2 + $0xd0] sm:$0xff]
      %v8402 = vld [vmem:[#allocation2 + $0xd8] sm:$0xff]
      %v8403 = vld [vmem:[#allocation2 + $0xe0] sm:$0xff]
      %v8404 = vld [vmem:[#allocation2 + $0xe8] sm:$0xff]
      %v8405 = vld [vmem:[#allocation2 + $0xf0] sm:$0xff]
      %v8406 = vld [vmem:[#allocation2 + $0xf8] sm:$0x3]
      %v8407 = vld [vmem:[#allocation2 + $0xf8] sm:$0x7]
      %v8408 = vld [vmem:[#allocation2 + $0x68] sm:$0x80]
      %v8410 = vshrl.u32 %v8388, 16
      %v8412 = vshll.u32 %v8388, 16
      %v8414 = vrot.slane %v8412, 1
      %v8415 = vor.u32 %v8410, %v8414
      %v8417 = vshll.u32 %v8389, 16
      %v8419 = vrot.slane %v8417, 1
      %v8420 = vsel %vm1827, %v8415, %v8419
      %v8421 = vshrl.u32 %v8389, 16
      %v8423 = vor.u32 %v8421, %v8419
      %v8425 = vshll.u32 %v8390, 16
      %v8427 = vrot.slane %v8425, 1
      %v8428 = vsel %vm1827, %v8423, %v8427
      %v8429 = vshrl.u32 %v8390, 16
      %v8431 = vor.u32 %v8429, %v8427
      %v8433 = vshll.u32 %v8391, 16
      %v8435 = vrot.slane %v8433, 1
      %v8436 = vsel %vm1827, %v8431, %v8435
      %v8437 = vshrl.u32 %v8391, 16
      %v8439 = vor.u32 %v8437, %v8435
      %v8441 = vshll.u32 %v8392, 16
      %v8443 = vrot.slane %v8441, 1
      %v8444 = vsel %vm1827, %v8439, %v8443
      %v8445 = vshrl.u32 %v8392, 16
      %v8447 = vor.u32 %v8445, %v8443
      %v8449 = vshll.u32 %v8393, 16
      %v8451 = vrot.slane %v8449, 1
      %v8452 = vsel %vm1827, %v8447, %v8451
      %v8453 = vshrl.u32 %v8393, 16
      %v8455 = vor.u32 %v8453, %v8451
      %v8457 = vshll.u32 %v8394, 16
      %v8459 = vrot.slane %v8457, 1
      %v8460 = vsel %vm1827, %v8455, %v8459
      %v8461 = vshrl.u32 %v8394, 16
      %v8463 = vor.u32 %v8461, %v8459
      %v8465 = vshll.u32 %v8395, 16
      %v8467 = vrot.slane %v8465, 1
      %v8468 = vsel %vm1827, %v8463, %v8467
      %v8469 = vshrl.u32 %v8395, 16
      %v8471 = vor.u32 %v8469, %v8467
      %v8473 = vshll.u32 %v8396, 16
      %v8475 = vrot.slane %v8473, 1
      %v8476 = vsel %vm1827, %v8471, %v8475
      %v8477 = vshrl.u32 %v8396, 16
      %v8479 = vor.u32 %v8477, %v8475
      %v8481 = vshll.u32 %v8397, 16
      %v8483 = vrot.slane %v8481, 1
      %v8484 = vsel %vm1827, %v8479, %v8483
      %v8485 = vshrl.u32 %v8397, 16
      %v8487 = vor.u32 %v8485, %v8483
      %v8489 = vshll.u32 %v8398, 16
      %v8491 = vrot.slane %v8489, 1
      %v8492 = vsel %vm1827, %v8487, %v8491
      %v8493 = vshrl.u32 %v8398, 16
      %v8495 = vor.u32 %v8493, %v8491
      %v8497 = vshll.u32 %v8399, 16
      %v8499 = vrot.slane %v8497, 1
      %v8500 = vsel %vm1827, %v8495, %v8499
      %v8501 = vshrl.u32 %v8399, 16
      %v8503 = vor.u32 %v8501, %v8499
      %v8505 = vshll.u32 %v8400, 16
      %v8507 = vrot.slane %v8505, 1
      %v8508 = vsel %vm1827, %v8503, %v8507
      %v8509 = vshrl.u32 %v8400, 16
      %v8511 = vor.u32 %v8509, %v8507
      %v8513 = vshll.u32 %v8401, 16
      %v8515 = vrot.slane %v8513, 1
      %v8516 = vsel %vm1827, %v8511, %v8515
      %v8517 = vshrl.u32 %v8401, 16
      %v8519 = vor.u32 %v8517, %v8515
      %v8521 = vshll.u32 %v8402, 16
      %v8523 = vrot.slane %v8521, 1
      %v8524 = vsel %vm1827, %v8519, %v8523
      %v8525 = vshrl.u32 %v8402, 16
      %v8527 = vor.u32 %v8525, %v8523
      %v8529 = vshll.u32 %v8403, 16
      %v8531 = vrot.slane %v8529, 1
      %v8532 = vsel %vm1827, %v8527, %v8531
      %v8533 = vshrl.u32 %v8403, 16
      %v8535 = vor.u32 %v8533, %v8531
      %v8537 = vshll.u32 %v8404, 16
      %v8539 = vrot.slane %v8537, 1
      %v8540 = vsel %vm1827, %v8535, %v8539
      %v8541 = vshrl.u32 %v8404, 16
      %v8543 = vor.u32 %v8541, %v8539
      %v8545 = vshll.u32 %v8405, 16
      %v8547 = vrot.slane %v8545, 1
      %v8548 = vsel %vm1827, %v8543, %v8547
      %v8549 = vshrl.u32 %v8405, 16
      %v8551 = vor.u32 %v8549, %v8547
      %v8553 = vshll.u32 %v8407, 16
      %v8555 = vrot.slane %v8553, 1
      %v8556 = vsel %vm1827, %v8551, %v8555
      %v8557 = vshrl.u32 %v8407, 16
      %v8559 = vor.u32 %v8557, %v8555
      %8560 = vrot.lane.b32.xlu0 %v8420, 64
      %v8561 = vpop.permute.xlu0 %8560
      %8562 = vrot.lane.b32.xlu0 %v8428, 64
      %v8563 = vpop.permute.xlu0 %8562
      %8564 = vrot.lane.b32.xlu0 %v8436, 64
      %v8565 = vpop.permute.xlu0 %8564
      %8566 = vrot.lane.b32.xlu0 %v8444, 64
      %v8567 = vpop.permute.xlu0 %8566
      %8568 = vrot.lane.b32.xlu0 %v8452, 64
      %v8569 = vpop.permute.xlu0 %8568
      %8570 = vrot.lane.b32.xlu0 %v8460, 64
      %v8571 = vpop.permute.xlu0 %8570
      %8572 = vrot.lane.b32.xlu0 %v8468, 64
      %v8573 = vpop.permute.xlu0 %8572
      %8574 = vrot.lane.b32.xlu0 %v8476, 64
      %v8575 = vpop.permute.xlu0 %8574
      %8576 = vrot.lane.b32.xlu0 %v8484, 64
      %v8577 = vpop.permute.xlu0 %8576
      %8578 = vrot.lane.b32.xlu0 %v8492, 64
      %v8579 = vpop.permute.xlu0 %8578
      %8580 = vrot.lane.b32.xlu0 %v8500, 64
      %v8581 = vpop.permute.xlu0 %8580
      %8582 = vrot.lane.b32.xlu0 %v8508, 64
      %v8583 = vpop.permute.xlu0 %8582
      %8584 = vrot.lane.b32.xlu0 %v8516, 64
      %v8585 = vpop.permute.xlu0 %8584
      %8586 = vrot.lane.b32.xlu0 %v8524, 64
      %v8587 = vpop.permute.xlu0 %8586
      %8588 = vrot.lane.b32.xlu0 %v8532, 64
      %v8589 = vpop.permute.xlu0 %8588
      %8590 = vrot.lane.b32.xlu0 %v8540, 64
      %v8591 = vpop.permute.xlu0 %8590
      %8592 = vrot.lane.b32.xlu0 %v8548, 64
      %v8593 = vpop.permute.xlu0 %8592
      %8594 = vrot.lane.b32.xlu0 %v8556, 64
      %v8595 = vpop.permute.xlu0 %8594
      %8596 = vrot.lane.b32.xlu0 %v8559, 64
      %v8597 = vpop.permute.xlu0 %8596
      %v8617 = vrot.slane %v8408, 1
      %v8618 = vrot.slane %v8389, 1
      %v8619 = vsel %vm2025, %v8617, %v8618
      %v8620 = vrot.slane %v8390, 1
      %v8621 = vsel %vm2025, %v8618, %v8620
      %v8622 = vrot.slane %v8391, 1
      %v8623 = vsel %vm2025, %v8620, %v8622
      %v8624 = vrot.slane %v8392, 1
      %v8625 = vsel %vm2025, %v8622, %v8624
      %v8626 = vrot.slane %v8393, 1
      %v8627 = vsel %vm2025, %v8624, %v8626
      %v8628 = vrot.slane %v8394, 1
      %v8629 = vsel %vm2025, %v8626, %v8628
      %v8630 = vrot.slane %v8395, 1
      %v8631 = vsel %vm2025, %v8628, %v8630
      %v8632 = vrot.slane %v8396, 1
      %v8633 = vsel %vm2025, %v8630, %v8632
      %v8634 = vrot.slane %v8397, 1
      %v8635 = vsel %vm2025, %v8632, %v8634
      %v8636 = vrot.slane %v8398, 1
      %v8637 = vsel %vm2025, %v8634, %v8636
      %v8638 = vrot.slane %v8399, 1
      %v8639 = vsel %vm2025, %v8636, %v8638
      %v8640 = vrot.slane %v8400, 1
      %v8641 = vsel %vm2025, %v8638, %v8640
      %v8642 = vrot.slane %v8401, 1
      %v8643 = vsel %vm2025, %v8640, %v8642
      %v8644 = vrot.slane %v8402, 1
      %v8645 = vsel %vm2025, %v8642, %v8644
      %v8646 = vrot.slane %v8403, 1
      %v8647 = vsel %vm2025, %v8644, %v8646
      %v8648 = vrot.slane %v8404, 1
      %v8649 = vsel %vm2025, %v8646, %v8648
      %v8650 = vrot.slane %v8405, 1
      %v8651 = vsel %vm2025, %v8648, %v8650
      %v8652 = vrot.slane %v8407, 1
      %v8653 = vsel %vm2025, %v8650, %v8652
      %v8655 = vsel %vm1739, %v8388, %v8561
      %v8657 = vsel %vm1739, %v8389, %v8563
      %v8659 = vsel %vm1739, %v8390, %v8565
      %v8661 = vsel %vm1739, %v8391, %v8567
      %v8663 = vsel %vm1739, %v8392, %v8569
      %v8665 = vsel %vm1739, %v8393, %v8571
      %v8667 = vsel %vm1739, %v8394, %v8573
      %v8669 = vsel %vm1739, %v8395, %v8575
      %v8671 = vsel %vm1739, %v8396, %v8577
      %v8673 = vsel %vm1739, %v8397, %v8579
      %v8675 = vsel %vm1739, %v8398, %v8581
      %v8677 = vsel %vm1739, %v8399, %v8583
      %v8679 = vsel %vm1739, %v8400, %v8585
      %v8681 = vsel %vm1739, %v8401, %v8587
      %v8683 = vsel %vm1739, %v8402, %v8589
      %v8685 = vsel %vm1739, %v8403, %v8591
      %v8687 = vsel %vm1739, %v8404, %v8593
      %v8689 = vsel %vm1739, %v8405, %v8595
      %v8692 = vsel %vm1739, %v8406, %v8597
      %v8693 = vld [vmem:[#allocation3] sm:$0xff]
      %v8694 = vld [vmem:[#allocation3 + $0x8] sm:$0xff]
      %v8695 = vld [vmem:[#allocation3 + $0x10] sm:$0xff]
      %v8696 = vld [vmem:[#allocation3 + $0x18] sm:$0xff]
      %v8697 = vld [vmem:[#allocation3 + $0x20] sm:$0xff]
      %v8698 = vld [vmem:[#allocation3 + $0x28] sm:$0xff]
      %v8699 = vld [vmem:[#allocation3 + $0x30] sm:$0xff]
      %v8700 = vld [vmem:[#allocation3 + $0x38] sm:$0xff]
      %v8701 = vld [vmem:[#allocation3 + $0x40] sm:$0xff]
      %v8702 = vld [vmem:[#allocation3 + $0x48] sm:$0xff]
      %v8703 = vld [vmem:[#allocation3 + $0x50] sm:$0xff]
      %v8704 = vld [vmem:[#allocation3 + $0x58] sm:$0xff]
      %v8705 = vld [vmem:[#allocation3 + $0x60] sm:$0xff]
      %v8706 = vld [vmem:[#allocation3 + $0x68] sm:$0xff]
      %v8707 = vld [vmem:[#allocation3 + $0x70] sm:$0xff]
      %v8708 = vld [vmem:[#allocation3 + $0x78] sm:$0xff]
      %v8709 = vld [vmem:[#allocation3 + $0x80] sm:$0xff]
      %v8710 = vld [vmem:[#allocation3 + $0x88] sm:$0xff]
      %v8711 = vld [vmem:[#allocation3 + $0x90] sm:$0xff]
      %v8712 = vld [vmem:[#allocation3 + $0x98] sm:$0xff]
      %v8713 = vld [vmem:[#allocation3 + $0xa0] sm:$0xff]
      %v8714 = vld [vmem:[#allocation3 + $0xa8] sm:$0xff]
      %v8715 = vld [vmem:[#allocation3 + $0xb0] sm:$0xff]
      %v8716 = vld [vmem:[#allocation3 + $0xb8] sm:$0xff]
      %v8717 = vld [vmem:[#allocation3 + $0xc0] sm:$0xff]
      %v8718 = vld [vmem:[#allocation3 + $0xc8] sm:$0xff]
      %v8719 = vld [vmem:[#allocation3 + $0xd0] sm:$0xff]
      %v8720 = vld [vmem:[#allocation3 + $0xd8] sm:$0xff]
      %v8721 = vld [vmem:[#allocation3 + $0xe0] sm:$0xff]
      %v8722 = vld [vmem:[#allocation3 + $0xe8] sm:$0xff]
      %v8723 = vld [vmem:[#allocation3 + $0xf0] sm:$0xff]
      %v8724 = vld [vmem:[#allocation3 + $0xf8] sm:$0xff]
      %v8725 = vld [vmem:[#allocation3 + $0x100] sm:$0xff]
      %v8726 = vld [vmem:[#allocation3 + $0x108] sm:$0xff]
      %v8727 = vld [vmem:[#allocation3 + $0x110] sm:$0xff]
      %s8728 = scalar_lea.vmem %s3, 768
      %v8729 = vld [vmem:[%s8728] sm:$0xf]
      %v8730 = vld [vmem:[%s8728 + $0x4] sm:$0xf]
      %v8731 = vld [vmem:[%s8728 + $0x8] sm:$0xf]
      %v8732 = vld [vmem:[%s8728 + $0xc] sm:$0xf]
      %v8733 = vld [vmem:[%s8728 + $0x10] sm:$0xf]
      %v8734 = vld [vmem:[%s8728 + $0x14] sm:$0xf]
      %v8735 = vld [vmem:[%s8728 + $0x18] sm:$0xf]
      %v8736 = vld [vmem:[%s8728 + $0x1c] sm:$0xf]
      %v8737 = vld [vmem:[%s8728 + $0x20] sm:$0xf]
      %v8738 = vld [vmem:[%s8728 + $0x24] sm:$0xf]
      %v8739 = vld [vmem:[%s8728 + $0x28] sm:$0xf]
      %v8740 = vld [vmem:[%s8728 + $0x2c] sm:$0xf]
      %v8741 = vld [vmem:[%s8728 + $0x30] sm:$0xf]
      %v8742 = vld [vmem:[%s8728 + $0x34] sm:$0xf]
      %v8743 = vld [vmem:[%s8728 + $0x38] sm:$0xf]
      %v8744 = vld [vmem:[%s8728 + $0x3c] sm:$0xf]
      %v8745 = vld [vmem:[%s8728 + $0x40] sm:$0xf]
      %v8746 = vld [vmem:[%s8728 + $0x44] sm:$0xf]
      %v8747 = vld [vmem:[%s8728 + $0x48] sm:$0xf]
      %v8748 = vld [vmem:[%s8728 + $0x4c] sm:$0xf]
      %v8749 = vld [vmem:[%s8728 + $0x50] sm:$0xf]
      %v8750 = vld [vmem:[%s8728 + $0x54] sm:$0xf]
      %v8751 = vld [vmem:[%s8728 + $0x58] sm:$0xf]
      %v8752 = vld [vmem:[%s8728 + $0x5c] sm:$0xf]
      %vm8772 = vcmask 1041408
      %v8773 = vrot.slane %v8655, 6
      %v8774 = vrot.slane %v8657, 6
      %v8775 = vsel %vm8772, %v8773, %v8774
      %v8776 = vrot.slane %v8619, 6
      %v8777 = vrot.slane %v8621, 6
      %v8778 = vsel %vm8772, %v8776, %v8777
      %v8779 = vrot.slane %v8659, 6
      %v8780 = vsel %vm8772, %v8774, %v8779
      %v8781 = vrot.slane %v8623, 6
      %v8782 = vsel %vm8772, %v8777, %v8781
      %v8783 = vrot.slane %v8661, 6
      %v8784 = vsel %vm8772, %v8779, %v8783
      %v8785 = vrot.slane %v8625, 6
      %v8786 = vsel %vm8772, %v8781, %v8785
      %v8787 = vrot.slane %v8663, 6
      %v8788 = vsel %vm8772, %v8783, %v8787
      %v8789 = vrot.slane %v8627, 6
      %v8790 = vsel %vm8772, %v8785, %v8789
      %v8791 = vrot.slane %v8665, 6
      %v8792 = vsel %vm8772, %v8787, %v8791
      %v8793 = vrot.slane %v8629, 6
      %v8794 = vsel %vm8772, %v8789, %v8793
      %v8795 = vrot.slane %v8667, 6
      %v8796 = vsel %vm8772, %v8791, %v8795
      %v8797 = vrot.slane %v8631, 6
      %v8798 = vsel %vm8772, %v8793, %v8797
      %v8799 = vrot.slane %v8669, 6
      %v8800 = vsel %vm8772, %v8795, %v8799
      %v8801 = vrot.slane %v8633, 6
      %v8802 = vsel %vm8772, %v8797, %v8801
      %v8803 = vrot.slane %v8671, 6
      %v8804 = vsel %vm8772, %v8799, %v8803
      %v8805 = vrot.slane %v8635, 6
      %v8806 = vsel %vm8772, %v8801, %v8805
      %v8807 = vrot.slane %v8673, 6
      %v8808 = vsel %vm8772, %v8803, %v8807
      %v8809 = vrot.slane %v8637, 6
      %v8810 = vsel %vm8772, %v8805, %v8809
      %v8811 = vrot.slane %v8675, 6
      %v8812 = vsel %vm8772, %v8807, %v8811
      %v8813 = vrot.slane %v8639, 6
      %v8814 = vsel %vm8772, %v8809, %v8813
      %v8815 = vrot.slane %v8677, 6
      %v8816 = vsel %vm8772, %v8811, %v8815
      %v8817 = vrot.slane %v8641, 6
      %v8818 = vsel %vm8772, %v8813, %v8817
      %v8819 = vrot.slane %v8679, 6
      %v8820 = vsel %vm8772, %v8815, %v8819
      %v8821 = vrot.slane %v8643, 6
      %v8822 = vsel %vm8772, %v8817, %v8821
      %v8823 = vrot.slane %v8681, 6
      %v8824 = vsel %vm8772, %v8819, %v8823
      %v8825 = vrot.slane %v8645, 6
      %v8826 = vsel %vm8772, %v8821, %v8825
      %v8827 = vrot.slane %v8683, 6
      %v8828 = vsel %vm8772, %v8823, %v8827
      %v8829 = vrot.slane %v8647, 6
      %v8830 = vsel %vm8772, %v8825, %v8829
      %v8831 = vrot.slane %v8685, 6
      %v8832 = vsel %vm8772, %v8827, %v8831
      %v8833 = vrot.slane %v8649, 6
      %v8834 = vsel %vm8772, %v8829, %v8833
      %v8835 = vrot.slane %v8687, 6
      %v8836 = vsel %vm8772, %v8831, %v8835
      %v8837 = vrot.slane %v8651, 6
      %v8838 = vsel %vm8772, %v8833, %v8837
      %v8839 = vrot.slane %v8689, 6
      %v8840 = vsel %vm8772, %v8835, %v8839
      %v8841 = vrot.slane %v8653, 6
      %v8842 = vsel %vm8772, %v8837, %v8841
      %v8843 = vrot.slane %v8692, 6
      %v8844 = vsel %vm8772, %v8839, %v8843
      %v8845 = vrot.slane %v8652, 6
      %v8846 = vsel %vm8772, %v8841, %v8845
      %v8889 = vunpack.c.l.b16 %v8729
      %v8890 = vunpack.c.l.b16 %v8730
      %v8891 = vunpack.c.l.b16 %v8731
      %v8892 = vunpack.c.l.b16 %v8732
      %v8893 = vunpack.c.l.b16 %v8733
      %v8894 = vunpack.c.l.b16 %v8734
      %v8895 = vunpack.c.l.b16 %v8735
      %v8896 = vunpack.c.l.b16 %v8736
      %v8897 = vunpack.c.l.b16 %v8737
      %v8898 = vunpack.c.l.b16 %v8738
      %v8899 = vunpack.c.l.b16 %v8739
      %v8900 = vunpack.c.l.b16 %v8740
      %v8901 = vunpack.c.l.b16 %v8741
      %v8902 = vunpack.c.l.b16 %v8742
      %v8903 = vunpack.c.l.b16 %v8743
      %v8904 = vunpack.c.l.b16 %v8744
      %v8905 = vunpack.c.l.b16 %v8745
      %v8906 = vunpack.c.l.b16 %v8746
      %v8907 = vunpack.c.l.b16 %v8747
      %v8908 = vunpack.c.l.b16 %v8748
      %v8909 = vunpack.c.l.b16 %v8749
      %v8910 = vunpack.c.l.b16 %v8750
      %v8911 = vunpack.c.l.b16 %v8751
      %v8912 = vunpack.c.l.b16 %v8752
      %v8913 = vpack.c.b16 %v8890, %v8889
      %v8914 = vpack.c.b16 %v8892, %v8891
      %v8915 = vpack.c.b16 %v8894, %v8893
      %v8916 = vpack.c.b16 %v8896, %v8895
      %v8917 = vpack.c.b16 %v8898, %v8897
      %v8918 = vpack.c.b16 %v8900, %v8899
      %v8919 = vpack.c.b16 %v8902, %v8901
      %v8920 = vpack.c.b16 %v8904, %v8903
      %v8921 = vpack.c.b16 %v8906, %v8905
      %v8922 = vpack.c.b16 %v8908, %v8907
      %v8923 = vpack.c.b16 %v8910, %v8909
      %v8924 = vpack.c.b16 %v8912, %v8911
      %v8938 = vsel %vm1739, %v8778, 0
      %v8941 = vsel %vm1739, %v8782, 0
      %v8944 = vsel %vm1739, %v8786, 0
      %v8947 = vsel %vm1739, %v8790, 0
      %v8950 = vsel %vm1739, %v8794, 0
      %v8953 = vsel %vm1739, %v8798, 0
      %v8956 = vsel %vm1739, %v8802, 0
      %v8959 = vsel %vm1739, %v8806, 0
      %v8962 = vsel %vm1739, %v8810, 0
      %v8965 = vsel %vm1739, %v8814, 0
      %v8968 = vsel %vm1739, %v8818, 0
      %v8971 = vsel %vm1739, %v8822, 0
      %v8974 = vsel %vm1739, %v8826, 0
      %v8977 = vsel %vm1739, %v8830, 0
      %v8980 = vsel %vm1739, %v8834, 0
      %v8983 = vsel %vm1739, %v8838, 0
      %v8986 = vsel %vm1739, %v8842, 0
      %v8989 = vsel %vm1739, %v8846, 0
      %8991 = vmatprep.subr.bf16.mxu0 0
      %8992 = vmatpush1.bf16.msra.mxu0 %v8913
      %8993 = vmatprep.subr.bf16.mxu0 0
      %8994 = vmatpush1.bf16.msra.mxu0 %v8914
      %8995 = vmatprep.subr.bf16.mxu0 0
      %8996 = vmatpush1.bf16.msra.mxu0 %v8915
      %8997 = vmatprep.subr.bf16.mxu0 0
      %8998 = vmatpush1.bf16.msra.mxu0 %v8916
      %8999 = vmatprep.subr.bf16.mxu0 0
      %9000 = vmatpush1.bf16.msra.mxu0 %v8917
      %9001 = vmatprep.subr.bf16.mxu0 0
      %9002 = vmatpush1.bf16.msra.mxu0 %v8918
      %9003 = vmatprep.subr.bf16.mxu0 0
      %9004 = vmatpush1.bf16.msra.mxu0 %v8919
      %9005 = vmatprep.subr.bf16.mxu0 0
      %9006 = vmatpush1.bf16.msra.mxu0 %v8920
      %9007 = vmatprep.subr.bf16.mxu0 0
      %9008 = vmatpush1.bf16.msra.mxu0 %v8921
      %9009 = vmatprep.subr.bf16.mxu0 0
      %9010 = vmatpush1.bf16.msra.mxu0 %v8922
      %9011 = vmatprep.subr.bf16.mxu0 0
      %9012 = vmatpush1.bf16.msra.mxu0 %v8923
      %9013 = vmatprep.subr.bf16.mxu0 0
      %9014 = vmatpush1.bf16.msra.mxu0 %v8924
      %9015 = vmatprep.subr.bf16.mxu0 0
      %9016 = vmatpush1.bf16.msra.mxu0 0
      %9017 = vmatprep.subr.bf16.mxu0 0
      %9018 = vmatpush1.bf16.msra.mxu0 0
      %9019 = vmatprep.subr.bf16.mxu0 0
      %9020 = vmatpush1.bf16.msra.mxu0 0
      %9021 = vmatprep.subr.bf16.mxu0 0
      %9022 = vmatpush1.bf16.msra.mxu0 0
      %9023 = vmatprep.mubr.bf16.mxu0 %v8938
      %9024 = vmatmul.mubr.bf16.gmra.mrb[0].mxu0 %v8775
      %v9025 = vpop.f32.mrb[0].mxu0
      %v9026 = vadd.f32 0.0, %v9025
      %v9027 = vpop.f32.mrb[0].mxu0
      %v9028 = vpop.f32.mrb[0].mxu0
      %v9029 = vadd.f32 0.0, %v9028
      %v9030 = vpop.f32.mrb[0].mxu0
      %9031 = vmatprep.mubr.bf16.mxu0 %v8941
      %9032 = vmatmul.mubr.bf16.gmra.mrb[0].mxu0 %v8780
      %v9033 = vpop.f32.mrb[0].mxu0
      %v9034 = vadd.f32 0.0, %v9033
      %v9035 = vpop.f32.mrb[0].mxu0
      %v9036 = vpop.f32.mrb[0].mxu0
      %v9037 = vadd.f32 0.0, %v9036
      %v9038 = vpop.f32.mrb[0].mxu0
      %9039 = vmatprep.mubr.bf16.mxu0 %v8944
      %9040 = vmatmul.mubr.bf16.gmra.mrb[0].mxu0 %v8784
      %v9041 = vpop.f32.mrb[0].mxu0
      %v9042 = vadd.f32 0.0, %v9041
      %v9043 = vpop.f32.mrb[0].mxu0
      %v9044 = vpop.f32.mrb[0].mxu0
      %v9045 = vadd.f32 0.0, %v9044
      %v9046 = vpop.f32.mrb[0].mxu0
      %9047 = vmatprep.mubr.bf16.mxu0 %v8947
      %9048 = vmatmul.mubr.bf16.gmra.mrb[0].mxu0 %v8788
      %v9049 = vpop.f32.mrb[0].mxu0
      %v9050 = vadd.f32 0.0, %v9049
      %v9051 = vpop.f32.mrb[0].mxu0
      %v9052 = vpop.f32.mrb[0].mxu0
      %v9053 = vadd.f32 0.0, %v9052
      %v9054 = vpop.f32.mrb[0].mxu0
      %9055 = vmatprep.mubr.bf16.mxu0 %v8950
      %9056 = vmatmul.mubr.bf16.gmra.mrb[0].mxu0 %v8792
      %v9057 = vpop.f32.mrb[0].mxu0
      %v9058 = vadd.f32 0.0, %v9057
      %v9059 = vpop.f32.mrb[0].mxu0
      %v9060 = vpop.f32.mrb[0].mxu0
      %v9061 = vadd.f32 0.0, %v9060
      %v9062 = vpop.f32.mrb[0].mxu0
      %9063 = vmatprep.mubr.bf16.mxu0 %v8953
      %9064 = vmatmul.mubr.bf16.gmra.mrb[0].mxu0 %v8796
      %v9065 = vpop.f32.mrb[0].mxu0
      %v9066 = vadd.f32 0.0, %v9065
      %v9067 = vpop.f32.mrb[0].mxu0
      %v9068 = vpop.f32.mrb[0].mxu0
      %v9069 = vadd.f32 0.0, %v9068
      %v9070 = vpop.f32.mrb[0].mxu0
      %9071 = vmatprep.mubr.bf16.mxu0 %v8956
      %9072 = vmatmul.mubr.bf16.gmra.mrb[0].mxu0 %v8800
      %v9073 = vpop.f32.mrb[0].mxu0
      %v9074 = vadd.f32 0.0, %v9073
      %v9075 = vpop.f32.mrb[0].mxu0
      %v9076 = vpop.f32.mrb[0].mxu0
      %v9077 = vadd.f32 0.0, %v9076
      %v9078 = vpop.f32.mrb[0].mxu0
      %9079 = vmatprep.mubr.bf16.mxu0 %v8959
      %9080 = vmatmul.mubr.bf16.gmra.mrb[0].mxu0 %v8804
      %v9081 = vpop.f32.mrb[0].mxu0
      %v9082 = vadd.f32 0.0, %v9081
      %v9083 = vpop.f32.mrb[0].mxu0
      %v9084 = vpop.f32.mrb[0].mxu0
      %v9085 = vadd.f32 0.0, %v9084
      %v9086 = vpop.f32.mrb[0].mxu0
      %9087 = vmatprep.mubr.bf16.mxu0 %v8962
      %9088 = vmatmul.mubr.bf16.gmra.mrb[0].mxu0 %v8808
      %v9089 = vpop.f32.mrb[0].mxu0
      %v9090 = vadd.f32 0.0, %v9089
      %v9091 = vpop.f32.mrb[0].mxu0
      %v9092 = vpop.f32.mrb[0].mxu0
      %v9093 = vadd.f32 0.0, %v9092
      %v9094 = vpop.f32.mrb[0].mxu0
      %9095 = vmatprep.mubr.bf16.mxu0 %v8965
      %9096 = vmatmul.mubr.bf16.gmra.mrb[0].mxu0 %v8812
      %v9097 = vpop.f32.mrb[0].mxu0
      %v9098 = vadd.f32 0.0, %v9097
      %v9099 = vpop.f32.mrb[0].mxu0
      %v9100 = vpop.f32.mrb[0].mxu0
      %v9101 = vadd.f32 0.0, %v9100
      %v9102 = vpop.f32.mrb[0].mxu0
      %9103 = vmatprep.mubr.bf16.mxu0 %v8968
      %9104 = vmatmul.mubr.bf16.gmra.mrb[0].mxu0 %v8816
      %v9105 = vpop.f32.mrb[0].mxu0
      %v9106 = vadd.f32 0.0, %v9105
      %v9107 = vpop.f32.mrb[0].mxu0
      %v9108 = vpop.f32.mrb[0].mxu0
      %v9109 = vadd.f32 0.0, %v9108
      %v9110 = vpop.f32.mrb[0].mxu0
      %9111 = vmatprep.mubr.bf16.mxu0 %v8971
      %9112 = vmatmul.mubr.bf16.gmra.mrb[0].mxu0 %v8820
      %v9113 = vpop.f32.mrb[0].mxu0
      %v9114 = vadd.f32 0.0, %v9113
      %v9115 = vpop.f32.mrb[0].mxu0
      %v9116 = vpop.f32.mrb[0].mxu0
      %v9117 = vadd.f32 0.0, %v9116
      %v9118 = vpop.f32.mrb[0].mxu0
      %9119 = vmatprep.mubr.bf16.mxu0 %v8974
      %9120 = vmatmul.mubr.bf16.gmra.mrb[0].mxu0 %v8824
      %v9121 = vpop.f32.mrb[0].mxu0
      %v9122 = vadd.f32 0.0, %v9121
      %v9123 = vpop.f32.mrb[0].mxu0
      %v9124 = vpop.f32.mrb[0].mxu0
      %v9125 = vadd.f32 0.0, %v9124
      %v9126 = vpop.f32.mrb[0].mxu0
      %9127 = vmatprep.mubr.bf16.mxu0 %v8977
      %9128 = vmatmul.mubr.bf16.gmra.mrb[0].mxu0 %v8828
      %v9129 = vpop.f32.mrb[0].mxu0
      %v9130 = vadd.f32 0.0, %v9129
      %v9131 = vpop.f32.mrb[0].mxu0
      %v9132 = vpop.f32.mrb[0].mxu0
      %v9133 = vadd.f32 0.0, %v9132
      %v9134 = vpop.f32.mrb[0].mxu0
      %9135 = vmatprep.mubr.bf16.mxu0 %v8980
      %9136 = vmatmul.mubr.bf16.gmra.mrb[0].mxu0 %v8832
      %v9137 = vpop.f32.mrb[0].mxu0
      %v9138 = vadd.f32 0.0, %v9137
      %v9139 = vpop.f32.mrb[0].mxu0
      %v9140 = vpop.f32.mrb[0].mxu0
      %v9141 = vadd.f32 0.0, %v9140
      %v9142 = vpop.f32.mrb[0].mxu0
      %9143 = vmatprep.mubr.bf16.mxu0 %v8983
      %9144 = vmatmul.mubr.bf16.gmra.mrb[0].mxu0 %v8836
      %v9145 = vpop.f32.mrb[0].mxu0
      %v9146 = vadd.f32 0.0, %v9145
      %v9147 = vpop.f32.mrb[0].mxu0
      %v9148 = vpop.f32.mrb[0].mxu0
      %v9149 = vadd.f32 0.0, %v9148
      %v9150 = vpop.f32.mrb[0].mxu0
      %9151 = vmatprep.mubr.bf16.mxu0 %v8986
      %9152 = vmatmul.mubr.bf16.gmra.mrb[0].mxu0 %v8840
      %v9153 = vpop.f32.mrb[0].mxu0
      %v9154 = vadd.f32 0.0, %v9153
      %v9155 = vpop.f32.mrb[0].mxu0
      %v9156 = vpop.f32.mrb[0].mxu0
      %v9157 = vadd.f32 0.0, %v9156
      %v9158 = vpop.f32.mrb[0].mxu0
      %9159 = vmatprep.mubr.bf16.mxu0 %v8989
      %9160 = vmatmul.mubr.bf16.gmra.mrb[0].mxu0 %v8844
      %v9161 = vpop.f32.mrb[0].mxu0
      %v9162 = vadd.f32 0.0, %v9161
      %v9163 = vpop.f32.mrb[0].mxu0
      %v9164 = vpop.f32.mrb[0].mxu0
      %v9165 = vpop.f32.mrb[0].mxu0
      %9166 = vdwg.mxu0
      %v9167 = vadd.f32 %v8693, %v9026
      %v9168 = vadd.f32 %v8694, %v9029
      %v9169 = vadd.f32 %v8695, %v9034
      %v9170 = vadd.f32 %v8696, %v9037
      %v9171 = vadd.f32 %v8697, %v9042
      %v9172 = vadd.f32 %v8698, %v9045
      %v9173 = vadd.f32 %v8699, %v9050
      %v9174 = vadd.f32 %v8700, %v9053
      %v9175 = vadd.f32 %v8701, %v9058
      %v9176 = vadd.f32 %v8702, %v9061
      %v9177 = vadd.f32 %v8703, %v9066
      %v9178 = vadd.f32 %v8704, %v9069
      %v9179 = vadd.f32 %v8705, %v9074
      %v9180 = vadd.f32 %v8706, %v9077
      %v9181 = vadd.f32 %v8707, %v9082
      %v9182 = vadd.f32 %v8708, %v9085
      %v9183 = vadd.f32 %v8709, %v9090
      %v9184 = vadd.f32 %v8710, %v9093
      %v9185 = vadd.f32 %v8711, %v9098
      %v9186 = vadd.f32 %v8712, %v9101
      %v9187 = vadd.f32 %v8713, %v9106
      %v9188 = vadd.f32 %v8714, %v9109
      %v9189 = vadd.f32 %v8715, %v9114
      %v9190 = vadd.f32 %v8716, %v9117
      %v9191 = vadd.f32 %v8717, %v9122
      %v9192 = vadd.f32 %v8718, %v9125
      %v9193 = vadd.f32 %v8719, %v9130
      %v9194 = vadd.f32 %v8720, %v9133
      %v9195 = vadd.f32 %v8721, %v9138
      %v9196 = vadd.f32 %v8722, %v9141
      %v9197 = vadd.f32 %v8723, %v9146
      %v9198 = vadd.f32 %v8724, %v9149
      %v9199 = vadd.f32 %v8725, %v9154
      %v9200 = vadd.f32 %v8726, %v9157
      %v9201 = vadd.f32 %v8727, %v9162
      %9202 = vst [vmem:[#allocation3] sm:$0xff] %v9167
      %9203 = vst [vmem:[#allocation3 + $0x8] sm:$0xff] %v9168
      %9204 = vst [vmem:[#allocation3 + $0x10] sm:$0xff] %v9169
      %9205 = vst [vmem:[#allocation3 + $0x18] sm:$0xff] %v9170
      %9206 = vst [vmem:[#allocation3 + $0x20] sm:$0xff] %v9171
      %9207 = vst [vmem:[#allocation3 + $0x28] sm:$0xff] %v9172
      %9208 = vst [vmem:[#allocation3 + $0x30] sm:$0xff] %v9173
      %9209 = vst [vmem:[#allocation3 + $0x38] sm:$0xff] %v9174
      %9210 = vst [vmem:[#allocation3 + $0x40] sm:$0xff] %v9175
      %9211 = vst [vmem:[#allocation3 + $0x48] sm:$0xff] %v9176
      %9212 = vst [vmem:[#allocation3 + $0x50] sm:$0xff] %v9177
      %9213 = vst [vmem:[#allocation3 + $0x58] sm:$0xff] %v9178
      %9214 = vst [vmem:[#allocation3 + $0x60] sm:$0xff] %v9179
      %9215 = vst [vmem:[#allocation3 + $0x68] sm:$0xff] %v9180
      %9216 = vst [vmem:[#allocation3 + $0x70] sm:$0xff] %v9181
      %9217 = vst [vmem:[#allocation3 + $0x78] sm:$0xff] %v9182
      %9218 = vst [vmem:[#allocation3 + $0x80] sm:$0xff] %v9183
      %9219 = vst [vmem:[#allocation3 + $0x88] sm:$0xff] %v9184
      %9220 = vst [vmem:[#allocation3 + $0x90] sm:$0xff] %v9185
      %9221 = vst [vmem:[#allocation3 + $0x98] sm:$0xff] %v9186
      %9222 = vst [vmem:[#allocation3 + $0xa0] sm:$0xff] %v9187
      %9223 = vst [vmem:[#allocation3 + $0xa8] sm:$0xff] %v9188
      %9224 = vst [vmem:[#allocation3 + $0xb0] sm:$0xff] %v9189
      %9225 = vst [vmem:[#allocation3 + $0xb8] sm:$0xff] %v9190
      %9226 = vst [vmem:[#allocation3 + $0xc0] sm:$0xff] %v9191
      %9227 = vst [vmem:[#allocation3 + $0xc8] sm:$0xff] %v9192
      %9228 = vst [vmem:[#allocation3 + $0xd0] sm:$0xff] %v9193
      %9229 = vst [vmem:[#allocation3 + $0xd8] sm:$0xff] %v9194
      %9230 = vst [vmem:[#allocation3 + $0xe0] sm:$0xff] %v9195
      %9231 = vst [vmem:[#allocation3 + $0xe8] sm:$0xff] %v9196
      %9232 = vst [vmem:[#allocation3 + $0xf0] sm:$0xff] %v9197
      %9233 = vst [vmem:[#allocation3 + $0xf8] sm:$0xff] %v9198
      %9234 = vst [vmem:[#allocation3 + $0x100] sm:$0xff] %v9199
      %9235 = vst [vmem:[#allocation3 + $0x108] sm:$0xff] %v9200
      %9236 = vst [vmem:[#allocation3 + $0x110] sm:$0xff] %v9201
      %v9237 = vld [vmem:[#allocation3] sm:$0xff]
      %v9238 = vld [vmem:[#allocation3 + $0x8] sm:$0xff]
      %v9239 = vld [vmem:[#allocation3 + $0x10] sm:$0xff]
      %v9240 = vld [vmem:[#allocation3 + $0x18] sm:$0xff]
      %v9241 = vld [vmem:[#allocation3 + $0x20] sm:$0xff]
      %v9242 = vld [vmem:[#allocation3 + $0x28] sm:$0xff]
      %v9243 = vld [vmem:[#allocation3 + $0x30] sm:$0xff]
      %v9244 = vld [vmem:[#allocation3 + $0x38] sm:$0xff]
      %v9245 = vld [vmem:[#allocation3 + $0x40] sm:$0xff]
      %v9246 = vld [vmem:[#allocation3 + $0x48] sm:$0xff]
      %v9247 = vld [vmem:[#allocation3 + $0x50] sm:$0xff]
      %v9248 = vld [vmem:[#allocation3 + $0x58] sm:$0xff]
      %v9249 = vld [vmem:[#allocation3 + $0x60] sm:$0xff]
      %v9250 = vld [vmem:[#allocation3 + $0x68] sm:$0xff]
      %v9251 = vld [vmem:[#allocation3 + $0x70] sm:$0xff]
      %v9252 = vld [vmem:[#allocation3 + $0x78] sm:$0xff]
      %v9253 = vld [vmem:[#allocation3 + $0x80] sm:$0xff]
      %v9254 = vld [vmem:[#allocation3 + $0x88] sm:$0xff]
      %v9255 = vld [vmem:[#allocation3 + $0x90] sm:$0xff]
      %v9256 = vld [vmem:[#allocation3 + $0x98] sm:$0xff]
      %v9257 = vld [vmem:[#allocation3 + $0xa0] sm:$0xff]
      %v9258 = vld [vmem:[#allocation3 + $0xa8] sm:$0xff]
      %v9259 = vld [vmem:[#allocation3 + $0xb0] sm:$0xff]
      %v9260 = vld [vmem:[#allocation3 + $0xb8] sm:$0xff]
      %v9261 = vld [vmem:[#allocation3 + $0xc0] sm:$0xff]
      %v9262 = vld [vmem:[#allocation3 + $0xc8] sm:$0xff]
      %v9263 = vld [vmem:[#allocation3 + $0xd0] sm:$0xff]
      %v9264 = vld [vmem:[#allocation3 + $0xd8] sm:$0xff]
      %v9265 = vld [vmem:[#allocation3 + $0xe0] sm:$0xff]
      %v9266 = vld [vmem:[#allocation3 + $0xe8] sm:$0xff]
      %v9267 = vld [vmem:[#allocation3 + $0xf0] sm:$0xff]
      %v9268 = vld [vmem:[#allocation3 + $0xf8] sm:$0xff]
      %v9269 = vld [vmem:[#allocation3 + $0x100] sm:$0xff]
      %v9270 = vld [vmem:[#allocation3 + $0x108] sm:$0xff]
      %v9271 = vld [vmem:[#allocation3 + $0x110] sm:$0xff]
      %v9272 = vld [vmem:[%s4] sm:$0x1]
      %v9274 = vlaneseq
      %v9275 = vshrl.u32 %v9274, 7
      %v9276 = vsub.s32 0, %v9275
      %v9277 = vrot.slane %v9272, %v9276
      %v9279 = vadd.f32 %v9237, %v9277
      %v9280 = vadd.f32 %v9238, %v9277
      %v9281 = vadd.f32 %v9239, %v9277
      %v9282 = vadd.f32 %v9240, %v9277
      %v9283 = vadd.f32 %v9241, %v9277
      %v9284 = vadd.f32 %v9242, %v9277
      %v9285 = vadd.f32 %v9243, %v9277
      %v9286 = vadd.f32 %v9244, %v9277
      %v9287 = vadd.f32 %v9245, %v9277
      %v9288 = vadd.f32 %v9246, %v9277
      %v9289 = vadd.f32 %v9247, %v9277
      %v9290 = vadd.f32 %v9248, %v9277
      %v9291 = vadd.f32 %v9249, %v9277
      %v9292 = vadd.f32 %v9250, %v9277
      %v9293 = vadd.f32 %v9251, %v9277
      %v9294 = vadd.f32 %v9252, %v9277
      %v9295 = vadd.f32 %v9253, %v9277
      %v9296 = vadd.f32 %v9254, %v9277
      %v9297 = vadd.f32 %v9255, %v9277
      %v9298 = vadd.f32 %v9256, %v9277
      %v9299 = vadd.f32 %v9257, %v9277
      %v9300 = vadd.f32 %v9258, %v9277
      %v9301 = vadd.f32 %v9259, %v9277
      %v9302 = vadd.f32 %v9260, %v9277
      %v9303 = vadd.f32 %v9261, %v9277
      %v9304 = vadd.f32 %v9262, %v9277
      %v9305 = vadd.f32 %v9263, %v9277
      %v9306 = vadd.f32 %v9264, %v9277
      %v9307 = vadd.f32 %v9265, %v9277
      %v9308 = vadd.f32 %v9266, %v9277
      %v9309 = vadd.f32 %v9267, %v9277
      %v9310 = vadd.f32 %v9268, %v9277
      %v9311 = vadd.f32 %v9269, %v9277
      %v9312 = vadd.f32 %v9270, %v9277
      %v9313 = vadd.f32 %v9271, %v9277
      %v9314 = vmax.f32 %v9279, 0.0
      %v9315 = vmax.f32 %v9280, 0.0
      %v9316 = vmax.f32 %v9281, 0.0
      %v9317 = vmax.f32 %v9282, 0.0
      %v9318 = vmax.f32 %v9283, 0.0
      %v9319 = vmax.f32 %v9284, 0.0
      %v9320 = vmax.f32 %v9285, 0.0
      %v9321 = vmax.f32 %v9286, 0.0
      %v9322 = vmax.f32 %v9287, 0.0
      %v9323 = vmax.f32 %v9288, 0.0
      %v9324 = vmax.f32 %v9289, 0.0
      %v9325 = vmax.f32 %v9290, 0.0
      %v9326 = vmax.f32 %v9291, 0.0
      %v9327 = vmax.f32 %v9292, 0.0
      %v9328 = vmax.f32 %v9293, 0.0
      %v9329 = vmax.f32 %v9294, 0.0
      %v9330 = vmax.f32 %v9295, 0.0
      %v9331 = vmax.f32 %v9296, 0.0
      %v9332 = vmax.f32 %v9297, 0.0
      %v9333 = vmax.f32 %v9298, 0.0
      %v9334 = vmax.f32 %v9299, 0.0
      %v9335 = vmax.f32 %v9300, 0.0
      %v9336 = vmax.f32 %v9301, 0.0
      %v9337 = vmax.f32 %v9302, 0.0
      %v9338 = vmax.f32 %v9303, 0.0
      %v9339 = vmax.f32 %v9304, 0.0
      %v9340 = vmax.f32 %v9305, 0.0
      %v9341 = vmax.f32 %v9306, 0.0
      %v9342 = vmax.f32 %v9307, 0.0
      %v9343 = vmax.f32 %v9308, 0.0
      %v9344 = vmax.f32 %v9309, 0.0
      %v9345 = vmax.f32 %v9310, 0.0
      %v9346 = vmax.f32 %v9311, 0.0
      %v9347 = vmax.f32 %v9312, 0.0
      %v9348 = vmax.f32 %v9313, 0.0
      %9349 = vst [vmem:[%s224] sm:$0xff] %v9314
      %9350 = vst [vmem:[%s224 + $0x8] sm:$0xff] %v9315
      %9351 = vst [vmem:[%s224 + $0x10] sm:$0xff] %v9316
      %9352 = vst [vmem:[%s224 + $0x18] sm:$0xff] %v9317
      %9353 = vst [vmem:[%s224 + $0x20] sm:$0xff] %v9318
      %9354 = vst [vmem:[%s224 + $0x28] sm:$0xff] %v9319
      %9355 = vst [vmem:[%s224 + $0x30] sm:$0xff] %v9320
      %9356 = vst [vmem:[%s224 + $0x38] sm:$0xff] %v9321
      %9357 = vst [vmem:[%s224 + $0x40] sm:$0xff] %v9322
      %9358 = vst [vmem:[%s224 + $0x48] sm:$0xff] %v9323
      %9359 = vst [vmem:[%s224 + $0x50] sm:$0xff] %v9324
      %9360 = vst [vmem:[%s224 + $0x58] sm:$0xff] %v9325
      %9361 = vst [vmem:[%s224 + $0x60] sm:$0xff] %v9326
      %9362 = vst [vmem:[%s224 + $0x68] sm:$0xff] %v9327
      %9363 = vst [vmem:[%s224 + $0x70] sm:$0xff] %v9328
      %9364 = vst [vmem:[%s224 + $0x78] sm:$0xff] %v9329
      %9365 = vst [vmem:[%s224 + $0x80] sm:$0xff] %v9330
      %9366 = vst [vmem:[%s224 + $0x88] sm:$0xff] %v9331
      %9367 = vst [vmem:[%s224 + $0x90] sm:$0xff] %v9332
      %9368 = vst [vmem:[%s224 + $0x98] sm:$0xff] %v9333
      %9369 = vst [vmem:[%s224 + $0xa0] sm:$0xff] %v9334
      %9370 = vst [vmem:[%s224 + $0xa8] sm:$0xff] %v9335
      %9371 = vst [vmem:[%s224 + $0xb0] sm:$0xff] %v9336
      %9372 = vst [vmem:[%s224 + $0xb8] sm:$0xff] %v9337
      %9373 = vst [vmem:[%s224 + $0xc0] sm:$0xff] %v9338
      %9374 = vst [vmem:[%s224 + $0xc8] sm:$0xff] %v9339
      %9375 = vst [vmem:[%s224 + $0xd0] sm:$0xff] %v9340
      %9376 = vst [vmem:[%s224 + $0xd8] sm:$0xff] %v9341
      %9377 = vst [vmem:[%s224 + $0xe0] sm:$0xff] %v9342
      %9378 = vst [vmem:[%s224 + $0xe8] sm:$0xff] %v9343
      %9379 = vst [vmem:[%s224 + $0xf0] sm:$0xff] %v9344
      %9380 = vst [vmem:[%s224 + $0xf8] sm:$0xff] %v9345
      %9381 = vst [vmem:[%s224 + $0x100] sm:$0xff] %v9346
      %9382 = vst [vmem:[%s224 + $0x108] sm:$0xff] %v9347
      %9383 = vst [vmem:[%s224 + $0x110] sm:$0xff] %v9348
      %p9384 = scmp.lt.s32.totalorder %s16, 1
      %s9385 = scalar_select %p9384, %s16, 1
      %s9386 = smul.addr %s9385, 35
      %s9387 = smul.addr %s9386, 8
      %s9388 = scalar_lea.vmem %s5, %s9387
      // Predicated region
      $region41: #{conv6_forward.1} parent=39 // pred_check
        %p9389 = pneg %p144
      $region42: #{conv6_forward.1} parent=39 // pred_check_branch
        %9391 = sbr.rel (%p9389) target = $region44
      $region43: #{conv6_forward.1} parent=39 // pred_region
        _
      $region44: #{conv6_forward.1} parent=39 // pred_fallthru
        _
    $region40: #{conv6_forward.1} parent=5 // pred_fallthru
      _
    %p9392 = scmp.le.s32.totalorder 2, %s11
    // Predicated region
    $region45: #{conv6_forward.1} parent=5 // pred_check
      %p9393 = pneg %p9392
    $region46: #{conv6_forward.1} parent=5 // pred_check_branch
      %9395 = sbr.rel (%p9393) target = $region48
    $region47: #{conv6_forward.1} parent=5 // pred_region
      %s9396 = ssub.s32 %s11, 2
      // Predicated region
      $region49: #{conv6_forward.1} parent=47 // pred_check
        %p9397 = pneg %p150
      $region50: #{conv6_forward.1} parent=47 // pred_check_branch
        %9399 = sbr.rel (%p9397) target = $region52
      $region51: #{conv6_forward.1} parent=47 // pred_region
        %p9400 = scmp.lt.s32.totalorder %s17, 1
        %s9401 = scalar_select %p9400, %s17, 1
        %s9402 = smul.addr %s9401, 35
        %s9403 = smul.addr %s9402, 8
        %s9404 = scalar_lea.vmem %s5, %s9403
      $region52: #{conv6_forward.1} parent=47 // pred_fallthru
        _
    $region48: #{conv6_forward.1} parent=5 // pred_fallthru
      _
  $region6: #{conv6_forward.1} parent=0 // loop_footer
    %s15 = sadd.s32 1, %s11
  $region7: #{conv6_forward.1} parent=0 // loop_footer_branch
    %10 = sbr.rel target = $region3
  $region8: #{conv6_forward.1} parent=0 // loop_exit
    _

</llo_original>
